<compile_context>
chip_gen: v6e
topology: v6e:2x2x1
jax: 0.10.0
libtpu: 0.0.40
codegen_flags: <defaults>
</compile_context>

<pallas_src>
import functools

import jax
import jax.numpy as jnp
from jax.experimental import pallas as pl
from jax.experimental.pallas import tpu as pltpu


ENC_CH = 128                    # synthetic encoder channels (multiple of 128 -> lane-dense)
DEC_CH = 128                    # synthetic decoder channels
_VMEM_BUDGET = 12 * 2 ** 20     # per-grid-step working-set target
_VMEM_LIMIT = 32 * 2 ** 20      # explicit scoped-VMEM cap (safe on v5e / v6e / v7x)


# ----------------------------------------------------------------------------
# helpers
# ----------------------------------------------------------------------------

def nchw_to_nhwc(x):
    return jnp.transpose(x, (0, 2, 3, 1))


def _pick_row_tile(n_rows, step_bytes_fn, cap=8):
    """Largest divisor of n_rows (<= cap) whose estimated VMEM working set fits the budget."""
    for d in range(int(min(n_rows, cap)), 0, -1):
        if n_rows % d == 0 and step_bytes_fn(d) <= _VMEM_BUDGET:
            return d
    return 1


def _mxu_k_depth():
    """256 on v6e/v7x-class MXUs (pair 3x3 taps to K=256); 128 on v5e and older."""
    try:
        kind = jax.devices()[0].device_kind.lower()
    except Exception:
        return 128
    for tag in ("v2", "v3", "v4", "v5"):
        if tag in kind:
            return 128
    return 256


def _compiler_params():
    return pltpu.CompilerParams(
        dimension_semantics=("parallel", "parallel"),
        vmem_limit_bytes=_VMEM_LIMIT)


# ----------------------------------------------------------------------------
# Kernel A: fused 3x3 conv (11->C) + bias + ReLU + 2x2 maxpool with slot indices
# ----------------------------------------------------------------------------

def _enc_fused_kernel(xe_ref, xet_ref, xeb_ref, xo_ref, xot_ref, xob_ref,
                      w_ref, b_ref, pool_ref, idx_ref, *, TP, Wo, Cin, C):
    t = pl.program_id(1)
    nt = pl.num_programs(1)
    R = 2 * TP
    keep_top = (t != 0).astype(jnp.bfloat16)          # top halo row is zero-pad at t == 0
    keep_bot = (t != nt - 1).astype(jnp.bfloat16)     # bottom halo row is zero-pad at last tile

    def assemble(core_ref, top_ref, bot_ref):
        top = top_ref[...] * keep_top
        bot = bot_ref[...] * keep_bot
        return jnp.concatenate([top, core_ref[...], bot], axis=0)   # (R+2, Wo+1, Cin)

    Xe = assemble(xe_ref, xet_ref, xeb_ref)    # even (zero-padded) input columns
    Xo = assemble(xo_ref, xot_ref, xob_ref)    # odd  (zero-padded) input columns

    w = w_ref[...]                             # (9*Cin, C) bf16, tap-major packed
    b = b_ref[...]                             # (1, C) f32

    def conv_cols(par):
        # conv output at columns j = 2*w + par for all R rows of the tile: all nine 3x3 taps
        # are packed on the K axis (K = 9*Cin = 99) -> ONE MXU matmul per column parity.
        parts = []
        for di in range(3):
            for dj in range(3):
                u = (par + dj) // 2
                plane = Xe if (par + dj) % 2 == 0 else Xo
                parts.append(plane[di:di + R, u:u + Wo, :].reshape(R * Wo, Cin))
        lhs = jnp.concatenate(parts, axis=-1)                       # (R*Wo, 9*Cin)
        acc = jnp.dot(lhs, w, preferred_element_type=jnp.float32)   # (R*Wo, C) f32
        return jnp.maximum(acc + b, 0.0).reshape(TP, 2, Wo, C)

    ye = conv_cols(0)          # even output columns
    yo = conv_cols(1)          # odd output columns

    # fused 2x2 maxpool: column pairing is elementwise (ye vs yo); row pairing is an outer-dim
    # split.  k in 0..3 is the window slot 2*row_offset + col_offset; ties take the smaller slot.
    v00, v10 = ye[:, 0], ye[:, 1]
    v01, v11 = yo[:, 0], yo[:, 1]
    m0 = jnp.maximum(v00, v01)
    k0 = (v01 > v00).astype(jnp.int32)               # 0 / 1
    m1 = jnp.maximum(v10, v11)
    k1 = (v11 > v10).astype(jnp.int32) + 2           # 2 / 3
    pooled = jnp.maximum(m0, m1)
    kk = jnp.where(m1 > m0, k1, k0)

    pool_ref[...] = pooled.astype(pool_ref.dtype)
    idx_ref[...] = kk.astype(jnp.int8)


def encoder_forward(params, resnet_input_nhwc):
    """Fused conv3x3(11->128)+ReLU+maxpool2x2(+indices).  Returns ([pooled], indices).

    TODO(synk): return_feature_maps=True in the real encoder yields several ResNet stages;
    here only the (fused) pooled map exists because the pre-pool features never hit HBM.
    """
    N, H, W, Cin = resnet_input_nhwc.shape
    assert H % 2 == 0 and W % 2 == 0, "even spatial dims expected"
    Ho, Wo = H // 2, W // 2
    C = ENC_CH

    # Column-parity split of the (1-column zero padded) 11-channel input: the only pad pass in
    # the whole pipeline, on the cheapest tensor, and it removes any strided op from the kernel.
    xp = jnp.pad(resnet_input_nhwc, ((0, 0), (0, 0), (1, 1), (0, 0)))
    xe = xp[:, :, 0::2, :].astype(jnp.bfloat16)      # (N, H, Wo+1, Cin)
    xo = xp[:, :, 1::2, :].astype(jnp.bfloat16)

    w = jnp.transpose(params["enc_w"], (2, 3, 1, 0)).reshape(9 * Cin, C).astype(jnp.bfloat16)
    b = params["enc_b"].reshape(1, C).astype(jnp.float32)

    def step_bytes(tp):                 # rough per-step VMEM working set
        r = 2 * tp
        xin = 2 * 2 * (r + 2) * (Wo + 1) * 128 * 2          # xe+xo blocks (lane-padded), dbuf
        outb = 2 * tp * Wo * C * (2 + 1)                    # pooled bf16 + idx int8, dbuf
        vals = 2 * r * Wo * (9 * Cin * 2 + C * 4)           # packed LHS + f32 accumulators
        return xin + outb + vals

    TP = _pick_row_tile(Ho, step_bytes, cap=8)
    R = 2 * TP
    nt = H // R

    core_map = lambda n, t: (n, t, 0, 0)
    top_map = lambda n, t: (n, jnp.maximum(t * R - 1, 0), 0, 0)       # clamped halo row
    bot_map = lambda n, t: (n, jnp.minimum(t * R + R, H - 1), 0, 0)   # clamped halo row

    kern = functools.partial(_enc_fused_kernel, TP=TP, Wo=Wo, Cin=Cin, C=C)
    pooled, idx = pl.pallas_call(
        kern,
        out_shape=(jax.ShapeDtypeStruct((N, Ho, Wo, C), jnp.bfloat16),
                   jax.ShapeDtypeStruct((N, Ho, Wo, C), jnp.int8)),
        grid=(N, nt),
        in_specs=[
            pl.BlockSpec((None, R, Wo + 1, Cin), core_map),
            pl.BlockSpec((None, 1, Wo + 1, Cin), top_map),
            pl.BlockSpec((None, 1, Wo + 1, Cin), bot_map),
            pl.BlockSpec((None, R, Wo + 1, Cin), core_map),
            pl.BlockSpec((None, 1, Wo + 1, Cin), top_map),
            pl.BlockSpec((None, 1, Wo + 1, Cin), bot_map),
            pl.BlockSpec((9 * Cin, C), lambda n, t: (0, 0)),
            pl.BlockSpec((1, C), lambda n, t: (0, 0)),
        ],
        out_specs=[
            pl.BlockSpec((None, TP, Wo, C), lambda n, t: (n, t, 0, 0)),
            pl.BlockSpec((None, TP, Wo, C), lambda n, t: (n, t, 0, 0)),
        ],
        compiler_params=_compiler_params(),
    )(xe, xe, xe, xo, xo, xo, w, b)
    return [pooled], idx


# ----------------------------------------------------------------------------
# Kernel B: fused 2x2 max-unpool + 3x3 conv (C->C) + bias + ReLU + 1x1 FBA head
# ----------------------------------------------------------------------------

def _dec_fused_kernel(p_ref, pt_ref, pb_ref, k_ref, kt_ref, kb_ref, it_ref,
                      w_ref, b1_ref, wx_ref, wit_ref, b2_ref, o_ref,
                      *, TP, Wo, C, groups):
    t = pl.program_id(1)
    nt = pl.num_programs(1)
    keep_top = (t != 0).astype(jnp.bfloat16)
    keep_bot = (t != nt - 1).astype(jnp.bfloat16)

    # pooled / index tiles with one pooled-row halo (zeroed at grid edges) and one zero column
    # halo on each side, assembled purely in value-land (no padded HBM tensors).
    p_rows = jnp.concatenate(
        [pt_ref[...] * keep_top, p_ref[...], pb_ref[...] * keep_bot], axis=0)  # (TP+2, Wo, C)
    k_rows = jnp.concatenate(
        [kt_ref[...], k_ref[...], kb_ref[...]], axis=0).astype(jnp.int32)
    zc = jnp.zeros((TP + 2, 1, C), jnp.bfloat16)
    zi = jnp.zeros((TP + 2, 1, C), jnp.int32)
    P = jnp.concatenate([zc, p_rows, zc], axis=1)                    # (TP+2, Wo+2, C)
    KS = jnp.concatenate([zi, k_rows, zi], axis=1)

    # max-unpool as four "parity planes": plane[q] holds the pooled value where window slot q
    # (q = 2*row_parity + col_parity) was the argmax, else zero.
    zero = jnp.zeros_like(P)
    planes = [jnp.where(KS == q, P, zero) for q in range(4)]

    w = w_ref[...]                      # (G, Kg, C) bf16; Kg = 128 (v5e) or 256 (v6e/v7x)
    taps_per_group = w.shape[1] // C
    b1 = b1_ref[...]                    # (1, C) f32
    wx = wx_ref[...]                    # (C, 8) bf16
    wit = wit_ref[...]                  # (5, 8) f32   (image 3 + trimap 2)
    b2 = b2_ref[...]                    # (1, 8) f32
    itv = it_ref[...].reshape(TP * Wo, 20).astype(jnp.float32)       # 4 parities x 5 channels
    col = jax.lax.broadcasted_iota(jnp.int32, (TP * Wo, 8), 1)

    for a in (0, 1):                    # output row parity
        for bpar in (0, 1):             # output column parity
            q = 2 * a + bpar
            acc = jnp.zeros((TP * Wo, C), jnp.float32)
            for gi, taps in enumerate(groups):
                parts = []
                for (di, dj) in taps:
                    s, pa = divmod(a - 1 + di, 2)       # pooled-row offset / row parity
                    u, pb = divmod(bpar - 1 + dj, 2)    # pooled-col offset / col parity
                    parts.append(planes[2 * pa + pb]
                                 [1 + s:1 + s + TP, 1 + u:1 + u + Wo, :]
                                 .reshape(TP * Wo, C))
                while len(parts) < taps_per_group:      # zero-padded last pair (weights are 0)
                    parts.append(parts[-1])
                lhs = parts[0] if taps_per_group == 1 else jnp.concatenate(parts, axis=-1)
                acc = acc + jnp.dot(lhs, w[gi], preferred_element_type=jnp.float32)
            h = jnp.maximum(acc + b1, 0.0).astype(jnp.bfloat16)       # conv + ReLU
            # fused 1x1 FBA head on [h, image, trimap]
            y = jnp.dot(h, wx, preferred_element_type=jnp.float32)    # (TP*Wo, 8)
            itq = itv[:, 5 * q:5 * q + 5]
            for c in range(5):
                y = y + itq[:, c:c + 1] * wit[c:c + 1, :]
            y = y + b2
            # channel 0 = alpha -> clamp [0,1]; channels 1..6 = F,B -> sigmoid (7 is padding)
            y = jnp.where(col < 1, jnp.clip(y, 0.0, 1.0), jax.nn.sigmoid(y))
            o_ref[q] = y.reshape(TP, Wo, 8)


def decoder_forward(params, conv_out, image_nchw, indices, two_chan_trimap_nchw):
    pooled = conv_out[-1]                          # (N, Ho, Wo, C) bf16
    idx = indices                                  # (N, Ho, Wo, C) int8 window slots
    N, Ho, Wo, C = pooled.shape
    assert C == ENC_CH == DEC_CH
    H, W = 2 * Ho, 2 * Wo
    assert image_nchw.shape[2] == H and image_nchw.shape[3] == W

    # image / trimap parity planes, channel-packed: parity q = 2a+b -> channels [5q:5q+5]
    it = jnp.concatenate(
        [nchw_to_nhwc(image_nchw), nchw_to_nhwc(two_chan_trimap_nchw)], axis=-1)  # (N,H,W,5)
    it_planes = jnp.concatenate(
        [it[:, a::2, b::2, :] for a in (0, 1) for b in (0, 1)],
        axis=-1).astype(jnp.bfloat16)                                             # (N,Ho,Wo,20)

    # decoder 3x3 weights, tap-major; pair taps to K=256 on 256-deep MXUs (v6e/v7x only).
    w9 = jnp.transpose(params["dec_w1"], (2, 3, 1, 0)).reshape(9, C, C).astype(jnp.bfloat16)
    taps = [(di, dj) for di in range(3) for dj in range(3)]
    if _mxu_k_depth() >= 256:
        groups = [taps[i:i + 2] for i in range(0, 8, 2)] + [taps[8:]]
        wg = []
        for g in groups:
            ws = [w9[3 * di + dj] for (di, dj) in g]
            if len(ws) == 1:
                ws = ws + [jnp.zeros_like(ws[0])]
            wg.append(jnp.concatenate(ws, axis=0))
        w_dec = jnp.stack(wg)                       # (5, 2C, C)
    else:
        groups = [[tap] for tap in taps]
        w_dec = w9                                  # (9, C, C)
    b1 = params["dec_b1"].reshape(1, C).astype(jnp.float32)

    w2 = jnp.transpose(params["dec_w2"][:, :, 0, 0], (1, 0))          # (C+5, 7)
    w2 = jnp.pad(w2, ((0, 0), (0, 1)))                                # lane-pad 7 -> 8
    wx = w2[:C].astype(jnp.bfloat16)                                  # (C, 8)
    wit = w2[C:C + 5].astype(jnp.float32)                             # (5, 8)
    b2 = jnp.pad(params["dec_b2"], (0, 1)).reshape(1, 8).astype(jnp.float32)

    kg = w_dec.shape[1]

    def step_bytes(tp):                 # rough per-step VMEM working set
        inb = 2 * tp * Wo * C * (2 + 1) + 2 * tp * Wo * 20 * 2
        pln = 4 * (tp + 2) * (Wo + 2) * C * 2
        vals = tp * Wo * (C * 4 + kg * 2 + C * 4)
        outb = 2 * 4 * tp * Wo * 8 * 4
        return inb + pln + vals + outb

    TP = _pick_row_tile(Ho, step_bytes, cap=8)
    nt = Ho // TP

    core_map = lambda n, t: (n, t, 0, 0)
    top_map = lambda n, t: (n, jnp.maximum(t * TP - 1, 0), 0, 0)
    bot_map = lambda n, t: (n, jnp.minimum(t * TP + TP, Ho - 1), 0, 0)

    kern = functools.partial(_dec_fused_kernel, TP=TP, Wo=Wo, C=C, groups=groups)
    dec = pl.pallas_call(
        kern,
        out_shape=jax.ShapeDtypeStruct((N, 4, Ho, Wo, 8), jnp.float32),
        grid=(N, nt),
        in_specs=[
            pl.BlockSpec((None, TP, Wo, C), core_map),
            pl.BlockSpec((None, 1, Wo, C), top_map),
            pl.BlockSpec((None, 1, Wo, C), bot_map),
            pl.BlockSpec((None, TP, Wo, C), core_map),
            pl.BlockSpec((None, 1, Wo, C), top_map),
            pl.BlockSpec((None, 1, Wo, C), bot_map),
            pl.BlockSpec((None, TP, Wo, 20), core_map),
            pl.BlockSpec(w_dec.shape, lambda n, t: (0, 0, 0)),
            pl.BlockSpec((1, C), lambda n, t: (0, 0)),
            pl.BlockSpec((C, 8), lambda n, t: (0, 0)),
            pl.BlockSpec((5, 8), lambda n, t: (0, 0)),
            pl.BlockSpec((1, 8), lambda n, t: (0, 0)),
        ],
        out_specs=pl.BlockSpec((None, 4, TP, Wo, 8), lambda n, t: (n, 0, t, 0, 0)),
        compiler_params=_compiler_params(),
    )(pooled, pooled, pooled, idx, idx, idx, it_planes, w_dec, b1, wx, wit, b2)

    # reassemble the four parity planes into NCHW (matches the PyTorch decoder output layout)
    y = dec[..., :7].reshape(N, 2, 2, Ho, Wo, 7)       # (n, a, b, p, w, c)
    y = jnp.transpose(y, (0, 5, 3, 1, 4, 2))           # (n, c, p, a, w, b)
    return y.reshape(N, 7, H, W)


# ----------------------------------------------------------------------------
# Synthetic encoder / decoder parameters (deterministic init, no checkpoints)
# ----------------------------------------------------------------------------

def init_params(key):
    k1, k2, k3 = jax.random.split(key, 3)
    return {
        "enc_w": 0.1 * jax.random.normal(k1, (ENC_CH, 11, 3, 3), jnp.float32),
        "enc_b": jnp.zeros((ENC_CH,), jnp.float32),
        "dec_w1": 0.05 * jax.random.normal(k2, (DEC_CH, ENC_CH, 3, 3), jnp.float32),
        "dec_b1": jnp.zeros((DEC_CH,), jnp.float32),
        "dec_w2": 0.1 * jax.random.normal(k3, (7, DEC_CH + 3 + 2, 1, 1), jnp.float32),
        "dec_b2": jnp.zeros((7,), jnp.float32),
    }


# ----------------------------------------------------------------------------
# MattingModule forward
# ----------------------------------------------------------------------------

def matting_module_forward(params, image, two_chan_trimap, image_n, trimap_transformed):
    # Exact MattingModule.forward semantics; the 11-channel concat is done on the NHWC lane
    # axis (after per-source transposes) so the encoder input is lane-contiguous.
    resnet_input = jnp.concatenate(
        [nchw_to_nhwc(image_n), nchw_to_nhwc(trimap_transformed),
         nchw_to_nhwc(two_chan_trimap)], axis=-1)                    # (N, H, W, 11)
    conv_out, indices = encoder_forward(params, resnet_input)
    return decoder_forward(params, conv_out, image, indices, two_chan_trimap)


# ----------------------------------------------------------------------------
# Demo
# ----------------------------------------------------------------------------

if __name__ == "__main__":
    key = jax.random.PRNGKey(0)
    kp, ki = jax.random.split(key)
    params = init_params(kp)

    B, H, W = 2, 16, 16
    k1, k2, k3, k4 = jax.random.split(ki, 4)
    image = jax.random.uniform(k1, (B, 3, H, W), jnp.float32)
    two_chan_trimap = jax.random.uniform(k2, (B, 2, H, W), jnp.float32)
    image_n = jax.random.normal(k3, (B, 3, H, W), jnp.float32)
    trimap_transformed = jax.random.uniform(k4, (B, 6, H, W), jnp.float32)

    fwd = jax.jit(functools.partial(matting_module_forward, params))
    out = jax.block_until_ready(fwd(image, two_chan_trimap, image_n, trimap_transformed))

    assert out.shape == (B, 7, H, W), out.shape
    assert out.dtype == jnp.float32
    assert bool(jnp.all(jnp.isfinite(out)))
    # alpha channel (0) is clamped to [0,1]; F/B channels are sigmoid outputs in (0,1)
    assert bool(jnp.all((out >= 0.0) & (out <= 1.0)))
    print("KERNEL_OK")
</pallas_src>

<mosaic_0001>
module attributes {stable_mosaic.version = 11 : i64} {
  func.func @_enc_fused_kernel(%arg0: i32, %arg1: i32, %arg2: memref<1x16x9x11xbf16, #tpu.memory_space<vmem>>, %arg3: memref<1x1x9x11xbf16, #tpu.memory_space<vmem>>, %arg4: memref<1x1x9x11xbf16, #tpu.memory_space<vmem>>, %arg5: memref<1x16x9x11xbf16, #tpu.memory_space<vmem>>, %arg6: memref<1x1x9x11xbf16, #tpu.memory_space<vmem>>, %arg7: memref<1x1x9x11xbf16, #tpu.memory_space<vmem>>, %arg8: memref<99x128xbf16, #tpu.memory_space<vmem>>, %arg9: memref<1x128xf32, #tpu.memory_space<vmem>>, %arg10: memref<1x8x8x128xbf16, #tpu.memory_space<vmem>>, %arg11: memref<1x8x8x128xi8, #tpu.memory_space<vmem>>) attributes {dimension_semantics = [#tpu.dimension_semantics<parallel>, #tpu.dimension_semantics<parallel>], iteration_bounds = array<i64: 2, 1>, scalar_prefetch = 0 : i64, scratch_operands = 0 : i64, tpu.core_type = #tpu.core_type<tc>, window_params = [{transform_indices = @transform_0, window_bounds = array<i64: 1, 16, 9, 11>}, {transform_indices = @transform_1, window_bounds = array<i64: 1, 1, 9, 11>}, {transform_indices = @transform_2, window_bounds = array<i64: 1, 1, 9, 11>}, {transform_indices = @transform_3, window_bounds = array<i64: 1, 16, 9, 11>}, {transform_indices = @transform_4, window_bounds = array<i64: 1, 1, 9, 11>}, {transform_indices = @transform_5, window_bounds = array<i64: 1, 1, 9, 11>}, {pipeline_mode = #tpu.pipeline_mode<synchronous>, transform_indices = @transform_6, window_bounds = array<i64: 99, 128>}, {pipeline_mode = #tpu.pipeline_mode<synchronous>, transform_indices = @transform_7, window_bounds = array<i64: 1, 128>}, {transform_indices = @transform_8, window_bounds = array<i64: 1, 8, 8, 128>}, {transform_indices = @transform_9, window_bounds = array<i64: 1, 8, 8, 128>}]} {
    %c0_i32 = arith.constant 0 : i32
    %0 = arith.cmpi ne, %arg1, %c0_i32 : i32
    %1 = arith.extui %0 : i1 to i32
    %2 = arith.sitofp %1 : i32 to f32
    %3 = arith.truncf %2 : f32 to bf16
    %c0_i32_0 = arith.constant 0 : i32
    %4 = arith.cmpi ne, %arg1, %c0_i32_0 : i32
    %5 = arith.extui %4 : i1 to i32
    %6 = arith.sitofp %5 : i32 to f32
    %7 = arith.truncf %6 : f32 to bf16
    %c0 = arith.constant 0 : index
    %c0_1 = arith.constant 0 : index
    %c0_2 = arith.constant 0 : index
    %c0_3 = arith.constant 0 : index
    %8 = vector.load %arg3[%c0, %c0_1, %c0_2, %c0_3] : memref<1x1x9x11xbf16, #tpu.memory_space<vmem>>, vector<1x1x9x11xbf16>
    %9 = vector.shape_cast %8 : vector<1x1x9x11xbf16> to vector<1x9x11xbf16>
    %10 = vector.broadcast %3 : bf16 to vector<1x9x11xbf16>
    %11 = arith.mulf %9, %10 : vector<1x9x11xbf16>
    %c0_4 = arith.constant 0 : index
    %c0_5 = arith.constant 0 : index
    %c0_6 = arith.constant 0 : index
    %c0_7 = arith.constant 0 : index
    %12 = vector.load %arg4[%c0_4, %c0_5, %c0_6, %c0_7] : memref<1x1x9x11xbf16, #tpu.memory_space<vmem>>, vector<1x1x9x11xbf16>
    %13 = vector.shape_cast %12 : vector<1x1x9x11xbf16> to vector<1x9x11xbf16>
    %14 = vector.broadcast %7 : bf16 to vector<1x9x11xbf16>
    %15 = arith.mulf %13, %14 : vector<1x9x11xbf16>
    %c0_8 = arith.constant 0 : index
    %c0_9 = arith.constant 0 : index
    %c0_10 = arith.constant 0 : index
    %c0_11 = arith.constant 0 : index
    %16 = vector.load %arg2[%c0_8, %c0_9, %c0_10, %c0_11] : memref<1x16x9x11xbf16, #tpu.memory_space<vmem>>, vector<1x16x9x11xbf16>
    %17 = vector.shape_cast %16 : vector<1x16x9x11xbf16> to vector<16x9x11xbf16>
    %18 = tpu.concatenate %11, %17, %15 in 0 : vector<1x9x11xbf16>, vector<16x9x11xbf16>, vector<1x9x11xbf16> -> vector<18x9x11xbf16>
    %c0_12 = arith.constant 0 : index
    %c0_13 = arith.constant 0 : index
    %c0_14 = arith.constant 0 : index
    %c0_15 = arith.constant 0 : index
    %19 = vector.load %arg6[%c0_12, %c0_13, %c0_14, %c0_15] : memref<1x1x9x11xbf16, #tpu.memory_space<vmem>>, vector<1x1x9x11xbf16>
    %20 = vector.shape_cast %19 : vector<1x1x9x11xbf16> to vector<1x9x11xbf16>
    %21 = vector.broadcast %3 : bf16 to vector<1x9x11xbf16>
    %22 = arith.mulf %20, %21 : vector<1x9x11xbf16>
    %c0_16 = arith.constant 0 : index
    %c0_17 = arith.constant 0 : index
    %c0_18 = arith.constant 0 : index
    %c0_19 = arith.constant 0 : index
    %23 = vector.load %arg7[%c0_16, %c0_17, %c0_18, %c0_19] : memref<1x1x9x11xbf16, #tpu.memory_space<vmem>>, vector<1x1x9x11xbf16>
    %24 = vector.shape_cast %23 : vector<1x1x9x11xbf16> to vector<1x9x11xbf16>
    %25 = vector.broadcast %7 : bf16 to vector<1x9x11xbf16>
    %26 = arith.mulf %24, %25 : vector<1x9x11xbf16>
    %c0_20 = arith.constant 0 : index
    %c0_21 = arith.constant 0 : index
    %c0_22 = arith.constant 0 : index
    %c0_23 = arith.constant 0 : index
    %27 = vector.load %arg5[%c0_20, %c0_21, %c0_22, %c0_23] : memref<1x16x9x11xbf16, #tpu.memory_space<vmem>>, vector<1x16x9x11xbf16>
    %28 = vector.shape_cast %27 : vector<1x16x9x11xbf16> to vector<16x9x11xbf16>
    %29 = tpu.concatenate %22, %28, %26 in 0 : vector<1x9x11xbf16>, vector<16x9x11xbf16>, vector<1x9x11xbf16> -> vector<18x9x11xbf16>
    %c0_24 = arith.constant 0 : index
    %c0_25 = arith.constant 0 : index
    %30 = vector.load %arg8[%c0_24, %c0_25] : memref<99x128xbf16, #tpu.memory_space<vmem>>, vector<99x128xbf16>
    %c0_26 = arith.constant 0 : index
    %c0_27 = arith.constant 0 : index
    %31 = vector.load %arg9[%c0_26, %c0_27] : memref<1x128xf32, #tpu.memory_space<vmem>>, vector<1x128xf32>
    %32 = vector.extract_strided_slice %18 {offsets = [0, 0, 0], sizes = [16, 8, 11], strides = [1, 1, 1]} : vector<18x9x11xbf16> to vector<16x8x11xbf16>
    %33 = vector.shape_cast %32 : vector<16x8x11xbf16> to vector<128x11xbf16>
    %34 = vector.extract_strided_slice %29 {offsets = [0, 0, 0], sizes = [16, 8, 11], strides = [1, 1, 1]} : vector<18x9x11xbf16> to vector<16x8x11xbf16>
    %35 = vector.shape_cast %34 : vector<16x8x11xbf16> to vector<128x11xbf16>
    %36 = vector.extract_strided_slice %18 {offsets = [0, 1, 0], sizes = [16, 8, 11], strides = [1, 1, 1]} : vector<18x9x11xbf16> to vector<16x8x11xbf16>
    %37 = vector.shape_cast %36 : vector<16x8x11xbf16> to vector<128x11xbf16>
    %38 = vector.extract_strided_slice %18 {offsets = [1, 0, 0], sizes = [16, 8, 11], strides = [1, 1, 1]} : vector<18x9x11xbf16> to vector<16x8x11xbf16>
    %39 = vector.shape_cast %38 : vector<16x8x11xbf16> to vector<128x11xbf16>
    %40 = vector.extract_strided_slice %29 {offsets = [1, 0, 0], sizes = [16, 8, 11], strides = [1, 1, 1]} : vector<18x9x11xbf16> to vector<16x8x11xbf16>
    %41 = vector.shape_cast %40 : vector<16x8x11xbf16> to vector<128x11xbf16>
    %42 = vector.extract_strided_slice %18 {offsets = [1, 1, 0], sizes = [16, 8, 11], strides = [1, 1, 1]} : vector<18x9x11xbf16> to vector<16x8x11xbf16>
    %43 = vector.shape_cast %42 : vector<16x8x11xbf16> to vector<128x11xbf16>
    %44 = vector.extract_strided_slice %18 {offsets = [2, 0, 0], sizes = [16, 8, 11], strides = [1, 1, 1]} : vector<18x9x11xbf16> to vector<16x8x11xbf16>
    %45 = vector.shape_cast %44 : vector<16x8x11xbf16> to vector<128x11xbf16>
    %46 = vector.extract_strided_slice %29 {offsets = [2, 0, 0], sizes = [16, 8, 11], strides = [1, 1, 1]} : vector<18x9x11xbf16> to vector<16x8x11xbf16>
    %47 = vector.shape_cast %46 : vector<16x8x11xbf16> to vector<128x11xbf16>
    %48 = vector.extract_strided_slice %18 {offsets = [2, 1, 0], sizes = [16, 8, 11], strides = [1, 1, 1]} : vector<18x9x11xbf16> to vector<16x8x11xbf16>
    %49 = vector.shape_cast %48 : vector<16x8x11xbf16> to vector<128x11xbf16>
    %50 = tpu.concatenate %33, %35, %37, %39, %41, %43, %45, %47, %49 in 1 : vector<128x11xbf16>, vector<128x11xbf16>, vector<128x11xbf16>, vector<128x11xbf16>, vector<128x11xbf16>, vector<128x11xbf16>, vector<128x11xbf16>, vector<128x11xbf16>, vector<128x11xbf16> -> vector<128x99xbf16>
    %cst = arith.constant dense<0.000000e+00> : vector<128x128xf32>
    %51 = tpu.matmul %50, %30, %cst {dimension_numbers = #tpu.dot_dimension_numbers<[1], [0], [0], [1], [0, 0, 1, 1], [], []>} : vector<128x99xbf16>, vector<99x128xbf16>, vector<128x128xf32> -> vector<128x128xf32>
    %52 = vector.broadcast %31 : vector<1x128xf32> to vector<128x128xf32>
    %53 = arith.addf %51, %52 : vector<128x128xf32>
    %cst_28 = arith.constant 0.000000e+00 : f32
    %54 = vector.broadcast %cst_28 : f32 to vector<128x128xf32>
    %55 = arith.maximumf %53, %54 : vector<128x128xf32>
    %56 = vector.shape_cast %55 : vector<128x128xf32> to vector<8x2x8x128xf32>
    %57 = vector.extract_strided_slice %29 {offsets = [0, 0, 0], sizes = [16, 8, 11], strides = [1, 1, 1]} : vector<18x9x11xbf16> to vector<16x8x11xbf16>
    %58 = vector.shape_cast %57 : vector<16x8x11xbf16> to vector<128x11xbf16>
    %59 = vector.extract_strided_slice %18 {offsets = [0, 1, 0], sizes = [16, 8, 11], strides = [1, 1, 1]} : vector<18x9x11xbf16> to vector<16x8x11xbf16>
    %60 = vector.shape_cast %59 : vector<16x8x11xbf16> to vector<128x11xbf16>
    %61 = vector.extract_strided_slice %29 {offsets = [0, 1, 0], sizes = [16, 8, 11], strides = [1, 1, 1]} : vector<18x9x11xbf16> to vector<16x8x11xbf16>
    %62 = vector.shape_cast %61 : vector<16x8x11xbf16> to vector<128x11xbf16>
    %63 = vector.extract_strided_slice %29 {offsets = [1, 0, 0], sizes = [16, 8, 11], strides = [1, 1, 1]} : vector<18x9x11xbf16> to vector<16x8x11xbf16>
    %64 = vector.shape_cast %63 : vector<16x8x11xbf16> to vector<128x11xbf16>
    %65 = vector.extract_strided_slice %18 {offsets = [1, 1, 0], sizes = [16, 8, 11], strides = [1, 1, 1]} : vector<18x9x11xbf16> to vector<16x8x11xbf16>
    %66 = vector.shape_cast %65 : vector<16x8x11xbf16> to vector<128x11xbf16>
    %67 = vector.extract_strided_slice %29 {offsets = [1, 1, 0], sizes = [16, 8, 11], strides = [1, 1, 1]} : vector<18x9x11xbf16> to vector<16x8x11xbf16>
    %68 = vector.shape_cast %67 : vector<16x8x11xbf16> to vector<128x11xbf16>
    %69 = vector.extract_strided_slice %29 {offsets = [2, 0, 0], sizes = [16, 8, 11], strides = [1, 1, 1]} : vector<18x9x11xbf16> to vector<16x8x11xbf16>
    %70 = vector.shape_cast %69 : vector<16x8x11xbf16> to vector<128x11xbf16>
    %71 = vector.extract_strided_slice %18 {offsets = [2, 1, 0], sizes = [16, 8, 11], strides = [1, 1, 1]} : vector<18x9x11xbf16> to vector<16x8x11xbf16>
    %72 = vector.shape_cast %71 : vector<16x8x11xbf16> to vector<128x11xbf16>
    %73 = vector.extract_strided_slice %29 {offsets = [2, 1, 0], sizes = [16, 8, 11], strides = [1, 1, 1]} : vector<18x9x11xbf16> to vector<16x8x11xbf16>
    %74 = vector.shape_cast %73 : vector<16x8x11xbf16> to vector<128x11xbf16>
    %75 = tpu.concatenate %58, %60, %62, %64, %66, %68, %70, %72, %74 in 1 : vector<128x11xbf16>, vector<128x11xbf16>, vector<128x11xbf16>, vector<128x11xbf16>, vector<128x11xbf16>, vector<128x11xbf16>, vector<128x11xbf16>, vector<128x11xbf16>, vector<128x11xbf16> -> vector<128x99xbf16>
    %cst_29 = arith.constant dense<0.000000e+00> : vector<128x128xf32>
    %76 = tpu.matmul %75, %30, %cst_29 {dimension_numbers = #tpu.dot_dimension_numbers<[1], [0], [0], [1], [0, 0, 1, 1], [], []>} : vector<128x99xbf16>, vector<99x128xbf16>, vector<128x128xf32> -> vector<128x128xf32>
    %77 = vector.broadcast %31 : vector<1x128xf32> to vector<128x128xf32>
    %78 = arith.addf %76, %77 : vector<128x128xf32>
    %cst_30 = arith.constant 0.000000e+00 : f32
    %79 = vector.broadcast %cst_30 : f32 to vector<128x128xf32>
    %80 = arith.maximumf %78, %79 : vector<128x128xf32>
    %81 = vector.shape_cast %80 : vector<128x128xf32> to vector<8x2x8x128xf32>
    %82 = vector.extract_strided_slice %56 {offsets = [0, 0, 0, 0], sizes = [8, 1, 8, 128], strides = [1, 1, 1, 1]} : vector<8x2x8x128xf32> to vector<8x1x8x128xf32>
    %83 = vector.shape_cast %82 : vector<8x1x8x128xf32> to vector<8x8x128xf32>
    %84 = vector.extract_strided_slice %56 {offsets = [0, 1, 0, 0], sizes = [8, 1, 8, 128], strides = [1, 1, 1, 1]} : vector<8x2x8x128xf32> to vector<8x1x8x128xf32>
    %85 = vector.shape_cast %84 : vector<8x1x8x128xf32> to vector<8x8x128xf32>
    %86 = vector.extract_strided_slice %81 {offsets = [0, 0, 0, 0], sizes = [8, 1, 8, 128], strides = [1, 1, 1, 1]} : vector<8x2x8x128xf32> to vector<8x1x8x128xf32>
    %87 = vector.shape_cast %86 : vector<8x1x8x128xf32> to vector<8x8x128xf32>
    %88 = vector.extract_strided_slice %81 {offsets = [0, 1, 0, 0], sizes = [8, 1, 8, 128], strides = [1, 1, 1, 1]} : vector<8x2x8x128xf32> to vector<8x1x8x128xf32>
    %89 = vector.shape_cast %88 : vector<8x1x8x128xf32> to vector<8x8x128xf32>
    %90 = arith.maximumf %83, %87 : vector<8x8x128xf32>
    %91 = arith.cmpf ogt, %87, %83 : vector<8x8x128xf32>
    %92 = arith.extui %91 : vector<8x8x128xi1> to vector<8x8x128xi32>
    %93 = arith.maximumf %85, %89 : vector<8x8x128xf32>
    %94 = arith.cmpf ogt, %89, %85 : vector<8x8x128xf32>
    %95 = arith.extui %94 : vector<8x8x128xi1> to vector<8x8x128xi32>
    %c2_i32 = arith.constant 2 : i32
    %96 = vector.broadcast %c2_i32 : i32 to vector<8x8x128xi32>
    %97 = arith.addi %95, %96 : vector<8x8x128xi32>
    %98 = arith.maximumf %90, %93 : vector<8x8x128xf32>
    %99 = arith.cmpf ogt, %93, %90 : vector<8x8x128xf32>
    %100 = arith.select %99, %97, %92 : vector<8x8x128xi1>, vector<8x8x128xi32>
    %101 = arith.truncf %98 : vector<8x8x128xf32> to vector<8x8x128xbf16>
    %c0_31 = arith.constant 0 : index
    %c0_32 = arith.constant 0 : index
    %c0_33 = arith.constant 0 : index
    %c0_34 = arith.constant 0 : index
    %102 = vector.load %arg10[%c0_31, %c0_32, %c0_33, %c0_34] : memref<1x8x8x128xbf16, #tpu.memory_space<vmem>>, vector<1x8x8x128xbf16>
    %103 = vector.shape_cast %102 : vector<1x8x8x128xbf16> to vector<8x8x128xbf16>
    %104 = vector.shape_cast %101 : vector<8x8x128xbf16> to vector<1x8x8x128xbf16>
    tpu.vector_store %arg10[%c0_31, %c0_32, %c0_33, %c0_34], %104 {strides = array<i32>} : memref<1x8x8x128xbf16, #tpu.memory_space<vmem>>, vector<1x8x8x128xbf16>,
    %105 = arith.trunci %100 : vector<8x8x128xi32> to vector<8x8x128xi8>
    %c0_35 = arith.constant 0 : index
    %c0_36 = arith.constant 0 : index
    %c0_37 = arith.constant 0 : index
    %c0_38 = arith.constant 0 : index
    %106 = vector.load %arg11[%c0_35, %c0_36, %c0_37, %c0_38] : memref<1x8x8x128xi8, #tpu.memory_space<vmem>>, vector<1x8x8x128xi8>
    %107 = vector.shape_cast %106 : vector<1x8x8x128xi8> to vector<8x8x128xi8>
    %108 = vector.shape_cast %105 : vector<8x8x128xi8> to vector<1x8x8x128xi8>
    tpu.vector_store %arg11[%c0_35, %c0_36, %c0_37, %c0_38], %108 {strides = array<i32>} : memref<1x8x8x128xi8, #tpu.memory_space<vmem>>, vector<1x8x8x128xi8>,
    return
  }
  func.func @transform_0(%arg0: i32, %arg1: i32) -> (i32, i32, i32, i32) {
    %c0_i32 = arith.constant 0 : i32
    %c0_i32_0 = arith.constant 0 : i32
    %c0_i32_1 = arith.constant 0 : i32
    return %arg0, %arg1, %c0_i32, %c0_i32_0 : i32, i32, i32, i32
  }
  func.func @transform_1(%arg0: i32, %arg1: i32) -> (i32, i32, i32, i32) {
    %c16_i32 = arith.constant 16 : i32
    %0 = arith.muli %arg1, %c16_i32 : i32
    %c1_i32 = arith.constant 1 : i32
    %1 = arith.subi %0, %c1_i32 : i32
    %c0_i32 = arith.constant 0 : i32
    %2 = arith.maxsi %1, %c0_i32 : i32
    %c0_i32_0 = arith.constant 0 : i32
    %c0_i32_1 = arith.constant 0 : i32
    %c0_i32_2 = arith.constant 0 : i32
    return %arg0, %2, %c0_i32_0, %c0_i32_1 : i32, i32, i32, i32
  }
  func.func @transform_2(%arg0: i32, %arg1: i32) -> (i32, i32, i32, i32) {
    %c16_i32 = arith.constant 16 : i32
    %0 = arith.muli %arg1, %c16_i32 : i32
    %c16_i32_0 = arith.constant 16 : i32
    %1 = arith.addi %0, %c16_i32_0 : i32
    %c15_i32 = arith.constant 15 : i32
    %2 = arith.minsi %1, %c15_i32 : i32
    %c0_i32 = arith.constant 0 : i32
    %c0_i32_1 = arith.constant 0 : i32
    %c0_i32_2 = arith.constant 0 : i32
    return %arg0, %2, %c0_i32, %c0_i32_1 : i32, i32, i32, i32
  }
  func.func @transform_3(%arg0: i32, %arg1: i32) -> (i32, i32, i32, i32) {
    %c0_i32 = arith.constant 0 : i32
    %c0_i32_0 = arith.constant 0 : i32
    %c0_i32_1 = arith.constant 0 : i32
    return %arg0, %arg1, %c0_i32, %c0_i32_0 : i32, i32, i32, i32
  }
  func.func @transform_4(%arg0: i32, %arg1: i32) -> (i32, i32, i32, i32) {
    %c16_i32 = arith.constant 16 : i32
    %0 = arith.muli %arg1, %c16_i32 : i32
    %c1_i32 = arith.constant 1 : i32
    %1 = arith.subi %0, %c1_i32 : i32
    %c0_i32 = arith.constant 0 : i32
    %2 = arith.maxsi %1, %c0_i32 : i32
    %c0_i32_0 = arith.constant 0 : i32
    %c0_i32_1 = arith.constant 0 : i32
    %c0_i32_2 = arith.constant 0 : i32
    return %arg0, %2, %c0_i32_0, %c0_i32_1 : i32, i32, i32, i32
  }
  func.func @transform_5(%arg0: i32, %arg1: i32) -> (i32, i32, i32, i32) {
    %c16_i32 = arith.constant 16 : i32
    %0 = arith.muli %arg1, %c16_i32 : i32
    %c16_i32_0 = arith.constant 16 : i32
    %1 = arith.addi %0, %c16_i32_0 : i32
    %c15_i32 = arith.constant 15 : i32
    %2 = arith.minsi %1, %c15_i32 : i32
    %c0_i32 = arith.constant 0 : i32
    %c0_i32_1 = arith.constant 0 : i32
    %c0_i32_2 = arith.constant 0 : i32
    return %arg0, %2, %c0_i32, %c0_i32_1 : i32, i32, i32, i32
  }
  func.func @transform_6(%arg0: i32, %arg1: i32) -> (i32, i32) {
    %c0_i32 = arith.constant 0 : i32
    %c0_i32_0 = arith.constant 0 : i32
    %c0_i32_1 = arith.constant 0 : i32
    return %c0_i32, %c0_i32_0 : i32, i32
  }
  func.func @transform_7(%arg0: i32, %arg1: i32) -> (i32, i32) {
    %c0_i32 = arith.constant 0 : i32
    %c0_i32_0 = arith.constant 0 : i32
    %c0_i32_1 = arith.constant 0 : i32
    return %c0_i32, %c0_i32_0 : i32, i32
  }
  func.func @transform_8(%arg0: i32, %arg1: i32) -> (i32, i32, i32, i32) {
    %c0_i32 = arith.constant 0 : i32
    %c0_i32_0 = arith.constant 0 : i32
    %c0_i32_1 = arith.constant 0 : i32
    return %arg0, %arg1, %c0_i32, %c0_i32_0 : i32, i32, i32, i32
  }
  func.func @transform_9(%arg0: i32, %arg1: i32) -> (i32, i32, i32, i32) {
    %c0_i32 = arith.constant 0 : i32
    %c0_i32_0 = arith.constant 0 : i32
    %c0_i32_1 = arith.constant 0 : i32
    return %arg0, %arg1, %c0_i32, %c0_i32_0 : i32, i32, i32, i32
  }
}

module attributes {stable_mosaic.version = 11 : i64} {
  func.func @_dec_fused_kernel(%arg0: i32, %arg1: i32, %arg2: memref<1x8x8x128xbf16, #tpu.memory_space<vmem>>, %arg3: memref<1x1x8x128xbf16, #tpu.memory_space<vmem>>, %arg4: memref<1x1x8x128xbf16, #tpu.memory_space<vmem>>, %arg5: memref<1x8x8x128xi8, #tpu.memory_space<vmem>>, %arg6: memref<1x1x8x128xi8, #tpu.memory_space<vmem>>, %arg7: memref<1x1x8x128xi8, #tpu.memory_space<vmem>>, %arg8: memref<1x8x8x20xbf16, #tpu.memory_space<vmem>>, %arg9: memref<5x256x128xbf16, #tpu.memory_space<vmem>>, %arg10: memref<1x128xf32, #tpu.memory_space<vmem>>, %arg11: memref<128x8xbf16, #tpu.memory_space<vmem>>, %arg12: memref<5x8xf32, #tpu.memory_space<vmem>>, %arg13: memref<1x8xf32, #tpu.memory_space<vmem>>, %arg14: memref<1x4x8x8x8xf32, #tpu.memory_space<vmem>>) attributes {dimension_semantics = [#tpu.dimension_semantics<parallel>, #tpu.dimension_semantics<parallel>], iteration_bounds = array<i64: 2, 1>, scalar_prefetch = 0 : i64, scratch_operands = 0 : i64, tpu.core_type = #tpu.core_type<tc>, window_params = [{transform_indices = @transform_0, window_bounds = array<i64: 1, 8, 8, 128>}, {transform_indices = @transform_1, window_bounds = array<i64: 1, 1, 8, 128>}, {transform_indices = @transform_2, window_bounds = array<i64: 1, 1, 8, 128>}, {transform_indices = @transform_3, window_bounds = array<i64: 1, 8, 8, 128>}, {transform_indices = @transform_4, window_bounds = array<i64: 1, 1, 8, 128>}, {transform_indices = @transform_5, window_bounds = array<i64: 1, 1, 8, 128>}, {transform_indices = @transform_6, window_bounds = array<i64: 1, 8, 8, 20>}, {pipeline_mode = #tpu.pipeline_mode<synchronous>, transform_indices = @transform_7, window_bounds = array<i64: 5, 256, 128>}, {pipeline_mode = #tpu.pipeline_mode<synchronous>, transform_indices = @transform_8, window_bounds = array<i64: 1, 128>}, {pipeline_mode = #tpu.pipeline_mode<synchronous>, transform_indices = @transform_9, window_bounds = array<i64: 128, 8>}, {pipeline_mode = #tpu.pipeline_mode<synchronous>, transform_indices = @transform_10, window_bounds = array<i64: 5, 8>}, {pipeline_mode = #tpu.pipeline_mode<synchronous>, transform_indices = @transform_11, window_bounds = array<i64: 1, 8>}, {transform_indices = @transform_12, window_bounds = array<i64: 1, 4, 8, 8, 8>}]} {
    %c0_i32 = arith.constant 0 : i32
    %0 = arith.cmpi ne, %arg1, %c0_i32 : i32
    %1 = arith.extui %0 : i1 to i32
    %2 = arith.sitofp %1 : i32 to f32
    %3 = arith.truncf %2 : f32 to bf16
    %c0_i32_0 = arith.constant 0 : i32
    %4 = arith.cmpi ne, %arg1, %c0_i32_0 : i32
    %5 = arith.extui %4 : i1 to i32
    %6 = arith.sitofp %5 : i32 to f32
    %7 = arith.truncf %6 : f32 to bf16
    %c0 = arith.constant 0 : index
    %c0_1 = arith.constant 0 : index
    %c0_2 = arith.constant 0 : index
    %c0_3 = arith.constant 0 : index
    %8 = vector.load %arg3[%c0, %c0_1, %c0_2, %c0_3] : memref<1x1x8x128xbf16, #tpu.memory_space<vmem>>, vector<1x1x8x128xbf16>
    %9 = vector.shape_cast %8 : vector<1x1x8x128xbf16> to vector<1x8x128xbf16>
    %10 = vector.broadcast %3 : bf16 to vector<1x8x128xbf16>
    %11 = arith.mulf %9, %10 : vector<1x8x128xbf16>
    %c0_4 = arith.constant 0 : index
    %c0_5 = arith.constant 0 : index
    %c0_6 = arith.constant 0 : index
    %c0_7 = arith.constant 0 : index
    %12 = vector.load %arg2[%c0_4, %c0_5, %c0_6, %c0_7] : memref<1x8x8x128xbf16, #tpu.memory_space<vmem>>, vector<1x8x8x128xbf16>
    %13 = vector.shape_cast %12 : vector<1x8x8x128xbf16> to vector<8x8x128xbf16>
    %c0_8 = arith.constant 0 : index
    %c0_9 = arith.constant 0 : index
    %c0_10 = arith.constant 0 : index
    %c0_11 = arith.constant 0 : index
    %14 = vector.load %arg4[%c0_8, %c0_9, %c0_10, %c0_11] : memref<1x1x8x128xbf16, #tpu.memory_space<vmem>>, vector<1x1x8x128xbf16>
    %15 = vector.shape_cast %14 : vector<1x1x8x128xbf16> to vector<1x8x128xbf16>
    %16 = vector.broadcast %7 : bf16 to vector<1x8x128xbf16>
    %17 = arith.mulf %15, %16 : vector<1x8x128xbf16>
    %18 = tpu.concatenate %11, %13, %17 in 0 : vector<1x8x128xbf16>, vector<8x8x128xbf16>, vector<1x8x128xbf16> -> vector<10x8x128xbf16>
    %c0_12 = arith.constant 0 : index
    %c0_13 = arith.constant 0 : index
    %c0_14 = arith.constant 0 : index
    %c0_15 = arith.constant 0 : index
    %19 = vector.load %arg6[%c0_12, %c0_13, %c0_14, %c0_15] : memref<1x1x8x128xi8, #tpu.memory_space<vmem>>, vector<1x1x8x128xi8>
    %20 = vector.shape_cast %19 : vector<1x1x8x128xi8> to vector<1x8x128xi8>
    %c0_16 = arith.constant 0 : index
    %c0_17 = arith.constant 0 : index
    %c0_18 = arith.constant 0 : index
    %c0_19 = arith.constant 0 : index
    %21 = vector.load %arg5[%c0_16, %c0_17, %c0_18, %c0_19] : memref<1x8x8x128xi8, #tpu.memory_space<vmem>>, vector<1x8x8x128xi8>
    %22 = vector.shape_cast %21 : vector<1x8x8x128xi8> to vector<8x8x128xi8>
    %c0_20 = arith.constant 0 : index
    %c0_21 = arith.constant 0 : index
    %c0_22 = arith.constant 0 : index
    %c0_23 = arith.constant 0 : index
    %23 = vector.load %arg7[%c0_20, %c0_21, %c0_22, %c0_23] : memref<1x1x8x128xi8, #tpu.memory_space<vmem>>, vector<1x1x8x128xi8>
    %24 = vector.shape_cast %23 : vector<1x1x8x128xi8> to vector<1x8x128xi8>
    %25 = tpu.concatenate %20, %22, %24 in 0 : vector<1x8x128xi8>, vector<8x8x128xi8>, vector<1x8x128xi8> -> vector<10x8x128xi8>
    %26 = arith.extsi %25 : vector<10x8x128xi8> to vector<10x8x128xi32>
    %cst = arith.constant 0.000000e+00 : bf16
    %27 = vector.broadcast %cst : bf16 to vector<10x1x128xbf16>
    %c0_i32_24 = arith.constant 0 : i32
    %28 = vector.broadcast %c0_i32_24 : i32 to vector<10x1x128xi32>
    %29 = tpu.concatenate %27, %18, %27 in 1 : vector<10x1x128xbf16>, vector<10x8x128xbf16>, vector<10x1x128xbf16> -> vector<10x10x128xbf16>
    %30 = tpu.concatenate %28, %26, %28 in 1 : vector<10x1x128xi32>, vector<10x8x128xi32>, vector<10x1x128xi32> -> vector<10x10x128xi32>
    %cst_25 = arith.constant 0.000000e+00 : bf16
    %31 = vector.broadcast %cst_25 : bf16 to vector<10x10x128xbf16>
    %c0_i32_26 = arith.constant 0 : i32
    %32 = vector.broadcast %c0_i32_26 : i32 to vector<10x10x128xi32>
    %33 = arith.cmpi eq, %30, %32 : vector<10x10x128xi32>
    %34 = arith.select %33, %29, %31 : vector<10x10x128xi1>, vector<10x10x128xbf16>
    %c1_i32 = arith.constant 1 : i32
    %35 = vector.broadcast %c1_i32 : i32 to vector<10x10x128xi32>
    %36 = arith.cmpi eq, %30, %35 : vector<10x10x128xi32>
    %37 = arith.select %36, %29, %31 : vector<10x10x128xi1>, vector<10x10x128xbf16>
    %c2_i32 = arith.constant 2 : i32
    %38 = vector.broadcast %c2_i32 : i32 to vector<10x10x128xi32>
    %39 = arith.cmpi eq, %30, %38 : vector<10x10x128xi32>
    %40 = arith.select %39, %29, %31 : vector<10x10x128xi1>, vector<10x10x128xbf16>
    %c3_i32 = arith.constant 3 : i32
    %41 = vector.broadcast %c3_i32 : i32 to vector<10x10x128xi32>
    %42 = arith.cmpi eq, %30, %41 : vector<10x10x128xi32>
    %43 = arith.select %42, %29, %31 : vector<10x10x128xi1>, vector<10x10x128xbf16>
    %c0_27 = arith.constant 0 : index
    %c0_28 = arith.constant 0 : index
    %c0_29 = arith.constant 0 : index
    %44 = vector.load %arg9[%c0_27, %c0_28, %c0_29] : memref<5x256x128xbf16, #tpu.memory_space<vmem>>, vector<5x256x128xbf16>
    %c0_30 = arith.constant 0 : index
    %c0_31 = arith.constant 0 : index
    %45 = vector.load %arg10[%c0_30, %c0_31] : memref<1x128xf32, #tpu.memory_space<vmem>>, vector<1x128xf32>
    %c0_32 = arith.constant 0 : index
    %c0_33 = arith.constant 0 : index
    %46 = vector.load %arg11[%c0_32, %c0_33] : memref<128x8xbf16, #tpu.memory_space<vmem>>, vector<128x8xbf16>
    %c0_34 = arith.constant 0 : index
    %c0_35 = arith.constant 0 : index
    %47 = vector.load %arg12[%c0_34, %c0_35] : memref<5x8xf32, #tpu.memory_space<vmem>>, vector<5x8xf32>
    %c0_36 = arith.constant 0 : index
    %c0_37 = arith.constant 0 : index
    %48 = vector.load %arg13[%c0_36, %c0_37] : memref<1x8xf32, #tpu.memory_space<vmem>>, vector<1x8xf32>
    %c0_38 = arith.constant 0 : index
    %c0_39 = arith.constant 0 : index
    %c0_40 = arith.constant 0 : index
    %c0_41 = arith.constant 0 : index
    %49 = vector.load %arg8[%c0_38, %c0_39, %c0_40, %c0_41] : memref<1x8x8x20xbf16, #tpu.memory_space<vmem>>, vector<1x8x8x20xbf16>
    %50 = vector.shape_cast %49 : vector<1x8x8x20xbf16> to vector<8x8x20xbf16>
    %51 = vector.shape_cast %50 : vector<8x8x20xbf16> to vector<64x20xbf16>
    %52 = arith.extf %51 : vector<64x20xbf16> to vector<64x20xf32>
    %53 = tpu.iota {dimensions = array<i32: 1>} : vector<64x8xi32>
    %cst_42 = arith.constant 0.000000e+00 : f32
    %54 = vector.broadcast %cst_42 : f32 to vector<64x128xf32>
    %55 = vector.extract_strided_slice %43 {offsets = [0, 0, 0], sizes = [8, 8, 128], strides = [1, 1, 1]} : vector<10x10x128xbf16> to vector<8x8x128xbf16>
    %56 = vector.shape_cast %55 : vector<8x8x128xbf16> to vector<64x128xbf16>
    %57 = vector.extract_strided_slice %40 {offsets = [0, 1, 0], sizes = [8, 8, 128], strides = [1, 1, 1]} : vector<10x10x128xbf16> to vector<8x8x128xbf16>
    %58 = vector.shape_cast %57 : vector<8x8x128xbf16> to vector<64x128xbf16>
    %59 = tpu.concatenate %56, %58 in 1 : vector<64x128xbf16>, vector<64x128xbf16> -> vector<64x256xbf16>
    %60 = vector.extract_strided_slice %44 {offsets = [0, 0, 0], sizes = [1, 256, 128], strides = [1, 1, 1]} : vector<5x256x128xbf16> to vector<1x256x128xbf16>
    %61 = vector.shape_cast %60 : vector<1x256x128xbf16> to vector<256x128xbf16>
    %cst_43 = arith.constant dense<0.000000e+00> : vector<64x128xf32>
    %62 = tpu.matmul %59, %61, %cst_43 {dimension_numbers = #tpu.dot_dimension_numbers<[1], [0], [0], [1], [0, 0, 1, 1], [], []>} : vector<64x256xbf16>, vector<256x128xbf16>, vector<64x128xf32> -> vector<64x128xf32>
    %63 = arith.addf %54, %62 : vector<64x128xf32>
    %64 = vector.extract_strided_slice %43 {offsets = [0, 1, 0], sizes = [8, 8, 128], strides = [1, 1, 1]} : vector<10x10x128xbf16> to vector<8x8x128xbf16>
    %65 = vector.shape_cast %64 : vector<8x8x128xbf16> to vector<64x128xbf16>
    %66 = vector.extract_strided_slice %37 {offsets = [1, 0, 0], sizes = [8, 8, 128], strides = [1, 1, 1]} : vector<10x10x128xbf16> to vector<8x8x128xbf16>
    %67 = vector.shape_cast %66 : vector<8x8x128xbf16> to vector<64x128xbf16>
    %68 = tpu.concatenate %65, %67 in 1 : vector<64x128xbf16>, vector<64x128xbf16> -> vector<64x256xbf16>
    %69 = vector.extract_strided_slice %44 {offsets = [1, 0, 0], sizes = [1, 256, 128], strides = [1, 1, 1]} : vector<5x256x128xbf16> to vector<1x256x128xbf16>
    %70 = vector.shape_cast %69 : vector<1x256x128xbf16> to vector<256x128xbf16>
    %cst_44 = arith.constant dense<0.000000e+00> : vector<64x128xf32>
    %71 = tpu.matmul %68, %70, %cst_44 {dimension_numbers = #tpu.dot_dimension_numbers<[1], [0], [0], [1], [0, 0, 1, 1], [], []>} : vector<64x256xbf16>, vector<256x128xbf16>, vector<64x128xf32> -> vector<64x128xf32>
    %72 = arith.addf %63, %71 : vector<64x128xf32>
    %73 = vector.extract_strided_slice %34 {offsets = [1, 1, 0], sizes = [8, 8, 128], strides = [1, 1, 1]} : vector<10x10x128xbf16> to vector<8x8x128xbf16>
    %74 = vector.shape_cast %73 : vector<8x8x128xbf16> to vector<64x128xbf16>
    %75 = vector.extract_strided_slice %37 {offsets = [1, 1, 0], sizes = [8, 8, 128], strides = [1, 1, 1]} : vector<10x10x128xbf16> to vector<8x8x128xbf16>
    %76 = vector.shape_cast %75 : vector<8x8x128xbf16> to vector<64x128xbf16>
    %77 = tpu.concatenate %74, %76 in 1 : vector<64x128xbf16>, vector<64x128xbf16> -> vector<64x256xbf16>
    %78 = vector.extract_strided_slice %44 {offsets = [2, 0, 0], sizes = [1, 256, 128], strides = [1, 1, 1]} : vector<5x256x128xbf16> to vector<1x256x128xbf16>
    %79 = vector.shape_cast %78 : vector<1x256x128xbf16> to vector<256x128xbf16>
    %cst_45 = arith.constant dense<0.000000e+00> : vector<64x128xf32>
    %80 = tpu.matmul %77, %79, %cst_45 {dimension_numbers = #tpu.dot_dimension_numbers<[1], [0], [0], [1], [0, 0, 1, 1], [], []>} : vector<64x256xbf16>, vector<256x128xbf16>, vector<64x128xf32> -> vector<64x128xf32>
    %81 = arith.addf %72, %80 : vector<64x128xf32>
    %82 = vector.extract_strided_slice %43 {offsets = [1, 0, 0], sizes = [8, 8, 128], strides = [1, 1, 1]} : vector<10x10x128xbf16> to vector<8x8x128xbf16>
    %83 = vector.shape_cast %82 : vector<8x8x128xbf16> to vector<64x128xbf16>
    %84 = vector.extract_strided_slice %40 {offsets = [1, 1, 0], sizes = [8, 8, 128], strides = [1, 1, 1]} : vector<10x10x128xbf16> to vector<8x8x128xbf16>
    %85 = vector.shape_cast %84 : vector<8x8x128xbf16> to vector<64x128xbf16>
    %86 = tpu.concatenate %83, %85 in 1 : vector<64x128xbf16>, vector<64x128xbf16> -> vector<64x256xbf16>
    %87 = vector.extract_strided_slice %44 {offsets = [3, 0, 0], sizes = [1, 256, 128], strides = [1, 1, 1]} : vector<5x256x128xbf16> to vector<1x256x128xbf16>
    %88 = vector.shape_cast %87 : vector<1x256x128xbf16> to vector<256x128xbf16>
    %cst_46 = arith.constant dense<0.000000e+00> : vector<64x128xf32>
    %89 = tpu.matmul %86, %88, %cst_46 {dimension_numbers = #tpu.dot_dimension_numbers<[1], [0], [0], [1], [0, 0, 1, 1], [], []>} : vector<64x256xbf16>, vector<256x128xbf16>, vector<64x128xf32> -> vector<64x128xf32>
    %90 = arith.addf %81, %89 : vector<64x128xf32>
    %91 = vector.extract_strided_slice %43 {offsets = [1, 1, 0], sizes = [8, 8, 128], strides = [1, 1, 1]} : vector<10x10x128xbf16> to vector<8x8x128xbf16>
    %92 = vector.shape_cast %91 : vector<8x8x128xbf16> to vector<64x128xbf16>
    %93 = tpu.concatenate %92, %92 in 1 : vector<64x128xbf16>, vector<64x128xbf16> -> vector<64x256xbf16>
    %94 = vector.extract_strided_slice %44 {offsets = [4, 0, 0], sizes = [1, 256, 128], strides = [1, 1, 1]} : vector<5x256x128xbf16> to vector<1x256x128xbf16>
    %95 = vector.shape_cast %94 : vector<1x256x128xbf16> to vector<256x128xbf16>
    %cst_47 = arith.constant dense<0.000000e+00> : vector<64x128xf32>
    %96 = tpu.matmul %93, %95, %cst_47 {dimension_numbers = #tpu.dot_dimension_numbers<[1], [0], [0], [1], [0, 0, 1, 1], [], []>} : vector<64x256xbf16>, vector<256x128xbf16>, vector<64x128xf32> -> vector<64x128xf32>
    %97 = arith.addf %90, %96 : vector<64x128xf32>
    %98 = vector.broadcast %45 : vector<1x128xf32> to vector<64x128xf32>
    %99 = arith.addf %97, %98 : vector<64x128xf32>
    %cst_48 = arith.constant 0.000000e+00 : f32
    %100 = vector.broadcast %cst_48 : f32 to vector<64x128xf32>
    %101 = arith.maximumf %99, %100 : vector<64x128xf32>
    %102 = arith.truncf %101 : vector<64x128xf32> to vector<64x128xbf16>
    %cst_49 = arith.constant dense<0.000000e+00> : vector<64x8xf32>
    %103 = tpu.matmul %102, %46, %cst_49 {dimension_numbers = #tpu.dot_dimension_numbers<[1], [0], [0], [1], [0, 0, 1, 1], [], []>} : vector<64x128xbf16>, vector<128x8xbf16>, vector<64x8xf32> -> vector<64x8xf32>
    %104 = vector.extract_strided_slice %52 {offsets = [0, 0], sizes = [64, 5], strides = [1, 1]} : vector<64x20xf32> to vector<64x5xf32>
    %105 = vector.extract_strided_slice %104 {offsets = [0, 0], sizes = [64, 1], strides = [1, 1]} : vector<64x5xf32> to vector<64x1xf32>
    %106 = vector.extract_strided_slice %47 {offsets = [0, 0], sizes = [1, 8], strides = [1, 1]} : vector<5x8xf32> to vector<1x8xf32>
    %107 = vector.broadcast %105 : vector<64x1xf32> to vector<64x8xf32>
    %108 = vector.broadcast %106 : vector<1x8xf32> to vector<64x8xf32>
    %109 = arith.mulf %107, %108 : vector<64x8xf32>
    %110 = arith.addf %103, %109 : vector<64x8xf32>
    %111 = vector.extract_strided_slice %104 {offsets = [0, 1], sizes = [64, 1], strides = [1, 1]} : vector<64x5xf32> to vector<64x1xf32>
    %112 = vector.extract_strided_slice %47 {offsets = [1, 0], sizes = [1, 8], strides = [1, 1]} : vector<5x8xf32> to vector<1x8xf32>
    %113 = vector.broadcast %111 : vector<64x1xf32> to vector<64x8xf32>
    %114 = vector.broadcast %112 : vector<1x8xf32> to vector<64x8xf32>
    %115 = arith.mulf %113, %114 : vector<64x8xf32>
    %116 = arith.addf %110, %115 : vector<64x8xf32>
    %117 = vector.extract_strided_slice %104 {offsets = [0, 2], sizes = [64, 1], strides = [1, 1]} : vector<64x5xf32> to vector<64x1xf32>
    %118 = vector.extract_strided_slice %47 {offsets = [2, 0], sizes = [1, 8], strides = [1, 1]} : vector<5x8xf32> to vector<1x8xf32>
    %119 = vector.broadcast %117 : vector<64x1xf32> to vector<64x8xf32>
    %120 = vector.broadcast %118 : vector<1x8xf32> to vector<64x8xf32>
    %121 = arith.mulf %119, %120 : vector<64x8xf32>
    %122 = arith.addf %116, %121 : vector<64x8xf32>
    %123 = vector.extract_strided_slice %104 {offsets = [0, 3], sizes = [64, 1], strides = [1, 1]} : vector<64x5xf32> to vector<64x1xf32>
    %124 = vector.extract_strided_slice %47 {offsets = [3, 0], sizes = [1, 8], strides = [1, 1]} : vector<5x8xf32> to vector<1x8xf32>
    %125 = vector.broadcast %123 : vector<64x1xf32> to vector<64x8xf32>
    %126 = vector.broadcast %124 : vector<1x8xf32> to vector<64x8xf32>
    %127 = arith.mulf %125, %126 : vector<64x8xf32>
    %128 = arith.addf %122, %127 : vector<64x8xf32>
    %129 = vector.extract_strided_slice %104 {offsets = [0, 4], sizes = [64, 1], strides = [1, 1]} : vector<64x5xf32> to vector<64x1xf32>
    %130 = vector.extract_strided_slice %47 {offsets = [4, 0], sizes = [1, 8], strides = [1, 1]} : vector<5x8xf32> to vector<1x8xf32>
    %131 = vector.broadcast %129 : vector<64x1xf32> to vector<64x8xf32>
    %132 = vector.broadcast %130 : vector<1x8xf32> to vector<64x8xf32>
    %133 = arith.mulf %131, %132 : vector<64x8xf32>
    %134 = arith.addf %128, %133 : vector<64x8xf32>
    %135 = vector.broadcast %48 : vector<1x8xf32> to vector<64x8xf32>
    %136 = arith.addf %134, %135 : vector<64x8xf32>
    %c1_i32_50 = arith.constant 1 : i32
    %137 = vector.broadcast %c1_i32_50 : i32 to vector<64x8xi32>
    %138 = arith.cmpi slt, %53, %137 : vector<64x8xi32>
    %cst_51 = arith.constant 0.000000e+00 : f32
    %cst_52 = arith.constant 1.000000e+00 : f32
    %139 = vector.broadcast %cst_51 : f32 to vector<64x8xf32>
    %140 = arith.maximumf %139, %136 : vector<64x8xf32>
    %141 = vector.broadcast %cst_52 : f32 to vector<64x8xf32>
    %142 = arith.minimumf %141, %140 : vector<64x8xf32>
    %143 = arith.negf %136 : vector<64x8xf32>
    %144 = math.exp %143 : vector<64x8xf32>
    %cst_53 = arith.constant 1.000000e+00 : f32
    %145 = vector.broadcast %cst_53 : f32 to vector<64x8xf32>
    %146 = arith.addf %145, %144 : vector<64x8xf32>
    %147 = arith.divf %145, %146 : vector<64x8xf32>
    %148 = arith.select %138, %142, %147 : vector<64x8xi1>, vector<64x8xf32>
    %149 = vector.shape_cast %148 : vector<64x8xf32> to vector<8x8x8xf32>
    %c0_54 = arith.constant 0 : index
    %c0_55 = arith.constant 0 : index
    %c0_56 = arith.constant 0 : index
    %c0_57 = arith.constant 0 : index
    %c0_58 = arith.constant 0 : index
    %150 = vector.load %arg14[%c0_54, %c0_55, %c0_56, %c0_57, %c0_58] : memref<1x4x8x8x8xf32, #tpu.memory_space<vmem>>, vector<1x1x8x8x8xf32>
    %151 = vector.shape_cast %150 : vector<1x1x8x8x8xf32> to vector<8x8x8xf32>
    %152 = vector.shape_cast %149 : vector<8x8x8xf32> to vector<1x1x8x8x8xf32>
    tpu.vector_store %arg14[%c0_54, %c0_55, %c0_56, %c0_57, %c0_58], %152 {strides = array<i32>} : memref<1x4x8x8x8xf32, #tpu.memory_space<vmem>>, vector<1x1x8x8x8xf32>,
    %cst_59 = arith.constant 0.000000e+00 : f32
    %153 = vector.broadcast %cst_59 : f32 to vector<64x128xf32>
    %154 = vector.extract_strided_slice %40 {offsets = [0, 1, 0], sizes = [8, 8, 128], strides = [1, 1, 1]} : vector<10x10x128xbf16> to vector<8x8x128xbf16>
    %155 = vector.shape_cast %154 : vector<8x8x128xbf16> to vector<64x128xbf16>
    %156 = vector.extract_strided_slice %43 {offsets = [0, 1, 0], sizes = [8, 8, 128], strides = [1, 1, 1]} : vector<10x10x128xbf16> to vector<8x8x128xbf16>
    %157 = vector.shape_cast %156 : vector<8x8x128xbf16> to vector<64x128xbf16>
    %158 = tpu.concatenate %155, %157 in 1 : vector<64x128xbf16>, vector<64x128xbf16> -> vector<64x256xbf16>
    %159 = vector.extract_strided_slice %44 {offsets = [0, 0, 0], sizes = [1, 256, 128], strides = [1, 1, 1]} : vector<5x256x128xbf16> to vector<1x256x128xbf16>
    %160 = vector.shape_cast %159 : vector<1x256x128xbf16> to vector<256x128xbf16>
    %cst_60 = arith.constant dense<0.000000e+00> : vector<64x128xf32>
    %161 = tpu.matmul %158, %160, %cst_60 {dimension_numbers = #tpu.dot_dimension_numbers<[1], [0], [0], [1], [0, 0, 1, 1], [], []>} : vector<64x256xbf16>, vector<256x128xbf16>, vector<64x128xf32> -> vector<64x128xf32>
    %162 = arith.addf %153, %161 : vector<64x128xf32>
    %163 = vector.extract_strided_slice %40 {offsets = [0, 2, 0], sizes = [8, 8, 128], strides = [1, 1, 1]} : vector<10x10x128xbf16> to vector<8x8x128xbf16>
    %164 = vector.shape_cast %163 : vector<8x8x128xbf16> to vector<64x128xbf16>
    %165 = vector.extract_strided_slice %34 {offsets = [1, 1, 0], sizes = [8, 8, 128], strides = [1, 1, 1]} : vector<10x10x128xbf16> to vector<8x8x128xbf16>
    %166 = vector.shape_cast %165 : vector<8x8x128xbf16> to vector<64x128xbf16>
    %167 = tpu.concatenate %164, %166 in 1 : vector<64x128xbf16>, vector<64x128xbf16> -> vector<64x256xbf16>
    %168 = vector.extract_strided_slice %44 {offsets = [1, 0, 0], sizes = [1, 256, 128], strides = [1, 1, 1]} : vector<5x256x128xbf16> to vector<1x256x128xbf16>
    %169 = vector.shape_cast %168 : vector<1x256x128xbf16> to vector<256x128xbf16>
    %cst_61 = arith.constant dense<0.000000e+00> : vector<64x128xf32>
    %170 = tpu.matmul %167, %169, %cst_61 {dimension_numbers = #tpu.dot_dimension_numbers<[1], [0], [0], [1], [0, 0, 1, 1], [], []>} : vector<64x256xbf16>, vector<256x128xbf16>, vector<64x128xf32> -> vector<64x128xf32>
    %171 = arith.addf %162, %170 : vector<64x128xf32>
    %172 = vector.extract_strided_slice %37 {offsets = [1, 1, 0], sizes = [8, 8, 128], strides = [1, 1, 1]} : vector<10x10x128xbf16> to vector<8x8x128xbf16>
    %173 = vector.shape_cast %172 : vector<8x8x128xbf16> to vector<64x128xbf16>
    %174 = vector.extract_strided_slice %34 {offsets = [1, 2, 0], sizes = [8, 8, 128], strides = [1, 1, 1]} : vector<10x10x128xbf16> to vector<8x8x128xbf16>
    %175 = vector.shape_cast %174 : vector<8x8x128xbf16> to vector<64x128xbf16>
    %176 = tpu.concatenate %173, %175 in 1 : vector<64x128xbf16>, vector<64x128xbf16> -> vector<64x256xbf16>
    %177 = vector.extract_strided_slice %44 {offsets = [2, 0, 0], sizes = [1, 256, 128], strides = [1, 1, 1]} : vector<5x256x128xbf16> to vector<1x256x128xbf16>
    %178 = vector.shape_cast %177 : vector<1x256x128xbf16> to vector<256x128xbf16>
    %cst_62 = arith.constant dense<0.000000e+00> : vector<64x128xf32>
    %179 = tpu.matmul %176, %178, %cst_62 {dimension_numbers = #tpu.dot_dimension_numbers<[1], [0], [0], [1], [0, 0, 1, 1], [], []>} : vector<64x256xbf16>, vector<256x128xbf16>, vector<64x128xf32> -> vector<64x128xf32>
    %180 = arith.addf %171, %179 : vector<64x128xf32>
    %181 = vector.extract_strided_slice %40 {offsets = [1, 1, 0], sizes = [8, 8, 128], strides = [1, 1, 1]} : vector<10x10x128xbf16> to vector<8x8x128xbf16>
    %182 = vector.shape_cast %181 : vector<8x8x128xbf16> to vector<64x128xbf16>
    %183 = vector.extract_strided_slice %43 {offsets = [1, 1, 0], sizes = [8, 8, 128], strides = [1, 1, 1]} : vector<10x10x128xbf16> to vector<8x8x128xbf16>
    %184 = vector.shape_cast %183 : vector<8x8x128xbf16> to vector<64x128xbf16>
    %185 = tpu.concatenate %182, %184 in 1 : vector<64x128xbf16>, vector<64x128xbf16> -> vector<64x256xbf16>
    %186 = vector.extract_strided_slice %44 {offsets = [3, 0, 0], sizes = [1, 256, 128], strides = [1, 1, 1]} : vector<5x256x128xbf16> to vector<1x256x128xbf16>
    %187 = vector.shape_cast %186 : vector<1x256x128xbf16> to vector<256x128xbf16>
    %cst_63 = arith.constant dense<0.000000e+00> : vector<64x128xf32>
    %188 = tpu.matmul %185, %187, %cst_63 {dimension_numbers = #tpu.dot_dimension_numbers<[1], [0], [0], [1], [0, 0, 1, 1], [], []>} : vector<64x256xbf16>, vector<256x128xbf16>, vector<64x128xf32> -> vector<64x128xf32>
    %189 = arith.addf %180, %188 : vector<64x128xf32>
    %190 = vector.extract_strided_slice %40 {offsets = [1, 2, 0], sizes = [8, 8, 128], strides = [1, 1, 1]} : vector<10x10x128xbf16> to vector<8x8x128xbf16>
    %191 = vector.shape_cast %190 : vector<8x8x128xbf16> to vector<64x128xbf16>
    %192 = tpu.concatenate %191, %191 in 1 : vector<64x128xbf16>, vector<64x128xbf16> -> vector<64x256xbf16>
    %193 = vector.extract_strided_slice %44 {offsets = [4, 0, 0], sizes = [1, 256, 128], strides = [1, 1, 1]} : vector<5x256x128xbf16> to vector<1x256x128xbf16>
    %194 = vector.shape_cast %193 : vector<1x256x128xbf16> to vector<256x128xbf16>
    %cst_64 = arith.constant dense<0.000000e+00> : vector<64x128xf32>
    %195 = tpu.matmul %192, %194, %cst_64 {dimension_numbers = #tpu.dot_dimension_numbers<[1], [0], [0], [1], [0, 0, 1, 1], [], []>} : vector<64x256xbf16>, vector<256x128xbf16>, vector<64x128xf32> -> vector<64x128xf32>
    %196 = arith.addf %189, %195 : vector<64x128xf32>
    %197 = vector.broadcast %45 : vector<1x128xf32> to vector<64x128xf32>
    %198 = arith.addf %196, %197 : vector<64x128xf32>
    %cst_65 = arith.constant 0.000000e+00 : f32
    %199 = vector.broadcast %cst_65 : f32 to vector<64x128xf32>
    %200 = arith.maximumf %198, %199 : vector<64x128xf32>
    %201 = arith.truncf %200 : vector<64x128xf32> to vector<64x128xbf16>
    %cst_66 = arith.constant dense<0.000000e+00> : vector<64x8xf32>
    %202 = tpu.matmul %201, %46, %cst_66 {dimension_numbers = #tpu.dot_dimension_numbers<[1], [0], [0], [1], [0, 0, 1, 1], [], []>} : vector<64x128xbf16>, vector<128x8xbf16>, vector<64x8xf32> -> vector<64x8xf32>
    %203 = vector.extract_strided_slice %52 {offsets = [0, 5], sizes = [64, 5], strides = [1, 1]} : vector<64x20xf32> to vector<64x5xf32>
    %204 = vector.extract_strided_slice %203 {offsets = [0, 0], sizes = [64, 1], strides = [1, 1]} : vector<64x5xf32> to vector<64x1xf32>
    %205 = vector.extract_strided_slice %47 {offsets = [0, 0], sizes = [1, 8], strides = [1, 1]} : vector<5x8xf32> to vector<1x8xf32>
    %206 = vector.broadcast %204 : vector<64x1xf32> to vector<64x8xf32>
    %207 = vector.broadcast %205 : vector<1x8xf32> to vector<64x8xf32>
    %208 = arith.mulf %206, %207 : vector<64x8xf32>
    %209 = arith.addf %202, %208 : vector<64x8xf32>
    %210 = vector.extract_strided_slice %203 {offsets = [0, 1], sizes = [64, 1], strides = [1, 1]} : vector<64x5xf32> to vector<64x1xf32>
    %211 = vector.extract_strided_slice %47 {offsets = [1, 0], sizes = [1, 8], strides = [1, 1]} : vector<5x8xf32> to vector<1x8xf32>
    %212 = vector.broadcast %210 : vector<64x1xf32> to vector<64x8xf32>
    %213 = vector.broadcast %211 : vector<1x8xf32> to vector<64x8xf32>
    %214 = arith.mulf %212, %213 : vector<64x8xf32>
    %215 = arith.addf %209, %214 : vector<64x8xf32>
    %216 = vector.extract_strided_slice %203 {offsets = [0, 2], sizes = [64, 1], strides = [1, 1]} : vector<64x5xf32> to vector<64x1xf32>
    %217 = vector.extract_strided_slice %47 {offsets = [2, 0], sizes = [1, 8], strides = [1, 1]} : vector<5x8xf32> to vector<1x8xf32>
    %218 = vector.broadcast %216 : vector<64x1xf32> to vector<64x8xf32>
    %219 = vector.broadcast %217 : vector<1x8xf32> to vector<64x8xf32>
    %220 = arith.mulf %218, %219 : vector<64x8xf32>
    %221 = arith.addf %215, %220 : vector<64x8xf32>
    %222 = vector.extract_strided_slice %203 {offsets = [0, 3], sizes = [64, 1], strides = [1, 1]} : vector<64x5xf32> to vector<64x1xf32>
    %223 = vector.extract_strided_slice %47 {offsets = [3, 0], sizes = [1, 8], strides = [1, 1]} : vector<5x8xf32> to vector<1x8xf32>
    %224 = vector.broadcast %222 : vector<64x1xf32> to vector<64x8xf32>
    %225 = vector.broadcast %223 : vector<1x8xf32> to vector<64x8xf32>
    %226 = arith.mulf %224, %225 : vector<64x8xf32>
    %227 = arith.addf %221, %226 : vector<64x8xf32>
    %228 = vector.extract_strided_slice %203 {offsets = [0, 4], sizes = [64, 1], strides = [1, 1]} : vector<64x5xf32> to vector<64x1xf32>
    %229 = vector.extract_strided_slice %47 {offsets = [4, 0], sizes = [1, 8], strides = [1, 1]} : vector<5x8xf32> to vector<1x8xf32>
    %230 = vector.broadcast %228 : vector<64x1xf32> to vector<64x8xf32>
    %231 = vector.broadcast %229 : vector<1x8xf32> to vector<64x8xf32>
    %232 = arith.mulf %230, %231 : vector<64x8xf32>
    %233 = arith.addf %227, %232 : vector<64x8xf32>
    %234 = vector.broadcast %48 : vector<1x8xf32> to vector<64x8xf32>
    %235 = arith.addf %233, %234 : vector<64x8xf32>
    %c1_i32_67 = arith.constant 1 : i32
    %236 = vector.broadcast %c1_i32_67 : i32 to vector<64x8xi32>
    %237 = arith.cmpi slt, %53, %236 : vector<64x8xi32>
    %cst_68 = arith.constant 0.000000e+00 : f32
    %cst_69 = arith.constant 1.000000e+00 : f32
    %238 = vector.broadcast %cst_68 : f32 to vector<64x8xf32>
    %239 = arith.maximumf %238, %235 : vector<64x8xf32>
    %240 = vector.broadcast %cst_69 : f32 to vector<64x8xf32>
    %241 = arith.minimumf %240, %239 : vector<64x8xf32>
    %242 = arith.negf %235 : vector<64x8xf32>
    %243 = math.exp %242 : vector<64x8xf32>
    %cst_70 = arith.constant 1.000000e+00 : f32
    %244 = vector.broadcast %cst_70 : f32 to vector<64x8xf32>
    %245 = arith.addf %244, %243 : vector<64x8xf32>
    %246 = arith.divf %244, %245 : vector<64x8xf32>
    %247 = arith.select %237, %241, %246 : vector<64x8xi1>, vector<64x8xf32>
    %248 = vector.shape_cast %247 : vector<64x8xf32> to vector<8x8x8xf32>
    %c0_71 = arith.constant 0 : index
    %c1 = arith.constant 1 : index
    %c0_72 = arith.constant 0 : index
    %c0_73 = arith.constant 0 : index
    %c0_74 = arith.constant 0 : index
    %249 = vector.load %arg14[%c0_71, %c1, %c0_72, %c0_73, %c0_74] : memref<1x4x8x8x8xf32, #tpu.memory_space<vmem>>, vector<1x1x8x8x8xf32>
    %250 = vector.shape_cast %249 : vector<1x1x8x8x8xf32> to vector<8x8x8xf32>
    %251 = vector.shape_cast %248 : vector<8x8x8xf32> to vector<1x1x8x8x8xf32>
    tpu.vector_store %arg14[%c0_71, %c1, %c0_72, %c0_73, %c0_74], %251 {strides = array<i32>} : memref<1x4x8x8x8xf32, #tpu.memory_space<vmem>>, vector<1x1x8x8x8xf32>,
    %cst_75 = arith.constant 0.000000e+00 : f32
    %252 = vector.broadcast %cst_75 : f32 to vector<64x128xf32>
    %253 = vector.extract_strided_slice %37 {offsets = [1, 0, 0], sizes = [8, 8, 128], strides = [1, 1, 1]} : vector<10x10x128xbf16> to vector<8x8x128xbf16>
    %254 = vector.shape_cast %253 : vector<8x8x128xbf16> to vector<64x128xbf16>
    %255 = vector.extract_strided_slice %34 {offsets = [1, 1, 0], sizes = [8, 8, 128], strides = [1, 1, 1]} : vector<10x10x128xbf16> to vector<8x8x128xbf16>
    %256 = vector.shape_cast %255 : vector<8x8x128xbf16> to vector<64x128xbf16>
    %257 = tpu.concatenate %254, %256 in 1 : vector<64x128xbf16>, vector<64x128xbf16> -> vector<64x256xbf16>
    %258 = vector.extract_strided_slice %44 {offsets = [0, 0, 0], sizes = [1, 256, 128], strides = [1, 1, 1]} : vector<5x256x128xbf16> to vector<1x256x128xbf16>
    %259 = vector.shape_cast %258 : vector<1x256x128xbf16> to vector<256x128xbf16>
    %cst_76 = arith.constant dense<0.000000e+00> : vector<64x128xf32>
    %260 = tpu.matmul %257, %259, %cst_76 {dimension_numbers = #tpu.dot_dimension_numbers<[1], [0], [0], [1], [0, 0, 1, 1], [], []>} : vector<64x256xbf16>, vector<256x128xbf16>, vector<64x128xf32> -> vector<64x128xf32>
    %261 = arith.addf %252, %260 : vector<64x128xf32>
    %262 = vector.extract_strided_slice %37 {offsets = [1, 1, 0], sizes = [8, 8, 128], strides = [1, 1, 1]} : vector<10x10x128xbf16> to vector<8x8x128xbf16>
    %263 = vector.shape_cast %262 : vector<8x8x128xbf16> to vector<64x128xbf16>
    %264 = vector.extract_strided_slice %43 {offsets = [1, 0, 0], sizes = [8, 8, 128], strides = [1, 1, 1]} : vector<10x10x128xbf16> to vector<8x8x128xbf16>
    %265 = vector.shape_cast %264 : vector<8x8x128xbf16> to vector<64x128xbf16>
    %266 = tpu.concatenate %263, %265 in 1 : vector<64x128xbf16>, vector<64x128xbf16> -> vector<64x256xbf16>
    %267 = vector.extract_strided_slice %44 {offsets = [1, 0, 0], sizes = [1, 256, 128], strides = [1, 1, 1]} : vector<5x256x128xbf16> to vector<1x256x128xbf16>
    %268 = vector.shape_cast %267 : vector<1x256x128xbf16> to vector<256x128xbf16>
    %cst_77 = arith.constant dense<0.000000e+00> : vector<64x128xf32>
    %269 = tpu.matmul %266, %268, %cst_77 {dimension_numbers = #tpu.dot_dimension_numbers<[1], [0], [0], [1], [0, 0, 1, 1], [], []>} : vector<64x256xbf16>, vector<256x128xbf16>, vector<64x128xf32> -> vector<64x128xf32>
    %270 = arith.addf %261, %269 : vector<64x128xf32>
    %271 = vector.extract_strided_slice %40 {offsets = [1, 1, 0], sizes = [8, 8, 128], strides = [1, 1, 1]} : vector<10x10x128xbf16> to vector<8x8x128xbf16>
    %272 = vector.shape_cast %271 : vector<8x8x128xbf16> to vector<64x128xbf16>
    %273 = vector.extract_strided_slice %43 {offsets = [1, 1, 0], sizes = [8, 8, 128], strides = [1, 1, 1]} : vector<10x10x128xbf16> to vector<8x8x128xbf16>
    %274 = vector.shape_cast %273 : vector<8x8x128xbf16> to vector<64x128xbf16>
    %275 = tpu.concatenate %272, %274 in 1 : vector<64x128xbf16>, vector<64x128xbf16> -> vector<64x256xbf16>
    %276 = vector.extract_strided_slice %44 {offsets = [2, 0, 0], sizes = [1, 256, 128], strides = [1, 1, 1]} : vector<5x256x128xbf16> to vector<1x256x128xbf16>
    %277 = vector.shape_cast %276 : vector<1x256x128xbf16> to vector<256x128xbf16>
    %cst_78 = arith.constant dense<0.000000e+00> : vector<64x128xf32>
    %278 = tpu.matmul %275, %277, %cst_78 {dimension_numbers = #tpu.dot_dimension_numbers<[1], [0], [0], [1], [0, 0, 1, 1], [], []>} : vector<64x256xbf16>, vector<256x128xbf16>, vector<64x128xf32> -> vector<64x128xf32>
    %279 = arith.addf %270, %278 : vector<64x128xf32>
    %280 = vector.extract_strided_slice %37 {offsets = [2, 0, 0], sizes = [8, 8, 128], strides = [1, 1, 1]} : vector<10x10x128xbf16> to vector<8x8x128xbf16>
    %281 = vector.shape_cast %280 : vector<8x8x128xbf16> to vector<64x128xbf16>
    %282 = vector.extract_strided_slice %34 {offsets = [2, 1, 0], sizes = [8, 8, 128], strides = [1, 1, 1]} : vector<10x10x128xbf16> to vector<8x8x128xbf16>
    %283 = vector.shape_cast %282 : vector<8x8x128xbf16> to vector<64x128xbf16>
    %284 = tpu.concatenate %281, %283 in 1 : vector<64x128xbf16>, vector<64x128xbf16> -> vector<64x256xbf16>
    %285 = vector.extract_strided_slice %44 {offsets = [3, 0, 0], sizes = [1, 256, 128], strides = [1, 1, 1]} : vector<5x256x128xbf16> to vector<1x256x128xbf16>
    %286 = vector.shape_cast %285 : vector<1x256x128xbf16> to vector<256x128xbf16>
    %cst_79 = arith.constant dense<0.000000e+00> : vector<64x128xf32>
    %287 = tpu.matmul %284, %286, %cst_79 {dimension_numbers = #tpu.dot_dimension_numbers<[1], [0], [0], [1], [0, 0, 1, 1], [], []>} : vector<64x256xbf16>, vector<256x128xbf16>, vector<64x128xf32> -> vector<64x128xf32>
    %288 = arith.addf %279, %287 : vector<64x128xf32>
    %289 = vector.extract_strided_slice %37 {offsets = [2, 1, 0], sizes = [8, 8, 128], strides = [1, 1, 1]} : vector<10x10x128xbf16> to vector<8x8x128xbf16>
    %290 = vector.shape_cast %289 : vector<8x8x128xbf16> to vector<64x128xbf16>
    %291 = tpu.concatenate %290, %290 in 1 : vector<64x128xbf16>, vector<64x128xbf16> -> vector<64x256xbf16>
    %292 = vector.extract_strided_slice %44 {offsets = [4, 0, 0], sizes = [1, 256, 128], strides = [1, 1, 1]} : vector<5x256x128xbf16> to vector<1x256x128xbf16>
    %293 = vector.shape_cast %292 : vector<1x256x128xbf16> to vector<256x128xbf16>
    %cst_80 = arith.constant dense<0.000000e+00> : vector<64x128xf32>
    %294 = tpu.matmul %291, %293, %cst_80 {dimension_numbers = #tpu.dot_dimension_numbers<[1], [0], [0], [1], [0, 0, 1, 1], [], []>} : vector<64x256xbf16>, vector<256x128xbf16>, vector<64x128xf32> -> vector<64x128xf32>
    %295 = arith.addf %288, %294 : vector<64x128xf32>
    %296 = vector.broadcast %45 : vector<1x128xf32> to vector<64x128xf32>
    %297 = arith.addf %295, %296 : vector<64x128xf32>
    %cst_81 = arith.constant 0.000000e+00 : f32
    %298 = vector.broadcast %cst_81 : f32 to vector<64x128xf32>
    %299 = arith.maximumf %297, %298 : vector<64x128xf32>
    %300 = arith.truncf %299 : vector<64x128xf32> to vector<64x128xbf16>
    %cst_82 = arith.constant dense<0.000000e+00> : vector<64x8xf32>
    %301 = tpu.matmul %300, %46, %cst_82 {dimension_numbers = #tpu.dot_dimension_numbers<[1], [0], [0], [1], [0, 0, 1, 1], [], []>} : vector<64x128xbf16>, vector<128x8xbf16>, vector<64x8xf32> -> vector<64x8xf32>
    %302 = vector.extract_strided_slice %52 {offsets = [0, 10], sizes = [64, 5], strides = [1, 1]} : vector<64x20xf32> to vector<64x5xf32>
    %303 = vector.extract_strided_slice %302 {offsets = [0, 0], sizes = [64, 1], strides = [1, 1]} : vector<64x5xf32> to vector<64x1xf32>
    %304 = vector.extract_strided_slice %47 {offsets = [0, 0], sizes = [1, 8], strides = [1, 1]} : vector<5x8xf32> to vector<1x8xf32>
    %305 = vector.broadcast %303 : vector<64x1xf32> to vector<64x8xf32>
    %306 = vector.broadcast %304 : vector<1x8xf32> to vector<64x8xf32>
    %307 = arith.mulf %305, %306 : vector<64x8xf32>
    %308 = arith.addf %301, %307 : vector<64x8xf32>
    %309 = vector.extract_strided_slice %302 {offsets = [0, 1], sizes = [64, 1], strides = [1, 1]} : vector<64x5xf32> to vector<64x1xf32>
    %310 = vector.extract_strided_slice %47 {offsets = [1, 0], sizes = [1, 8], strides = [1, 1]} : vector<5x8xf32> to vector<1x8xf32>
    %311 = vector.broadcast %309 : vector<64x1xf32> to vector<64x8xf32>
    %312 = vector.broadcast %310 : vector<1x8xf32> to vector<64x8xf32>
    %313 = arith.mulf %311, %312 : vector<64x8xf32>
    %314 = arith.addf %308, %313 : vector<64x8xf32>
    %315 = vector.extract_strided_slice %302 {offsets = [0, 2], sizes = [64, 1], strides = [1, 1]} : vector<64x5xf32> to vector<64x1xf32>
    %316 = vector.extract_strided_slice %47 {offsets = [2, 0], sizes = [1, 8], strides = [1, 1]} : vector<5x8xf32> to vector<1x8xf32>
    %317 = vector.broadcast %315 : vector<64x1xf32> to vector<64x8xf32>
    %318 = vector.broadcast %316 : vector<1x8xf32> to vector<64x8xf32>
    %319 = arith.mulf %317, %318 : vector<64x8xf32>
    %320 = arith.addf %314, %319 : vector<64x8xf32>
    %321 = vector.extract_strided_slice %302 {offsets = [0, 3], sizes = [64, 1], strides = [1, 1]} : vector<64x5xf32> to vector<64x1xf32>
    %322 = vector.extract_strided_slice %47 {offsets = [3, 0], sizes = [1, 8], strides = [1, 1]} : vector<5x8xf32> to vector<1x8xf32>
    %323 = vector.broadcast %321 : vector<64x1xf32> to vector<64x8xf32>
    %324 = vector.broadcast %322 : vector<1x8xf32> to vector<64x8xf32>
    %325 = arith.mulf %323, %324 : vector<64x8xf32>
    %326 = arith.addf %320, %325 : vector<64x8xf32>
    %327 = vector.extract_strided_slice %302 {offsets = [0, 4], sizes = [64, 1], strides = [1, 1]} : vector<64x5xf32> to vector<64x1xf32>
    %328 = vector.extract_strided_slice %47 {offsets = [4, 0], sizes = [1, 8], strides = [1, 1]} : vector<5x8xf32> to vector<1x8xf32>
    %329 = vector.broadcast %327 : vector<64x1xf32> to vector<64x8xf32>
    %330 = vector.broadcast %328 : vector<1x8xf32> to vector<64x8xf32>
    %331 = arith.mulf %329, %330 : vector<64x8xf32>
    %332 = arith.addf %326, %331 : vector<64x8xf32>
    %333 = vector.broadcast %48 : vector<1x8xf32> to vector<64x8xf32>
    %334 = arith.addf %332, %333 : vector<64x8xf32>
    %c1_i32_83 = arith.constant 1 : i32
    %335 = vector.broadcast %c1_i32_83 : i32 to vector<64x8xi32>
    %336 = arith.cmpi slt, %53, %335 : vector<64x8xi32>
    %cst_84 = arith.constant 0.000000e+00 : f32
    %cst_85 = arith.constant 1.000000e+00 : f32
    %337 = vector.broadcast %cst_84 : f32 to vector<64x8xf32>
    %338 = arith.maximumf %337, %334 : vector<64x8xf32>
    %339 = vector.broadcast %cst_85 : f32 to vector<64x8xf32>
    %340 = arith.minimumf %339, %338 : vector<64x8xf32>
    %341 = arith.negf %334 : vector<64x8xf32>
    %342 = math.exp %341 : vector<64x8xf32>
    %cst_86 = arith.constant 1.000000e+00 : f32
    %343 = vector.broadcast %cst_86 : f32 to vector<64x8xf32>
    %344 = arith.addf %343, %342 : vector<64x8xf32>
    %345 = arith.divf %343, %344 : vector<64x8xf32>
    %346 = arith.select %336, %340, %345 : vector<64x8xi1>, vector<64x8xf32>
    %347 = vector.shape_cast %346 : vector<64x8xf32> to vector<8x8x8xf32>
    %c0_87 = arith.constant 0 : index
    %c2 = arith.constant 2 : index
    %c0_88 = arith.constant 0 : index
    %c0_89 = arith.constant 0 : index
    %c0_90 = arith.constant 0 : index
    %348 = vector.load %arg14[%c0_87, %c2, %c0_88, %c0_89, %c0_90] : memref<1x4x8x8x8xf32, #tpu.memory_space<vmem>>, vector<1x1x8x8x8xf32>
    %349 = vector.shape_cast %348 : vector<1x1x8x8x8xf32> to vector<8x8x8xf32>
    %350 = vector.shape_cast %347 : vector<8x8x8xf32> to vector<1x1x8x8x8xf32>
    tpu.vector_store %arg14[%c0_87, %c2, %c0_88, %c0_89, %c0_90], %350 {strides = array<i32>} : memref<1x4x8x8x8xf32, #tpu.memory_space<vmem>>, vector<1x1x8x8x8xf32>,
    %cst_91 = arith.constant 0.000000e+00 : f32
    %351 = vector.broadcast %cst_91 : f32 to vector<64x128xf32>
    %352 = vector.extract_strided_slice %34 {offsets = [1, 1, 0], sizes = [8, 8, 128], strides = [1, 1, 1]} : vector<10x10x128xbf16> to vector<8x8x128xbf16>
    %353 = vector.shape_cast %352 : vector<8x8x128xbf16> to vector<64x128xbf16>
    %354 = vector.extract_strided_slice %37 {offsets = [1, 1, 0], sizes = [8, 8, 128], strides = [1, 1, 1]} : vector<10x10x128xbf16> to vector<8x8x128xbf16>
    %355 = vector.shape_cast %354 : vector<8x8x128xbf16> to vector<64x128xbf16>
    %356 = tpu.concatenate %353, %355 in 1 : vector<64x128xbf16>, vector<64x128xbf16> -> vector<64x256xbf16>
    %357 = vector.extract_strided_slice %44 {offsets = [0, 0, 0], sizes = [1, 256, 128], strides = [1, 1, 1]} : vector<5x256x128xbf16> to vector<1x256x128xbf16>
    %358 = vector.shape_cast %357 : vector<1x256x128xbf16> to vector<256x128xbf16>
    %cst_92 = arith.constant dense<0.000000e+00> : vector<64x128xf32>
    %359 = tpu.matmul %356, %358, %cst_92 {dimension_numbers = #tpu.dot_dimension_numbers<[1], [0], [0], [1], [0, 0, 1, 1], [], []>} : vector<64x256xbf16>, vector<256x128xbf16>, vector<64x128xf32> -> vector<64x128xf32>
    %360 = arith.addf %351, %359 : vector<64x128xf32>
    %361 = vector.extract_strided_slice %34 {offsets = [1, 2, 0], sizes = [8, 8, 128], strides = [1, 1, 1]} : vector<10x10x128xbf16> to vector<8x8x128xbf16>
    %362 = vector.shape_cast %361 : vector<8x8x128xbf16> to vector<64x128xbf16>
    %363 = vector.extract_strided_slice %40 {offsets = [1, 1, 0], sizes = [8, 8, 128], strides = [1, 1, 1]} : vector<10x10x128xbf16> to vector<8x8x128xbf16>
    %364 = vector.shape_cast %363 : vector<8x8x128xbf16> to vector<64x128xbf16>
    %365 = tpu.concatenate %362, %364 in 1 : vector<64x128xbf16>, vector<64x128xbf16> -> vector<64x256xbf16>
    %366 = vector.extract_strided_slice %44 {offsets = [1, 0, 0], sizes = [1, 256, 128], strides = [1, 1, 1]} : vector<5x256x128xbf16> to vector<1x256x128xbf16>
    %367 = vector.shape_cast %366 : vector<1x256x128xbf16> to vector<256x128xbf16>
    %cst_93 = arith.constant dense<0.000000e+00> : vector<64x128xf32>
    %368 = tpu.matmul %365, %367, %cst_93 {dimension_numbers = #tpu.dot_dimension_numbers<[1], [0], [0], [1], [0, 0, 1, 1], [], []>} : vector<64x256xbf16>, vector<256x128xbf16>, vector<64x128xf32> -> vector<64x128xf32>
    %369 = arith.addf %360, %368 : vector<64x128xf32>
    %370 = vector.extract_strided_slice %43 {offsets = [1, 1, 0], sizes = [8, 8, 128], strides = [1, 1, 1]} : vector<10x10x128xbf16> to vector<8x8x128xbf16>
    %371 = vector.shape_cast %370 : vector<8x8x128xbf16> to vector<64x128xbf16>
    %372 = vector.extract_strided_slice %40 {offsets = [1, 2, 0], sizes = [8, 8, 128], strides = [1, 1, 1]} : vector<10x10x128xbf16> to vector<8x8x128xbf16>
    %373 = vector.shape_cast %372 : vector<8x8x128xbf16> to vector<64x128xbf16>
    %374 = tpu.concatenate %371, %373 in 1 : vector<64x128xbf16>, vector<64x128xbf16> -> vector<64x256xbf16>
    %375 = vector.extract_strided_slice %44 {offsets = [2, 0, 0], sizes = [1, 256, 128], strides = [1, 1, 1]} : vector<5x256x128xbf16> to vector<1x256x128xbf16>
    %376 = vector.shape_cast %375 : vector<1x256x128xbf16> to vector<256x128xbf16>
    %cst_94 = arith.constant dense<0.000000e+00> : vector<64x128xf32>
    %377 = tpu.matmul %374, %376, %cst_94 {dimension_numbers = #tpu.dot_dimension_numbers<[1], [0], [0], [1], [0, 0, 1, 1], [], []>} : vector<64x256xbf16>, vector<256x128xbf16>, vector<64x128xf32> -> vector<64x128xf32>
    %378 = arith.addf %369, %377 : vector<64x128xf32>
    %379 = vector.extract_strided_slice %34 {offsets = [2, 1, 0], sizes = [8, 8, 128], strides = [1, 1, 1]} : vector<10x10x128xbf16> to vector<8x8x128xbf16>
    %380 = vector.shape_cast %379 : vector<8x8x128xbf16> to vector<64x128xbf16>
    %381 = vector.extract_strided_slice %37 {offsets = [2, 1, 0], sizes = [8, 8, 128], strides = [1, 1, 1]} : vector<10x10x128xbf16> to vector<8x8x128xbf16>
    %382 = vector.shape_cast %381 : vector<8x8x128xbf16> to vector<64x128xbf16>
    %383 = tpu.concatenate %380, %382 in 1 : vector<64x128xbf16>, vector<64x128xbf16> -> vector<64x256xbf16>
    %384 = vector.extract_strided_slice %44 {offsets = [3, 0, 0], sizes = [1, 256, 128], strides = [1, 1, 1]} : vector<5x256x128xbf16> to vector<1x256x128xbf16>
    %385 = vector.shape_cast %384 : vector<1x256x128xbf16> to vector<256x128xbf16>
    %cst_95 = arith.constant dense<0.000000e+00> : vector<64x128xf32>
    %386 = tpu.matmul %383, %385, %cst_95 {dimension_numbers = #tpu.dot_dimension_numbers<[1], [0], [0], [1], [0, 0, 1, 1], [], []>} : vector<64x256xbf16>, vector<256x128xbf16>, vector<64x128xf32> -> vector<64x128xf32>
    %387 = arith.addf %378, %386 : vector<64x128xf32>
    %388 = vector.extract_strided_slice %34 {offsets = [2, 2, 0], sizes = [8, 8, 128], strides = [1, 1, 1]} : vector<10x10x128xbf16> to vector<8x8x128xbf16>
    %389 = vector.shape_cast %388 : vector<8x8x128xbf16> to vector<64x128xbf16>
    %390 = tpu.concatenate %389, %389 in 1 : vector<64x128xbf16>, vector<64x128xbf16> -> vector<64x256xbf16>
    %391 = vector.extract_strided_slice %44 {offsets = [4, 0, 0], sizes = [1, 256, 128], strides = [1, 1, 1]} : vector<5x256x128xbf16> to vector<1x256x128xbf16>
    %392 = vector.shape_cast %391 : vector<1x256x128xbf16> to vector<256x128xbf16>
    %cst_96 = arith.constant dense<0.000000e+00> : vector<64x128xf32>
    %393 = tpu.matmul %390, %392, %cst_96 {dimension_numbers = #tpu.dot_dimension_numbers<[1], [0], [0], [1], [0, 0, 1, 1], [], []>} : vector<64x256xbf16>, vector<256x128xbf16>, vector<64x128xf32> -> vector<64x128xf32>
    %394 = arith.addf %387, %393 : vector<64x128xf32>
    %395 = vector.broadcast %45 : vector<1x128xf32> to vector<64x128xf32>
    %396 = arith.addf %394, %395 : vector<64x128xf32>
    %cst_97 = arith.constant 0.000000e+00 : f32
    %397 = vector.broadcast %cst_97 : f32 to vector<64x128xf32>
    %398 = arith.maximumf %396, %397 : vector<64x128xf32>
    %399 = arith.truncf %398 : vector<64x128xf32> to vector<64x128xbf16>
    %cst_98 = arith.constant dense<0.000000e+00> : vector<64x8xf32>
    %400 = tpu.matmul %399, %46, %cst_98 {dimension_numbers = #tpu.dot_dimension_numbers<[1], [0], [0], [1], [0, 0, 1, 1], [], []>} : vector<64x128xbf16>, vector<128x8xbf16>, vector<64x8xf32> -> vector<64x8xf32>
    %401 = vector.extract_strided_slice %52 {offsets = [0, 15], sizes = [64, 5], strides = [1, 1]} : vector<64x20xf32> to vector<64x5xf32>
    %402 = vector.extract_strided_slice %401 {offsets = [0, 0], sizes = [64, 1], strides = [1, 1]} : vector<64x5xf32> to vector<64x1xf32>
    %403 = vector.extract_strided_slice %47 {offsets = [0, 0], sizes = [1, 8], strides = [1, 1]} : vector<5x8xf32> to vector<1x8xf32>
    %404 = vector.broadcast %402 : vector<64x1xf32> to vector<64x8xf32>
    %405 = vector.broadcast %403 : vector<1x8xf32> to vector<64x8xf32>
    %406 = arith.mulf %404, %405 : vector<64x8xf32>
    %407 = arith.addf %400, %406 : vector<64x8xf32>
    %408 = vector.extract_strided_slice %401 {offsets = [0, 1], sizes = [64, 1], strides = [1, 1]} : vector<64x5xf32> to vector<64x1xf32>
    %409 = vector.extract_strided_slice %47 {offsets = [1, 0], sizes = [1, 8], strides = [1, 1]} : vector<5x8xf32> to vector<1x8xf32>
    %410 = vector.broadcast %408 : vector<64x1xf32> to vector<64x8xf32>
    %411 = vector.broadcast %409 : vector<1x8xf32> to vector<64x8xf32>
    %412 = arith.mulf %410, %411 : vector<64x8xf32>
    %413 = arith.addf %407, %412 : vector<64x8xf32>
    %414 = vector.extract_strided_slice %401 {offsets = [0, 2], sizes = [64, 1], strides = [1, 1]} : vector<64x5xf32> to vector<64x1xf32>
    %415 = vector.extract_strided_slice %47 {offsets = [2, 0], sizes = [1, 8], strides = [1, 1]} : vector<5x8xf32> to vector<1x8xf32>
    %416 = vector.broadcast %414 : vector<64x1xf32> to vector<64x8xf32>
    %417 = vector.broadcast %415 : vector<1x8xf32> to vector<64x8xf32>
    %418 = arith.mulf %416, %417 : vector<64x8xf32>
    %419 = arith.addf %413, %418 : vector<64x8xf32>
    %420 = vector.extract_strided_slice %401 {offsets = [0, 3], sizes = [64, 1], strides = [1, 1]} : vector<64x5xf32> to vector<64x1xf32>
    %421 = vector.extract_strided_slice %47 {offsets = [3, 0], sizes = [1, 8], strides = [1, 1]} : vector<5x8xf32> to vector<1x8xf32>
    %422 = vector.broadcast %420 : vector<64x1xf32> to vector<64x8xf32>
    %423 = vector.broadcast %421 : vector<1x8xf32> to vector<64x8xf32>
    %424 = arith.mulf %422, %423 : vector<64x8xf32>
    %425 = arith.addf %419, %424 : vector<64x8xf32>
    %426 = vector.extract_strided_slice %401 {offsets = [0, 4], sizes = [64, 1], strides = [1, 1]} : vector<64x5xf32> to vector<64x1xf32>
    %427 = vector.extract_strided_slice %47 {offsets = [4, 0], sizes = [1, 8], strides = [1, 1]} : vector<5x8xf32> to vector<1x8xf32>
    %428 = vector.broadcast %426 : vector<64x1xf32> to vector<64x8xf32>
    %429 = vector.broadcast %427 : vector<1x8xf32> to vector<64x8xf32>
    %430 = arith.mulf %428, %429 : vector<64x8xf32>
    %431 = arith.addf %425, %430 : vector<64x8xf32>
    %432 = vector.broadcast %48 : vector<1x8xf32> to vector<64x8xf32>
    %433 = arith.addf %431, %432 : vector<64x8xf32>
    %c1_i32_99 = arith.constant 1 : i32
    %434 = vector.broadcast %c1_i32_99 : i32 to vector<64x8xi32>
    %435 = arith.cmpi slt, %53, %434 : vector<64x8xi32>
    %cst_100 = arith.constant 0.000000e+00 : f32
    %cst_101 = arith.constant 1.000000e+00 : f32
    %436 = vector.broadcast %cst_100 : f32 to vector<64x8xf32>
    %437 = arith.maximumf %436, %433 : vector<64x8xf32>
    %438 = vector.broadcast %cst_101 : f32 to vector<64x8xf32>
    %439 = arith.minimumf %438, %437 : vector<64x8xf32>
    %440 = arith.negf %433 : vector<64x8xf32>
    %441 = math.exp %440 : vector<64x8xf32>
    %cst_102 = arith.constant 1.000000e+00 : f32
    %442 = vector.broadcast %cst_102 : f32 to vector<64x8xf32>
    %443 = arith.addf %442, %441 : vector<64x8xf32>
    %444 = arith.divf %442, %443 : vector<64x8xf32>
    %445 = arith.select %435, %439, %444 : vector<64x8xi1>, vector<64x8xf32>
    %446 = vector.shape_cast %445 : vector<64x8xf32> to vector<8x8x8xf32>
    %c0_103 = arith.constant 0 : index
    %c3 = arith.constant 3 : index
    %c0_104 = arith.constant 0 : index
    %c0_105 = arith.constant 0 : index
    %c0_106 = arith.constant 0 : index
    %447 = vector.load %arg14[%c0_103, %c3, %c0_104, %c0_105, %c0_106] : memref<1x4x8x8x8xf32, #tpu.memory_space<vmem>>, vector<1x1x8x8x8xf32>
    %448 = vector.shape_cast %447 : vector<1x1x8x8x8xf32> to vector<8x8x8xf32>
    %449 = vector.shape_cast %446 : vector<8x8x8xf32> to vector<1x1x8x8x8xf32>
    tpu.vector_store %arg14[%c0_103, %c3, %c0_104, %c0_105, %c0_106], %449 {strides = array<i32>} : memref<1x4x8x8x8xf32, #tpu.memory_space<vmem>>, vector<1x1x8x8x8xf32>,
    return
  }
  func.func @transform_0(%arg0: i32, %arg1: i32) -> (i32, i32, i32, i32) {
    %c0_i32 = arith.constant 0 : i32
    %c0_i32_0 = arith.constant 0 : i32
    %c0_i32_1 = arith.constant 0 : i32
    return %arg0, %arg1, %c0_i32, %c0_i32_0 : i32, i32, i32, i32
  }
  func.func @transform_1(%arg0: i32, %arg1: i32) -> (i32, i32, i32, i32) {
    %c8_i32 = arith.constant 8 : i32
    %0 = arith.muli %arg1, %c8_i32 : i32
    %c1_i32 = arith.constant 1 : i32
    %1 = arith.subi %0, %c1_i32 : i32
    %c0_i32 = arith.constant 0 : i32
    %2 = arith.maxsi %1, %c0_i32 : i32
    %c0_i32_0 = arith.constant 0 : i32
    %c0_i32_1 = arith.constant 0 : i32
    %c0_i32_2 = arith.constant 0 : i32
    return %arg0, %2, %c0_i32_0, %c0_i32_1 : i32, i32, i32, i32
  }
  func.func @transform_2(%arg0: i32, %arg1: i32) -> (i32, i32, i32, i32) {
    %c8_i32 = arith.constant 8 : i32
    %0 = arith.muli %arg1, %c8_i32 : i32
    %c8_i32_0 = arith.constant 8 : i32
    %1 = arith.addi %0, %c8_i32_0 : i32
    %c7_i32 = arith.constant 7 : i32
    %2 = arith.minsi %1, %c7_i32 : i32
    %c0_i32 = arith.constant 0 : i32
    %c0_i32_1 = arith.constant 0 : i32
    %c0_i32_2 = arith.constant 0 : i32
    return %arg0, %2, %c0_i32, %c0_i32_1 : i32, i32, i32, i32
  }
  func.func @transform_3(%arg0: i32, %arg1: i32) -> (i32, i32, i32, i32) {
    %c0_i32 = arith.constant 0 : i32
    %c0_i32_0 = arith.constant 0 : i32
    %c0_i32_1 = arith.constant 0 : i32
    return %arg0, %arg1, %c0_i32, %c0_i32_0 : i32, i32, i32, i32
  }
  func.func @transform_4(%arg0: i32, %arg1: i32) -> (i32, i32, i32, i32) {
    %c8_i32 = arith.constant 8 : i32
    %0 = arith.muli %arg1, %c8_i32 : i32
    %c1_i32 = arith.constant 1 : i32
    %1 = arith.subi %0, %c1_i32 : i32
    %c0_i32 = arith.constant 0 : i32
    %2 = arith.maxsi %1, %c0_i32 : i32
    %c0_i32_0 = arith.constant 0 : i32
    %c0_i32_1 = arith.constant 0 : i32
    %c0_i32_2 = arith.constant 0 : i32
    return %arg0, %2, %c0_i32_0, %c0_i32_1 : i32, i32, i32, i32
  }
  func.func @transform_5(%arg0: i32, %arg1: i32) -> (i32, i32, i32, i32) {
    %c8_i32 = arith.constant 8 : i32
    %0 = arith.muli %arg1, %c8_i32 : i32
    %c8_i32_0 = arith.constant 8 : i32
    %1 = arith.addi %0, %c8_i32_0 : i32
    %c7_i32 = arith.constant 7 : i32
    %2 = arith.minsi %1, %c7_i32 : i32
    %c0_i32 = arith.constant 0 : i32
    %c0_i32_1 = arith.constant 0 : i32
    %c0_i32_2 = arith.constant 0 : i32
    return %arg0, %2, %c0_i32, %c0_i32_1 : i32, i32, i32, i32
  }
  func.func @transform_6(%arg0: i32, %arg1: i32) -> (i32, i32, i32, i32) {
    %c0_i32 = arith.constant 0 : i32
    %c0_i32_0 = arith.constant 0 : i32
    %c0_i32_1 = arith.constant 0 : i32
    return %arg0, %arg1, %c0_i32, %c0_i32_0 : i32, i32, i32, i32
  }
  func.func @transform_7(%arg0: i32, %arg1: i32) -> (i32, i32, i32) {
    %c0_i32 = arith.constant 0 : i32
    %c0_i32_0 = arith.constant 0 : i32
    %c0_i32_1 = arith.constant 0 : i32
    %c0_i32_2 = arith.constant 0 : i32
    return %c0_i32, %c0_i32_0, %c0_i32_1 : i32, i32, i32
  }
  func.func @transform_8(%arg0: i32, %arg1: i32) -> (i32, i32) {
    %c0_i32 = arith.constant 0 : i32
    %c0_i32_0 = arith.constant 0 : i32
    %c0_i32_1 = arith.constant 0 : i32
    return %c0_i32, %c0_i32_0 : i32, i32
  }
  func.func @transform_9(%arg0: i32, %arg1: i32) -> (i32, i32) {
    %c0_i32 = arith.constant 0 : i32
    %c0_i32_0 = arith.constant 0 : i32
    %c0_i32_1 = arith.constant 0 : i32
    return %c0_i32, %c0_i32_0 : i32, i32
  }
  func.func @transform_10(%arg0: i32, %arg1: i32) -> (i32, i32) {
    %c0_i32 = arith.constant 0 : i32
    %c0_i32_0 = arith.constant 0 : i32
    %c0_i32_1 = arith.constant 0 : i32
    return %c0_i32, %c0_i32_0 : i32, i32
  }
  func.func @transform_11(%arg0: i32, %arg1: i32) -> (i32, i32) {
    %c0_i32 = arith.constant 0 : i32
    %c0_i32_0 = arith.constant 0 : i32
    %c0_i32_1 = arith.constant 0 : i32
    return %c0_i32, %c0_i32_0 : i32, i32
  }
  func.func @transform_12(%arg0: i32, %arg1: i32) -> (i32, i32, i32, i32, i32) {
    %c0_i32 = arith.constant 0 : i32
    %c0_i32_0 = arith.constant 0 : i32
    %c0_i32_1 = arith.constant 0 : i32
    %c0_i32_2 = arith.constant 0 : i32
    return %arg0, %c0_i32, %arg1, %c0_i32_0, %c0_i32_1 : i32, i32, i32, i32, i32
  }
}

</mosaic_0001>

<llo_original>
// kernel: matting_module_forward.2
$region0: #{matting_module_forward.2}
  #allocation0 [shape = 'u32[]', space=smem, size = 0x4, offset = 0x4, fixed_abs, tag = 'smem constant byte address 0x4 - core index']
  #allocation1 [shape = 'u32[144,128]{1,0:T(1,128)}', space=vmem, size = 0x12000, scoped, tag = 'internal scratch']
  %s0 = inlined_call_operand.vmem [shape: bf16[2,16,9,11], index: 0, kind: input, shape index: {}, may-alias: {0,1,2}]
  %s1 = inlined_call_operand.vmem [shape: bf16[2,16,9,11], index: 1, kind: input, shape index: {}, may-alias: {0,1,2}]
  %s2 = inlined_call_operand.vmem [shape: bf16[2,16,9,11], index: 2, kind: input, shape index: {}, may-alias: {0,1,2}]
  %s3 = inlined_call_operand.vmem [shape: bf16[2,16,9,11], index: 3, kind: input, shape index: {}, may-alias: {3,4,5}]
  %s4 = inlined_call_operand.vmem [shape: bf16[2,16,9,11], index: 4, kind: input, shape index: {}, may-alias: {3,4,5}]
  %s5 = inlined_call_operand.vmem [shape: bf16[2,16,9,11], index: 5, kind: input, shape index: {}, may-alias: {3,4,5}]
  %s6 = inlined_call_operand.vmem [shape: bf16[99,128], index: 6, kind: input, shape index: {}]
  %s7 = inlined_call_operand.vmem [shape: f32[1,128], index: 7, kind: input, shape index: {}]
  %s8 = inlined_call_operand.vmem [shape: bf16[2,8,8,128], index: 8, kind: output, shape index: {0}]
  %s9 = inlined_call_operand.vmem [shape: s8[2,8,8,128], index: 9, kind: output, shape index: {1}]
  %10 = xla_tuple %s8, %s9
  %s11 = sld [smem:[#allocation0]]
  $region73: #{matting_module_forward.2} parent=0
    _
  %s13 = ssub.s32 1, %s11
  %s14 = scalar_select 0, %s13, %s11
  loop: start=0, step=1, limit=4
  $region2: #{matting_module_forward.2} parent=0 // loop_pre_header
    _
  $region3: #{matting_module_forward.2} parent=0 // loop_header
    %s16 = sphi 0, %s20
    %p17 = scmp.ge.s32.totalorder %s16, 4
    %s23 = sphi 0, %s35
    %s24 = sphi 0, %s31
    %s25 = sphi 0, %s23
    %s26 = sphi 0, %s24
    %s27 = sphi 0, %s25
    %s28 = sphi 0, %s26
    %s40 = sphi 0, %s42
    %s43 = sphi 0, %s40
    %s44 = sphi 0, %s43
    %s60 = sphi 0, %s44
    %s76 = sphi 0, %s78
    %s79 = sphi 0, %s76
    %s80 = sphi 0, %s79
    %s96 = sphi 0, %s80
    %s112 = sphi 0, %s114
    %s115 = sphi 0, %s112
    %s116 = sphi 0, %s115
    %s132 = sphi 0, %s116
    %s140 = sphi 0, %s142
    %s143 = sphi 0, %s140
    %s144 = sphi 0, %s143
    %s160 = sphi 0, %s144
    %s176 = sphi 0, %s178
    %s179 = sphi 0, %s176
    %s180 = sphi 0, %s179
    %s196 = sphi 0, %s180
    %s212 = sphi 0, %s214
    %s215 = sphi 0, %s212
    %s216 = sphi 0, %s215
    %s232 = sphi 0, %s216
    %s236 = sphi 0, %s236
    %s238 = sphi 0, %s236
    %s239 = sphi 0, %s238
    %s253 = sphi 0, %s239
    %s257 = sphi 0, %s257
    %s259 = sphi 0, %s257
    %s260 = sphi 0, %s259
    %s274 = sphi 0, %s260
    %s282 = sphi 0, %s284
    %s285 = sphi 0, %s282
    %s286 = sphi 0, %s285
    %s302 = sphi 0, %s286
    %s310 = sphi 0, %s312
    %s313 = sphi 0, %s310
    %s314 = sphi 0, %s313
    %s330 = sphi 0, %s314
  $region4: #{matting_module_forward.2} parent=0 // loop_header_branch
    %19 = sbr.rel (%p17) target = $region8
  $region5: #{matting_module_forward.2} parent=0 // loop_body
    %s21 = ssub.s32 %s16, 1
    %s22 = ssub.s32 %s16, 2
    %s29 = sadd.s32 1, %s24
    %p30 = scmp.ge.s32.totalorder %s29, 1
    %s31 = scalar_select %p30, 0, %s29
    %s32 = sadd.s32 1, %s23
    %s33 = scalar_select %p30, %s32, %s23
    %p34 = scmp.ge.s32.totalorder %s33, 2
    %s35 = scalar_select %p34, 0, %s33
    %s36 = ssub.s32 %s23, %s35
    %s37 = ssub.s32 %s24, %s31
    %s38 = sor.u32 %s36, %s37
    %p39 = scmp.eq.s32.totalorder %s38, 0
    %s41 = sadd.s32 %s40, 1
    %s42 = scalar_select %p39, %s40, %s41
    %p45 = pneg %p39
    %p46 = scmp.eq.s32.totalorder %s16, 1
    %p47 = por %p45, %p46
    %p48 = scmp.ne.s32.totalorder %s40, %s43
    %p49 = scmp.eq.s32.totalorder %s16, 0
    %p50 = por %p48, %p49
    %p51 = scmp.ne.s32.totalorder %s40, %s43
    %p52 = scmp.eq.s32.totalorder %s21, 1
    %p53 = por %p51, %p52
    %p54 = scmp.ne.s32.totalorder %s43, %s44
    %p55 = scmp.eq.s32.totalorder %s21, 0
    %p56 = por %p54, %p55
    %p57 = scmp.ne.s32.totalorder %s43, %s44
    %p58 = scmp.eq.s32.totalorder %s22, 1
    %p59 = por %p57, %p58
    %p61 = scmp.ne.s32.totalorder %s44, %s60
    %p62 = scmp.eq.s32.totalorder %s22, 0
    %p63 = por %p61, %p62
    %s64 = smul.u32 %s24, 16
    %s65 = ssub.s32 %s64, 1
    %p66 = scmp.gt.s32.totalorder %s65, 0
    %s67 = scalar_select %p66, %s65, 0
    %s68 = smul.u32 %s31, 16
    %s69 = ssub.s32 %s68, 1
    %p70 = scmp.gt.s32.totalorder %s69, 0
    %s71 = scalar_select %p70, %s69, 0
    %s72 = ssub.s32 %s23, %s35
    %s73 = ssub.s32 %s67, %s71
    %s74 = sor.u32 %s72, %s73
    %p75 = scmp.eq.s32.totalorder %s74, 0
    %s77 = sadd.s32 %s76, 1
    %s78 = scalar_select %p75, %s76, %s77
    %p81 = pneg %p75
    %p82 = scmp.eq.s32.totalorder %s16, 1
    %p83 = por %p81, %p82
    %p84 = scmp.ne.s32.totalorder %s76, %s79
    %p85 = scmp.eq.s32.totalorder %s16, 0
    %p86 = por %p84, %p85
    %p87 = scmp.ne.s32.totalorder %s76, %s79
    %p88 = scmp.eq.s32.totalorder %s21, 1
    %p89 = por %p87, %p88
    %p90 = scmp.ne.s32.totalorder %s79, %s80
    %p91 = scmp.eq.s32.totalorder %s21, 0
    %p92 = por %p90, %p91
    %p93 = scmp.ne.s32.totalorder %s79, %s80
    %p94 = scmp.eq.s32.totalorder %s22, 1
    %p95 = por %p93, %p94
    %p97 = scmp.ne.s32.totalorder %s80, %s96
    %p98 = scmp.eq.s32.totalorder %s22, 0
    %p99 = por %p97, %p98
    %s100 = smul.u32 %s24, 16
    %s101 = sadd.s32 %s100, 16
    %p102 = scmp.lt.s32.totalorder %s101, 15
    %s103 = scalar_select %p102, %s101, 15
    %s104 = smul.u32 %s31, 16
    %s105 = sadd.s32 %s104, 16
    %p106 = scmp.lt.s32.totalorder %s105, 15
    %s107 = scalar_select %p106, %s105, 15
    %s108 = ssub.s32 %s23, %s35
    %s109 = ssub.s32 %s103, %s107
    %s110 = sor.u32 %s108, %s109
    %p111 = scmp.eq.s32.totalorder %s110, 0
    %s113 = sadd.s32 %s112, 1
    %s114 = scalar_select %p111, %s112, %s113
    %p117 = pneg %p111
    %p118 = scmp.eq.s32.totalorder %s16, 1
    %p119 = por %p117, %p118
    %p120 = scmp.ne.s32.totalorder %s112, %s115
    %p121 = scmp.eq.s32.totalorder %s16, 0
    %p122 = por %p120, %p121
    %p123 = scmp.ne.s32.totalorder %s112, %s115
    %p124 = scmp.eq.s32.totalorder %s21, 1
    %p125 = por %p123, %p124
    %p126 = scmp.ne.s32.totalorder %s115, %s116
    %p127 = scmp.eq.s32.totalorder %s21, 0
    %p128 = por %p126, %p127
    %p129 = scmp.ne.s32.totalorder %s115, %s116
    %p130 = scmp.eq.s32.totalorder %s22, 1
    %p131 = por %p129, %p130
    %p133 = scmp.ne.s32.totalorder %s116, %s132
    %p134 = scmp.eq.s32.totalorder %s22, 0
    %p135 = por %p133, %p134
    %s136 = ssub.s32 %s23, %s35
    %s137 = ssub.s32 %s24, %s31
    %s138 = sor.u32 %s136, %s137
    %p139 = scmp.eq.s32.totalorder %s138, 0
    %s141 = sadd.s32 %s140, 1
    %s142 = scalar_select %p139, %s140, %s141
    %p145 = pneg %p139
    %p146 = scmp.eq.s32.totalorder %s16, 1
    %p147 = por %p145, %p146
    %p148 = scmp.ne.s32.totalorder %s140, %s143
    %p149 = scmp.eq.s32.totalorder %s16, 0
    %p150 = por %p148, %p149
    %p151 = scmp.ne.s32.totalorder %s140, %s143
    %p152 = scmp.eq.s32.totalorder %s21, 1
    %p153 = por %p151, %p152
    %p154 = scmp.ne.s32.totalorder %s143, %s144
    %p155 = scmp.eq.s32.totalorder %s21, 0
    %p156 = por %p154, %p155
    %p157 = scmp.ne.s32.totalorder %s143, %s144
    %p158 = scmp.eq.s32.totalorder %s22, 1
    %p159 = por %p157, %p158
    %p161 = scmp.ne.s32.totalorder %s144, %s160
    %p162 = scmp.eq.s32.totalorder %s22, 0
    %p163 = por %p161, %p162
    %s164 = smul.u32 %s24, 16
    %s165 = ssub.s32 %s164, 1
    %p166 = scmp.gt.s32.totalorder %s165, 0
    %s167 = scalar_select %p166, %s165, 0
    %s168 = smul.u32 %s31, 16
    %s169 = ssub.s32 %s168, 1
    %p170 = scmp.gt.s32.totalorder %s169, 0
    %s171 = scalar_select %p170, %s169, 0
    %s172 = ssub.s32 %s23, %s35
    %s173 = ssub.s32 %s167, %s171
    %s174 = sor.u32 %s172, %s173
    %p175 = scmp.eq.s32.totalorder %s174, 0
    %s177 = sadd.s32 %s176, 1
    %s178 = scalar_select %p175, %s176, %s177
    %p181 = pneg %p175
    %p182 = scmp.eq.s32.totalorder %s16, 1
    %p183 = por %p181, %p182
    %p184 = scmp.ne.s32.totalorder %s176, %s179
    %p185 = scmp.eq.s32.totalorder %s16, 0
    %p186 = por %p184, %p185
    %p187 = scmp.ne.s32.totalorder %s176, %s179
    %p188 = scmp.eq.s32.totalorder %s21, 1
    %p189 = por %p187, %p188
    %p190 = scmp.ne.s32.totalorder %s179, %s180
    %p191 = scmp.eq.s32.totalorder %s21, 0
    %p192 = por %p190, %p191
    %p193 = scmp.ne.s32.totalorder %s179, %s180
    %p194 = scmp.eq.s32.totalorder %s22, 1
    %p195 = por %p193, %p194
    %p197 = scmp.ne.s32.totalorder %s180, %s196
    %p198 = scmp.eq.s32.totalorder %s22, 0
    %p199 = por %p197, %p198
    %s200 = smul.u32 %s24, 16
    %s201 = sadd.s32 %s200, 16
    %p202 = scmp.lt.s32.totalorder %s201, 15
    %s203 = scalar_select %p202, %s201, 15
    %s204 = smul.u32 %s31, 16
    %s205 = sadd.s32 %s204, 16
    %p206 = scmp.lt.s32.totalorder %s205, 15
    %s207 = scalar_select %p206, %s205, 15
    %s208 = ssub.s32 %s23, %s35
    %s209 = ssub.s32 %s203, %s207
    %s210 = sor.u32 %s208, %s209
    %p211 = scmp.eq.s32.totalorder %s210, 0
    %s213 = sadd.s32 %s212, 1
    %s214 = scalar_select %p211, %s212, %s213
    %p217 = pneg %p211
    %p218 = scmp.eq.s32.totalorder %s16, 1
    %p219 = por %p217, %p218
    %p220 = scmp.ne.s32.totalorder %s212, %s215
    %p221 = scmp.eq.s32.totalorder %s16, 0
    %p222 = por %p220, %p221
    %p223 = scmp.ne.s32.totalorder %s212, %s215
    %p224 = scmp.eq.s32.totalorder %s21, 1
    %p225 = por %p223, %p224
    %p226 = scmp.ne.s32.totalorder %s215, %s216
    %p227 = scmp.eq.s32.totalorder %s21, 0
    %p228 = por %p226, %p227
    %p229 = scmp.ne.s32.totalorder %s215, %s216
    %p230 = scmp.eq.s32.totalorder %s22, 1
    %p231 = por %p229, %p230
    %p233 = scmp.ne.s32.totalorder %s216, %s232
    %p234 = scmp.eq.s32.totalorder %s22, 0
    %p235 = por %p233, %p234
    %s237 = sadd.s32 %s236, 1
    %p240 = scmp.eq.s32.totalorder %s16, 1
    %p241 = scmp.ne.s32.totalorder %s236, %s238
    %p242 = scmp.eq.s32.totalorder %s16, 0
    %p243 = por %p241, %p242
    %p244 = scmp.ne.s32.totalorder %s236, %s238
    %p245 = scmp.eq.s32.totalorder %s21, 1
    %p246 = por %p244, %p245
    %p247 = scmp.ne.s32.totalorder %s238, %s239
    %p248 = scmp.eq.s32.totalorder %s21, 0
    %p249 = por %p247, %p248
    %p250 = scmp.ne.s32.totalorder %s238, %s239
    %p251 = scmp.eq.s32.totalorder %s22, 1
    %p252 = por %p250, %p251
    %p254 = scmp.ne.s32.totalorder %s239, %s253
    %p255 = scmp.eq.s32.totalorder %s22, 0
    %p256 = por %p254, %p255
    %s258 = sadd.s32 %s257, 1
    %p261 = scmp.eq.s32.totalorder %s16, 1
    %p262 = scmp.ne.s32.totalorder %s257, %s259
    %p263 = scmp.eq.s32.totalorder %s16, 0
    %p264 = por %p262, %p263
    %p265 = scmp.ne.s32.totalorder %s257, %s259
    %p266 = scmp.eq.s32.totalorder %s21, 1
    %p267 = por %p265, %p266
    %p268 = scmp.ne.s32.totalorder %s259, %s260
    %p269 = scmp.eq.s32.totalorder %s21, 0
    %p270 = por %p268, %p269
    %p271 = scmp.ne.s32.totalorder %s259, %s260
    %p272 = scmp.eq.s32.totalorder %s22, 1
    %p273 = por %p271, %p272
    %p275 = scmp.ne.s32.totalorder %s260, %s274
    %p276 = scmp.eq.s32.totalorder %s22, 0
    %p277 = por %p275, %p276
    %s278 = ssub.s32 %s23, %s35
    %s279 = ssub.s32 %s24, %s31
    %s280 = sor.u32 %s278, %s279
    %p281 = scmp.eq.s32.totalorder %s280, 0
    %s283 = sadd.s32 %s282, 1
    %s284 = scalar_select %p281, %s282, %s283
    %p287 = pneg %p281
    %p288 = scmp.eq.s32.totalorder %s16, 1
    %p289 = por %p287, %p288
    %p290 = scmp.ne.s32.totalorder %s282, %s285
    %p291 = scmp.eq.s32.totalorder %s16, 0
    %p292 = por %p290, %p291
    %p293 = scmp.ne.s32.totalorder %s282, %s285
    %p294 = scmp.eq.s32.totalorder %s21, 1
    %p295 = por %p293, %p294
    %p296 = scmp.ne.s32.totalorder %s285, %s286
    %p297 = scmp.eq.s32.totalorder %s21, 0
    %p298 = por %p296, %p297
    %p299 = scmp.ne.s32.totalorder %s285, %s286
    %p300 = scmp.eq.s32.totalorder %s22, 1
    %p301 = por %p299, %p300
    %p303 = scmp.ne.s32.totalorder %s286, %s302
    %p304 = scmp.eq.s32.totalorder %s22, 0
    %p305 = por %p303, %p304
    %s306 = ssub.s32 %s23, %s35
    %s307 = ssub.s32 %s24, %s31
    %s308 = sor.u32 %s306, %s307
    %p309 = scmp.eq.s32.totalorder %s308, 0
    %s311 = sadd.s32 %s310, 1
    %s312 = scalar_select %p309, %s310, %s311
    %p315 = pneg %p309
    %p316 = scmp.eq.s32.totalorder %s16, 1
    %p317 = por %p315, %p316
    %p318 = scmp.ne.s32.totalorder %s310, %s313
    %p319 = scmp.eq.s32.totalorder %s16, 0
    %p320 = por %p318, %p319
    %p321 = scmp.ne.s32.totalorder %s310, %s313
    %p322 = scmp.eq.s32.totalorder %s21, 1
    %p323 = por %p321, %p322
    %p324 = scmp.ne.s32.totalorder %s313, %s314
    %p325 = scmp.eq.s32.totalorder %s21, 0
    %p326 = por %p324, %p325
    %p327 = scmp.ne.s32.totalorder %s313, %s314
    %p328 = scmp.eq.s32.totalorder %s22, 1
    %p329 = por %p327, %p328
    %p331 = scmp.ne.s32.totalorder %s314, %s330
    %p332 = scmp.eq.s32.totalorder %s22, 0
    %p333 = por %p331, %p332
    %p334 = scmp.le.s32.totalorder 1, %s16
    %p335 = scmp.lt.s32.totalorder %s16, 3
    %p336 = pnand %p334, %p335
    %p337 = pneg %p336
    // Predicated region
    $region9: #{matting_module_forward.2} parent=5 // pred_check
      _
    $region10: #{matting_module_forward.2} parent=5 // pred_check_branch
      %339 = sbr.rel (%p336) target = $region12
    $region11: #{matting_module_forward.2} parent=5 // pred_region
      %s340 = ssub.s32 %s16, 1
      // Predicated region
      $region13: #{matting_module_forward.2} parent=11 // pred_check
        %p341 = pneg %p249
      $region14: #{matting_module_forward.2} parent=11 // pred_check_branch
        %343 = sbr.rel (%p341) target = $region16
      $region15: #{matting_module_forward.2} parent=11 // pred_region
        _
      $region16: #{matting_module_forward.2} parent=11 // pred_fallthru
        _
      // Predicated region
      $region17: #{matting_module_forward.2} parent=11 // pred_check
        %p344 = pneg %p270
      $region18: #{matting_module_forward.2} parent=11 // pred_check_branch
        %346 = sbr.rel (%p344) target = $region20
      $region19: #{matting_module_forward.2} parent=11 // pred_region
        _
      $region20: #{matting_module_forward.2} parent=11 // pred_fallthru
        _
    $region12: #{matting_module_forward.2} parent=5 // pred_fallthru
      _
    %p347 = scmp.lt.s32.totalorder %s16, 2
    // Predicated region
    $region21: #{matting_module_forward.2} parent=5 // pred_check
      %p348 = pneg %p347
    $region22: #{matting_module_forward.2} parent=5 // pred_check_branch
      %350 = sbr.rel (%p348) target = $region24
    $region23: #{matting_module_forward.2} parent=5 // pred_region
      // Predicated region
      $region25: #{matting_module_forward.2} parent=23 // pred_check
        %p351 = pneg %p50
      $region26: #{matting_module_forward.2} parent=23 // pred_check_branch
        %353 = sbr.rel (%p351) target = $region28
      $region27: #{matting_module_forward.2} parent=23 // pred_region
        %s354 = smul.u32 16, %s24
        %p355 = scmp.lt.s32.totalorder %s23, 1
        %s356 = scalar_select %p355, %s23, 1
        %p357 = scmp.lt.s32.totalorder %s354, 15
        %s358 = scalar_select %p357, %s354, 15
        %s359 = smul.addr %s358, 2
        %s360 = smul.addr %s356, 32
        %s361 = sadd.s32 %s359, %s360
        %s362 = smul.addr %s361, 4
        %s363 = scalar_lea.vmem %s0, %s362
        %s364 = smul.u32 16, %s24
      $region28: #{matting_module_forward.2} parent=23 // pred_fallthru
        _
      // Predicated region
      $region29: #{matting_module_forward.2} parent=23 // pred_check
        %p365 = pneg %p86
      $region30: #{matting_module_forward.2} parent=23 // pred_check_branch
        %367 = sbr.rel (%p365) target = $region32
      $region31: #{matting_module_forward.2} parent=23 // pred_region
        %s368 = smul.u32 %s24, 16
        %s369 = ssub.s32 %s368, 1
        %p370 = scmp.gt.s32.totalorder %s369, 0
        %s371 = scalar_select %p370, %s369, 0
        %p372 = scmp.lt.s32.totalorder %s23, 1
        %s373 = scalar_select %p372, %s23, 1
        %p374 = scmp.lt.s32.totalorder %s371, 15
        %s375 = scalar_select %p374, %s371, 15
        %s376 = smul.addr %s375, 2
        %s377 = smul.addr %s373, 32
        %s378 = sadd.s32 %s376, %s377
        %s379 = smul.addr %s378, 4
        %s380 = scalar_lea.vmem %s1, %s379
        %s381 = smul.u32 %s24, 16
        %s382 = ssub.s32 %s381, 1
        %p383 = scmp.gt.s32.totalorder %s382, 0
        %s384 = scalar_select %p383, %s382, 0
      $region32: #{matting_module_forward.2} parent=23 // pred_fallthru
        _
      // Predicated region
      $region33: #{matting_module_forward.2} parent=23 // pred_check
        %p385 = pneg %p122
      $region34: #{matting_module_forward.2} parent=23 // pred_check_branch
        %387 = sbr.rel (%p385) target = $region36
      $region35: #{matting_module_forward.2} parent=23 // pred_region
        %s388 = smul.u32 %s24, 16
        %s389 = sadd.s32 %s388, 16
        %p390 = scmp.lt.s32.totalorder %s389, 15
        %s391 = scalar_select %p390, %s389, 15
        %p392 = scmp.lt.s32.totalorder %s23, 1
        %s393 = scalar_select %p392, %s23, 1
        %p394 = scmp.lt.s32.totalorder %s391, 15
        %s395 = scalar_select %p394, %s391, 15
        %s396 = smul.addr %s395, 2
        %s397 = smul.addr %s393, 32
        %s398 = sadd.s32 %s396, %s397
        %s399 = smul.addr %s398, 4
        %s400 = scalar_lea.vmem %s2, %s399
        %s401 = smul.u32 %s24, 16
        %s402 = sadd.s32 %s401, 16
        %p403 = scmp.lt.s32.totalorder %s402, 15
        %s404 = scalar_select %p403, %s402, 15
      $region36: #{matting_module_forward.2} parent=23 // pred_fallthru
        _
      // Predicated region
      $region37: #{matting_module_forward.2} parent=23 // pred_check
        %p405 = pneg %p150
      $region38: #{matting_module_forward.2} parent=23 // pred_check_branch
        %407 = sbr.rel (%p405) target = $region40
      $region39: #{matting_module_forward.2} parent=23 // pred_region
        %s408 = smul.u32 16, %s24
        %p409 = scmp.lt.s32.totalorder %s23, 1
        %s410 = scalar_select %p409, %s23, 1
        %p411 = scmp.lt.s32.totalorder %s408, 15
        %s412 = scalar_select %p411, %s408, 15
        %s413 = smul.addr %s412, 2
        %s414 = smul.addr %s410, 32
        %s415 = sadd.s32 %s413, %s414
        %s416 = smul.addr %s415, 4
        %s417 = scalar_lea.vmem %s3, %s416
        %s418 = smul.u32 16, %s24
      $region40: #{matting_module_forward.2} parent=23 // pred_fallthru
        _
      // Predicated region
      $region41: #{matting_module_forward.2} parent=23 // pred_check
        %p419 = pneg %p186
      $region42: #{matting_module_forward.2} parent=23 // pred_check_branch
        %421 = sbr.rel (%p419) target = $region44
      $region43: #{matting_module_forward.2} parent=23 // pred_region
        %s422 = smul.u32 %s24, 16
        %s423 = ssub.s32 %s422, 1
        %p424 = scmp.gt.s32.totalorder %s423, 0
        %s425 = scalar_select %p424, %s423, 0
        %p426 = scmp.lt.s32.totalorder %s23, 1
        %s427 = scalar_select %p426, %s23, 1
        %p428 = scmp.lt.s32.totalorder %s425, 15
        %s429 = scalar_select %p428, %s425, 15
        %s430 = smul.addr %s429, 2
        %s431 = smul.addr %s427, 32
        %s432 = sadd.s32 %s430, %s431
        %s433 = smul.addr %s432, 4
        %s434 = scalar_lea.vmem %s4, %s433
        %s435 = smul.u32 %s24, 16
        %s436 = ssub.s32 %s435, 1
        %p437 = scmp.gt.s32.totalorder %s436, 0
        %s438 = scalar_select %p437, %s436, 0
      $region44: #{matting_module_forward.2} parent=23 // pred_fallthru
        _
      // Predicated region
      $region45: #{matting_module_forward.2} parent=23 // pred_check
        %p439 = pneg %p222
      $region46: #{matting_module_forward.2} parent=23 // pred_check_branch
        %441 = sbr.rel (%p439) target = $region48
      $region47: #{matting_module_forward.2} parent=23 // pred_region
        %s442 = smul.u32 %s24, 16
        %s443 = sadd.s32 %s442, 16
        %p444 = scmp.lt.s32.totalorder %s443, 15
        %s445 = scalar_select %p444, %s443, 15
        %p446 = scmp.lt.s32.totalorder %s23, 1
        %s447 = scalar_select %p446, %s23, 1
        %p448 = scmp.lt.s32.totalorder %s445, 15
        %s449 = scalar_select %p448, %s445, 15
        %s450 = smul.addr %s449, 2
        %s451 = smul.addr %s447, 32
        %s452 = sadd.s32 %s450, %s451
        %s453 = smul.addr %s452, 4
        %s454 = scalar_lea.vmem %s5, %s453
        %s455 = smul.u32 %s24, 16
        %s456 = sadd.s32 %s455, 16
        %p457 = scmp.lt.s32.totalorder %s456, 15
        %s458 = scalar_select %p457, %s456, 15
      $region48: #{matting_module_forward.2} parent=23 // pred_fallthru
        _
    $region24: #{matting_module_forward.2} parent=5 // pred_fallthru
      _
    %p459 = scmp.le.s32.totalorder 1, %s16
    %p460 = scmp.lt.s32.totalorder %s16, 3
    %p461 = pnand %p459, %p460
    %p462 = pneg %p461
    // Predicated region
    $region49: #{matting_module_forward.2} parent=5 // pred_check
      _
    $region50: #{matting_module_forward.2} parent=5 // pred_check_branch
      %464 = sbr.rel (%p461) target = $region52
    $region51: #{matting_module_forward.2} parent=5 // pred_region
      %s465 = ssub.s32 %s16, 1
      %s466 = smul.u32 16, %s26
      %p467 = scmp.lt.s32.totalorder %s25, 1
      %s468 = scalar_select %p467, %s25, 1
      %p469 = scmp.lt.s32.totalorder %s466, 15
      %s470 = scalar_select %p469, %s466, 15
      %s471 = smul.addr %s470, 2
      %s472 = smul.addr %s468, 32
      %s473 = sadd.s32 %s471, %s472
      %s474 = smul.addr %s473, 4
      %s475 = scalar_lea.vmem %s0, %s474
      %p476 = pneg %p56
      %p477 = pneg %p53
      %s478 = smul.u32 %s26, 16
      %s479 = ssub.s32 %s478, 1
      %p480 = scmp.gt.s32.totalorder %s479, 0
      %s481 = scalar_select %p480, %s479, 0
      %p482 = scmp.lt.s32.totalorder %s25, 1
      %s483 = scalar_select %p482, %s25, 1
      %p484 = scmp.lt.s32.totalorder %s481, 15
      %s485 = scalar_select %p484, %s481, 15
      %s486 = smul.addr %s485, 2
      %s487 = smul.addr %s483, 32
      %s488 = sadd.s32 %s486, %s487
      %s489 = smul.addr %s488, 4
      %s490 = scalar_lea.vmem %s1, %s489
      %p491 = pneg %p92
      %p492 = pneg %p89
      %s493 = smul.u32 %s26, 16
      %s494 = sadd.s32 %s493, 16
      %p495 = scmp.lt.s32.totalorder %s494, 15
      %s496 = scalar_select %p495, %s494, 15
      %p497 = scmp.lt.s32.totalorder %s25, 1
      %s498 = scalar_select %p497, %s25, 1
      %p499 = scmp.lt.s32.totalorder %s496, 15
      %s500 = scalar_select %p499, %s496, 15
      %s501 = smul.addr %s500, 2
      %s502 = smul.addr %s498, 32
      %s503 = sadd.s32 %s501, %s502
      %s504 = smul.addr %s503, 4
      %s505 = scalar_lea.vmem %s2, %s504
      %p506 = pneg %p128
      %p507 = pneg %p125
      %s508 = smul.u32 16, %s26
      %p509 = scmp.lt.s32.totalorder %s25, 1
      %s510 = scalar_select %p509, %s25, 1
      %p511 = scmp.lt.s32.totalorder %s508, 15
      %s512 = scalar_select %p511, %s508, 15
      %s513 = smul.addr %s512, 2
      %s514 = smul.addr %s510, 32
      %s515 = sadd.s32 %s513, %s514
      %s516 = smul.addr %s515, 4
      %s517 = scalar_lea.vmem %s3, %s516
      %p518 = pneg %p156
      %p519 = pneg %p153
      %s520 = smul.u32 %s26, 16
      %s521 = ssub.s32 %s520, 1
      %p522 = scmp.gt.s32.totalorder %s521, 0
      %s523 = scalar_select %p522, %s521, 0
      %p524 = scmp.lt.s32.totalorder %s25, 1
      %s525 = scalar_select %p524, %s25, 1
      %p526 = scmp.lt.s32.totalorder %s523, 15
      %s527 = scalar_select %p526, %s523, 15
      %s528 = smul.addr %s527, 2
      %s529 = smul.addr %s525, 32
      %s530 = sadd.s32 %s528, %s529
      %s531 = smul.addr %s530, 4
      %s532 = scalar_lea.vmem %s4, %s531
      %p533 = pneg %p192
      %p534 = pneg %p189
      %s535 = smul.u32 %s26, 16
      %s536 = sadd.s32 %s535, 16
      %p537 = scmp.lt.s32.totalorder %s536, 15
      %s538 = scalar_select %p537, %s536, 15
      %p539 = scmp.lt.s32.totalorder %s25, 1
      %s540 = scalar_select %p539, %s25, 1
      %p541 = scmp.lt.s32.totalorder %s538, 15
      %s542 = scalar_select %p541, %s538, 15
      %s543 = smul.addr %s542, 2
      %s544 = smul.addr %s540, 32
      %s545 = sadd.s32 %s543, %s544
      %s546 = smul.addr %s545, 4
      %s547 = scalar_lea.vmem %s5, %s546
      %p548 = pneg %p228
      %p549 = pneg %p225
      %p550 = pneg %p249
      %p551 = pneg %p246
      %p552 = pneg %p270
      %p553 = pneg %p267
      %p554 = pneg %p298
      %p555 = pneg %p295
      %s556 = smul.u32 8, %s26
      %p557 = scmp.lt.s32.totalorder %s25, 1
      %s558 = scalar_select %p557, %s25, 1
      %p559 = scmp.lt.s32.totalorder %s556, 7
      %s560 = scalar_select %p559, %s556, 7
      %s561 = smul.addr %s558, 8
      %s562 = sadd.s32 %s560, %s561
      %s563 = smul.addr %s562, 4
      %s564 = scalar_lea.vmem %s8, %s563
      %p565 = pneg %p326
      %p566 = pneg %p323
      %s567 = smul.u32 8, %s26
      %p568 = scmp.lt.s32.totalorder %s25, 1
      %s569 = scalar_select %p568, %s25, 1
      %p570 = scmp.lt.s32.totalorder %s567, 7
      %s571 = scalar_select %p570, %s567, 7
      %s572 = smul.addr %s569, 8
      %s573 = sadd.s32 %s571, %s572
      %s574 = smul.addr %s573, 2
      %s575 = scalar_lea.vmem %s9, %s574
      %s576 = smul.u32 16, %s26
      %p577 = scmp.lt.s32.totalorder %s25, 1
      %s578 = scalar_select %p577, %s25, 1
      %p579 = scmp.lt.s32.totalorder %s576, 15
      %s580 = scalar_select %p579, %s576, 15
      %s581 = smul.addr %s580, 2
      %s582 = smul.addr %s578, 32
      %s583 = sadd.s32 %s581, %s582
      %s584 = smul.addr %s583, 4
      %s585 = scalar_lea.vmem %s0, %s584
      %s586 = smul.u32 16, %s26
      %s587 = smul.u32 %s26, 16
      %s588 = ssub.s32 %s587, 1
      %p589 = scmp.gt.s32.totalorder %s588, 0
      %s590 = scalar_select %p589, %s588, 0
      %p591 = scmp.lt.s32.totalorder %s25, 1
      %s592 = scalar_select %p591, %s25, 1
      %p593 = scmp.lt.s32.totalorder %s590, 15
      %s594 = scalar_select %p593, %s590, 15
      %s595 = smul.addr %s594, 2
      %s596 = smul.addr %s592, 32
      %s597 = sadd.s32 %s595, %s596
      %s598 = smul.addr %s597, 4
      %s599 = scalar_lea.vmem %s1, %s598
      %s600 = smul.u32 %s26, 16
      %s601 = ssub.s32 %s600, 1
      %p602 = scmp.gt.s32.totalorder %s601, 0
      %s603 = scalar_select %p602, %s601, 0
      %s604 = smul.u32 %s26, 16
      %s605 = sadd.s32 %s604, 16
      %p606 = scmp.lt.s32.totalorder %s605, 15
      %s607 = scalar_select %p606, %s605, 15
      %p608 = scmp.lt.s32.totalorder %s25, 1
      %s609 = scalar_select %p608, %s25, 1
      %p610 = scmp.lt.s32.totalorder %s607, 15
      %s611 = scalar_select %p610, %s607, 15
      %s612 = smul.addr %s611, 2
      %s613 = smul.addr %s609, 32
      %s614 = sadd.s32 %s612, %s613
      %s615 = smul.addr %s614, 4
      %s616 = scalar_lea.vmem %s2, %s615
      %s617 = smul.u32 %s26, 16
      %s618 = sadd.s32 %s617, 16
      %p619 = scmp.lt.s32.totalorder %s618, 15
      %s620 = scalar_select %p619, %s618, 15
      %s621 = smul.u32 16, %s26
      %p622 = scmp.lt.s32.totalorder %s25, 1
      %s623 = scalar_select %p622, %s25, 1
      %p624 = scmp.lt.s32.totalorder %s621, 15
      %s625 = scalar_select %p624, %s621, 15
      %s626 = smul.addr %s625, 2
      %s627 = smul.addr %s623, 32
      %s628 = sadd.s32 %s626, %s627
      %s629 = smul.addr %s628, 4
      %s630 = scalar_lea.vmem %s3, %s629
      %s631 = smul.u32 16, %s26
      %s632 = smul.u32 %s26, 16
      %s633 = ssub.s32 %s632, 1
      %p634 = scmp.gt.s32.totalorder %s633, 0
      %s635 = scalar_select %p634, %s633, 0
      %p636 = scmp.lt.s32.totalorder %s25, 1
      %s637 = scalar_select %p636, %s25, 1
      %p638 = scmp.lt.s32.totalorder %s635, 15
      %s639 = scalar_select %p638, %s635, 15
      %s640 = smul.addr %s639, 2
      %s641 = smul.addr %s637, 32
      %s642 = sadd.s32 %s640, %s641
      %s643 = smul.addr %s642, 4
      %s644 = scalar_lea.vmem %s4, %s643
      %s645 = smul.u32 %s26, 16
      %s646 = ssub.s32 %s645, 1
      %p647 = scmp.gt.s32.totalorder %s646, 0
      %s648 = scalar_select %p647, %s646, 0
      %s649 = smul.u32 %s26, 16
      %s650 = sadd.s32 %s649, 16
      %p651 = scmp.lt.s32.totalorder %s650, 15
      %s652 = scalar_select %p651, %s650, 15
      %p653 = scmp.lt.s32.totalorder %s25, 1
      %s654 = scalar_select %p653, %s25, 1
      %p655 = scmp.lt.s32.totalorder %s652, 15
      %s656 = scalar_select %p655, %s652, 15
      %s657 = smul.addr %s656, 2
      %s658 = smul.addr %s654, 32
      %s659 = sadd.s32 %s657, %s658
      %s660 = smul.addr %s659, 4
      %s661 = scalar_lea.vmem %s5, %s660
      %s662 = smul.u32 %s26, 16
      %s663 = sadd.s32 %s662, 16
      %p664 = scmp.lt.s32.totalorder %s663, 15
      %s665 = scalar_select %p664, %s663, 15
      %s666 = smul.u32 8, %s26
      %p667 = scmp.lt.s32.totalorder %s25, 1
      %s668 = scalar_select %p667, %s25, 1
      %p669 = scmp.lt.s32.totalorder %s666, 7
      %s670 = scalar_select %p669, %s666, 7
      %s671 = smul.addr %s668, 8
      %s672 = sadd.s32 %s670, %s671
      %s673 = smul.addr %s672, 4
      %s674 = scalar_lea.vmem %s8, %s673
      %s675 = smul.u32 8, %s26
      %s676 = smul.u32 8, %s26
      %p677 = scmp.lt.s32.totalorder %s25, 1
      %s678 = scalar_select %p677, %s25, 1
      %p679 = scmp.lt.s32.totalorder %s676, 7
      %s680 = scalar_select %p679, %s676, 7
      %s681 = smul.addr %s678, 8
      %s682 = sadd.s32 %s680, %s681
      %s683 = smul.addr %s682, 2
      %s684 = scalar_lea.vmem %s9, %s683
      %s685 = smul.u32 8, %s26
      %p687 = scmp.ne.s32.totalorder %s26, 0
      %s688 = scalar_select %p687, 1, 0
      %s689 = scvt.s32.f32 %s688
      %p691 = scmp.ne.f32.partialorder %s689, %s689
      %s692 = sshrl.u32 %s689, 16
      %s693 = sand.u32 %s692, 1
      %s694 = sadd.s32 32767, %s693
      %s695 = sadd.s32 %s689, %s694
      %s696 = sand.u32 %s695, 4294901760
      %s697 = scalar_select %p691, 2143289344, %s696
      %s699 = sshrl.u32 %s697, 16
      %v700 = vld [vmem:[%s599] sm:$0xf]
      %v701 = vld [vmem:[%s599 + $0x4] sm:$0x1]
      %s702 = sshll.u32 %s699, 16
      %s703 = sor.u32 %s699, %s702
      %v704 = vstv %s703
      %v706 = vmul.bf16 %v700, %v704
      %v707 = vmul.bf16 %v701, %v704
      %v708 = vld [vmem:[%s616] sm:$0xf]
      %v709 = vld [vmem:[%s616 + $0x4] sm:$0x1]
      %v710 = vmul.bf16 %v708, %v704
      %v711 = vmul.bf16 %v709, %v704
      %v712 = vld [vmem:[%s585] sm:$0xf]
      %v713 = vld [vmem:[%s585 + $0x4] sm:$0x1]
      %v714 = vld [vmem:[%s585 + $0x8] sm:$0xf]
      %v715 = vld [vmem:[%s585 + $0xc] sm:$0x1]
      %v716 = vld [vmem:[%s585 + $0x10] sm:$0xf]
      %v717 = vld [vmem:[%s585 + $0x14] sm:$0x1]
      %v718 = vld [vmem:[%s585 + $0x18] sm:$0xf]
      %v719 = vld [vmem:[%s585 + $0x1c] sm:$0x1]
      %v720 = vld [vmem:[%s585 + $0x20] sm:$0xf]
      %v721 = vld [vmem:[%s585 + $0x24] sm:$0x1]
      %v722 = vld [vmem:[%s585 + $0x28] sm:$0xf]
      %v723 = vld [vmem:[%s585 + $0x2c] sm:$0x1]
      %v724 = vld [vmem:[%s585 + $0x30] sm:$0xf]
      %v725 = vld [vmem:[%s585 + $0x34] sm:$0x1]
      %v726 = vld [vmem:[%s585 + $0x38] sm:$0xf]
      %v727 = vld [vmem:[%s585 + $0x3c] sm:$0x1]
      %v728 = vld [vmem:[%s585 + $0x40] sm:$0xf]
      %v729 = vld [vmem:[%s585 + $0x44] sm:$0x1]
      %v730 = vld [vmem:[%s585 + $0x48] sm:$0xf]
      %v731 = vld [vmem:[%s585 + $0x4c] sm:$0x1]
      %v732 = vld [vmem:[%s585 + $0x50] sm:$0xf]
      %v733 = vld [vmem:[%s585 + $0x54] sm:$0x1]
      %v734 = vld [vmem:[%s585 + $0x58] sm:$0xf]
      %v735 = vld [vmem:[%s585 + $0x5c] sm:$0x1]
      %v736 = vld [vmem:[%s585 + $0x60] sm:$0xf]
      %v737 = vld [vmem:[%s585 + $0x64] sm:$0x1]
      %v738 = vld [vmem:[%s585 + $0x68] sm:$0xf]
      %v739 = vld [vmem:[%s585 + $0x6c] sm:$0x1]
      %v740 = vld [vmem:[%s585 + $0x70] sm:$0xf]
      %v741 = vld [vmem:[%s585 + $0x74] sm:$0x1]
      %v742 = vld [vmem:[%s585 + $0x78] sm:$0xf]
      %v743 = vld [vmem:[%s585 + $0x7c] sm:$0x1]
      %v744 = vld [vmem:[%s644] sm:$0xf]
      %v745 = vld [vmem:[%s644 + $0x4] sm:$0x1]
      %v746 = vmul.bf16 %v744, %v704
      %v747 = vmul.bf16 %v745, %v704
      %v748 = vld [vmem:[%s661] sm:$0xf]
      %v749 = vld [vmem:[%s661 + $0x4] sm:$0x1]
      %v750 = vmul.bf16 %v748, %v704
      %v751 = vmul.bf16 %v749, %v704
      %v752 = vld [vmem:[%s630] sm:$0xf]
      %v753 = vld [vmem:[%s630 + $0x4] sm:$0x1]
      %v754 = vld [vmem:[%s630 + $0x8] sm:$0xf]
      %v755 = vld [vmem:[%s630 + $0xc] sm:$0x1]
      %v756 = vld [vmem:[%s630 + $0x10] sm:$0xf]
      %v757 = vld [vmem:[%s630 + $0x14] sm:$0x1]
      %v758 = vld [vmem:[%s630 + $0x18] sm:$0xf]
      %v759 = vld [vmem:[%s630 + $0x1c] sm:$0x1]
      %v760 = vld [vmem:[%s630 + $0x20] sm:$0xf]
      %v761 = vld [vmem:[%s630 + $0x24] sm:$0x1]
      %v762 = vld [vmem:[%s630 + $0x28] sm:$0xf]
      %v763 = vld [vmem:[%s630 + $0x2c] sm:$0x1]
      %v764 = vld [vmem:[%s630 + $0x30] sm:$0xf]
      %v765 = vld [vmem:[%s630 + $0x34] sm:$0x1]
      %v766 = vld [vmem:[%s630 + $0x38] sm:$0xf]
      %v767 = vld [vmem:[%s630 + $0x3c] sm:$0x1]
      %v768 = vld [vmem:[%s630 + $0x40] sm:$0xf]
      %v769 = vld [vmem:[%s630 + $0x44] sm:$0x1]
      %v770 = vld [vmem:[%s630 + $0x48] sm:$0xf]
      %v771 = vld [vmem:[%s630 + $0x4c] sm:$0x1]
      %v772 = vld [vmem:[%s630 + $0x50] sm:$0xf]
      %v773 = vld [vmem:[%s630 + $0x54] sm:$0x1]
      %v774 = vld [vmem:[%s630 + $0x58] sm:$0xf]
      %v775 = vld [vmem:[%s630 + $0x5c] sm:$0x1]
      %v776 = vld [vmem:[%s630 + $0x60] sm:$0xf]
      %v777 = vld [vmem:[%s630 + $0x64] sm:$0x1]
      %v778 = vld [vmem:[%s630 + $0x68] sm:$0xf]
      %v779 = vld [vmem:[%s630 + $0x6c] sm:$0x1]
      %v780 = vld [vmem:[%s630 + $0x70] sm:$0xf]
      %v781 = vld [vmem:[%s630 + $0x74] sm:$0x1]
      %v782 = vld [vmem:[%s630 + $0x78] sm:$0xf]
      %v783 = vld [vmem:[%s630 + $0x7c] sm:$0x1]
      %v784 = vld [vmem:[%s6] sm:$0xf]
      %v785 = vld [vmem:[%s6 + $0x4] sm:$0xf]
      %v786 = vld [vmem:[%s6 + $0x8] sm:$0xf]
      %v787 = vld [vmem:[%s6 + $0xc] sm:$0xf]
      %v788 = vld [vmem:[%s6 + $0x10] sm:$0xf]
      %v789 = vld [vmem:[%s6 + $0x14] sm:$0xf]
      %v790 = vld [vmem:[%s6 + $0x18] sm:$0xf]
      %v791 = vld [vmem:[%s6 + $0x1c] sm:$0xf]
      %v792 = vld [vmem:[%s6 + $0x20] sm:$0xf]
      %v793 = vld [vmem:[%s6 + $0x24] sm:$0xf]
      %v794 = vld [vmem:[%s6 + $0x28] sm:$0xf]
      %v795 = vld [vmem:[%s6 + $0x2c] sm:$0xf]
      %v796 = vld [vmem:[%s6 + $0x30] sm:$0x3]
      %v797 = vld [vmem:[%s7] sm:$0x1]
      %vm798 = vsmask.f32 3328
      %vm799 = vsmask.f32 7440
      %vm800 = vmor %vm798, %vm799
      %v802 = vshrl.u32 %v706, 16
      %v804 = vrot.slane %v802, 4
      %v805 = vshll.u32 %v706, 16
      %v807 = vrot.slane %v805, 5
      %v808 = vor.u32 %v804, %v807
      %v809 = vrot.slane %v808, 4
      %v811 = vshll.u32 %v707, 16
      %v813 = vrot.slane %v811, 5
      %v814 = vsel %vm800, %v809, %v813
      %v816 = vshrl.u32 %v712, 16
      %v818 = vrot.slane %v816, 4
      %v819 = vshll.u32 %v712, 16
      %v821 = vrot.slane %v819, 5
      %v822 = vor.u32 %v818, %v821
      %v823 = vrot.slane %v822, 4
      %v825 = vshll.u32 %v713, 16
      %v827 = vrot.slane %v825, 5
      %v828 = vsel %vm800, %v823, %v827
      %v830 = vshrl.u32 %v714, 16
      %v832 = vrot.slane %v830, 4
      %v833 = vshll.u32 %v714, 16
      %v835 = vrot.slane %v833, 5
      %v836 = vor.u32 %v832, %v835
      %v837 = vrot.slane %v836, 4
      %v839 = vshll.u32 %v715, 16
      %v841 = vrot.slane %v839, 5
      %v842 = vsel %vm800, %v837, %v841
      %v844 = vshrl.u32 %v716, 16
      %v846 = vrot.slane %v844, 4
      %v847 = vshll.u32 %v716, 16
      %v849 = vrot.slane %v847, 5
      %v850 = vor.u32 %v846, %v849
      %v851 = vrot.slane %v850, 4
      %v853 = vshll.u32 %v717, 16
      %v855 = vrot.slane %v853, 5
      %v856 = vsel %vm800, %v851, %v855
      %v858 = vshrl.u32 %v718, 16
      %v860 = vrot.slane %v858, 4
      %v861 = vshll.u32 %v718, 16
      %v863 = vrot.slane %v861, 5
      %v864 = vor.u32 %v860, %v863
      %v865 = vrot.slane %v864, 4
      %v867 = vshll.u32 %v719, 16
      %v869 = vrot.slane %v867, 5
      %v870 = vsel %vm800, %v865, %v869
      %v872 = vshrl.u32 %v720, 16
      %v874 = vrot.slane %v872, 4
      %v875 = vshll.u32 %v720, 16
      %v877 = vrot.slane %v875, 5
      %v878 = vor.u32 %v874, %v877
      %v879 = vrot.slane %v878, 4
      %v881 = vshll.u32 %v721, 16
      %v883 = vrot.slane %v881, 5
      %v884 = vsel %vm800, %v879, %v883
      %v886 = vshrl.u32 %v722, 16
      %v888 = vrot.slane %v886, 4
      %v889 = vshll.u32 %v722, 16
      %v891 = vrot.slane %v889, 5
      %v892 = vor.u32 %v888, %v891
      %v893 = vrot.slane %v892, 4
      %v895 = vshll.u32 %v723, 16
      %v897 = vrot.slane %v895, 5
      %v898 = vsel %vm800, %v893, %v897
      %v900 = vshrl.u32 %v724, 16
      %v902 = vrot.slane %v900, 4
      %v903 = vshll.u32 %v724, 16
      %v905 = vrot.slane %v903, 5
      %v906 = vor.u32 %v902, %v905
      %v907 = vrot.slane %v906, 4
      %v909 = vshll.u32 %v725, 16
      %v911 = vrot.slane %v909, 5
      %v912 = vsel %vm800, %v907, %v911
      %v914 = vshrl.u32 %v726, 16
      %v916 = vrot.slane %v914, 4
      %v917 = vshll.u32 %v726, 16
      %v919 = vrot.slane %v917, 5
      %v920 = vor.u32 %v916, %v919
      %v921 = vrot.slane %v920, 4
      %v923 = vshll.u32 %v727, 16
      %v925 = vrot.slane %v923, 5
      %v926 = vsel %vm800, %v921, %v925
      %v928 = vshrl.u32 %v728, 16
      %v930 = vrot.slane %v928, 4
      %v931 = vshll.u32 %v728, 16
      %v933 = vrot.slane %v931, 5
      %v934 = vor.u32 %v930, %v933
      %v935 = vrot.slane %v934, 4
      %v937 = vshll.u32 %v729, 16
      %v939 = vrot.slane %v937, 5
      %v940 = vsel %vm800, %v935, %v939
      %v942 = vshrl.u32 %v730, 16
      %v944 = vrot.slane %v942, 4
      %v945 = vshll.u32 %v730, 16
      %v947 = vrot.slane %v945, 5
      %v948 = vor.u32 %v944, %v947
      %v949 = vrot.slane %v948, 4
      %v951 = vshll.u32 %v731, 16
      %v953 = vrot.slane %v951, 5
      %v954 = vsel %vm800, %v949, %v953
      %v956 = vshrl.u32 %v732, 16
      %v958 = vrot.slane %v956, 4
      %v959 = vshll.u32 %v732, 16
      %v961 = vrot.slane %v959, 5
      %v962 = vor.u32 %v958, %v961
      %v963 = vrot.slane %v962, 4
      %v965 = vshll.u32 %v733, 16
      %v967 = vrot.slane %v965, 5
      %v968 = vsel %vm800, %v963, %v967
      %v970 = vshrl.u32 %v734, 16
      %v972 = vrot.slane %v970, 4
      %v973 = vshll.u32 %v734, 16
      %v975 = vrot.slane %v973, 5
      %v976 = vor.u32 %v972, %v975
      %v977 = vrot.slane %v976, 4
      %v979 = vshll.u32 %v735, 16
      %v981 = vrot.slane %v979, 5
      %v982 = vsel %vm800, %v977, %v981
      %v984 = vshrl.u32 %v736, 16
      %v986 = vrot.slane %v984, 4
      %v987 = vshll.u32 %v736, 16
      %v989 = vrot.slane %v987, 5
      %v990 = vor.u32 %v986, %v989
      %v991 = vrot.slane %v990, 4
      %v993 = vshll.u32 %v737, 16
      %v995 = vrot.slane %v993, 5
      %v996 = vsel %vm800, %v991, %v995
      %v998 = vshrl.u32 %v738, 16
      %v1000 = vrot.slane %v998, 4
      %v1001 = vshll.u32 %v738, 16
      %v1003 = vrot.slane %v1001, 5
      %v1004 = vor.u32 %v1000, %v1003
      %v1005 = vrot.slane %v1004, 4
      %v1007 = vshll.u32 %v739, 16
      %v1009 = vrot.slane %v1007, 5
      %v1010 = vsel %vm800, %v1005, %v1009
      %v1012 = vshrl.u32 %v740, 16
      %v1014 = vrot.slane %v1012, 4
      %v1015 = vshll.u32 %v740, 16
      %v1017 = vrot.slane %v1015, 5
      %v1018 = vor.u32 %v1014, %v1017
      %v1019 = vrot.slane %v1018, 4
      %v1021 = vshll.u32 %v741, 16
      %v1023 = vrot.slane %v1021, 5
      %v1024 = vsel %vm800, %v1019, %v1023
      %v1026 = vshrl.u32 %v742, 16
      %v1028 = vrot.slane %v1026, 4
      %v1029 = vshll.u32 %v742, 16
      %v1031 = vrot.slane %v1029, 5
      %v1032 = vor.u32 %v1028, %v1031
      %v1033 = vrot.slane %v1032, 4
      %v1035 = vshll.u32 %v743, 16
      %v1037 = vrot.slane %v1035, 5
      %v1038 = vsel %vm800, %v1033, %v1037
      %v1040 = vshrl.u32 %v710, 16
      %v1042 = vrot.slane %v1040, 4
      %v1043 = vshll.u32 %v710, 16
      %v1045 = vrot.slane %v1043, 5
      %v1046 = vor.u32 %v1042, %v1045
      %v1047 = vrot.slane %v1046, 4
      %v1049 = vshll.u32 %v711, 16
      %v1051 = vrot.slane %v1049, 5
      %v1052 = vsel %vm800, %v1047, %v1051
      %v1069 = vunpack.c.l.b16 %v706
      %v1070 = vunpack.c.l.b16 %v712
      %v1071 = vunpack.c.l.b16 %v714
      %v1072 = vunpack.c.l.b16 %v716
      %v1073 = vunpack.c.l.b16 %v718
      %v1074 = vunpack.c.l.b16 %v720
      %v1075 = vunpack.c.l.b16 %v722
      %v1076 = vunpack.c.l.b16 %v724
      %v1077 = vunpack.c.l.b16 %v726
      %v1078 = vunpack.c.l.b16 %v728
      %v1079 = vunpack.c.l.b16 %v730
      %v1080 = vunpack.c.l.b16 %v732
      %v1081 = vunpack.c.l.b16 %v734
      %v1082 = vunpack.c.l.b16 %v736
      %v1083 = vunpack.c.l.b16 %v738
      %v1084 = vunpack.c.l.b16 %v740
      %v1085 = vpack.c.b16 %v1070, %v1069
      %v1086 = vpack.c.b16 %v1072, %v1071
      %v1087 = vpack.c.b16 %v1074, %v1073
      %v1088 = vpack.c.b16 %v1076, %v1075
      %v1089 = vpack.c.b16 %v1078, %v1077
      %v1090 = vpack.c.b16 %v1080, %v1079
      %v1091 = vpack.c.b16 %v1082, %v1081
      %v1092 = vpack.c.b16 %v1084, %v1083
      %v1109 = vunpack.c.l.b16 %v746
      %v1110 = vunpack.c.l.b16 %v752
      %v1111 = vunpack.c.l.b16 %v754
      %v1112 = vunpack.c.l.b16 %v756
      %v1113 = vunpack.c.l.b16 %v758
      %v1114 = vunpack.c.l.b16 %v760
      %v1115 = vunpack.c.l.b16 %v762
      %v1116 = vunpack.c.l.b16 %v764
      %v1117 = vunpack.c.l.b16 %v766
      %v1118 = vunpack.c.l.b16 %v768
      %v1119 = vunpack.c.l.b16 %v770
      %v1120 = vunpack.c.l.b16 %v772
      %v1121 = vunpack.c.l.b16 %v774
      %v1122 = vunpack.c.l.b16 %v776
      %v1123 = vunpack.c.l.b16 %v778
      %v1124 = vunpack.c.l.b16 %v780
      %v1125 = vpack.c.b16 %v1110, %v1109
      %v1126 = vpack.c.b16 %v1112, %v1111
      %v1127 = vpack.c.b16 %v1114, %v1113
      %v1128 = vpack.c.b16 %v1116, %v1115
      %v1129 = vpack.c.b16 %v1118, %v1117
      %v1130 = vpack.c.b16 %v1120, %v1119
      %v1131 = vpack.c.b16 %v1122, %v1121
      %v1132 = vpack.c.b16 %v1124, %v1123
      %1133 = vrot.lane.b32.xlu0 %v1125, 11
      %v1134 = vpop.permute.xlu0 %1133
      %1135 = vrot.lane.b32.xlu0 %v1126, 11
      %v1136 = vpop.permute.xlu0 %1135
      %1137 = vrot.lane.b32.xlu0 %v1127, 11
      %v1138 = vpop.permute.xlu0 %1137
      %1139 = vrot.lane.b32.xlu0 %v1128, 11
      %v1140 = vpop.permute.xlu0 %1139
      %1141 = vrot.lane.b32.xlu0 %v1129, 11
      %v1142 = vpop.permute.xlu0 %1141
      %1143 = vrot.lane.b32.xlu0 %v1130, 11
      %v1144 = vpop.permute.xlu0 %1143
      %1145 = vrot.lane.b32.xlu0 %v1131, 11
      %v1146 = vpop.permute.xlu0 %1145
      %1147 = vrot.lane.b32.xlu0 %v1132, 11
      %v1148 = vpop.permute.xlu0 %1147
      %v1149 = vunpack.c.l.b16 %v814
      %v1150 = vunpack.c.l.b16 %v828
      %v1151 = vunpack.c.l.b16 %v842
      %v1152 = vunpack.c.l.b16 %v856
      %v1153 = vunpack.c.l.b16 %v870
      %v1154 = vunpack.c.l.b16 %v884
      %v1155 = vunpack.c.l.b16 %v898
      %v1156 = vunpack.c.l.b16 %v912
      %v1157 = vunpack.c.l.b16 %v926
      %v1158 = vunpack.c.l.b16 %v940
      %v1159 = vunpack.c.l.b16 %v954
      %v1160 = vunpack.c.l.b16 %v968
      %v1161 = vunpack.c.l.b16 %v982
      %v1162 = vunpack.c.l.b16 %v996
      %v1163 = vunpack.c.l.b16 %v1010
      %v1164 = vunpack.c.l.b16 %v1024
      %v1165 = vpack.c.b16 %v1150, %v1149
      %v1166 = vpack.c.b16 %v1152, %v1151
      %v1167 = vpack.c.b16 %v1154, %v1153
      %v1168 = vpack.c.b16 %v1156, %v1155
      %v1169 = vpack.c.b16 %v1158, %v1157
      %v1170 = vpack.c.b16 %v1160, %v1159
      %v1171 = vpack.c.b16 %v1162, %v1161
      %v1172 = vpack.c.b16 %v1164, %v1163
      %1173 = vrot.lane.b32.xlu0 %v1165, 22
      %v1174 = vpop.permute.xlu0 %1173
      %1175 = vrot.lane.b32.xlu0 %v1166, 22
      %v1176 = vpop.permute.xlu0 %1175
      %1177 = vrot.lane.b32.xlu0 %v1167, 22
      %v1178 = vpop.permute.xlu0 %1177
      %1179 = vrot.lane.b32.xlu0 %v1168, 22
      %v1180 = vpop.permute.xlu0 %1179
      %1181 = vrot.lane.b32.xlu0 %v1169, 22
      %v1182 = vpop.permute.xlu0 %1181
      %1183 = vrot.lane.b32.xlu0 %v1170, 22
      %v1184 = vpop.permute.xlu0 %1183
      %1185 = vrot.lane.b32.xlu0 %v1171, 22
      %v1186 = vpop.permute.xlu0 %1185
      %1187 = vrot.lane.b32.xlu0 %v1172, 22
      %v1188 = vpop.permute.xlu0 %1187
      %v1190 = vunpack.c.l.b16 %v742
      %v1191 = vpack.c.b16 %v1071, %v1070
      %v1192 = vpack.c.b16 %v1073, %v1072
      %v1193 = vpack.c.b16 %v1075, %v1074
      %v1194 = vpack.c.b16 %v1077, %v1076
      %v1195 = vpack.c.b16 %v1079, %v1078
      %v1196 = vpack.c.b16 %v1081, %v1080
      %v1197 = vpack.c.b16 %v1083, %v1082
      %v1198 = vpack.c.b16 %v1190, %v1084
      %1199 = vrot.lane.b32.xlu0 %v1191, 33
      %v1200 = vpop.permute.xlu0 %1199
      %1201 = vrot.lane.b32.xlu0 %v1192, 33
      %v1202 = vpop.permute.xlu0 %1201
      %1203 = vrot.lane.b32.xlu0 %v1193, 33
      %v1204 = vpop.permute.xlu0 %1203
      %1205 = vrot.lane.b32.xlu0 %v1194, 33
      %v1206 = vpop.permute.xlu0 %1205
      %1207 = vrot.lane.b32.xlu0 %v1195, 33
      %v1208 = vpop.permute.xlu0 %1207
      %1209 = vrot.lane.b32.xlu0 %v1196, 33
      %v1210 = vpop.permute.xlu0 %1209
      %1211 = vrot.lane.b32.xlu0 %v1197, 33
      %v1212 = vpop.permute.xlu0 %1211
      %1213 = vrot.lane.b32.xlu0 %v1198, 33
      %v1214 = vpop.permute.xlu0 %1213
      %v1216 = vunpack.c.l.b16 %v782
      %v1217 = vpack.c.b16 %v1111, %v1110
      %v1218 = vpack.c.b16 %v1113, %v1112
      %v1219 = vpack.c.b16 %v1115, %v1114
      %v1220 = vpack.c.b16 %v1117, %v1116
      %v1221 = vpack.c.b16 %v1119, %v1118
      %v1222 = vpack.c.b16 %v1121, %v1120
      %v1223 = vpack.c.b16 %v1123, %v1122
      %v1224 = vpack.c.b16 %v1216, %v1124
      %1225 = vrot.lane.b32.xlu0 %v1217, 44
      %v1226 = vpop.permute.xlu0 %1225
      %1227 = vrot.lane.b32.xlu0 %v1218, 44
      %v1228 = vpop.permute.xlu0 %1227
      %1229 = vrot.lane.b32.xlu0 %v1219, 44
      %v1230 = vpop.permute.xlu0 %1229
      %1231 = vrot.lane.b32.xlu0 %v1220, 44
      %v1232 = vpop.permute.xlu0 %1231
      %1233 = vrot.lane.b32.xlu0 %v1221, 44
      %v1234 = vpop.permute.xlu0 %1233
      %1235 = vrot.lane.b32.xlu0 %v1222, 44
      %v1236 = vpop.permute.xlu0 %1235
      %1237 = vrot.lane.b32.xlu0 %v1223, 44
      %v1238 = vpop.permute.xlu0 %1237
      %1239 = vrot.lane.b32.xlu0 %v1224, 44
      %v1240 = vpop.permute.xlu0 %1239
      %v1241 = vunpack.c.l.b16 %v1038
      %v1242 = vpack.c.b16 %v1151, %v1150
      %v1243 = vpack.c.b16 %v1153, %v1152
      %v1244 = vpack.c.b16 %v1155, %v1154
      %v1245 = vpack.c.b16 %v1157, %v1156
      %v1246 = vpack.c.b16 %v1159, %v1158
      %v1247 = vpack.c.b16 %v1161, %v1160
      %v1248 = vpack.c.b16 %v1163, %v1162
      %v1249 = vpack.c.b16 %v1241, %v1164
      %1250 = vrot.lane.b32.xlu0 %v1242, 55
      %v1251 = vpop.permute.xlu0 %1250
      %1252 = vrot.lane.b32.xlu0 %v1243, 55
      %v1253 = vpop.permute.xlu0 %1252
      %1254 = vrot.lane.b32.xlu0 %v1244, 55
      %v1255 = vpop.permute.xlu0 %1254
      %1256 = vrot.lane.b32.xlu0 %v1245, 55
      %v1257 = vpop.permute.xlu0 %1256
      %1258 = vrot.lane.b32.xlu0 %v1246, 55
      %v1259 = vpop.permute.xlu0 %1258
      %1260 = vrot.lane.b32.xlu0 %v1247, 55
      %v1261 = vpop.permute.xlu0 %1260
      %1262 = vrot.lane.b32.xlu0 %v1248, 55
      %v1263 = vpop.permute.xlu0 %1262
      %1264 = vrot.lane.b32.xlu0 %v1249, 55
      %v1265 = vpop.permute.xlu0 %1264
      %v1267 = vunpack.c.l.b16 %v710
      %v1268 = vpack.c.b16 %v1267, %v1190
      %1269 = vrot.lane.b32.xlu0 %v1086, 66
      %v1270 = vpop.permute.xlu0 %1269
      %1271 = vrot.lane.b32.xlu0 %v1087, 66
      %v1272 = vpop.permute.xlu0 %1271
      %1273 = vrot.lane.b32.xlu0 %v1088, 66
      %v1274 = vpop.permute.xlu0 %1273
      %1275 = vrot.lane.b32.xlu0 %v1089, 66
      %v1276 = vpop.permute.xlu0 %1275
      %1277 = vrot.lane.b32.xlu0 %v1090, 66
      %v1278 = vpop.permute.xlu0 %1277
      %1279 = vrot.lane.b32.xlu0 %v1091, 66
      %v1280 = vpop.permute.xlu0 %1279
      %1281 = vrot.lane.b32.xlu0 %v1092, 66
      %v1282 = vpop.permute.xlu0 %1281
      %1283 = vrot.lane.b32.xlu0 %v1268, 66
      %v1284 = vpop.permute.xlu0 %1283
      %v1286 = vunpack.c.l.b16 %v750
      %v1287 = vpack.c.b16 %v1286, %v1216
      %1288 = vrot.lane.b32.xlu0 %v1126, 77
      %v1289 = vpop.permute.xlu0 %1288
      %1290 = vrot.lane.b32.xlu0 %v1127, 77
      %v1291 = vpop.permute.xlu0 %1290
      %1292 = vrot.lane.b32.xlu0 %v1128, 77
      %v1293 = vpop.permute.xlu0 %1292
      %1294 = vrot.lane.b32.xlu0 %v1129, 77
      %v1295 = vpop.permute.xlu0 %1294
      %1296 = vrot.lane.b32.xlu0 %v1130, 77
      %v1297 = vpop.permute.xlu0 %1296
      %1298 = vrot.lane.b32.xlu0 %v1131, 77
      %v1299 = vpop.permute.xlu0 %1298
      %1300 = vrot.lane.b32.xlu0 %v1132, 77
      %v1301 = vpop.permute.xlu0 %1300
      %1302 = vrot.lane.b32.xlu0 %v1287, 77
      %v1303 = vpop.permute.xlu0 %1302
      %v1304 = vunpack.c.l.b16 %v1052
      %v1305 = vpack.c.b16 %v1304, %v1241
      %1306 = vrot.lane.b32.xlu0 %v1166, 88
      %v1307 = vpop.permute.xlu0 %1306
      %1308 = vrot.lane.b32.xlu0 %v1167, 88
      %v1309 = vpop.permute.xlu0 %1308
      %1310 = vrot.lane.b32.xlu0 %v1168, 88
      %v1311 = vpop.permute.xlu0 %1310
      %1312 = vrot.lane.b32.xlu0 %v1169, 88
      %v1313 = vpop.permute.xlu0 %1312
      %1314 = vrot.lane.b32.xlu0 %v1170, 88
      %v1315 = vpop.permute.xlu0 %1314
      %1316 = vrot.lane.b32.xlu0 %v1171, 88
      %v1317 = vpop.permute.xlu0 %1316
      %1318 = vrot.lane.b32.xlu0 %v1172, 88
      %v1319 = vpop.permute.xlu0 %1318
      %1320 = vrot.lane.b32.xlu0 %v1305, 88
      %v1321 = vpop.permute.xlu0 %1320
      %vm1322 = vcmask 89088
      %v1325 = vsel %vm1322, %v1085, %v1134
      %v1328 = vsel %vm1322, %v1086, %v1136
      %v1331 = vsel %vm1322, %v1087, %v1138
      %v1334 = vsel %vm1322, %v1088, %v1140
      %v1337 = vsel %vm1322, %v1089, %v1142
      %v1340 = vsel %vm1322, %v1090, %v1144
      %v1343 = vsel %vm1322, %v1091, %v1146
      %v1346 = vsel %vm1322, %v1092, %v1148
      %vm1347 = vcmask 179200
      %v1349 = vsel %vm1347, %v1325, %v1174
      %v1351 = vsel %vm1347, %v1328, %v1176
      %v1353 = vsel %vm1347, %v1331, %v1178
      %v1355 = vsel %vm1347, %v1334, %v1180
      %v1357 = vsel %vm1347, %v1337, %v1182
      %v1359 = vsel %vm1347, %v1340, %v1184
      %v1361 = vsel %vm1347, %v1343, %v1186
      %v1363 = vsel %vm1347, %v1346, %v1188
      %vm1364 = vcmask 269312
      %v1366 = vsel %vm1364, %v1349, %v1200
      %v1368 = vsel %vm1364, %v1351, %v1202
      %v1370 = vsel %vm1364, %v1353, %v1204
      %v1372 = vsel %vm1364, %v1355, %v1206
      %v1374 = vsel %vm1364, %v1357, %v1208
      %v1376 = vsel %vm1364, %v1359, %v1210
      %v1378 = vsel %vm1364, %v1361, %v1212
      %v1380 = vsel %vm1364, %v1363, %v1214
      %vm1381 = vcmask 359424
      %v1383 = vsel %vm1381, %v1366, %v1226
      %v1385 = vsel %vm1381, %v1368, %v1228
      %v1387 = vsel %vm1381, %v1370, %v1230
      %v1389 = vsel %vm1381, %v1372, %v1232
      %v1391 = vsel %vm1381, %v1374, %v1234
      %v1393 = vsel %vm1381, %v1376, %v1236
      %v1395 = vsel %vm1381, %v1378, %v1238
      %v1397 = vsel %vm1381, %v1380, %v1240
      %vm1398 = vcmask 449536
      %v1400 = vsel %vm1398, %v1383, %v1251
      %v1402 = vsel %vm1398, %v1385, %v1253
      %v1404 = vsel %vm1398, %v1387, %v1255
      %v1406 = vsel %vm1398, %v1389, %v1257
      %v1408 = vsel %vm1398, %v1391, %v1259
      %v1410 = vsel %vm1398, %v1393, %v1261
      %v1412 = vsel %vm1398, %v1395, %v1263
      %v1414 = vsel %vm1398, %v1397, %v1265
      %vm1415 = vcmask 539648
      %v1417 = vsel %vm1415, %v1400, %v1270
      %v1419 = vsel %vm1415, %v1402, %v1272
      %v1421 = vsel %vm1415, %v1404, %v1274
      %v1423 = vsel %vm1415, %v1406, %v1276
      %v1425 = vsel %vm1415, %v1408, %v1278
      %v1427 = vsel %vm1415, %v1410, %v1280
      %v1429 = vsel %vm1415, %v1412, %v1282
      %v1431 = vsel %vm1415, %v1414, %v1284
      %vm1432 = vcmask 629760
      %v1434 = vsel %vm1432, %v1417, %v1289
      %v1436 = vsel %vm1432, %v1419, %v1291
      %v1438 = vsel %vm1432, %v1421, %v1293
      %v1440 = vsel %vm1432, %v1423, %v1295
      %v1442 = vsel %vm1432, %v1425, %v1297
      %v1444 = vsel %vm1432, %v1427, %v1299
      %v1446 = vsel %vm1432, %v1429, %v1301
      %v1448 = vsel %vm1432, %v1431, %v1303
      %vm1449 = vcmask 719872
      %v1451 = vsel %vm1449, %v1434, %v1307
      %v1453 = vsel %vm1449, %v1436, %v1309
      %v1455 = vsel %vm1449, %v1438, %v1311
      %v1457 = vsel %vm1449, %v1440, %v1313
      %v1459 = vsel %vm1449, %v1442, %v1315
      %v1461 = vsel %vm1449, %v1444, %v1317
      %v1463 = vsel %vm1449, %v1446, %v1319
      %v1465 = vsel %vm1449, %v1448, %v1321
      %v1467 = vlaneseq
      %v1468 = vshrl.u32 %v1467, 7
      %v1469 = vsub.s32 0, %v1468
      %v1470 = vrot.slane %v797, %v1469
      %v1485 = vunpack.c.l.b16 %v784
      %v1486 = vunpack.c.l.b16 %v785
      %v1487 = vunpack.c.l.b16 %v786
      %v1488 = vunpack.c.l.b16 %v787
      %v1489 = vunpack.c.l.b16 %v788
      %v1490 = vunpack.c.l.b16 %v789
      %v1491 = vunpack.c.l.b16 %v790
      %v1492 = vunpack.c.l.b16 %v791
      %v1493 = vunpack.c.l.b16 %v792
      %v1494 = vunpack.c.l.b16 %v793
      %v1495 = vunpack.c.l.b16 %v794
      %v1496 = vunpack.c.l.b16 %v795
      %v1497 = vunpack.c.l.b16 %v796
      %v1498 = vpack.c.b16 %v1486, %v1485
      %v1499 = vpack.c.b16 %v1488, %v1487
      %v1500 = vpack.c.b16 %v1490, %v1489
      %v1501 = vpack.c.b16 %v1492, %v1491
      %v1502 = vpack.c.b16 %v1494, %v1493
      %v1503 = vpack.c.b16 %v1496, %v1495
      %v1504 = vpack.c.b16 %v1497, %v1497
      %vm1511 = vcmask 809984
      %v1512 = vsel %vm1511, %v1451, 0
      %v1514 = vsel %vm1511, %v1453, 0
      %v1516 = vsel %vm1511, %v1455, 0
      %v1518 = vsel %vm1511, %v1457, 0
      %v1520 = vsel %vm1511, %v1459, 0
      %v1522 = vsel %vm1511, %v1461, 0
      %v1524 = vsel %vm1511, %v1463, 0
      %v1526 = vsel %vm1511, %v1465, 0
      %vm1528 = vcmask 1040384
      %vm1529 = vcmask 1041408
      %v1530 = vsel %vm1528, 4294967295, 65535
      %v1531 = vsel %vm1529, %v1530, 0
      %v1533 = vand.u32 %v1504, %v1531
      %1535 = vmatprep.subr.bf16.mxu0 0
      %1536 = vmatpush1.bf16.msra.mxu0 0
      %1537 = vmatprep.subr.bf16.mxu0 0
      %1538 = vmatpush1.bf16.msra.mxu0 %v1533
      %1539 = vmatprep.subr.bf16.mxu0 0
      %1540 = vmatpush1.bf16.msra.mxu0 %v1503
      %1541 = vmatprep.subr.bf16.mxu0 0
      %1542 = vmatpush1.bf16.msra.mxu0 %v1502
      %1543 = vmatprep.subr.bf16.mxu0 0
      %1544 = vmatpush1.bf16.msra.mxu0 %v1501
      %1545 = vmatprep.subr.bf16.mxu0 0
      %1546 = vmatpush1.bf16.msra.mxu0 %v1500
      %1547 = vmatprep.subr.bf16.mxu0 0
      %1548 = vmatpush1.bf16.msra.mxu0 %v1499
      %1549 = vmatprep.subr.bf16.mxu0 0
      %1550 = vmatpush1.bf16.msra.mxu0 %v1498
      %1551 = vmatprep.subr.bf16.mxu0 0
      %1552 = vmatpush2.bf16.msra.mxu0 0
      %1553 = vmatprep.subr.bf16.mxu0 0
      %1554 = vmatpush2.bf16.msra.mxu0 0
      %1555 = vmatprep.subr.bf16.mxu0 0
      %1556 = vmatpush2.bf16.msra.mxu0 0
      %1557 = vmatprep.subr.bf16.mxu0 0
      %1558 = vmatpush2.bf16.msra.mxu0 0
      %1559 = vmatprep.subr.bf16.mxu0 0
      %1560 = vmatpush2.bf16.msra.mxu0 0
      %1561 = vmatprep.subr.bf16.mxu0 0
      %1562 = vmatpush2.bf16.msra.mxu0 0
      %1563 = vmatprep.subr.bf16.mxu0 0
      %1564 = vmatpush2.bf16.msra.mxu0 0
      %1565 = vmatprep.subr.bf16.mxu0 0
      %1566 = vmatpush2.bf16.msra.mxu0 0
      %1567 = vmatprep.mubr.bf16.mxu0 0
      %1568 = vmatmul.mubr.bf16.gmra.mxu0 %v1512
      %v1569 = vpop.f32.mrf.mxu0
      %v1570 = vadd.f32 %v1470, %v1569
      %v1571 = vpop.f32.mrf.mxu0
      %v1572 = vpop.f32.mrf.mxu0
      %v1573 = vadd.f32 %v1470, %v1572
      %v1574 = vpop.f32.mrf.mxu0
      %1575 = vmatprep.mubr.bf16.mxu0 0
      %1576 = vmatmul.mubr.bf16.gmra.mxu0 %v1514
      %v1577 = vpop.f32.mrf.mxu0
      %v1578 = vadd.f32 %v1470, %v1577
      %v1579 = vpop.f32.mrf.mxu0
      %v1580 = vpop.f32.mrf.mxu0
      %v1581 = vadd.f32 %v1470, %v1580
      %v1582 = vpop.f32.mrf.mxu0
      %1583 = vmatprep.mubr.bf16.mxu0 0
      %1584 = vmatmul.mubr.bf16.gmra.mxu0 %v1516
      %v1585 = vpop.f32.mrf.mxu0
      %v1586 = vadd.f32 %v1470, %v1585
      %v1587 = vpop.f32.mrf.mxu0
      %v1588 = vpop.f32.mrf.mxu0
      %v1589 = vadd.f32 %v1470, %v1588
      %v1590 = vpop.f32.mrf.mxu0
      %1591 = vmatprep.mubr.bf16.mxu0 0
      %1592 = vmatmul.mubr.bf16.gmra.mxu0 %v1518
      %v1593 = vpop.f32.mrf.mxu0
      %v1594 = vadd.f32 %v1470, %v1593
      %v1595 = vpop.f32.mrf.mxu0
      %v1596 = vpop.f32.mrf.mxu0
      %v1597 = vadd.f32 %v1470, %v1596
      %v1598 = vpop.f32.mrf.mxu0
      %1599 = vmatprep.mubr.bf16.mxu0 0
      %1600 = vmatmul.mubr.bf16.gmra.mxu0 %v1520
      %v1601 = vpop.f32.mrf.mxu0
      %v1602 = vadd.f32 %v1470, %v1601
      %v1603 = vpop.f32.mrf.mxu0
      %v1604 = vpop.f32.mrf.mxu0
      %v1605 = vadd.f32 %v1470, %v1604
      %v1606 = vpop.f32.mrf.mxu0
      %1607 = vmatprep.mubr.bf16.mxu0 0
      %1608 = vmatmul.mubr.bf16.gmra.mxu0 %v1522
      %v1609 = vpop.f32.mrf.mxu0
      %v1610 = vadd.f32 %v1470, %v1609
      %v1611 = vpop.f32.mrf.mxu0
      %v1612 = vpop.f32.mrf.mxu0
      %v1613 = vadd.f32 %v1470, %v1612
      %v1614 = vpop.f32.mrf.mxu0
      %1615 = vmatprep.mubr.bf16.mxu0 0
      %1616 = vmatmul.mubr.bf16.gmra.mxu0 %v1524
      %v1617 = vpop.f32.mrf.mxu0
      %v1618 = vadd.f32 %v1470, %v1617
      %v1619 = vpop.f32.mrf.mxu0
      %v1620 = vpop.f32.mrf.mxu0
      %v1621 = vadd.f32 %v1470, %v1620
      %v1622 = vpop.f32.mrf.mxu0
      %1623 = vmatprep.mubr.bf16.mxu0 0
      %1624 = vmatmul.mubr.bf16.gmra.mxu0 %v1526
      %v1625 = vpop.f32.mrf.mxu0
      %v1626 = vadd.f32 %v1470, %v1625
      %v1627 = vpop.f32.mrf.mxu0
      %v1628 = vpop.f32.mrf.mxu0
      %v1629 = vadd.f32 %v1470, %v1628
      %v1630 = vpop.f32.mrf.mxu0
      %1631 = vdwg.mxu0
      %v1632 = vmax.f32 %v1570, 0.0
      %v1633 = vmax.f32 %v1573, 0.0
      %v1634 = vmax.f32 %v1578, 0.0
      %v1635 = vmax.f32 %v1581, 0.0
      %v1636 = vmax.f32 %v1586, 0.0
      %v1637 = vmax.f32 %v1589, 0.0
      %v1638 = vmax.f32 %v1594, 0.0
      %v1639 = vmax.f32 %v1597, 0.0
      %v1640 = vmax.f32 %v1602, 0.0
      %v1641 = vmax.f32 %v1605, 0.0
      %v1642 = vmax.f32 %v1610, 0.0
      %v1643 = vmax.f32 %v1613, 0.0
      %v1644 = vmax.f32 %v1618, 0.0
      %v1645 = vmax.f32 %v1621, 0.0
      %v1646 = vmax.f32 %v1626, 0.0
      %v1647 = vmax.f32 %v1629, 0.0
      %v1649 = vshrl.u32 %v746, 16
      %v1651 = vrot.slane %v1649, 4
      %v1652 = vshll.u32 %v746, 16
      %v1654 = vrot.slane %v1652, 5
      %v1655 = vor.u32 %v1651, %v1654
      %v1656 = vrot.slane %v1655, 4
      %v1658 = vshll.u32 %v747, 16
      %v1660 = vrot.slane %v1658, 5
      %v1661 = vsel %vm800, %v1656, %v1660
      %v1663 = vshrl.u32 %v752, 16
      %v1665 = vrot.slane %v1663, 4
      %v1666 = vshll.u32 %v752, 16
      %v1668 = vrot.slane %v1666, 5
      %v1669 = vor.u32 %v1665, %v1668
      %v1670 = vrot.slane %v1669, 4
      %v1672 = vshll.u32 %v753, 16
      %v1674 = vrot.slane %v1672, 5
      %v1675 = vsel %vm800, %v1670, %v1674
      %v1677 = vshrl.u32 %v754, 16
      %v1679 = vrot.slane %v1677, 4
      %v1680 = vshll.u32 %v754, 16
      %v1682 = vrot.slane %v1680, 5
      %v1683 = vor.u32 %v1679, %v1682
      %v1684 = vrot.slane %v1683, 4
      %v1686 = vshll.u32 %v755, 16
      %v1688 = vrot.slane %v1686, 5
      %v1689 = vsel %vm800, %v1684, %v1688
      %v1691 = vshrl.u32 %v756, 16
      %v1693 = vrot.slane %v1691, 4
      %v1694 = vshll.u32 %v756, 16
      %v1696 = vrot.slane %v1694, 5
      %v1697 = vor.u32 %v1693, %v1696
      %v1698 = vrot.slane %v1697, 4
      %v1700 = vshll.u32 %v757, 16
      %v1702 = vrot.slane %v1700, 5
      %v1703 = vsel %vm800, %v1698, %v1702
      %v1705 = vshrl.u32 %v758, 16
      %v1707 = vrot.slane %v1705, 4
      %v1708 = vshll.u32 %v758, 16
      %v1710 = vrot.slane %v1708, 5
      %v1711 = vor.u32 %v1707, %v1710
      %v1712 = vrot.slane %v1711, 4
      %v1714 = vshll.u32 %v759, 16
      %v1716 = vrot.slane %v1714, 5
      %v1717 = vsel %vm800, %v1712, %v1716
      %v1719 = vshrl.u32 %v760, 16
      %v1721 = vrot.slane %v1719, 4
      %v1722 = vshll.u32 %v760, 16
      %v1724 = vrot.slane %v1722, 5
      %v1725 = vor.u32 %v1721, %v1724
      %v1726 = vrot.slane %v1725, 4
      %v1728 = vshll.u32 %v761, 16
      %v1730 = vrot.slane %v1728, 5
      %v1731 = vsel %vm800, %v1726, %v1730
      %v1733 = vshrl.u32 %v762, 16
      %v1735 = vrot.slane %v1733, 4
      %v1736 = vshll.u32 %v762, 16
      %v1738 = vrot.slane %v1736, 5
      %v1739 = vor.u32 %v1735, %v1738
      %v1740 = vrot.slane %v1739, 4
      %v1742 = vshll.u32 %v763, 16
      %v1744 = vrot.slane %v1742, 5
      %v1745 = vsel %vm800, %v1740, %v1744
      %v1747 = vshrl.u32 %v764, 16
      %v1749 = vrot.slane %v1747, 4
      %v1750 = vshll.u32 %v764, 16
      %v1752 = vrot.slane %v1750, 5
      %v1753 = vor.u32 %v1749, %v1752
      %v1754 = vrot.slane %v1753, 4
      %v1756 = vshll.u32 %v765, 16
      %v1758 = vrot.slane %v1756, 5
      %v1759 = vsel %vm800, %v1754, %v1758
      %v1761 = vshrl.u32 %v766, 16
      %v1763 = vrot.slane %v1761, 4
      %v1764 = vshll.u32 %v766, 16
      %v1766 = vrot.slane %v1764, 5
      %v1767 = vor.u32 %v1763, %v1766
      %v1768 = vrot.slane %v1767, 4
      %v1770 = vshll.u32 %v767, 16
      %v1772 = vrot.slane %v1770, 5
      %v1773 = vsel %vm800, %v1768, %v1772
      %v1775 = vshrl.u32 %v768, 16
      %v1777 = vrot.slane %v1775, 4
      %v1778 = vshll.u32 %v768, 16
      %v1780 = vrot.slane %v1778, 5
      %v1781 = vor.u32 %v1777, %v1780
      %v1782 = vrot.slane %v1781, 4
      %v1784 = vshll.u32 %v769, 16
      %v1786 = vrot.slane %v1784, 5
      %v1787 = vsel %vm800, %v1782, %v1786
      %v1789 = vshrl.u32 %v770, 16
      %v1791 = vrot.slane %v1789, 4
      %v1792 = vshll.u32 %v770, 16
      %v1794 = vrot.slane %v1792, 5
      %v1795 = vor.u32 %v1791, %v1794
      %v1796 = vrot.slane %v1795, 4
      %v1798 = vshll.u32 %v771, 16
      %v1800 = vrot.slane %v1798, 5
      %v1801 = vsel %vm800, %v1796, %v1800
      %v1803 = vshrl.u32 %v772, 16
      %v1805 = vrot.slane %v1803, 4
      %v1806 = vshll.u32 %v772, 16
      %v1808 = vrot.slane %v1806, 5
      %v1809 = vor.u32 %v1805, %v1808
      %v1810 = vrot.slane %v1809, 4
      %v1812 = vshll.u32 %v773, 16
      %v1814 = vrot.slane %v1812, 5
      %v1815 = vsel %vm800, %v1810, %v1814
      %v1817 = vshrl.u32 %v774, 16
      %v1819 = vrot.slane %v1817, 4
      %v1820 = vshll.u32 %v774, 16
      %v1822 = vrot.slane %v1820, 5
      %v1823 = vor.u32 %v1819, %v1822
      %v1824 = vrot.slane %v1823, 4
      %v1826 = vshll.u32 %v775, 16
      %v1828 = vrot.slane %v1826, 5
      %v1829 = vsel %vm800, %v1824, %v1828
      %v1831 = vshrl.u32 %v776, 16
      %v1833 = vrot.slane %v1831, 4
      %v1834 = vshll.u32 %v776, 16
      %v1836 = vrot.slane %v1834, 5
      %v1837 = vor.u32 %v1833, %v1836
      %v1838 = vrot.slane %v1837, 4
      %v1840 = vshll.u32 %v777, 16
      %v1842 = vrot.slane %v1840, 5
      %v1843 = vsel %vm800, %v1838, %v1842
      %v1845 = vshrl.u32 %v778, 16
      %v1847 = vrot.slane %v1845, 4
      %v1848 = vshll.u32 %v778, 16
      %v1850 = vrot.slane %v1848, 5
      %v1851 = vor.u32 %v1847, %v1850
      %v1852 = vrot.slane %v1851, 4
      %v1854 = vshll.u32 %v779, 16
      %v1856 = vrot.slane %v1854, 5
      %v1857 = vsel %vm800, %v1852, %v1856
      %v1859 = vshrl.u32 %v780, 16
      %v1861 = vrot.slane %v1859, 4
      %v1862 = vshll.u32 %v780, 16
      %v1864 = vrot.slane %v1862, 5
      %v1865 = vor.u32 %v1861, %v1864
      %v1866 = vrot.slane %v1865, 4
      %v1868 = vshll.u32 %v781, 16
      %v1870 = vrot.slane %v1868, 5
      %v1871 = vsel %vm800, %v1866, %v1870
      %v1873 = vshrl.u32 %v782, 16
      %v1875 = vrot.slane %v1873, 4
      %v1876 = vshll.u32 %v782, 16
      %v1878 = vrot.slane %v1876, 5
      %v1879 = vor.u32 %v1875, %v1878
      %v1880 = vrot.slane %v1879, 4
      %v1882 = vshll.u32 %v783, 16
      %v1884 = vrot.slane %v1882, 5
      %v1885 = vsel %vm800, %v1880, %v1884
      %v1887 = vshrl.u32 %v750, 16
      %v1889 = vrot.slane %v1887, 4
      %v1890 = vshll.u32 %v750, 16
      %v1892 = vrot.slane %v1890, 5
      %v1893 = vor.u32 %v1889, %v1892
      %v1894 = vrot.slane %v1893, 4
      %v1896 = vshll.u32 %v751, 16
      %v1898 = vrot.slane %v1896, 5
      %v1899 = vsel %vm800, %v1894, %v1898
      %1900 = vrot.lane.b32.xlu0 %v1165, 11
      %v1901 = vpop.permute.xlu0 %1900
      %1902 = vrot.lane.b32.xlu0 %v1166, 11
      %v1903 = vpop.permute.xlu0 %1902
      %1904 = vrot.lane.b32.xlu0 %v1167, 11
      %v1905 = vpop.permute.xlu0 %1904
      %1906 = vrot.lane.b32.xlu0 %v1168, 11
      %v1907 = vpop.permute.xlu0 %1906
      %1908 = vrot.lane.b32.xlu0 %v1169, 11
      %v1909 = vpop.permute.xlu0 %1908
      %1910 = vrot.lane.b32.xlu0 %v1170, 11
      %v1911 = vpop.permute.xlu0 %1910
      %1912 = vrot.lane.b32.xlu0 %v1171, 11
      %v1913 = vpop.permute.xlu0 %1912
      %1914 = vrot.lane.b32.xlu0 %v1172, 11
      %v1915 = vpop.permute.xlu0 %1914
      %v1916 = vunpack.c.l.b16 %v1661
      %v1917 = vunpack.c.l.b16 %v1675
      %v1918 = vunpack.c.l.b16 %v1689
      %v1919 = vunpack.c.l.b16 %v1703
      %v1920 = vunpack.c.l.b16 %v1717
      %v1921 = vunpack.c.l.b16 %v1731
      %v1922 = vunpack.c.l.b16 %v1745
      %v1923 = vunpack.c.l.b16 %v1759
      %v1924 = vunpack.c.l.b16 %v1773
      %v1925 = vunpack.c.l.b16 %v1787
      %v1926 = vunpack.c.l.b16 %v1801
      %v1927 = vunpack.c.l.b16 %v1815
      %v1928 = vunpack.c.l.b16 %v1829
      %v1929 = vunpack.c.l.b16 %v1843
      %v1930 = vunpack.c.l.b16 %v1857
      %v1931 = vunpack.c.l.b16 %v1871
      %v1932 = vpack.c.b16 %v1917, %v1916
      %v1933 = vpack.c.b16 %v1919, %v1918
      %v1934 = vpack.c.b16 %v1921, %v1920
      %v1935 = vpack.c.b16 %v1923, %v1922
      %v1936 = vpack.c.b16 %v1925, %v1924
      %v1937 = vpack.c.b16 %v1927, %v1926
      %v1938 = vpack.c.b16 %v1929, %v1928
      %v1939 = vpack.c.b16 %v1931, %v1930
      %1940 = vrot.lane.b32.xlu0 %v1932, 22
      %v1941 = vpop.permute.xlu0 %1940
      %1942 = vrot.lane.b32.xlu0 %v1933, 22
      %v1943 = vpop.permute.xlu0 %1942
      %1944 = vrot.lane.b32.xlu0 %v1934, 22
      %v1945 = vpop.permute.xlu0 %1944
      %1946 = vrot.lane.b32.xlu0 %v1935, 22
      %v1947 = vpop.permute.xlu0 %1946
      %1948 = vrot.lane.b32.xlu0 %v1936, 22
      %v1949 = vpop.permute.xlu0 %1948
      %1950 = vrot.lane.b32.xlu0 %v1937, 22
      %v1951 = vpop.permute.xlu0 %1950
      %1952 = vrot.lane.b32.xlu0 %v1938, 22
      %v1953 = vpop.permute.xlu0 %1952
      %1954 = vrot.lane.b32.xlu0 %v1939, 22
      %v1955 = vpop.permute.xlu0 %1954
      %1956 = vrot.lane.b32.xlu0 %v1217, 33
      %v1957 = vpop.permute.xlu0 %1956
      %1958 = vrot.lane.b32.xlu0 %v1218, 33
      %v1959 = vpop.permute.xlu0 %1958
      %1960 = vrot.lane.b32.xlu0 %v1219, 33
      %v1961 = vpop.permute.xlu0 %1960
      %1962 = vrot.lane.b32.xlu0 %v1220, 33
      %v1963 = vpop.permute.xlu0 %1962
      %1964 = vrot.lane.b32.xlu0 %v1221, 33
      %v1965 = vpop.permute.xlu0 %1964
      %1966 = vrot.lane.b32.xlu0 %v1222, 33
      %v1967 = vpop.permute.xlu0 %1966
      %1968 = vrot.lane.b32.xlu0 %v1223, 33
      %v1969 = vpop.permute.xlu0 %1968
      %1970 = vrot.lane.b32.xlu0 %v1224, 33
      %v1971 = vpop.permute.xlu0 %1970
      %1972 = vrot.lane.b32.xlu0 %v1242, 44
      %v1973 = vpop.permute.xlu0 %1972
      %1974 = vrot.lane.b32.xlu0 %v1243, 44
      %v1975 = vpop.permute.xlu0 %1974
      %1976 = vrot.lane.b32.xlu0 %v1244, 44
      %v1977 = vpop.permute.xlu0 %1976
      %1978 = vrot.lane.b32.xlu0 %v1245, 44
      %v1979 = vpop.permute.xlu0 %1978
      %1980 = vrot.lane.b32.xlu0 %v1246, 44
      %v1981 = vpop.permute.xlu0 %1980
      %1982 = vrot.lane.b32.xlu0 %v1247, 44
      %v1983 = vpop.permute.xlu0 %1982
      %1984 = vrot.lane.b32.xlu0 %v1248, 44
      %v1985 = vpop.permute.xlu0 %1984
      %1986 = vrot.lane.b32.xlu0 %v1249, 44
      %v1987 = vpop.permute.xlu0 %1986
      %v1988 = vunpack.c.l.b16 %v1885
      %v1989 = vpack.c.b16 %v1918, %v1917
      %v1990 = vpack.c.b16 %v1920, %v1919
      %v1991 = vpack.c.b16 %v1922, %v1921
      %v1992 = vpack.c.b16 %v1924, %v1923
      %v1993 = vpack.c.b16 %v1926, %v1925
      %v1994 = vpack.c.b16 %v1928, %v1927
      %v1995 = vpack.c.b16 %v1930, %v1929
      %v1996 = vpack.c.b16 %v1988, %v1931
      %1997 = vrot.lane.b32.xlu0 %v1989, 55
      %v1998 = vpop.permute.xlu0 %1997
      %1999 = vrot.lane.b32.xlu0 %v1990, 55
      %v2000 = vpop.permute.xlu0 %1999
      %2001 = vrot.lane.b32.xlu0 %v1991, 55
      %v2002 = vpop.permute.xlu0 %2001
      %2003 = vrot.lane.b32.xlu0 %v1992, 55
      %v2004 = vpop.permute.xlu0 %2003
      %2005 = vrot.lane.b32.xlu0 %v1993, 55
      %v2006 = vpop.permute.xlu0 %2005
      %2007 = vrot.lane.b32.xlu0 %v1994, 55
      %v2008 = vpop.permute.xlu0 %2007
      %2009 = vrot.lane.b32.xlu0 %v1995, 55
      %v2010 = vpop.permute.xlu0 %2009
      %2011 = vrot.lane.b32.xlu0 %v1996, 55
      %v2012 = vpop.permute.xlu0 %2011
      %2013 = vrot.lane.b32.xlu0 %v1126, 66
      %v2014 = vpop.permute.xlu0 %2013
      %2015 = vrot.lane.b32.xlu0 %v1127, 66
      %v2016 = vpop.permute.xlu0 %2015
      %2017 = vrot.lane.b32.xlu0 %v1128, 66
      %v2018 = vpop.permute.xlu0 %2017
      %2019 = vrot.lane.b32.xlu0 %v1129, 66
      %v2020 = vpop.permute.xlu0 %2019
      %2021 = vrot.lane.b32.xlu0 %v1130, 66
      %v2022 = vpop.permute.xlu0 %2021
      %2023 = vrot.lane.b32.xlu0 %v1131, 66
      %v2024 = vpop.permute.xlu0 %2023
      %2025 = vrot.lane.b32.xlu0 %v1132, 66
      %v2026 = vpop.permute.xlu0 %2025
      %2027 = vrot.lane.b32.xlu0 %v1287, 66
      %v2028 = vpop.permute.xlu0 %2027
      %2029 = vrot.lane.b32.xlu0 %v1166, 77
      %v2030 = vpop.permute.xlu0 %2029
      %2031 = vrot.lane.b32.xlu0 %v1167, 77
      %v2032 = vpop.permute.xlu0 %2031
      %2033 = vrot.lane.b32.xlu0 %v1168, 77
      %v2034 = vpop.permute.xlu0 %2033
      %2035 = vrot.lane.b32.xlu0 %v1169, 77
      %v2036 = vpop.permute.xlu0 %2035
      %2037 = vrot.lane.b32.xlu0 %v1170, 77
      %v2038 = vpop.permute.xlu0 %2037
      %2039 = vrot.lane.b32.xlu0 %v1171, 77
      %v2040 = vpop.permute.xlu0 %2039
      %2041 = vrot.lane.b32.xlu0 %v1172, 77
      %v2042 = vpop.permute.xlu0 %2041
      %2043 = vrot.lane.b32.xlu0 %v1305, 77
      %v2044 = vpop.permute.xlu0 %2043
      %v2045 = vunpack.c.l.b16 %v1899
      %v2046 = vpack.c.b16 %v2045, %v1988
      %2047 = vrot.lane.b32.xlu0 %v1933, 88
      %v2048 = vpop.permute.xlu0 %2047
      %2049 = vrot.lane.b32.xlu0 %v1934, 88
      %v2050 = vpop.permute.xlu0 %2049
      %2051 = vrot.lane.b32.xlu0 %v1935, 88
      %v2052 = vpop.permute.xlu0 %2051
      %2053 = vrot.lane.b32.xlu0 %v1936, 88
      %v2054 = vpop.permute.xlu0 %2053
      %2055 = vrot.lane.b32.xlu0 %v1937, 88
      %v2056 = vpop.permute.xlu0 %2055
      %2057 = vrot.lane.b32.xlu0 %v1938, 88
      %v2058 = vpop.permute.xlu0 %2057
      %2059 = vrot.lane.b32.xlu0 %v1939, 88
      %v2060 = vpop.permute.xlu0 %2059
      %2061 = vrot.lane.b32.xlu0 %v2046, 88
      %v2062 = vpop.permute.xlu0 %2061
      %v2065 = vsel %vm1322, %v1125, %v1901
      %v2068 = vsel %vm1322, %v1126, %v1903
      %v2071 = vsel %vm1322, %v1127, %v1905
      %v2074 = vsel %vm1322, %v1128, %v1907
      %v2077 = vsel %vm1322, %v1129, %v1909
      %v2080 = vsel %vm1322, %v1130, %v1911
      %v2083 = vsel %vm1322, %v1131, %v1913
      %v2086 = vsel %vm1322, %v1132, %v1915
      %v2088 = vsel %vm1347, %v2065, %v1941
      %v2090 = vsel %vm1347, %v2068, %v1943
      %v2092 = vsel %vm1347, %v2071, %v1945
      %v2094 = vsel %vm1347, %v2074, %v1947
      %v2096 = vsel %vm1347, %v2077, %v1949
      %v2098 = vsel %vm1347, %v2080, %v1951
      %v2100 = vsel %vm1347, %v2083, %v1953
      %v2102 = vsel %vm1347, %v2086, %v1955
      %v2104 = vsel %vm1364, %v2088, %v1957
      %v2106 = vsel %vm1364, %v2090, %v1959
      %v2108 = vsel %vm1364, %v2092, %v1961
      %v2110 = vsel %vm1364, %v2094, %v1963
      %v2112 = vsel %vm1364, %v2096, %v1965
      %v2114 = vsel %vm1364, %v2098, %v1967
      %v2116 = vsel %vm1364, %v2100, %v1969
      %v2118 = vsel %vm1364, %v2102, %v1971
      %v2120 = vsel %vm1381, %v2104, %v1973
      %v2122 = vsel %vm1381, %v2106, %v1975
      %v2124 = vsel %vm1381, %v2108, %v1977
      %v2126 = vsel %vm1381, %v2110, %v1979
      %v2128 = vsel %vm1381, %v2112, %v1981
      %v2130 = vsel %vm1381, %v2114, %v1983
      %v2132 = vsel %vm1381, %v2116, %v1985
      %v2134 = vsel %vm1381, %v2118, %v1987
      %v2136 = vsel %vm1398, %v2120, %v1998
      %v2138 = vsel %vm1398, %v2122, %v2000
      %v2140 = vsel %vm1398, %v2124, %v2002
      %v2142 = vsel %vm1398, %v2126, %v2004
      %v2144 = vsel %vm1398, %v2128, %v2006
      %v2146 = vsel %vm1398, %v2130, %v2008
      %v2148 = vsel %vm1398, %v2132, %v2010
      %v2150 = vsel %vm1398, %v2134, %v2012
      %v2152 = vsel %vm1415, %v2136, %v2014
      %v2154 = vsel %vm1415, %v2138, %v2016
      %v2156 = vsel %vm1415, %v2140, %v2018
      %v2158 = vsel %vm1415, %v2142, %v2020
      %v2160 = vsel %vm1415, %v2144, %v2022
      %v2162 = vsel %vm1415, %v2146, %v2024
      %v2164 = vsel %vm1415, %v2148, %v2026
      %v2166 = vsel %vm1415, %v2150, %v2028
      %v2168 = vsel %vm1432, %v2152, %v2030
      %v2170 = vsel %vm1432, %v2154, %v2032
      %v2172 = vsel %vm1432, %v2156, %v2034
      %v2174 = vsel %vm1432, %v2158, %v2036
      %v2176 = vsel %vm1432, %v2160, %v2038
      %v2178 = vsel %vm1432, %v2162, %v2040
      %v2180 = vsel %vm1432, %v2164, %v2042
      %v2182 = vsel %vm1432, %v2166, %v2044
      %v2184 = vsel %vm1449, %v2168, %v2048
      %v2186 = vsel %vm1449, %v2170, %v2050
      %v2188 = vsel %vm1449, %v2172, %v2052
      %v2190 = vsel %vm1449, %v2174, %v2054
      %v2192 = vsel %vm1449, %v2176, %v2056
      %v2194 = vsel %vm1449, %v2178, %v2058
      %v2196 = vsel %vm1449, %v2180, %v2060
      %v2198 = vsel %vm1449, %v2182, %v2062
      %v2199 = vsel %vm1511, %v2184, 0
      %v2201 = vsel %vm1511, %v2186, 0
      %v2203 = vsel %vm1511, %v2188, 0
      %v2205 = vsel %vm1511, %v2190, 0
      %v2207 = vsel %vm1511, %v2192, 0
      %v2209 = vsel %vm1511, %v2194, 0
      %v2211 = vsel %vm1511, %v2196, 0
      %v2213 = vsel %vm1511, %v2198, 0
      %2215 = vmatprep.subr.bf16.mxu0 0
      %2216 = vmatpush1.bf16.msra.mxu0 0
      %2217 = vmatprep.subr.bf16.mxu0 0
      %2218 = vmatpush1.bf16.msra.mxu0 %v1533
      %2219 = vmatprep.subr.bf16.mxu0 0
      %2220 = vmatpush1.bf16.msra.mxu0 %v1503
      %2221 = vmatprep.subr.bf16.mxu0 0
      %2222 = vmatpush1.bf16.msra.mxu0 %v1502
      %2223 = vmatprep.subr.bf16.mxu0 0
      %2224 = vmatpush1.bf16.msra.mxu0 %v1501
      %2225 = vmatprep.subr.bf16.mxu0 0
      %2226 = vmatpush1.bf16.msra.mxu0 %v1500
      %2227 = vmatprep.subr.bf16.mxu0 0
      %2228 = vmatpush1.bf16.msra.mxu0 %v1499
      %2229 = vmatprep.subr.bf16.mxu0 0
      %2230 = vmatpush1.bf16.msra.mxu0 %v1498
      %2231 = vmatprep.subr.bf16.mxu0 0
      %2232 = vmatpush2.bf16.msra.mxu0 0
      %2233 = vmatprep.subr.bf16.mxu0 0
      %2234 = vmatpush2.bf16.msra.mxu0 0
      %2235 = vmatprep.subr.bf16.mxu0 0
      %2236 = vmatpush2.bf16.msra.mxu0 0
      %2237 = vmatprep.subr.bf16.mxu0 0
      %2238 = vmatpush2.bf16.msra.mxu0 0
      %2239 = vmatprep.subr.bf16.mxu0 0
      %2240 = vmatpush2.bf16.msra.mxu0 0
      %2241 = vmatprep.subr.bf16.mxu0 0
      %2242 = vmatpush2.bf16.msra.mxu0 0
      %2243 = vmatprep.subr.bf16.mxu0 0
      %2244 = vmatpush2.bf16.msra.mxu0 0
      %2245 = vmatprep.subr.bf16.mxu0 0
      %2246 = vmatpush2.bf16.msra.mxu0 0
      %2247 = vmatprep.mubr.bf16.mxu0 0
      %2248 = vmatmul.mubr.bf16.gmra.mxu0 %v2199
      %v2249 = vpop.f32.mrf.mxu0
      %v2250 = vadd.f32 %v1470, %v2249
      %v2251 = vpop.f32.mrf.mxu0
      %v2252 = vpop.f32.mrf.mxu0
      %v2253 = vadd.f32 %v1470, %v2252
      %v2254 = vpop.f32.mrf.mxu0
      %2255 = vmatprep.mubr.bf16.mxu0 0
      %2256 = vmatmul.mubr.bf16.gmra.mxu0 %v2201
      %v2257 = vpop.f32.mrf.mxu0
      %v2258 = vadd.f32 %v1470, %v2257
      %v2259 = vpop.f32.mrf.mxu0
      %v2260 = vpop.f32.mrf.mxu0
      %v2261 = vadd.f32 %v1470, %v2260
      %v2262 = vpop.f32.mrf.mxu0
      %2263 = vmatprep.mubr.bf16.mxu0 0
      %2264 = vmatmul.mubr.bf16.gmra.mxu0 %v2203
      %v2265 = vpop.f32.mrf.mxu0
      %v2266 = vadd.f32 %v1470, %v2265
      %v2267 = vpop.f32.mrf.mxu0
      %v2268 = vpop.f32.mrf.mxu0
      %v2269 = vadd.f32 %v1470, %v2268
      %v2270 = vpop.f32.mrf.mxu0
      %2271 = vmatprep.mubr.bf16.mxu0 0
      %2272 = vmatmul.mubr.bf16.gmra.mxu0 %v2205
      %v2273 = vpop.f32.mrf.mxu0
      %v2274 = vadd.f32 %v1470, %v2273
      %v2275 = vpop.f32.mrf.mxu0
      %v2276 = vpop.f32.mrf.mxu0
      %v2277 = vadd.f32 %v1470, %v2276
      %v2278 = vpop.f32.mrf.mxu0
      %2279 = vmatprep.mubr.bf16.mxu0 0
      %2280 = vmatmul.mubr.bf16.gmra.mxu0 %v2207
      %v2281 = vpop.f32.mrf.mxu0
      %v2282 = vadd.f32 %v1470, %v2281
      %v2283 = vpop.f32.mrf.mxu0
      %v2284 = vpop.f32.mrf.mxu0
      %v2285 = vadd.f32 %v1470, %v2284
      %v2286 = vpop.f32.mrf.mxu0
      %2287 = vmatprep.mubr.bf16.mxu0 0
      %2288 = vmatmul.mubr.bf16.gmra.mxu0 %v2209
      %v2289 = vpop.f32.mrf.mxu0
      %v2290 = vadd.f32 %v1470, %v2289
      %v2291 = vpop.f32.mrf.mxu0
      %v2292 = vpop.f32.mrf.mxu0
      %v2293 = vadd.f32 %v1470, %v2292
      %v2294 = vpop.f32.mrf.mxu0
      %2295 = vmatprep.mubr.bf16.mxu0 0
      %2296 = vmatmul.mubr.bf16.gmra.mxu0 %v2211
      %v2297 = vpop.f32.mrf.mxu0
      %v2298 = vadd.f32 %v1470, %v2297
      %v2299 = vpop.f32.mrf.mxu0
      %v2300 = vpop.f32.mrf.mxu0
      %v2301 = vadd.f32 %v1470, %v2300
      %v2302 = vpop.f32.mrf.mxu0
      %2303 = vmatprep.mubr.bf16.mxu0 0
      %2304 = vmatmul.mubr.bf16.gmra.mxu0 %v2213
      %v2305 = vpop.f32.mrf.mxu0
      %v2306 = vadd.f32 %v1470, %v2305
      %v2307 = vpop.f32.mrf.mxu0
      %v2308 = vpop.f32.mrf.mxu0
      %v2309 = vadd.f32 %v1470, %v2308
      %v2310 = vpop.f32.mrf.mxu0
      %2311 = vdwg.mxu0
      %v2312 = vmax.f32 %v2250, 0.0
      %v2313 = vmax.f32 %v2253, 0.0
      %v2314 = vmax.f32 %v2258, 0.0
      %v2315 = vmax.f32 %v2261, 0.0
      %v2316 = vmax.f32 %v2266, 0.0
      %v2317 = vmax.f32 %v2269, 0.0
      %v2318 = vmax.f32 %v2274, 0.0
      %v2319 = vmax.f32 %v2277, 0.0
      %v2320 = vmax.f32 %v2282, 0.0
      %v2321 = vmax.f32 %v2285, 0.0
      %v2322 = vmax.f32 %v2290, 0.0
      %v2323 = vmax.f32 %v2293, 0.0
      %v2324 = vmax.f32 %v2298, 0.0
      %v2325 = vmax.f32 %v2301, 0.0
      %v2326 = vmax.f32 %v2306, 0.0
      %v2327 = vmax.f32 %v2309, 0.0
      %v2328 = vmax.f32 %v1632, %v2312
      %v2329 = vmax.f32 %v1634, %v2314
      %v2330 = vmax.f32 %v1636, %v2316
      %v2331 = vmax.f32 %v1638, %v2318
      %v2332 = vmax.f32 %v1640, %v2320
      %v2333 = vmax.f32 %v1642, %v2322
      %v2334 = vmax.f32 %v1644, %v2324
      %v2335 = vmax.f32 %v1646, %v2326
      %vm2336 = vcmp.gt.f32.partialorder %v2312, %v1632
      %vm2337 = vcmp.gt.f32.partialorder %v2314, %v1634
      %vm2338 = vcmp.gt.f32.partialorder %v2316, %v1636
      %vm2339 = vcmp.gt.f32.partialorder %v2318, %v1638
      %vm2340 = vcmp.gt.f32.partialorder %v2320, %v1640
      %vm2341 = vcmp.gt.f32.partialorder %v2322, %v1642
      %vm2342 = vcmp.gt.f32.partialorder %v2324, %v1644
      %vm2343 = vcmp.gt.f32.partialorder %v2326, %v1646
      %v2344 = vsel %vm2336, 1, 0
      %v2345 = vsel %vm2337, 1, 0
      %v2346 = vsel %vm2338, 1, 0
      %v2347 = vsel %vm2339, 1, 0
      %v2348 = vsel %vm2340, 1, 0
      %v2349 = vsel %vm2341, 1, 0
      %v2350 = vsel %vm2342, 1, 0
      %v2351 = vsel %vm2343, 1, 0
      %v2352 = vmax.f32 %v1633, %v2313
      %v2353 = vmax.f32 %v1635, %v2315
      %v2354 = vmax.f32 %v1637, %v2317
      %v2355 = vmax.f32 %v1639, %v2319
      %v2356 = vmax.f32 %v1641, %v2321
      %v2357 = vmax.f32 %v1643, %v2323
      %v2358 = vmax.f32 %v1645, %v2325
      %v2359 = vmax.f32 %v1647, %v2327
      %vm2360 = vcmp.gt.f32.partialorder %v2313, %v1633
      %vm2361 = vcmp.gt.f32.partialorder %v2315, %v1635
      %vm2362 = vcmp.gt.f32.partialorder %v2317, %v1637
      %vm2363 = vcmp.gt.f32.partialorder %v2319, %v1639
      %vm2364 = vcmp.gt.f32.partialorder %v2321, %v1641
      %vm2365 = vcmp.gt.f32.partialorder %v2323, %v1643
      %vm2366 = vcmp.gt.f32.partialorder %v2325, %v1645
      %vm2367 = vcmp.gt.f32.partialorder %v2327, %v1647
      %v2368 = vsel %vm2360, 1, 0
      %v2369 = vsel %vm2361, 1, 0
      %v2370 = vsel %vm2362, 1, 0
      %v2371 = vsel %vm2363, 1, 0
      %v2372 = vsel %vm2364, 1, 0
      %v2373 = vsel %vm2365, 1, 0
      %v2374 = vsel %vm2366, 1, 0
      %v2375 = vsel %vm2367, 1, 0
      %v2376 = vadd.s32 %v2368, 2
      %v2377 = vadd.s32 %v2369, 2
      %v2378 = vadd.s32 %v2370, 2
      %v2379 = vadd.s32 %v2371, 2
      %v2380 = vadd.s32 %v2372, 2
      %v2381 = vadd.s32 %v2373, 2
      %v2382 = vadd.s32 %v2374, 2
      %v2383 = vadd.s32 %v2375, 2
      %v2384 = vmax.f32 %v2328, %v2352
      %v2385 = vmax.f32 %v2329, %v2353
      %v2386 = vmax.f32 %v2330, %v2354
      %v2387 = vmax.f32 %v2331, %v2355
      %v2388 = vmax.f32 %v2332, %v2356
      %v2389 = vmax.f32 %v2333, %v2357
      %v2390 = vmax.f32 %v2334, %v2358
      %v2391 = vmax.f32 %v2335, %v2359
      %vm2392 = vcmp.gt.f32.partialorder %v2352, %v2328
      %vm2393 = vcmp.gt.f32.partialorder %v2353, %v2329
      %vm2394 = vcmp.gt.f32.partialorder %v2354, %v2330
      %vm2395 = vcmp.gt.f32.partialorder %v2355, %v2331
      %vm2396 = vcmp.gt.f32.partialorder %v2356, %v2332
      %vm2397 = vcmp.gt.f32.partialorder %v2357, %v2333
      %vm2398 = vcmp.gt.f32.partialorder %v2358, %v2334
      %vm2399 = vcmp.gt.f32.partialorder %v2359, %v2335
      %v2400 = vsel %vm2392, %v2376, %v2344
      %v2401 = vsel %vm2393, %v2377, %v2345
      %v2402 = vsel %vm2394, %v2378, %v2346
      %v2403 = vsel %vm2395, %v2379, %v2347
      %v2404 = vsel %vm2396, %v2380, %v2348
      %v2405 = vsel %vm2397, %v2381, %v2349
      %v2406 = vsel %vm2398, %v2382, %v2350
      %v2407 = vsel %vm2399, %v2383, %v2351
      %v2408 = vpack.c.bf16 %v2384, %v2384
      %v2409 = vpack.c.bf16 %v2385, %v2385
      %v2410 = vpack.c.bf16 %v2386, %v2386
      %v2411 = vpack.c.bf16 %v2387, %v2387
      %v2412 = vpack.c.bf16 %v2388, %v2388
      %v2413 = vpack.c.bf16 %v2389, %v2389
      %v2414 = vpack.c.bf16 %v2390, %v2390
      %v2415 = vpack.c.bf16 %v2391, %v2391
      %2416 = vst [vmem:[%s674] sm:$0xf] %v2408
      %2417 = vst [vmem:[%s674 + $0x4] sm:$0xf] %v2409
      %2418 = vst [vmem:[%s674 + $0x8] sm:$0xf] %v2410
      %2419 = vst [vmem:[%s674 + $0xc] sm:$0xf] %v2411
      %2420 = vst [vmem:[%s674 + $0x10] sm:$0xf] %v2412
      %2421 = vst [vmem:[%s674 + $0x14] sm:$0xf] %v2413
      %2422 = vst [vmem:[%s674 + $0x18] sm:$0xf] %v2414
      %2423 = vst [vmem:[%s674 + $0x1c] sm:$0xf] %v2415
      %v2424 = vpack.c.b16 %v2400, %v2400
      %v2425 = vpack.c.b8 %v2424, %v2424
      %v2426 = vpack.c.b16 %v2401, %v2401
      %v2427 = vpack.c.b8 %v2426, %v2426
      %v2428 = vpack.c.b16 %v2402, %v2402
      %v2429 = vpack.c.b8 %v2428, %v2428
      %v2430 = vpack.c.b16 %v2403, %v2403
      %v2431 = vpack.c.b8 %v2430, %v2430
      %v2432 = vpack.c.b16 %v2404, %v2404
      %v2433 = vpack.c.b8 %v2432, %v2432
      %v2434 = vpack.c.b16 %v2405, %v2405
      %v2435 = vpack.c.b8 %v2434, %v2434
      %v2436 = vpack.c.b16 %v2406, %v2406
      %v2437 = vpack.c.b8 %v2436, %v2436
      %v2438 = vpack.c.b16 %v2407, %v2407
      %v2439 = vpack.c.b8 %v2438, %v2438
      %2440 = vst [vmem:[%s684] sm:$0x3] %v2425
      %2441 = vst [vmem:[%s684 + $0x2] sm:$0x3] %v2427
      %2442 = vst [vmem:[%s684 + $0x4] sm:$0x3] %v2429
      %2443 = vst [vmem:[%s684 + $0x6] sm:$0x3] %v2431
      %2444 = vst [vmem:[%s684 + $0x8] sm:$0x3] %v2433
      %2445 = vst [vmem:[%s684 + $0xa] sm:$0x3] %v2435
      %2446 = vst [vmem:[%s684 + $0xc] sm:$0x3] %v2437
      %2447 = vst [vmem:[%s684 + $0xe] sm:$0x3] %v2439
      %s2448 = smul.u32 8, %s26
      %p2449 = scmp.lt.s32.totalorder %s25, 1
      %s2450 = scalar_select %p2449, %s25, 1
      %p2451 = scmp.lt.s32.totalorder %s2448, 7
      %s2452 = scalar_select %p2451, %s2448, 7
      %s2453 = smul.addr %s2450, 8
      %s2454 = sadd.s32 %s2452, %s2453
      %s2455 = smul.addr %s2454, 4
      %s2456 = scalar_lea.vmem %s8, %s2455
      %s2457 = smul.u32 8, %s26
      %p2458 = scmp.lt.s32.totalorder %s25, 1
      %s2459 = scalar_select %p2458, %s25, 1
      %p2460 = scmp.lt.s32.totalorder %s2457, 7
      %s2461 = scalar_select %p2460, %s2457, 7
      %s2462 = smul.addr %s2459, 8
      %s2463 = sadd.s32 %s2461, %s2462
      %s2464 = smul.addr %s2463, 2
      %s2465 = scalar_lea.vmem %s9, %s2464
      // Predicated region
      $region53: #{matting_module_forward.2} parent=51 // pred_check
        %p2466 = pneg %p295
      $region54: #{matting_module_forward.2} parent=51 // pred_check_branch
        %2468 = sbr.rel (%p2466) target = $region56
      $region55: #{matting_module_forward.2} parent=51 // pred_region
        %s2469 = smul.u32 8, %s26
      $region56: #{matting_module_forward.2} parent=51 // pred_fallthru
        _
      // Predicated region
      $region57: #{matting_module_forward.2} parent=51 // pred_check
        %p2470 = pneg %p323
      $region58: #{matting_module_forward.2} parent=51 // pred_check_branch
        %2472 = sbr.rel (%p2470) target = $region60
      $region59: #{matting_module_forward.2} parent=51 // pred_region
        %s2473 = smul.u32 8, %s26
      $region60: #{matting_module_forward.2} parent=51 // pred_fallthru
        _
    $region52: #{matting_module_forward.2} parent=5 // pred_fallthru
      _
    %p2474 = scmp.le.s32.totalorder 2, %s16
    // Predicated region
    $region61: #{matting_module_forward.2} parent=5 // pred_check
      %p2475 = pneg %p2474
    $region62: #{matting_module_forward.2} parent=5 // pred_check_branch
      %2477 = sbr.rel (%p2475) target = $region64
    $region63: #{matting_module_forward.2} parent=5 // pred_region
      %s2478 = ssub.s32 %s16, 2
      // Predicated region
      $region65: #{matting_module_forward.2} parent=63 // pred_check
        %p2479 = pneg %p301
      $region66: #{matting_module_forward.2} parent=63 // pred_check_branch
        %2481 = sbr.rel (%p2479) target = $region68
      $region67: #{matting_module_forward.2} parent=63 // pred_region
        %s2482 = smul.u32 8, %s28
        %p2483 = scmp.lt.s32.totalorder %s27, 1
        %s2484 = scalar_select %p2483, %s27, 1
        %p2485 = scmp.lt.s32.totalorder %s2482, 7
        %s2486 = scalar_select %p2485, %s2482, 7
        %s2487 = smul.addr %s2484, 8
        %s2488 = sadd.s32 %s2486, %s2487
        %s2489 = smul.addr %s2488, 4
        %s2490 = scalar_lea.vmem %s8, %s2489
      $region68: #{matting_module_forward.2} parent=63 // pred_fallthru
        _
      // Predicated region
      $region69: #{matting_module_forward.2} parent=63 // pred_check
        %p2491 = pneg %p329
      $region70: #{matting_module_forward.2} parent=63 // pred_check_branch
        %2493 = sbr.rel (%p2491) target = $region72
      $region71: #{matting_module_forward.2} parent=63 // pred_region
        %s2494 = smul.u32 8, %s28
        %p2495 = scmp.lt.s32.totalorder %s27, 1
        %s2496 = scalar_select %p2495, %s27, 1
        %p2497 = scmp.lt.s32.totalorder %s2494, 7
        %s2498 = scalar_select %p2497, %s2494, 7
        %s2499 = smul.addr %s2496, 8
        %s2500 = sadd.s32 %s2498, %s2499
        %s2501 = smul.addr %s2500, 2
        %s2502 = scalar_lea.vmem %s9, %s2501
      $region72: #{matting_module_forward.2} parent=63 // pred_fallthru
        _
    $region64: #{matting_module_forward.2} parent=5 // pred_fallthru
      _
  $region6: #{matting_module_forward.2} parent=0 // loop_footer
    %s20 = sadd.s32 1, %s16
  $region7: #{matting_module_forward.2} parent=0 // loop_footer_branch
    %15 = sbr.rel target = $region3
  $region8: #{matting_module_forward.2} parent=0 // loop_exit
    _

// kernel: matting_module_forward.3
$region0: #{matting_module_forward.3}
  #allocation0 [shape = 'u32[]', space=smem, size = 0x4, offset = 0x4, fixed_abs, tag = 'smem constant byte address 0x4 - core index']
  #allocation1 [shape = 'u32[144,128]{1,0:T(1,128)}', space=vmem, size = 0x12000, scoped, tag = 'internal scratch']
  %s0 = inlined_call_operand.vmem [shape: bf16[2,8,8,128], index: 0, kind: input, shape index: {}, may-alias: {0,1,2}]
  %s1 = inlined_call_operand.vmem [shape: bf16[2,8,8,128], index: 1, kind: input, shape index: {}, may-alias: {0,1,2}]
  %s2 = inlined_call_operand.vmem [shape: bf16[2,8,8,128], index: 2, kind: input, shape index: {}, may-alias: {0,1,2}]
  %s3 = inlined_call_operand.vmem [shape: s8[2,8,8,128], index: 3, kind: input, shape index: {}, may-alias: {3,4,5}]
  %s4 = inlined_call_operand.vmem [shape: s8[2,8,8,128], index: 4, kind: input, shape index: {}, may-alias: {3,4,5}]
  %s5 = inlined_call_operand.vmem [shape: s8[2,8,8,128], index: 5, kind: input, shape index: {}, may-alias: {3,4,5}]
  %s6 = inlined_call_operand.vmem [shape: bf16[2,8,8,20], index: 6, kind: input, shape index: {}]
  %s7 = inlined_call_operand.vmem [shape: bf16[5,256,128], index: 7, kind: input, shape index: {}]
  %s8 = inlined_call_operand.vmem [shape: f32[1,128], index: 8, kind: input, shape index: {}]
  %s9 = inlined_call_operand.vmem [shape: bf16[128,8], index: 9, kind: input, shape index: {}]
  %s10 = inlined_call_operand.vmem [shape: f32[5,8], index: 10, kind: input, shape index: {}]
  %s11 = inlined_call_operand.vmem [shape: f32[1,8], index: 11, kind: input, shape index: {}]
  %s12 = inlined_call_operand.vmem [shape: f32[2,4,8,8,8], index: 12, kind: output, shape index: {}]
  %s13 = sld [smem:[#allocation0]]
  $region81: #{matting_module_forward.3} parent=0
    _
  %s15 = ssub.s32 1, %s13
  %s16 = scalar_select 0, %s15, %s13
  loop: start=0, step=1, limit=4
  $region2: #{matting_module_forward.3} parent=0 // loop_pre_header
    _
  $region3: #{matting_module_forward.3} parent=0 // loop_header
    %s18 = sphi 0, %s22
    %p19 = scmp.ge.s32.totalorder %s18, 4
    %s25 = sphi 0, %s37
    %s26 = sphi 0, %s33
    %s27 = sphi 0, %s25
    %s28 = sphi 0, %s26
    %s29 = sphi 0, %s27
    %s30 = sphi 0, %s28
    %s42 = sphi 0, %s44
    %s45 = sphi 0, %s42
    %s46 = sphi 0, %s45
    %s62 = sphi 0, %s46
    %s78 = sphi 0, %s80
    %s81 = sphi 0, %s78
    %s82 = sphi 0, %s81
    %s98 = sphi 0, %s82
    %s114 = sphi 0, %s116
    %s117 = sphi 0, %s114
    %s118 = sphi 0, %s117
    %s134 = sphi 0, %s118
    %s142 = sphi 0, %s144
    %s145 = sphi 0, %s142
    %s146 = sphi 0, %s145
    %s162 = sphi 0, %s146
    %s178 = sphi 0, %s180
    %s181 = sphi 0, %s178
    %s182 = sphi 0, %s181
    %s198 = sphi 0, %s182
    %s214 = sphi 0, %s216
    %s217 = sphi 0, %s214
    %s218 = sphi 0, %s217
    %s234 = sphi 0, %s218
    %s242 = sphi 0, %s244
    %s245 = sphi 0, %s242
    %s246 = sphi 0, %s245
    %s262 = sphi 0, %s246
    %s266 = sphi 0, %s266
    %s268 = sphi 0, %s266
    %s269 = sphi 0, %s268
    %s283 = sphi 0, %s269
    %s287 = sphi 0, %s287
    %s289 = sphi 0, %s287
    %s290 = sphi 0, %s289
    %s304 = sphi 0, %s290
    %s308 = sphi 0, %s308
    %s310 = sphi 0, %s308
    %s311 = sphi 0, %s310
    %s325 = sphi 0, %s311
    %s329 = sphi 0, %s329
    %s331 = sphi 0, %s329
    %s332 = sphi 0, %s331
    %s346 = sphi 0, %s332
    %s350 = sphi 0, %s350
    %s352 = sphi 0, %s350
    %s353 = sphi 0, %s352
    %s367 = sphi 0, %s353
    %s375 = sphi 0, %s377
    %s378 = sphi 0, %s375
    %s379 = sphi 0, %s378
    %s395 = sphi 0, %s379
  $region4: #{matting_module_forward.3} parent=0 // loop_header_branch
    %21 = sbr.rel (%p19) target = $region8
  $region5: #{matting_module_forward.3} parent=0 // loop_body
    %s23 = ssub.s32 %s18, 1
    %s24 = ssub.s32 %s18, 2
    %s31 = sadd.s32 1, %s26
    %p32 = scmp.ge.s32.totalorder %s31, 1
    %s33 = scalar_select %p32, 0, %s31
    %s34 = sadd.s32 1, %s25
    %s35 = scalar_select %p32, %s34, %s25
    %p36 = scmp.ge.s32.totalorder %s35, 2
    %s37 = scalar_select %p36, 0, %s35
    %s38 = ssub.s32 %s25, %s37
    %s39 = ssub.s32 %s26, %s33
    %s40 = sor.u32 %s38, %s39
    %p41 = scmp.eq.s32.totalorder %s40, 0
    %s43 = sadd.s32 %s42, 1
    %s44 = scalar_select %p41, %s42, %s43
    %p47 = pneg %p41
    %p48 = scmp.eq.s32.totalorder %s18, 1
    %p49 = por %p47, %p48
    %p50 = scmp.ne.s32.totalorder %s42, %s45
    %p51 = scmp.eq.s32.totalorder %s18, 0
    %p52 = por %p50, %p51
    %p53 = scmp.ne.s32.totalorder %s42, %s45
    %p54 = scmp.eq.s32.totalorder %s23, 1
    %p55 = por %p53, %p54
    %p56 = scmp.ne.s32.totalorder %s45, %s46
    %p57 = scmp.eq.s32.totalorder %s23, 0
    %p58 = por %p56, %p57
    %p59 = scmp.ne.s32.totalorder %s45, %s46
    %p60 = scmp.eq.s32.totalorder %s24, 1
    %p61 = por %p59, %p60
    %p63 = scmp.ne.s32.totalorder %s46, %s62
    %p64 = scmp.eq.s32.totalorder %s24, 0
    %p65 = por %p63, %p64
    %s66 = smul.u32 %s26, 8
    %s67 = ssub.s32 %s66, 1
    %p68 = scmp.gt.s32.totalorder %s67, 0
    %s69 = scalar_select %p68, %s67, 0
    %s70 = smul.u32 %s33, 8
    %s71 = ssub.s32 %s70, 1
    %p72 = scmp.gt.s32.totalorder %s71, 0
    %s73 = scalar_select %p72, %s71, 0
    %s74 = ssub.s32 %s25, %s37
    %s75 = ssub.s32 %s69, %s73
    %s76 = sor.u32 %s74, %s75
    %p77 = scmp.eq.s32.totalorder %s76, 0
    %s79 = sadd.s32 %s78, 1
    %s80 = scalar_select %p77, %s78, %s79
    %p83 = pneg %p77
    %p84 = scmp.eq.s32.totalorder %s18, 1
    %p85 = por %p83, %p84
    %p86 = scmp.ne.s32.totalorder %s78, %s81
    %p87 = scmp.eq.s32.totalorder %s18, 0
    %p88 = por %p86, %p87
    %p89 = scmp.ne.s32.totalorder %s78, %s81
    %p90 = scmp.eq.s32.totalorder %s23, 1
    %p91 = por %p89, %p90
    %p92 = scmp.ne.s32.totalorder %s81, %s82
    %p93 = scmp.eq.s32.totalorder %s23, 0
    %p94 = por %p92, %p93
    %p95 = scmp.ne.s32.totalorder %s81, %s82
    %p96 = scmp.eq.s32.totalorder %s24, 1
    %p97 = por %p95, %p96
    %p99 = scmp.ne.s32.totalorder %s82, %s98
    %p100 = scmp.eq.s32.totalorder %s24, 0
    %p101 = por %p99, %p100
    %s102 = smul.u32 %s26, 8
    %s103 = sadd.s32 %s102, 8
    %p104 = scmp.lt.s32.totalorder %s103, 7
    %s105 = scalar_select %p104, %s103, 7
    %s106 = smul.u32 %s33, 8
    %s107 = sadd.s32 %s106, 8
    %p108 = scmp.lt.s32.totalorder %s107, 7
    %s109 = scalar_select %p108, %s107, 7
    %s110 = ssub.s32 %s25, %s37
    %s111 = ssub.s32 %s105, %s109
    %s112 = sor.u32 %s110, %s111
    %p113 = scmp.eq.s32.totalorder %s112, 0
    %s115 = sadd.s32 %s114, 1
    %s116 = scalar_select %p113, %s114, %s115
    %p119 = pneg %p113
    %p120 = scmp.eq.s32.totalorder %s18, 1
    %p121 = por %p119, %p120
    %p122 = scmp.ne.s32.totalorder %s114, %s117
    %p123 = scmp.eq.s32.totalorder %s18, 0
    %p124 = por %p122, %p123
    %p125 = scmp.ne.s32.totalorder %s114, %s117
    %p126 = scmp.eq.s32.totalorder %s23, 1
    %p127 = por %p125, %p126
    %p128 = scmp.ne.s32.totalorder %s117, %s118
    %p129 = scmp.eq.s32.totalorder %s23, 0
    %p130 = por %p128, %p129
    %p131 = scmp.ne.s32.totalorder %s117, %s118
    %p132 = scmp.eq.s32.totalorder %s24, 1
    %p133 = por %p131, %p132
    %p135 = scmp.ne.s32.totalorder %s118, %s134
    %p136 = scmp.eq.s32.totalorder %s24, 0
    %p137 = por %p135, %p136
    %s138 = ssub.s32 %s25, %s37
    %s139 = ssub.s32 %s26, %s33
    %s140 = sor.u32 %s138, %s139
    %p141 = scmp.eq.s32.totalorder %s140, 0
    %s143 = sadd.s32 %s142, 1
    %s144 = scalar_select %p141, %s142, %s143
    %p147 = pneg %p141
    %p148 = scmp.eq.s32.totalorder %s18, 1
    %p149 = por %p147, %p148
    %p150 = scmp.ne.s32.totalorder %s142, %s145
    %p151 = scmp.eq.s32.totalorder %s18, 0
    %p152 = por %p150, %p151
    %p153 = scmp.ne.s32.totalorder %s142, %s145
    %p154 = scmp.eq.s32.totalorder %s23, 1
    %p155 = por %p153, %p154
    %p156 = scmp.ne.s32.totalorder %s145, %s146
    %p157 = scmp.eq.s32.totalorder %s23, 0
    %p158 = por %p156, %p157
    %p159 = scmp.ne.s32.totalorder %s145, %s146
    %p160 = scmp.eq.s32.totalorder %s24, 1
    %p161 = por %p159, %p160
    %p163 = scmp.ne.s32.totalorder %s146, %s162
    %p164 = scmp.eq.s32.totalorder %s24, 0
    %p165 = por %p163, %p164
    %s166 = smul.u32 %s26, 8
    %s167 = ssub.s32 %s166, 1
    %p168 = scmp.gt.s32.totalorder %s167, 0
    %s169 = scalar_select %p168, %s167, 0
    %s170 = smul.u32 %s33, 8
    %s171 = ssub.s32 %s170, 1
    %p172 = scmp.gt.s32.totalorder %s171, 0
    %s173 = scalar_select %p172, %s171, 0
    %s174 = ssub.s32 %s25, %s37
    %s175 = ssub.s32 %s169, %s173
    %s176 = sor.u32 %s174, %s175
    %p177 = scmp.eq.s32.totalorder %s176, 0
    %s179 = sadd.s32 %s178, 1
    %s180 = scalar_select %p177, %s178, %s179
    %p183 = pneg %p177
    %p184 = scmp.eq.s32.totalorder %s18, 1
    %p185 = por %p183, %p184
    %p186 = scmp.ne.s32.totalorder %s178, %s181
    %p187 = scmp.eq.s32.totalorder %s18, 0
    %p188 = por %p186, %p187
    %p189 = scmp.ne.s32.totalorder %s178, %s181
    %p190 = scmp.eq.s32.totalorder %s23, 1
    %p191 = por %p189, %p190
    %p192 = scmp.ne.s32.totalorder %s181, %s182
    %p193 = scmp.eq.s32.totalorder %s23, 0
    %p194 = por %p192, %p193
    %p195 = scmp.ne.s32.totalorder %s181, %s182
    %p196 = scmp.eq.s32.totalorder %s24, 1
    %p197 = por %p195, %p196
    %p199 = scmp.ne.s32.totalorder %s182, %s198
    %p200 = scmp.eq.s32.totalorder %s24, 0
    %p201 = por %p199, %p200
    %s202 = smul.u32 %s26, 8
    %s203 = sadd.s32 %s202, 8
    %p204 = scmp.lt.s32.totalorder %s203, 7
    %s205 = scalar_select %p204, %s203, 7
    %s206 = smul.u32 %s33, 8
    %s207 = sadd.s32 %s206, 8
    %p208 = scmp.lt.s32.totalorder %s207, 7
    %s209 = scalar_select %p208, %s207, 7
    %s210 = ssub.s32 %s25, %s37
    %s211 = ssub.s32 %s205, %s209
    %s212 = sor.u32 %s210, %s211
    %p213 = scmp.eq.s32.totalorder %s212, 0
    %s215 = sadd.s32 %s214, 1
    %s216 = scalar_select %p213, %s214, %s215
    %p219 = pneg %p213
    %p220 = scmp.eq.s32.totalorder %s18, 1
    %p221 = por %p219, %p220
    %p222 = scmp.ne.s32.totalorder %s214, %s217
    %p223 = scmp.eq.s32.totalorder %s18, 0
    %p224 = por %p222, %p223
    %p225 = scmp.ne.s32.totalorder %s214, %s217
    %p226 = scmp.eq.s32.totalorder %s23, 1
    %p227 = por %p225, %p226
    %p228 = scmp.ne.s32.totalorder %s217, %s218
    %p229 = scmp.eq.s32.totalorder %s23, 0
    %p230 = por %p228, %p229
    %p231 = scmp.ne.s32.totalorder %s217, %s218
    %p232 = scmp.eq.s32.totalorder %s24, 1
    %p233 = por %p231, %p232
    %p235 = scmp.ne.s32.totalorder %s218, %s234
    %p236 = scmp.eq.s32.totalorder %s24, 0
    %p237 = por %p235, %p236
    %s238 = ssub.s32 %s25, %s37
    %s239 = ssub.s32 %s26, %s33
    %s240 = sor.u32 %s238, %s239
    %p241 = scmp.eq.s32.totalorder %s240, 0
    %s243 = sadd.s32 %s242, 1
    %s244 = scalar_select %p241, %s242, %s243
    %p247 = pneg %p241
    %p248 = scmp.eq.s32.totalorder %s18, 1
    %p249 = por %p247, %p248
    %p250 = scmp.ne.s32.totalorder %s242, %s245
    %p251 = scmp.eq.s32.totalorder %s18, 0
    %p252 = por %p250, %p251
    %p253 = scmp.ne.s32.totalorder %s242, %s245
    %p254 = scmp.eq.s32.totalorder %s23, 1
    %p255 = por %p253, %p254
    %p256 = scmp.ne.s32.totalorder %s245, %s246
    %p257 = scmp.eq.s32.totalorder %s23, 0
    %p258 = por %p256, %p257
    %p259 = scmp.ne.s32.totalorder %s245, %s246
    %p260 = scmp.eq.s32.totalorder %s24, 1
    %p261 = por %p259, %p260
    %p263 = scmp.ne.s32.totalorder %s246, %s262
    %p264 = scmp.eq.s32.totalorder %s24, 0
    %p265 = por %p263, %p264
    %s267 = sadd.s32 %s266, 1
    %p270 = scmp.eq.s32.totalorder %s18, 1
    %p271 = scmp.ne.s32.totalorder %s266, %s268
    %p272 = scmp.eq.s32.totalorder %s18, 0
    %p273 = por %p271, %p272
    %p274 = scmp.ne.s32.totalorder %s266, %s268
    %p275 = scmp.eq.s32.totalorder %s23, 1
    %p276 = por %p274, %p275
    %p277 = scmp.ne.s32.totalorder %s268, %s269
    %p278 = scmp.eq.s32.totalorder %s23, 0
    %p279 = por %p277, %p278
    %p280 = scmp.ne.s32.totalorder %s268, %s269
    %p281 = scmp.eq.s32.totalorder %s24, 1
    %p282 = por %p280, %p281
    %p284 = scmp.ne.s32.totalorder %s269, %s283
    %p285 = scmp.eq.s32.totalorder %s24, 0
    %p286 = por %p284, %p285
    %s288 = sadd.s32 %s287, 1
    %p291 = scmp.eq.s32.totalorder %s18, 1
    %p292 = scmp.ne.s32.totalorder %s287, %s289
    %p293 = scmp.eq.s32.totalorder %s18, 0
    %p294 = por %p292, %p293
    %p295 = scmp.ne.s32.totalorder %s287, %s289
    %p296 = scmp.eq.s32.totalorder %s23, 1
    %p297 = por %p295, %p296
    %p298 = scmp.ne.s32.totalorder %s289, %s290
    %p299 = scmp.eq.s32.totalorder %s23, 0
    %p300 = por %p298, %p299
    %p301 = scmp.ne.s32.totalorder %s289, %s290
    %p302 = scmp.eq.s32.totalorder %s24, 1
    %p303 = por %p301, %p302
    %p305 = scmp.ne.s32.totalorder %s290, %s304
    %p306 = scmp.eq.s32.totalorder %s24, 0
    %p307 = por %p305, %p306
    %s309 = sadd.s32 %s308, 1
    %p312 = scmp.eq.s32.totalorder %s18, 1
    %p313 = scmp.ne.s32.totalorder %s308, %s310
    %p314 = scmp.eq.s32.totalorder %s18, 0
    %p315 = por %p313, %p314
    %p316 = scmp.ne.s32.totalorder %s308, %s310
    %p317 = scmp.eq.s32.totalorder %s23, 1
    %p318 = por %p316, %p317
    %p319 = scmp.ne.s32.totalorder %s310, %s311
    %p320 = scmp.eq.s32.totalorder %s23, 0
    %p321 = por %p319, %p320
    %p322 = scmp.ne.s32.totalorder %s310, %s311
    %p323 = scmp.eq.s32.totalorder %s24, 1
    %p324 = por %p322, %p323
    %p326 = scmp.ne.s32.totalorder %s311, %s325
    %p327 = scmp.eq.s32.totalorder %s24, 0
    %p328 = por %p326, %p327
    %s330 = sadd.s32 %s329, 1
    %p333 = scmp.eq.s32.totalorder %s18, 1
    %p334 = scmp.ne.s32.totalorder %s329, %s331
    %p335 = scmp.eq.s32.totalorder %s18, 0
    %p336 = por %p334, %p335
    %p337 = scmp.ne.s32.totalorder %s329, %s331
    %p338 = scmp.eq.s32.totalorder %s23, 1
    %p339 = por %p337, %p338
    %p340 = scmp.ne.s32.totalorder %s331, %s332
    %p341 = scmp.eq.s32.totalorder %s23, 0
    %p342 = por %p340, %p341
    %p343 = scmp.ne.s32.totalorder %s331, %s332
    %p344 = scmp.eq.s32.totalorder %s24, 1
    %p345 = por %p343, %p344
    %p347 = scmp.ne.s32.totalorder %s332, %s346
    %p348 = scmp.eq.s32.totalorder %s24, 0
    %p349 = por %p347, %p348
    %s351 = sadd.s32 %s350, 1
    %p354 = scmp.eq.s32.totalorder %s18, 1
    %p355 = scmp.ne.s32.totalorder %s350, %s352
    %p356 = scmp.eq.s32.totalorder %s18, 0
    %p357 = por %p355, %p356
    %p358 = scmp.ne.s32.totalorder %s350, %s352
    %p359 = scmp.eq.s32.totalorder %s23, 1
    %p360 = por %p358, %p359
    %p361 = scmp.ne.s32.totalorder %s352, %s353
    %p362 = scmp.eq.s32.totalorder %s23, 0
    %p363 = por %p361, %p362
    %p364 = scmp.ne.s32.totalorder %s352, %s353
    %p365 = scmp.eq.s32.totalorder %s24, 1
    %p366 = por %p364, %p365
    %p368 = scmp.ne.s32.totalorder %s353, %s367
    %p369 = scmp.eq.s32.totalorder %s24, 0
    %p370 = por %p368, %p369
    %s371 = ssub.s32 %s25, %s37
    %s372 = ssub.s32 %s26, %s33
    %s373 = sor.u32 %s371, %s372
    %p374 = scmp.eq.s32.totalorder %s373, 0
    %s376 = sadd.s32 %s375, 1
    %s377 = scalar_select %p374, %s375, %s376
    %p380 = pneg %p374
    %p381 = scmp.eq.s32.totalorder %s18, 1
    %p382 = por %p380, %p381
    %p383 = scmp.ne.s32.totalorder %s375, %s378
    %p384 = scmp.eq.s32.totalorder %s18, 0
    %p385 = por %p383, %p384
    %p386 = scmp.ne.s32.totalorder %s375, %s378
    %p387 = scmp.eq.s32.totalorder %s23, 1
    %p388 = por %p386, %p387
    %p389 = scmp.ne.s32.totalorder %s378, %s379
    %p390 = scmp.eq.s32.totalorder %s23, 0
    %p391 = por %p389, %p390
    %p392 = scmp.ne.s32.totalorder %s378, %s379
    %p393 = scmp.eq.s32.totalorder %s24, 1
    %p394 = por %p392, %p393
    %p396 = scmp.ne.s32.totalorder %s379, %s395
    %p397 = scmp.eq.s32.totalorder %s24, 0
    %p398 = por %p396, %p397
    %p399 = scmp.le.s32.totalorder 1, %s18
    %p400 = scmp.lt.s32.totalorder %s18, 3
    %p401 = pnand %p399, %p400
    %p402 = pneg %p401
    // Predicated region
    $region9: #{matting_module_forward.3} parent=5 // pred_check
      _
    $region10: #{matting_module_forward.3} parent=5 // pred_check_branch
      %404 = sbr.rel (%p401) target = $region12
    $region11: #{matting_module_forward.3} parent=5 // pred_region
      %s405 = ssub.s32 %s18, 1
      // Predicated region
      $region13: #{matting_module_forward.3} parent=11 // pred_check
        %p406 = pneg %p279
      $region14: #{matting_module_forward.3} parent=11 // pred_check_branch
        %408 = sbr.rel (%p406) target = $region16
      $region15: #{matting_module_forward.3} parent=11 // pred_region
        _
      $region16: #{matting_module_forward.3} parent=11 // pred_fallthru
        _
      // Predicated region
      $region17: #{matting_module_forward.3} parent=11 // pred_check
        %p409 = pneg %p300
      $region18: #{matting_module_forward.3} parent=11 // pred_check_branch
        %411 = sbr.rel (%p409) target = $region20
      $region19: #{matting_module_forward.3} parent=11 // pred_region
        _
      $region20: #{matting_module_forward.3} parent=11 // pred_fallthru
        _
      // Predicated region
      $region21: #{matting_module_forward.3} parent=11 // pred_check
        %p412 = pneg %p321
      $region22: #{matting_module_forward.3} parent=11 // pred_check_branch
        %414 = sbr.rel (%p412) target = $region24
      $region23: #{matting_module_forward.3} parent=11 // pred_region
        _
      $region24: #{matting_module_forward.3} parent=11 // pred_fallthru
        _
      // Predicated region
      $region25: #{matting_module_forward.3} parent=11 // pred_check
        %p415 = pneg %p342
      $region26: #{matting_module_forward.3} parent=11 // pred_check_branch
        %417 = sbr.rel (%p415) target = $region28
      $region27: #{matting_module_forward.3} parent=11 // pred_region
        _
      $region28: #{matting_module_forward.3} parent=11 // pred_fallthru
        _
      // Predicated region
      $region29: #{matting_module_forward.3} parent=11 // pred_check
        %p418 = pneg %p363
      $region30: #{matting_module_forward.3} parent=11 // pred_check_branch
        %420 = sbr.rel (%p418) target = $region32
      $region31: #{matting_module_forward.3} parent=11 // pred_region
        _
      $region32: #{matting_module_forward.3} parent=11 // pred_fallthru
        _
    $region12: #{matting_module_forward.3} parent=5 // pred_fallthru
      _
    %p421 = scmp.lt.s32.totalorder %s18, 2
    // Predicated region
    $region33: #{matting_module_forward.3} parent=5 // pred_check
      %p422 = pneg %p421
    $region34: #{matting_module_forward.3} parent=5 // pred_check_branch
      %424 = sbr.rel (%p422) target = $region36
    $region35: #{matting_module_forward.3} parent=5 // pred_region
      // Predicated region
      $region37: #{matting_module_forward.3} parent=35 // pred_check
        %p425 = pneg %p52
      $region38: #{matting_module_forward.3} parent=35 // pred_check_branch
        %427 = sbr.rel (%p425) target = $region40
      $region39: #{matting_module_forward.3} parent=35 // pred_region
        %s428 = smul.u32 8, %s26
        %p429 = scmp.lt.s32.totalorder %s25, 1
        %s430 = scalar_select %p429, %s25, 1
        %p431 = scmp.lt.s32.totalorder %s428, 7
        %s432 = scalar_select %p431, %s428, 7
        %s433 = smul.addr %s430, 8
        %s434 = sadd.s32 %s432, %s433
        %s435 = smul.addr %s434, 4
        %s436 = scalar_lea.vmem %s0, %s435
        %s437 = smul.u32 8, %s26
      $region40: #{matting_module_forward.3} parent=35 // pred_fallthru
        _
      // Predicated region
      $region41: #{matting_module_forward.3} parent=35 // pred_check
        %p438 = pneg %p88
      $region42: #{matting_module_forward.3} parent=35 // pred_check_branch
        %440 = sbr.rel (%p438) target = $region44
      $region43: #{matting_module_forward.3} parent=35 // pred_region
        %s441 = smul.u32 %s26, 8
        %s442 = ssub.s32 %s441, 1
        %p443 = scmp.gt.s32.totalorder %s442, 0
        %s444 = scalar_select %p443, %s442, 0
        %p445 = scmp.lt.s32.totalorder %s25, 1
        %s446 = scalar_select %p445, %s25, 1
        %p447 = scmp.lt.s32.totalorder %s444, 7
        %s448 = scalar_select %p447, %s444, 7
        %s449 = smul.addr %s446, 8
        %s450 = sadd.s32 %s448, %s449
        %s451 = smul.addr %s450, 4
        %s452 = scalar_lea.vmem %s1, %s451
        %s453 = smul.u32 %s26, 8
        %s454 = ssub.s32 %s453, 1
        %p455 = scmp.gt.s32.totalorder %s454, 0
        %s456 = scalar_select %p455, %s454, 0
      $region44: #{matting_module_forward.3} parent=35 // pred_fallthru
        _
      // Predicated region
      $region45: #{matting_module_forward.3} parent=35 // pred_check
        %p457 = pneg %p124
      $region46: #{matting_module_forward.3} parent=35 // pred_check_branch
        %459 = sbr.rel (%p457) target = $region48
      $region47: #{matting_module_forward.3} parent=35 // pred_region
        %s460 = smul.u32 %s26, 8
        %s461 = sadd.s32 %s460, 8
        %p462 = scmp.lt.s32.totalorder %s461, 7
        %s463 = scalar_select %p462, %s461, 7
        %p464 = scmp.lt.s32.totalorder %s25, 1
        %s465 = scalar_select %p464, %s25, 1
        %p466 = scmp.lt.s32.totalorder %s463, 7
        %s467 = scalar_select %p466, %s463, 7
        %s468 = smul.addr %s465, 8
        %s469 = sadd.s32 %s467, %s468
        %s470 = smul.addr %s469, 4
        %s471 = scalar_lea.vmem %s2, %s470
        %s472 = smul.u32 %s26, 8
        %s473 = sadd.s32 %s472, 8
        %p474 = scmp.lt.s32.totalorder %s473, 7
        %s475 = scalar_select %p474, %s473, 7
      $region48: #{matting_module_forward.3} parent=35 // pred_fallthru
        _
      // Predicated region
      $region49: #{matting_module_forward.3} parent=35 // pred_check
        %p476 = pneg %p152
      $region50: #{matting_module_forward.3} parent=35 // pred_check_branch
        %478 = sbr.rel (%p476) target = $region52
      $region51: #{matting_module_forward.3} parent=35 // pred_region
        %s479 = smul.u32 8, %s26
        %p480 = scmp.lt.s32.totalorder %s25, 1
        %s481 = scalar_select %p480, %s25, 1
        %p482 = scmp.lt.s32.totalorder %s479, 7
        %s483 = scalar_select %p482, %s479, 7
        %s484 = smul.addr %s481, 8
        %s485 = sadd.s32 %s483, %s484
        %s486 = smul.addr %s485, 2
        %s487 = scalar_lea.vmem %s3, %s486
        %s488 = smul.u32 8, %s26
      $region52: #{matting_module_forward.3} parent=35 // pred_fallthru
        _
      // Predicated region
      $region53: #{matting_module_forward.3} parent=35 // pred_check
        %p489 = pneg %p188
      $region54: #{matting_module_forward.3} parent=35 // pred_check_branch
        %491 = sbr.rel (%p489) target = $region56
      $region55: #{matting_module_forward.3} parent=35 // pred_region
        %s492 = smul.u32 %s26, 8
        %s493 = ssub.s32 %s492, 1
        %p494 = scmp.gt.s32.totalorder %s493, 0
        %s495 = scalar_select %p494, %s493, 0
        %p496 = scmp.lt.s32.totalorder %s25, 1
        %s497 = scalar_select %p496, %s25, 1
        %p498 = scmp.lt.s32.totalorder %s495, 7
        %s499 = scalar_select %p498, %s495, 7
        %s500 = smul.addr %s497, 8
        %s501 = sadd.s32 %s499, %s500
        %s502 = smul.addr %s501, 2
        %s503 = scalar_lea.vmem %s4, %s502
        %s504 = smul.u32 %s26, 8
        %s505 = ssub.s32 %s504, 1
        %p506 = scmp.gt.s32.totalorder %s505, 0
        %s507 = scalar_select %p506, %s505, 0
      $region56: #{matting_module_forward.3} parent=35 // pred_fallthru
        _
      // Predicated region
      $region57: #{matting_module_forward.3} parent=35 // pred_check
        %p508 = pneg %p224
      $region58: #{matting_module_forward.3} parent=35 // pred_check_branch
        %510 = sbr.rel (%p508) target = $region60
      $region59: #{matting_module_forward.3} parent=35 // pred_region
        %s511 = smul.u32 %s26, 8
        %s512 = sadd.s32 %s511, 8
        %p513 = scmp.lt.s32.totalorder %s512, 7
        %s514 = scalar_select %p513, %s512, 7
        %p515 = scmp.lt.s32.totalorder %s25, 1
        %s516 = scalar_select %p515, %s25, 1
        %p517 = scmp.lt.s32.totalorder %s514, 7
        %s518 = scalar_select %p517, %s514, 7
        %s519 = smul.addr %s516, 8
        %s520 = sadd.s32 %s518, %s519
        %s521 = smul.addr %s520, 2
        %s522 = scalar_lea.vmem %s5, %s521
        %s523 = smul.u32 %s26, 8
        %s524 = sadd.s32 %s523, 8
        %p525 = scmp.lt.s32.totalorder %s524, 7
        %s526 = scalar_select %p525, %s524, 7
      $region60: #{matting_module_forward.3} parent=35 // pred_fallthru
        _
      // Predicated region
      $region61: #{matting_module_forward.3} parent=35 // pred_check
        %p527 = pneg %p252
      $region62: #{matting_module_forward.3} parent=35 // pred_check_branch
        %529 = sbr.rel (%p527) target = $region64
      $region63: #{matting_module_forward.3} parent=35 // pred_region
        %s530 = smul.u32 8, %s26
        %p531 = scmp.lt.s32.totalorder %s25, 1
        %s532 = scalar_select %p531, %s25, 1
        %p533 = scmp.lt.s32.totalorder %s530, 7
        %s534 = scalar_select %p533, %s530, 7
        %s535 = smul.addr %s532, 8
        %s536 = sadd.s32 %s534, %s535
        %s537 = smul.addr %s536, 4
        %s538 = scalar_lea.vmem %s6, %s537
        %s539 = smul.u32 8, %s26
      $region64: #{matting_module_forward.3} parent=35 // pred_fallthru
        _
    $region36: #{matting_module_forward.3} parent=5 // pred_fallthru
      _
    %p540 = scmp.le.s32.totalorder 1, %s18
    %p541 = scmp.lt.s32.totalorder %s18, 3
    %p542 = pnand %p540, %p541
    %p543 = pneg %p542
    // Predicated region
    $region65: #{matting_module_forward.3} parent=5 // pred_check
      _
    $region66: #{matting_module_forward.3} parent=5 // pred_check_branch
      %545 = sbr.rel (%p542) target = $region68
    $region67: #{matting_module_forward.3} parent=5 // pred_region
      %s546 = ssub.s32 %s18, 1
      %s547 = smul.u32 8, %s28
      %p548 = scmp.lt.s32.totalorder %s27, 1
      %s549 = scalar_select %p548, %s27, 1
      %p550 = scmp.lt.s32.totalorder %s547, 7
      %s551 = scalar_select %p550, %s547, 7
      %s552 = smul.addr %s549, 8
      %s553 = sadd.s32 %s551, %s552
      %s554 = smul.addr %s553, 4
      %s555 = scalar_lea.vmem %s0, %s554
      %p556 = pneg %p58
      %p557 = pneg %p55
      %s558 = smul.u32 %s28, 8
      %s559 = ssub.s32 %s558, 1
      %p560 = scmp.gt.s32.totalorder %s559, 0
      %s561 = scalar_select %p560, %s559, 0
      %p562 = scmp.lt.s32.totalorder %s27, 1
      %s563 = scalar_select %p562, %s27, 1
      %p564 = scmp.lt.s32.totalorder %s561, 7
      %s565 = scalar_select %p564, %s561, 7
      %s566 = smul.addr %s563, 8
      %s567 = sadd.s32 %s565, %s566
      %s568 = smul.addr %s567, 4
      %s569 = scalar_lea.vmem %s1, %s568
      %p570 = pneg %p94
      %p571 = pneg %p91
      %s572 = smul.u32 %s28, 8
      %s573 = sadd.s32 %s572, 8
      %p574 = scmp.lt.s32.totalorder %s573, 7
      %s575 = scalar_select %p574, %s573, 7
      %p576 = scmp.lt.s32.totalorder %s27, 1
      %s577 = scalar_select %p576, %s27, 1
      %p578 = scmp.lt.s32.totalorder %s575, 7
      %s579 = scalar_select %p578, %s575, 7
      %s580 = smul.addr %s577, 8
      %s581 = sadd.s32 %s579, %s580
      %s582 = smul.addr %s581, 4
      %s583 = scalar_lea.vmem %s2, %s582
      %p584 = pneg %p130
      %p585 = pneg %p127
      %s586 = smul.u32 8, %s28
      %p587 = scmp.lt.s32.totalorder %s27, 1
      %s588 = scalar_select %p587, %s27, 1
      %p589 = scmp.lt.s32.totalorder %s586, 7
      %s590 = scalar_select %p589, %s586, 7
      %s591 = smul.addr %s588, 8
      %s592 = sadd.s32 %s590, %s591
      %s593 = smul.addr %s592, 2
      %s594 = scalar_lea.vmem %s3, %s593
      %p595 = pneg %p158
      %p596 = pneg %p155
      %s597 = smul.u32 %s28, 8
      %s598 = ssub.s32 %s597, 1
      %p599 = scmp.gt.s32.totalorder %s598, 0
      %s600 = scalar_select %p599, %s598, 0
      %p601 = scmp.lt.s32.totalorder %s27, 1
      %s602 = scalar_select %p601, %s27, 1
      %p603 = scmp.lt.s32.totalorder %s600, 7
      %s604 = scalar_select %p603, %s600, 7
      %s605 = smul.addr %s602, 8
      %s606 = sadd.s32 %s604, %s605
      %s607 = smul.addr %s606, 2
      %s608 = scalar_lea.vmem %s4, %s607
      %p609 = pneg %p194
      %p610 = pneg %p191
      %s611 = smul.u32 %s28, 8
      %s612 = sadd.s32 %s611, 8
      %p613 = scmp.lt.s32.totalorder %s612, 7
      %s614 = scalar_select %p613, %s612, 7
      %p615 = scmp.lt.s32.totalorder %s27, 1
      %s616 = scalar_select %p615, %s27, 1
      %p617 = scmp.lt.s32.totalorder %s614, 7
      %s618 = scalar_select %p617, %s614, 7
      %s619 = smul.addr %s616, 8
      %s620 = sadd.s32 %s618, %s619
      %s621 = smul.addr %s620, 2
      %s622 = scalar_lea.vmem %s5, %s621
      %p623 = pneg %p230
      %p624 = pneg %p227
      %s625 = smul.u32 8, %s28
      %p626 = scmp.lt.s32.totalorder %s27, 1
      %s627 = scalar_select %p626, %s27, 1
      %p628 = scmp.lt.s32.totalorder %s625, 7
      %s629 = scalar_select %p628, %s625, 7
      %s630 = smul.addr %s627, 8
      %s631 = sadd.s32 %s629, %s630
      %s632 = smul.addr %s631, 4
      %s633 = scalar_lea.vmem %s6, %s632
      %p634 = pneg %p258
      %p635 = pneg %p255
      %p636 = pneg %p279
      %p637 = pneg %p276
      %p638 = pneg %p300
      %p639 = pneg %p297
      %p640 = pneg %p321
      %p641 = pneg %p318
      %p642 = pneg %p342
      %p643 = pneg %p339
      %p644 = pneg %p363
      %p645 = pneg %p360
      %p646 = pneg %p391
      %p647 = pneg %p388
      %s648 = smul.u32 8, %s28
      %p649 = scmp.lt.s32.totalorder %s27, 1
      %s650 = scalar_select %p649, %s27, 1
      %p651 = scmp.lt.s32.totalorder %s648, 7
      %s652 = scalar_select %p651, %s648, 7
      %s653 = smul.addr %s650, 32
      %s654 = sadd.s32 %s652, %s653
      %s655 = smul.addr %s654, 8
      %s656 = scalar_lea.vmem %s12, %s655
      %s657 = smul.u32 8, %s28
      %p658 = scmp.lt.s32.totalorder %s27, 1
      %s659 = scalar_select %p658, %s27, 1
      %p660 = scmp.lt.s32.totalorder %s657, 7
      %s661 = scalar_select %p660, %s657, 7
      %s662 = smul.addr %s659, 8
      %s663 = sadd.s32 %s661, %s662
      %s664 = smul.addr %s663, 4
      %s665 = scalar_lea.vmem %s0, %s664
      %s666 = smul.u32 8, %s28
      %s667 = smul.u32 %s28, 8
      %s668 = ssub.s32 %s667, 1
      %p669 = scmp.gt.s32.totalorder %s668, 0
      %s670 = scalar_select %p669, %s668, 0
      %p671 = scmp.lt.s32.totalorder %s27, 1
      %s672 = scalar_select %p671, %s27, 1
      %p673 = scmp.lt.s32.totalorder %s670, 7
      %s674 = scalar_select %p673, %s670, 7
      %s675 = smul.addr %s672, 8
      %s676 = sadd.s32 %s674, %s675
      %s677 = smul.addr %s676, 4
      %s678 = scalar_lea.vmem %s1, %s677
      %s679 = smul.u32 %s28, 8
      %s680 = ssub.s32 %s679, 1
      %p681 = scmp.gt.s32.totalorder %s680, 0
      %s682 = scalar_select %p681, %s680, 0
      %s683 = smul.u32 %s28, 8
      %s684 = sadd.s32 %s683, 8
      %p685 = scmp.lt.s32.totalorder %s684, 7
      %s686 = scalar_select %p685, %s684, 7
      %p687 = scmp.lt.s32.totalorder %s27, 1
      %s688 = scalar_select %p687, %s27, 1
      %p689 = scmp.lt.s32.totalorder %s686, 7
      %s690 = scalar_select %p689, %s686, 7
      %s691 = smul.addr %s688, 8
      %s692 = sadd.s32 %s690, %s691
      %s693 = smul.addr %s692, 4
      %s694 = scalar_lea.vmem %s2, %s693
      %s695 = smul.u32 %s28, 8
      %s696 = sadd.s32 %s695, 8
      %p697 = scmp.lt.s32.totalorder %s696, 7
      %s698 = scalar_select %p697, %s696, 7
      %s699 = smul.u32 8, %s28
      %p700 = scmp.lt.s32.totalorder %s27, 1
      %s701 = scalar_select %p700, %s27, 1
      %p702 = scmp.lt.s32.totalorder %s699, 7
      %s703 = scalar_select %p702, %s699, 7
      %s704 = smul.addr %s701, 8
      %s705 = sadd.s32 %s703, %s704
      %s706 = smul.addr %s705, 2
      %s707 = scalar_lea.vmem %s3, %s706
      %s708 = smul.u32 8, %s28
      %s709 = smul.u32 %s28, 8
      %s710 = ssub.s32 %s709, 1
      %p711 = scmp.gt.s32.totalorder %s710, 0
      %s712 = scalar_select %p711, %s710, 0
      %p713 = scmp.lt.s32.totalorder %s27, 1
      %s714 = scalar_select %p713, %s27, 1
      %p715 = scmp.lt.s32.totalorder %s712, 7
      %s716 = scalar_select %p715, %s712, 7
      %s717 = smul.addr %s714, 8
      %s718 = sadd.s32 %s716, %s717
      %s719 = smul.addr %s718, 2
      %s720 = scalar_lea.vmem %s4, %s719
      %s721 = smul.u32 %s28, 8
      %s722 = ssub.s32 %s721, 1
      %p723 = scmp.gt.s32.totalorder %s722, 0
      %s724 = scalar_select %p723, %s722, 0
      %s725 = smul.u32 %s28, 8
      %s726 = sadd.s32 %s725, 8
      %p727 = scmp.lt.s32.totalorder %s726, 7
      %s728 = scalar_select %p727, %s726, 7
      %p729 = scmp.lt.s32.totalorder %s27, 1
      %s730 = scalar_select %p729, %s27, 1
      %p731 = scmp.lt.s32.totalorder %s728, 7
      %s732 = scalar_select %p731, %s728, 7
      %s733 = smul.addr %s730, 8
      %s734 = sadd.s32 %s732, %s733
      %s735 = smul.addr %s734, 2
      %s736 = scalar_lea.vmem %s5, %s735
      %s737 = smul.u32 %s28, 8
      %s738 = sadd.s32 %s737, 8
      %p739 = scmp.lt.s32.totalorder %s738, 7
      %s740 = scalar_select %p739, %s738, 7
      %s741 = smul.u32 8, %s28
      %p742 = scmp.lt.s32.totalorder %s27, 1
      %s743 = scalar_select %p742, %s27, 1
      %p744 = scmp.lt.s32.totalorder %s741, 7
      %s745 = scalar_select %p744, %s741, 7
      %s746 = smul.addr %s743, 8
      %s747 = sadd.s32 %s745, %s746
      %s748 = smul.addr %s747, 4
      %s749 = scalar_lea.vmem %s6, %s748
      %s750 = smul.u32 8, %s28
      %s751 = smul.u32 8, %s28
      %p752 = scmp.lt.s32.totalorder %s27, 1
      %s753 = scalar_select %p752, %s27, 1
      %p754 = scmp.lt.s32.totalorder %s751, 7
      %s755 = scalar_select %p754, %s751, 7
      %s756 = smul.addr %s753, 32
      %s757 = sadd.s32 %s755, %s756
      %s758 = smul.addr %s757, 8
      %s759 = scalar_lea.vmem %s12, %s758
      %s760 = smul.u32 8, %s28
      %p762 = scmp.ne.s32.totalorder %s28, 0
      %s763 = scalar_select %p762, 1, 0
      %s764 = scvt.s32.f32 %s763
      %p766 = scmp.ne.f32.partialorder %s764, %s764
      %s767 = sshrl.u32 %s764, 16
      %s768 = sand.u32 %s767, 1
      %s769 = sadd.s32 32767, %s768
      %s770 = sadd.s32 %s764, %s769
      %s771 = sand.u32 %s770, 4294901760
      %s772 = scalar_select %p766, 2143289344, %s771
      %s774 = sshrl.u32 %s772, 16
      %v775 = vld [vmem:[%s678] sm:$0xf]
      %s776 = sshll.u32 %s774, 16
      %s777 = sor.u32 %s774, %s776
      %v778 = vstv %s777
      %v780 = vmul.bf16 %v775, %v778
      %v781 = vld [vmem:[%s665] sm:$0xf]
      %v782 = vld [vmem:[%s665 + $0x4] sm:$0xf]
      %v783 = vld [vmem:[%s665 + $0x8] sm:$0xf]
      %v784 = vld [vmem:[%s665 + $0xc] sm:$0xf]
      %v785 = vld [vmem:[%s665 + $0x10] sm:$0xf]
      %v786 = vld [vmem:[%s665 + $0x14] sm:$0xf]
      %v787 = vld [vmem:[%s665 + $0x18] sm:$0xf]
      %v788 = vld [vmem:[%s665 + $0x1c] sm:$0xf]
      %v789 = vld [vmem:[%s694] sm:$0xf]
      %v790 = vmul.bf16 %v789, %v778
      %v791 = vld [vmem:[%s720] sm:$0x3]
      %v792 = vld [vmem:[%s707] sm:$0x3]
      %v793 = vld [vmem:[%s707 + $0x2] sm:$0x3]
      %v794 = vld [vmem:[%s707 + $0x4] sm:$0x3]
      %v795 = vld [vmem:[%s707 + $0x6] sm:$0x3]
      %v796 = vld [vmem:[%s707 + $0x8] sm:$0x3]
      %v797 = vld [vmem:[%s707 + $0xa] sm:$0x3]
      %v798 = vld [vmem:[%s707 + $0xc] sm:$0x3]
      %v799 = vld [vmem:[%s707 + $0xe] sm:$0x3]
      %v800 = vld [vmem:[%s736] sm:$0x3]
      %v801 = vunpack.c.0.s8 %v791
      %v802 = vunpack.c.0.s8 %v792
      %v803 = vunpack.c.0.s8 %v793
      %v804 = vunpack.c.0.s8 %v794
      %v805 = vunpack.c.0.s8 %v795
      %v806 = vunpack.c.0.s8 %v796
      %v807 = vunpack.c.0.s8 %v797
      %v808 = vunpack.c.0.s8 %v798
      %v809 = vunpack.c.0.s8 %v799
      %v810 = vunpack.c.0.s8 %v800
      %v821 = vunpack.c.l.b16 %v780
      %v822 = vunpack.c.l.b16 %v781
      %v823 = vunpack.c.l.b16 %v782
      %v824 = vunpack.c.l.b16 %v783
      %v825 = vunpack.c.l.b16 %v784
      %v826 = vunpack.c.l.b16 %v785
      %v827 = vunpack.c.l.b16 %v786
      %v828 = vunpack.c.l.b16 %v787
      %v829 = vunpack.c.l.b16 %v788
      %v830 = vunpack.c.l.b16 %v790
      %v831 = vpack.c.b16 %v821, %v821
      %v832 = vpack.c.b16 %v822, %v822
      %v833 = vpack.c.b16 %v823, %v823
      %v834 = vpack.c.b16 %v824, %v824
      %v835 = vpack.c.b16 %v825, %v825
      %v836 = vpack.c.b16 %v826, %v826
      %v837 = vpack.c.b16 %v827, %v827
      %v838 = vpack.c.b16 %v828, %v828
      %v839 = vpack.c.b16 %v829, %v829
      %v840 = vpack.c.b16 %v830, %v830
      %v842 = vshrl.u32 %v831, 16
      %v844 = vrot.slane %v842, 7
      %v845 = vshll.u32 %v831, 16
      %v847 = vor.u32 %v844, %v845
      %v849 = vshrl.u32 %v832, 16
      %v851 = vrot.slane %v849, 7
      %v852 = vshll.u32 %v832, 16
      %v854 = vor.u32 %v851, %v852
      %v856 = vshrl.u32 %v833, 16
      %v858 = vrot.slane %v856, 7
      %v859 = vshll.u32 %v833, 16
      %v861 = vor.u32 %v858, %v859
      %v863 = vshrl.u32 %v834, 16
      %v865 = vrot.slane %v863, 7
      %v866 = vshll.u32 %v834, 16
      %v868 = vor.u32 %v865, %v866
      %v870 = vshrl.u32 %v835, 16
      %v872 = vrot.slane %v870, 7
      %v873 = vshll.u32 %v835, 16
      %v875 = vor.u32 %v872, %v873
      %v877 = vshrl.u32 %v836, 16
      %v879 = vrot.slane %v877, 7
      %v880 = vshll.u32 %v836, 16
      %v882 = vor.u32 %v879, %v880
      %v884 = vshrl.u32 %v837, 16
      %v886 = vrot.slane %v884, 7
      %v887 = vshll.u32 %v837, 16
      %v889 = vor.u32 %v886, %v887
      %v891 = vshrl.u32 %v838, 16
      %v893 = vrot.slane %v891, 7
      %v894 = vshll.u32 %v838, 16
      %v896 = vor.u32 %v893, %v894
      %v898 = vshrl.u32 %v839, 16
      %v900 = vrot.slane %v898, 7
      %v901 = vshll.u32 %v839, 16
      %v903 = vor.u32 %v900, %v901
      %v905 = vshrl.u32 %v840, 16
      %v907 = vrot.slane %v905, 7
      %v908 = vshll.u32 %v840, 16
      %v910 = vor.u32 %v907, %v908
      %vm921 = vcmask 1040384
      %vm922 = vsmask.f32 256
      %vm923 = vmand %vm921, %vm922
      %v924 = vsel %vm923, 0, %v847
      %v925 = vsel %vm923, 0, %v854
      %v926 = vsel %vm923, 0, %v861
      %v927 = vsel %vm923, 0, %v868
      %v928 = vsel %vm923, 0, %v875
      %v929 = vsel %vm923, 0, %v882
      %v930 = vsel %vm923, 0, %v889
      %v931 = vsel %vm923, 0, %v896
      %v932 = vsel %vm923, 0, %v903
      %v933 = vsel %vm923, 0, %v910
      %vm934 = vcmask 1044480
      %vm935 = vsmask.f32 4352
      %vm936 = vmand %vm934, %vm935
      %v937 = vsel %vm936, %v924, 0
      %v938 = vsel %vm936, %v925, 0
      %v939 = vsel %vm936, %v926, 0
      %v940 = vsel %vm936, %v927, 0
      %v941 = vsel %vm936, %v928, 0
      %v942 = vsel %vm936, %v929, 0
      %v943 = vsel %vm936, %v930, 0
      %v944 = vsel %vm936, %v931, 0
      %v945 = vsel %vm936, %v932, 0
      %v946 = vsel %vm936, %v933, 0
      %v947 = vrot.slane %v801, 7
      %v948 = vrot.slane %v802, 7
      %v949 = vrot.slane %v803, 7
      %v950 = vrot.slane %v804, 7
      %v951 = vrot.slane %v805, 7
      %v952 = vrot.slane %v806, 7
      %v953 = vrot.slane %v807, 7
      %v954 = vrot.slane %v808, 7
      %v955 = vrot.slane %v809, 7
      %v956 = vrot.slane %v810, 7
      %vm957 = vcmask 1040384
      %v958 = vsel %vm957, 0, %v947
      %v959 = vsel %vm957, 0, %v948
      %v960 = vsel %vm957, 0, %v949
      %v961 = vsel %vm957, 0, %v950
      %v962 = vsel %vm957, 0, %v951
      %v963 = vsel %vm957, 0, %v952
      %v964 = vsel %vm957, 0, %v953
      %v965 = vsel %vm957, 0, %v954
      %v966 = vsel %vm957, 0, %v955
      %v967 = vsel %vm957, 0, %v956
      %v968 = vsel %vm957, %v947, 0
      %v969 = vsel %vm957, %v948, 0
      %v970 = vsel %vm957, %v949, 0
      %v971 = vsel %vm957, %v950, 0
      %v972 = vsel %vm957, %v951, 0
      %v973 = vsel %vm957, %v952, 0
      %v974 = vsel %vm957, %v953, 0
      %v975 = vsel %vm957, %v954, 0
      %v976 = vsel %vm957, %v955, 0
      %v977 = vsel %vm957, %v956, 0
      %vm978 = vcmp.eq.s32.totalorder %v959, 0
      %vm979 = vcmp.eq.s32.totalorder %v969, 0
      %vm980 = vcmp.eq.s32.totalorder %v960, 0
      %vm981 = vcmp.eq.s32.totalorder %v970, 0
      %vm982 = vcmp.eq.s32.totalorder %v961, 0
      %vm983 = vcmp.eq.s32.totalorder %v971, 0
      %vm984 = vcmp.eq.s32.totalorder %v962, 0
      %vm985 = vcmp.eq.s32.totalorder %v972, 0
      %vm986 = vcmp.eq.s32.totalorder %v963, 0
      %vm987 = vcmp.eq.s32.totalorder %v973, 0
      %vm988 = vcmp.eq.s32.totalorder %v964, 0
      %vm989 = vcmp.eq.s32.totalorder %v974, 0
      %vm990 = vcmp.eq.s32.totalorder %v965, 0
      %vm991 = vcmp.eq.s32.totalorder %v975, 0
      %vm992 = vcmp.eq.s32.totalorder %v966, 0
      %vm993 = vcmp.eq.s32.totalorder %v976, 0
      %vm994 = vcmp.eq.s32.totalorder %v967, 0
      %vm995 = vcmp.eq.s32.totalorder %v977, 0
      %vm996 = vmpackc.low %vm979, %vm978
      %vm997 = vmpackc.low %vm981, %vm980
      %vm998 = vmpackc.low %vm983, %vm982
      %vm999 = vmpackc.low %vm985, %vm984
      %vm1000 = vmpackc.low %vm987, %vm986
      %vm1001 = vmpackc.low %vm989, %vm988
      %vm1002 = vmpackc.low %vm991, %vm990
      %vm1003 = vmpackc.low %vm993, %vm992
      %vm1004 = vmpackc.low %vm995, %vm994
      %v1005 = vsel %vm996, %v938, 0
      %v1006 = vsel %vm997, %v939, 0
      %v1007 = vsel %vm998, %v940, 0
      %v1008 = vsel %vm999, %v941, 0
      %v1009 = vsel %vm1000, %v942, 0
      %v1010 = vsel %vm1001, %v943, 0
      %v1011 = vsel %vm1002, %v944, 0
      %v1012 = vsel %vm1003, %v945, 0
      %v1013 = vsel %vm1004, %v946, 0
      %vm1014 = vcmp.eq.s32.totalorder %v959, 1
      %vm1015 = vcmp.eq.s32.totalorder %v969, 1
      %vm1016 = vcmp.eq.s32.totalorder %v960, 1
      %vm1017 = vcmp.eq.s32.totalorder %v970, 1
      %vm1018 = vcmp.eq.s32.totalorder %v961, 1
      %vm1019 = vcmp.eq.s32.totalorder %v971, 1
      %vm1020 = vcmp.eq.s32.totalorder %v962, 1
      %vm1021 = vcmp.eq.s32.totalorder %v972, 1
      %vm1022 = vcmp.eq.s32.totalorder %v963, 1
      %vm1023 = vcmp.eq.s32.totalorder %v973, 1
      %vm1024 = vcmp.eq.s32.totalorder %v964, 1
      %vm1025 = vcmp.eq.s32.totalorder %v974, 1
      %vm1026 = vcmp.eq.s32.totalorder %v965, 1
      %vm1027 = vcmp.eq.s32.totalorder %v975, 1
      %vm1028 = vcmp.eq.s32.totalorder %v966, 1
      %vm1029 = vcmp.eq.s32.totalorder %v976, 1
      %vm1030 = vcmp.eq.s32.totalorder %v967, 1
      %vm1031 = vcmp.eq.s32.totalorder %v977, 1
      %vm1032 = vmpackc.low %vm1015, %vm1014
      %vm1033 = vmpackc.low %vm1017, %vm1016
      %vm1034 = vmpackc.low %vm1019, %vm1018
      %vm1035 = vmpackc.low %vm1021, %vm1020
      %vm1036 = vmpackc.low %vm1023, %vm1022
      %vm1037 = vmpackc.low %vm1025, %vm1024
      %vm1038 = vmpackc.low %vm1027, %vm1026
      %vm1039 = vmpackc.low %vm1029, %vm1028
      %vm1040 = vmpackc.low %vm1031, %vm1030
      %v1041 = vsel %vm1032, %v938, 0
      %v1042 = vsel %vm1033, %v939, 0
      %v1043 = vsel %vm1034, %v940, 0
      %v1044 = vsel %vm1035, %v941, 0
      %v1045 = vsel %vm1036, %v942, 0
      %v1046 = vsel %vm1037, %v943, 0
      %v1047 = vsel %vm1038, %v944, 0
      %v1048 = vsel %vm1039, %v945, 0
      %v1049 = vsel %vm1040, %v946, 0
      %vm1050 = vcmp.eq.s32.totalorder %v958, 2
      %vm1051 = vcmp.eq.s32.totalorder %v968, 2
      %vm1052 = vcmp.eq.s32.totalorder %v959, 2
      %vm1053 = vcmp.eq.s32.totalorder %v969, 2
      %vm1054 = vcmp.eq.s32.totalorder %v960, 2
      %vm1055 = vcmp.eq.s32.totalorder %v970, 2
      %vm1056 = vcmp.eq.s32.totalorder %v961, 2
      %vm1057 = vcmp.eq.s32.totalorder %v971, 2
      %vm1058 = vcmp.eq.s32.totalorder %v962, 2
      %vm1059 = vcmp.eq.s32.totalorder %v972, 2
      %vm1060 = vcmp.eq.s32.totalorder %v963, 2
      %vm1061 = vcmp.eq.s32.totalorder %v973, 2
      %vm1062 = vcmp.eq.s32.totalorder %v964, 2
      %vm1063 = vcmp.eq.s32.totalorder %v974, 2
      %vm1064 = vcmp.eq.s32.totalorder %v965, 2
      %vm1065 = vcmp.eq.s32.totalorder %v975, 2
      %vm1066 = vcmp.eq.s32.totalorder %v966, 2
      %vm1067 = vcmp.eq.s32.totalorder %v976, 2
      %vm1068 = vmpackc.low %vm1051, %vm1050
      %vm1069 = vmpackc.low %vm1053, %vm1052
      %vm1070 = vmpackc.low %vm1055, %vm1054
      %vm1071 = vmpackc.low %vm1057, %vm1056
      %vm1072 = vmpackc.low %vm1059, %vm1058
      %vm1073 = vmpackc.low %vm1061, %vm1060
      %vm1074 = vmpackc.low %vm1063, %vm1062
      %vm1075 = vmpackc.low %vm1065, %vm1064
      %vm1076 = vmpackc.low %vm1067, %vm1066
      %v1077 = vsel %vm1068, %v937, 0
      %v1078 = vsel %vm1069, %v938, 0
      %v1079 = vsel %vm1070, %v939, 0
      %v1080 = vsel %vm1071, %v940, 0
      %v1081 = vsel %vm1072, %v941, 0
      %v1082 = vsel %vm1073, %v942, 0
      %v1083 = vsel %vm1074, %v943, 0
      %v1084 = vsel %vm1075, %v944, 0
      %v1085 = vsel %vm1076, %v945, 0
      %vm1086 = vcmp.eq.s32.totalorder %v958, 3
      %vm1087 = vcmp.eq.s32.totalorder %v968, 3
      %vm1088 = vcmp.eq.s32.totalorder %v959, 3
      %vm1089 = vcmp.eq.s32.totalorder %v969, 3
      %vm1090 = vcmp.eq.s32.totalorder %v960, 3
      %vm1091 = vcmp.eq.s32.totalorder %v970, 3
      %vm1092 = vcmp.eq.s32.totalorder %v961, 3
      %vm1093 = vcmp.eq.s32.totalorder %v971, 3
      %vm1094 = vcmp.eq.s32.totalorder %v962, 3
      %vm1095 = vcmp.eq.s32.totalorder %v972, 3
      %vm1096 = vcmp.eq.s32.totalorder %v963, 3
      %vm1097 = vcmp.eq.s32.totalorder %v973, 3
      %vm1098 = vcmp.eq.s32.totalorder %v964, 3
      %vm1099 = vcmp.eq.s32.totalorder %v974, 3
      %vm1100 = vcmp.eq.s32.totalorder %v965, 3
      %vm1101 = vcmp.eq.s32.totalorder %v975, 3
      %vm1102 = vcmp.eq.s32.totalorder %v966, 3
      %vm1103 = vcmp.eq.s32.totalorder %v976, 3
      %vm1104 = vmpackc.low %vm1087, %vm1086
      %vm1105 = vmpackc.low %vm1089, %vm1088
      %vm1106 = vmpackc.low %vm1091, %vm1090
      %vm1107 = vmpackc.low %vm1093, %vm1092
      %vm1108 = vmpackc.low %vm1095, %vm1094
      %vm1109 = vmpackc.low %vm1097, %vm1096
      %vm1110 = vmpackc.low %vm1099, %vm1098
      %vm1111 = vmpackc.low %vm1101, %vm1100
      %vm1112 = vmpackc.low %vm1103, %vm1102
      %v1113 = vsel %vm1104, %v937, 0
      %v1114 = vsel %vm1105, %v938, 0
      %v1115 = vsel %vm1106, %v939, 0
      %v1116 = vsel %vm1107, %v940, 0
      %v1117 = vsel %vm1108, %v941, 0
      %v1118 = vsel %vm1109, %v942, 0
      %v1119 = vsel %vm1110, %v943, 0
      %v1120 = vsel %vm1111, %v944, 0
      %v1121 = vsel %vm1112, %v945, 0
      %v1122 = vld [vmem:[%s7] sm:$0xf]
      %v1123 = vld [vmem:[%s7 + $0x4] sm:$0xf]
      %v1124 = vld [vmem:[%s7 + $0x8] sm:$0xf]
      %v1125 = vld [vmem:[%s7 + $0xc] sm:$0xf]
      %v1126 = vld [vmem:[%s7 + $0x10] sm:$0xf]
      %v1127 = vld [vmem:[%s7 + $0x14] sm:$0xf]
      %v1128 = vld [vmem:[%s7 + $0x18] sm:$0xf]
      %v1129 = vld [vmem:[%s7 + $0x1c] sm:$0xf]
      %v1130 = vld [vmem:[%s7 + $0x20] sm:$0xf]
      %v1131 = vld [vmem:[%s7 + $0x24] sm:$0xf]
      %v1132 = vld [vmem:[%s7 + $0x28] sm:$0xf]
      %v1133 = vld [vmem:[%s7 + $0x2c] sm:$0xf]
      %v1134 = vld [vmem:[%s7 + $0x30] sm:$0xf]
      %v1135 = vld [vmem:[%s7 + $0x34] sm:$0xf]
      %v1136 = vld [vmem:[%s7 + $0x38] sm:$0xf]
      %v1137 = vld [vmem:[%s7 + $0x3c] sm:$0xf]
      %v1138 = vld [vmem:[%s7 + $0x40] sm:$0xf]
      %v1139 = vld [vmem:[%s7 + $0x44] sm:$0xf]
      %v1140 = vld [vmem:[%s7 + $0x48] sm:$0xf]
      %v1141 = vld [vmem:[%s7 + $0x4c] sm:$0xf]
      %v1142 = vld [vmem:[%s7 + $0x50] sm:$0xf]
      %v1143 = vld [vmem:[%s7 + $0x54] sm:$0xf]
      %v1144 = vld [vmem:[%s7 + $0x58] sm:$0xf]
      %v1145 = vld [vmem:[%s7 + $0x5c] sm:$0xf]
      %v1146 = vld [vmem:[%s7 + $0x60] sm:$0xf]
      %v1147 = vld [vmem:[%s7 + $0x64] sm:$0xf]
      %v1148 = vld [vmem:[%s7 + $0x68] sm:$0xf]
      %v1149 = vld [vmem:[%s7 + $0x6c] sm:$0xf]
      %v1150 = vld [vmem:[%s7 + $0x70] sm:$0xf]
      %v1151 = vld [vmem:[%s7 + $0x74] sm:$0xf]
      %v1152 = vld [vmem:[%s7 + $0x78] sm:$0xf]
      %v1153 = vld [vmem:[%s7 + $0x7c] sm:$0xf]
      %v1154 = vld [vmem:[%s7 + $0x80] sm:$0xf]
      %v1155 = vld [vmem:[%s7 + $0x84] sm:$0xf]
      %v1156 = vld [vmem:[%s7 + $0x88] sm:$0xf]
      %v1157 = vld [vmem:[%s7 + $0x8c] sm:$0xf]
      %v1158 = vld [vmem:[%s7 + $0x90] sm:$0xf]
      %v1159 = vld [vmem:[%s7 + $0x94] sm:$0xf]
      %v1160 = vld [vmem:[%s7 + $0x98] sm:$0xf]
      %v1161 = vld [vmem:[%s7 + $0x9c] sm:$0xf]
      %v1162 = vld [vmem:[%s7 + $0xa0] sm:$0xf]
      %v1163 = vld [vmem:[%s7 + $0xa4] sm:$0xf]
      %v1164 = vld [vmem:[%s7 + $0xa8] sm:$0xf]
      %v1165 = vld [vmem:[%s7 + $0xac] sm:$0xf]
      %v1166 = vld [vmem:[%s7 + $0xb0] sm:$0xf]
      %v1167 = vld [vmem:[%s7 + $0xb4] sm:$0xf]
      %v1168 = vld [vmem:[%s7 + $0xb8] sm:$0xf]
      %v1169 = vld [vmem:[%s7 + $0xbc] sm:$0xf]
      %v1170 = vld [vmem:[%s7 + $0xc0] sm:$0xf]
      %v1171 = vld [vmem:[%s7 + $0xc4] sm:$0xf]
      %v1172 = vld [vmem:[%s7 + $0xc8] sm:$0xf]
      %v1173 = vld [vmem:[%s7 + $0xcc] sm:$0xf]
      %v1174 = vld [vmem:[%s7 + $0xd0] sm:$0xf]
      %v1175 = vld [vmem:[%s7 + $0xd4] sm:$0xf]
      %v1176 = vld [vmem:[%s7 + $0xd8] sm:$0xf]
      %v1177 = vld [vmem:[%s7 + $0xdc] sm:$0xf]
      %v1178 = vld [vmem:[%s7 + $0xe0] sm:$0xf]
      %v1179 = vld [vmem:[%s7 + $0xe4] sm:$0xf]
      %v1180 = vld [vmem:[%s7 + $0xe8] sm:$0xf]
      %v1181 = vld [vmem:[%s7 + $0xec] sm:$0xf]
      %v1182 = vld [vmem:[%s7 + $0xf0] sm:$0xf]
      %v1183 = vld [vmem:[%s7 + $0xf4] sm:$0xf]
      %v1184 = vld [vmem:[%s7 + $0xf8] sm:$0xf]
      %v1185 = vld [vmem:[%s7 + $0xfc] sm:$0xf]
      %v1186 = vld [vmem:[%s7 + $0x100] sm:$0xf]
      %v1187 = vld [vmem:[%s7 + $0x104] sm:$0xf]
      %v1188 = vld [vmem:[%s7 + $0x108] sm:$0xf]
      %v1189 = vld [vmem:[%s7 + $0x10c] sm:$0xf]
      %v1190 = vld [vmem:[%s7 + $0x110] sm:$0xf]
      %v1191 = vld [vmem:[%s7 + $0x114] sm:$0xf]
      %v1192 = vld [vmem:[%s7 + $0x118] sm:$0xf]
      %v1193 = vld [vmem:[%s7 + $0x11c] sm:$0xf]
      %v1194 = vld [vmem:[%s7 + $0x120] sm:$0xf]
      %v1195 = vld [vmem:[%s7 + $0x124] sm:$0xf]
      %v1196 = vld [vmem:[%s7 + $0x128] sm:$0xf]
      %v1197 = vld [vmem:[%s7 + $0x12c] sm:$0xf]
      %v1198 = vld [vmem:[%s7 + $0x130] sm:$0xf]
      %v1199 = vld [vmem:[%s7 + $0x134] sm:$0xf]
      %v1200 = vld [vmem:[%s7 + $0x138] sm:$0xf]
      %v1201 = vld [vmem:[%s7 + $0x13c] sm:$0xf]
      %v1202 = vld [vmem:[%s7 + $0x140] sm:$0xf]
      %v1203 = vld [vmem:[%s7 + $0x144] sm:$0xf]
      %v1204 = vld [vmem:[%s7 + $0x148] sm:$0xf]
      %v1205 = vld [vmem:[%s7 + $0x14c] sm:$0xf]
      %v1206 = vld [vmem:[%s7 + $0x150] sm:$0xf]
      %v1207 = vld [vmem:[%s7 + $0x154] sm:$0xf]
      %v1208 = vld [vmem:[%s7 + $0x158] sm:$0xf]
      %v1209 = vld [vmem:[%s7 + $0x15c] sm:$0xf]
      %v1210 = vld [vmem:[%s7 + $0x160] sm:$0xf]
      %v1211 = vld [vmem:[%s7 + $0x164] sm:$0xf]
      %v1212 = vld [vmem:[%s7 + $0x168] sm:$0xf]
      %v1213 = vld [vmem:[%s7 + $0x16c] sm:$0xf]
      %v1214 = vld [vmem:[%s7 + $0x170] sm:$0xf]
      %v1215 = vld [vmem:[%s7 + $0x174] sm:$0xf]
      %v1216 = vld [vmem:[%s7 + $0x178] sm:$0xf]
      %v1217 = vld [vmem:[%s7 + $0x17c] sm:$0xf]
      %v1218 = vld [vmem:[%s7 + $0x180] sm:$0xf]
      %v1219 = vld [vmem:[%s7 + $0x184] sm:$0xf]
      %v1220 = vld [vmem:[%s7 + $0x188] sm:$0xf]
      %v1221 = vld [vmem:[%s7 + $0x18c] sm:$0xf]
      %v1222 = vld [vmem:[%s7 + $0x190] sm:$0xf]
      %v1223 = vld [vmem:[%s7 + $0x194] sm:$0xf]
      %v1224 = vld [vmem:[%s7 + $0x198] sm:$0xf]
      %v1225 = vld [vmem:[%s7 + $0x19c] sm:$0xf]
      %v1226 = vld [vmem:[%s7 + $0x1a0] sm:$0xf]
      %v1227 = vld [vmem:[%s7 + $0x1a4] sm:$0xf]
      %v1228 = vld [vmem:[%s7 + $0x1a8] sm:$0xf]
      %v1229 = vld [vmem:[%s7 + $0x1ac] sm:$0xf]
      %v1230 = vld [vmem:[%s7 + $0x1b0] sm:$0xf]
      %v1231 = vld [vmem:[%s7 + $0x1b4] sm:$0xf]
      %v1232 = vld [vmem:[%s7 + $0x1b8] sm:$0xf]
      %v1233 = vld [vmem:[%s7 + $0x1bc] sm:$0xf]
      %v1234 = vld [vmem:[%s7 + $0x1c0] sm:$0xf]
      %v1235 = vld [vmem:[%s7 + $0x1c4] sm:$0xf]
      %v1236 = vld [vmem:[%s7 + $0x1c8] sm:$0xf]
      %v1237 = vld [vmem:[%s7 + $0x1cc] sm:$0xf]
      %v1238 = vld [vmem:[%s7 + $0x1d0] sm:$0xf]
      %v1239 = vld [vmem:[%s7 + $0x1d4] sm:$0xf]
      %v1240 = vld [vmem:[%s7 + $0x1d8] sm:$0xf]
      %v1241 = vld [vmem:[%s7 + $0x1dc] sm:$0xf]
      %v1242 = vld [vmem:[%s7 + $0x1e0] sm:$0xf]
      %v1243 = vld [vmem:[%s7 + $0x1e4] sm:$0xf]
      %v1244 = vld [vmem:[%s7 + $0x1e8] sm:$0xf]
      %v1245 = vld [vmem:[%s7 + $0x1ec] sm:$0xf]
      %v1246 = vld [vmem:[%s7 + $0x1f0] sm:$0xf]
      %v1247 = vld [vmem:[%s7 + $0x1f4] sm:$0xf]
      %v1248 = vld [vmem:[%s7 + $0x1f8] sm:$0xf]
      %v1249 = vld [vmem:[%s7 + $0x1fc] sm:$0xf]
      %v1250 = vld [vmem:[%s7 + $0x200] sm:$0xf]
      %v1251 = vld [vmem:[%s7 + $0x204] sm:$0xf]
      %v1252 = vld [vmem:[%s7 + $0x208] sm:$0xf]
      %v1253 = vld [vmem:[%s7 + $0x20c] sm:$0xf]
      %v1254 = vld [vmem:[%s7 + $0x210] sm:$0xf]
      %v1255 = vld [vmem:[%s7 + $0x214] sm:$0xf]
      %v1256 = vld [vmem:[%s7 + $0x218] sm:$0xf]
      %v1257 = vld [vmem:[%s7 + $0x21c] sm:$0xf]
      %v1258 = vld [vmem:[%s7 + $0x220] sm:$0xf]
      %v1259 = vld [vmem:[%s7 + $0x224] sm:$0xf]
      %v1260 = vld [vmem:[%s7 + $0x228] sm:$0xf]
      %v1261 = vld [vmem:[%s7 + $0x22c] sm:$0xf]
      %v1262 = vld [vmem:[%s7 + $0x230] sm:$0xf]
      %v1263 = vld [vmem:[%s7 + $0x234] sm:$0xf]
      %v1264 = vld [vmem:[%s7 + $0x238] sm:$0xf]
      %v1265 = vld [vmem:[%s7 + $0x23c] sm:$0xf]
      %v1266 = vld [vmem:[%s7 + $0x240] sm:$0xf]
      %v1267 = vld [vmem:[%s7 + $0x244] sm:$0xf]
      %v1268 = vld [vmem:[%s7 + $0x248] sm:$0xf]
      %v1269 = vld [vmem:[%s7 + $0x24c] sm:$0xf]
      %v1270 = vld [vmem:[%s7 + $0x250] sm:$0xf]
      %v1271 = vld [vmem:[%s7 + $0x254] sm:$0xf]
      %v1272 = vld [vmem:[%s7 + $0x258] sm:$0xf]
      %v1273 = vld [vmem:[%s7 + $0x25c] sm:$0xf]
      %v1274 = vld [vmem:[%s7 + $0x260] sm:$0xf]
      %v1275 = vld [vmem:[%s7 + $0x264] sm:$0xf]
      %v1276 = vld [vmem:[%s7 + $0x268] sm:$0xf]
      %v1277 = vld [vmem:[%s7 + $0x26c] sm:$0xf]
      %v1278 = vld [vmem:[%s7 + $0x270] sm:$0xf]
      %v1279 = vld [vmem:[%s7 + $0x274] sm:$0xf]
      %v1280 = vld [vmem:[%s7 + $0x278] sm:$0xf]
      %v1281 = vld [vmem:[%s7 + $0x27c] sm:$0xf]
      %v1282 = vld [vmem:[%s8] sm:$0x1]
      %v1283 = vld [vmem:[%s9] sm:$0xf]
      %v1284 = vld [vmem:[%s9 + $0x4] sm:$0xf]
      %v1285 = vld [vmem:[%s9 + $0x8] sm:$0xf]
      %v1286 = vld [vmem:[%s9 + $0xc] sm:$0xf]
      %v1287 = vld [vmem:[%s9 + $0x10] sm:$0xf]
      %v1288 = vld [vmem:[%s9 + $0x14] sm:$0xf]
      %v1289 = vld [vmem:[%s9 + $0x18] sm:$0xf]
      %v1290 = vld [vmem:[%s9 + $0x1c] sm:$0xf]
      %v1291 = vld [vmem:[%s9 + $0x20] sm:$0xf]
      %v1292 = vld [vmem:[%s9 + $0x24] sm:$0xf]
      %v1293 = vld [vmem:[%s9 + $0x28] sm:$0xf]
      %v1294 = vld [vmem:[%s9 + $0x2c] sm:$0xf]
      %v1295 = vld [vmem:[%s9 + $0x30] sm:$0xf]
      %v1296 = vld [vmem:[%s9 + $0x34] sm:$0xf]
      %v1297 = vld [vmem:[%s9 + $0x38] sm:$0xf]
      %v1298 = vld [vmem:[%s9 + $0x3c] sm:$0xf]
      %v1299 = vld [vmem:[%s10] sm:$0x1f]
      %v1300 = vld [vmem:[%s11] sm:$0x1]
      %v1301 = vld [vmem:[%s749] sm:$0xf]
      %v1302 = vld [vmem:[%s749 + $0x4] sm:$0xf]
      %v1303 = vld [vmem:[%s749 + $0x8] sm:$0xf]
      %v1304 = vld [vmem:[%s749 + $0xc] sm:$0xf]
      %v1305 = vld [vmem:[%s749 + $0x10] sm:$0xf]
      %v1306 = vld [vmem:[%s749 + $0x14] sm:$0xf]
      %v1307 = vld [vmem:[%s749 + $0x18] sm:$0xf]
      %v1308 = vld [vmem:[%s749 + $0x1c] sm:$0xf]
      %v1309 = vunpack.c.l.bf16 %v1301
      %v1310 = vunpack.c.l.bf16 %v1302
      %v1311 = vunpack.c.l.bf16 %v1303
      %v1312 = vunpack.c.l.bf16 %v1304
      %v1313 = vunpack.c.l.bf16 %v1305
      %v1314 = vunpack.c.l.bf16 %v1306
      %v1315 = vunpack.c.l.bf16 %v1307
      %v1316 = vunpack.c.l.bf16 %v1308
      %v1317 = vlaneseq
      %v1318 = vand.u32 %v1317, 127
      %v1327 = vunpack.c.l.b16 %v1077
      %v1328 = vunpack.c.h.b16 %v1077
      %v1329 = vunpack.c.l.b16 %v1078
      %v1330 = vunpack.c.h.b16 %v1078
      %v1331 = vunpack.c.l.b16 %v1079
      %v1332 = vunpack.c.h.b16 %v1079
      %v1333 = vunpack.c.l.b16 %v1080
      %v1334 = vunpack.c.h.b16 %v1080
      %v1335 = vunpack.c.l.b16 %v1081
      %v1336 = vunpack.c.h.b16 %v1081
      %v1337 = vunpack.c.l.b16 %v1082
      %v1338 = vunpack.c.h.b16 %v1082
      %v1339 = vunpack.c.l.b16 %v1083
      %v1340 = vunpack.c.h.b16 %v1083
      %v1341 = vunpack.c.l.b16 %v1084
      %v1342 = vunpack.c.h.b16 %v1084
      %v1343 = vpack.c.b16 %v1327, %v1327
      %v1344 = vpack.c.b16 %v1328, %v1328
      %v1345 = vpack.c.b16 %v1329, %v1329
      %v1346 = vpack.c.b16 %v1330, %v1330
      %v1347 = vpack.c.b16 %v1331, %v1331
      %v1348 = vpack.c.b16 %v1332, %v1332
      %v1349 = vpack.c.b16 %v1333, %v1333
      %v1350 = vpack.c.b16 %v1334, %v1334
      %v1351 = vpack.c.b16 %v1335, %v1335
      %v1352 = vpack.c.b16 %v1336, %v1336
      %v1353 = vpack.c.b16 %v1337, %v1337
      %v1354 = vpack.c.b16 %v1338, %v1338
      %v1355 = vpack.c.b16 %v1339, %v1339
      %v1356 = vpack.c.b16 %v1340, %v1340
      %v1357 = vpack.c.b16 %v1341, %v1341
      %v1358 = vpack.c.b16 %v1342, %v1342
      %vm1359 = vsmask.f32 3328
      %vm1360 = vsmask.f32 7440
      %vm1361 = vmor %vm1359, %vm1360
      %v1363 = vshrl.u32 %v1343, 16
      %v1365 = vrot.slane %v1363, 4
      %v1366 = vshll.u32 %v1343, 16
      %v1368 = vrot.slane %v1366, 5
      %v1369 = vor.u32 %v1365, %v1368
      %v1370 = vrot.slane %v1369, 4
      %v1372 = vshll.u32 %v1344, 16
      %v1374 = vrot.slane %v1372, 5
      %v1375 = vsel %vm1361, %v1370, %v1374
      %v1377 = vshrl.u32 %v1345, 16
      %v1379 = vrot.slane %v1377, 4
      %v1380 = vshll.u32 %v1345, 16
      %v1382 = vrot.slane %v1380, 5
      %v1383 = vor.u32 %v1379, %v1382
      %v1384 = vrot.slane %v1383, 4
      %v1386 = vshll.u32 %v1346, 16
      %v1388 = vrot.slane %v1386, 5
      %v1389 = vsel %vm1361, %v1384, %v1388
      %v1391 = vshrl.u32 %v1347, 16
      %v1393 = vrot.slane %v1391, 4
      %v1394 = vshll.u32 %v1347, 16
      %v1396 = vrot.slane %v1394, 5
      %v1397 = vor.u32 %v1393, %v1396
      %v1398 = vrot.slane %v1397, 4
      %v1400 = vshll.u32 %v1348, 16
      %v1402 = vrot.slane %v1400, 5
      %v1403 = vsel %vm1361, %v1398, %v1402
      %v1405 = vshrl.u32 %v1349, 16
      %v1407 = vrot.slane %v1405, 4
      %v1408 = vshll.u32 %v1349, 16
      %v1410 = vrot.slane %v1408, 5
      %v1411 = vor.u32 %v1407, %v1410
      %v1412 = vrot.slane %v1411, 4
      %v1414 = vshll.u32 %v1350, 16
      %v1416 = vrot.slane %v1414, 5
      %v1417 = vsel %vm1361, %v1412, %v1416
      %v1419 = vshrl.u32 %v1351, 16
      %v1421 = vrot.slane %v1419, 4
      %v1422 = vshll.u32 %v1351, 16
      %v1424 = vrot.slane %v1422, 5
      %v1425 = vor.u32 %v1421, %v1424
      %v1426 = vrot.slane %v1425, 4
      %v1428 = vshll.u32 %v1352, 16
      %v1430 = vrot.slane %v1428, 5
      %v1431 = vsel %vm1361, %v1426, %v1430
      %v1433 = vshrl.u32 %v1353, 16
      %v1435 = vrot.slane %v1433, 4
      %v1436 = vshll.u32 %v1353, 16
      %v1438 = vrot.slane %v1436, 5
      %v1439 = vor.u32 %v1435, %v1438
      %v1440 = vrot.slane %v1439, 4
      %v1442 = vshll.u32 %v1354, 16
      %v1444 = vrot.slane %v1442, 5
      %v1445 = vsel %vm1361, %v1440, %v1444
      %v1447 = vshrl.u32 %v1355, 16
      %v1449 = vrot.slane %v1447, 4
      %v1450 = vshll.u32 %v1355, 16
      %v1452 = vrot.slane %v1450, 5
      %v1453 = vor.u32 %v1449, %v1452
      %v1454 = vrot.slane %v1453, 4
      %v1456 = vshll.u32 %v1356, 16
      %v1458 = vrot.slane %v1456, 5
      %v1459 = vsel %vm1361, %v1454, %v1458
      %v1461 = vshrl.u32 %v1357, 16
      %v1463 = vrot.slane %v1461, 4
      %v1464 = vshll.u32 %v1357, 16
      %v1466 = vrot.slane %v1464, 5
      %v1467 = vor.u32 %v1463, %v1466
      %v1468 = vrot.slane %v1467, 4
      %v1470 = vshll.u32 %v1358, 16
      %v1472 = vrot.slane %v1470, 5
      %v1473 = vsel %vm1361, %v1468, %v1472
      %v1482 = vunpack.c.l.b16 %v1113
      %v1483 = vunpack.c.l.b16 %v1114
      %v1484 = vunpack.c.l.b16 %v1115
      %v1485 = vunpack.c.l.b16 %v1116
      %v1486 = vunpack.c.l.b16 %v1117
      %v1487 = vunpack.c.l.b16 %v1118
      %v1488 = vunpack.c.l.b16 %v1119
      %v1489 = vunpack.c.l.b16 %v1120
      %v1490 = vpack.c.b16 %v1483, %v1482
      %v1491 = vpack.c.b16 %v1485, %v1484
      %v1492 = vpack.c.b16 %v1487, %v1486
      %v1493 = vpack.c.b16 %v1489, %v1488
      %v1498 = vunpack.c.l.b16 %v1375
      %v1499 = vunpack.c.l.b16 %v1389
      %v1500 = vunpack.c.l.b16 %v1403
      %v1501 = vunpack.c.l.b16 %v1417
      %v1502 = vunpack.c.l.b16 %v1431
      %v1503 = vunpack.c.l.b16 %v1445
      %v1504 = vunpack.c.l.b16 %v1459
      %v1505 = vunpack.c.l.b16 %v1473
      %v1506 = vpack.c.b16 %v1499, %v1498
      %v1507 = vpack.c.b16 %v1501, %v1500
      %v1508 = vpack.c.b16 %v1503, %v1502
      %v1509 = vpack.c.b16 %v1505, %v1504
      %v1514 = vunpack.c.h.b16 %v1113
      %v1515 = vunpack.c.h.b16 %v1114
      %v1516 = vunpack.c.h.b16 %v1115
      %v1517 = vunpack.c.h.b16 %v1116
      %v1518 = vunpack.c.h.b16 %v1117
      %v1519 = vunpack.c.h.b16 %v1118
      %v1520 = vunpack.c.h.b16 %v1119
      %v1521 = vunpack.c.h.b16 %v1120
      %v1522 = vpack.c.b16 %v1482, %v1482
      %v1523 = vpack.c.b16 %v1514, %v1514
      %v1524 = vpack.c.b16 %v1483, %v1483
      %v1525 = vpack.c.b16 %v1515, %v1515
      %v1526 = vpack.c.b16 %v1484, %v1484
      %v1527 = vpack.c.b16 %v1516, %v1516
      %v1528 = vpack.c.b16 %v1485, %v1485
      %v1529 = vpack.c.b16 %v1517, %v1517
      %v1530 = vpack.c.b16 %v1486, %v1486
      %v1531 = vpack.c.b16 %v1518, %v1518
      %v1532 = vpack.c.b16 %v1487, %v1487
      %v1533 = vpack.c.b16 %v1519, %v1519
      %v1534 = vpack.c.b16 %v1488, %v1488
      %v1535 = vpack.c.b16 %v1520, %v1520
      %v1536 = vpack.c.b16 %v1489, %v1489
      %v1537 = vpack.c.b16 %v1521, %v1521
      %v1539 = vshrl.u32 %v1522, 16
      %v1541 = vrot.slane %v1539, 4
      %v1542 = vshll.u32 %v1522, 16
      %v1544 = vrot.slane %v1542, 5
      %v1545 = vor.u32 %v1541, %v1544
      %v1546 = vrot.slane %v1545, 4
      %v1548 = vshll.u32 %v1523, 16
      %v1550 = vrot.slane %v1548, 5
      %v1551 = vsel %vm1361, %v1546, %v1550
      %v1553 = vshrl.u32 %v1524, 16
      %v1555 = vrot.slane %v1553, 4
      %v1556 = vshll.u32 %v1524, 16
      %v1558 = vrot.slane %v1556, 5
      %v1559 = vor.u32 %v1555, %v1558
      %v1560 = vrot.slane %v1559, 4
      %v1562 = vshll.u32 %v1525, 16
      %v1564 = vrot.slane %v1562, 5
      %v1565 = vsel %vm1361, %v1560, %v1564
      %v1567 = vshrl.u32 %v1526, 16
      %v1569 = vrot.slane %v1567, 4
      %v1570 = vshll.u32 %v1526, 16
      %v1572 = vrot.slane %v1570, 5
      %v1573 = vor.u32 %v1569, %v1572
      %v1574 = vrot.slane %v1573, 4
      %v1576 = vshll.u32 %v1527, 16
      %v1578 = vrot.slane %v1576, 5
      %v1579 = vsel %vm1361, %v1574, %v1578
      %v1581 = vshrl.u32 %v1528, 16
      %v1583 = vrot.slane %v1581, 4
      %v1584 = vshll.u32 %v1528, 16
      %v1586 = vrot.slane %v1584, 5
      %v1587 = vor.u32 %v1583, %v1586
      %v1588 = vrot.slane %v1587, 4
      %v1590 = vshll.u32 %v1529, 16
      %v1592 = vrot.slane %v1590, 5
      %v1593 = vsel %vm1361, %v1588, %v1592
      %v1595 = vshrl.u32 %v1530, 16
      %v1597 = vrot.slane %v1595, 4
      %v1598 = vshll.u32 %v1530, 16
      %v1600 = vrot.slane %v1598, 5
      %v1601 = vor.u32 %v1597, %v1600
      %v1602 = vrot.slane %v1601, 4
      %v1604 = vshll.u32 %v1531, 16
      %v1606 = vrot.slane %v1604, 5
      %v1607 = vsel %vm1361, %v1602, %v1606
      %v1609 = vshrl.u32 %v1532, 16
      %v1611 = vrot.slane %v1609, 4
      %v1612 = vshll.u32 %v1532, 16
      %v1614 = vrot.slane %v1612, 5
      %v1615 = vor.u32 %v1611, %v1614
      %v1616 = vrot.slane %v1615, 4
      %v1618 = vshll.u32 %v1533, 16
      %v1620 = vrot.slane %v1618, 5
      %v1621 = vsel %vm1361, %v1616, %v1620
      %v1623 = vshrl.u32 %v1534, 16
      %v1625 = vrot.slane %v1623, 4
      %v1626 = vshll.u32 %v1534, 16
      %v1628 = vrot.slane %v1626, 5
      %v1629 = vor.u32 %v1625, %v1628
      %v1630 = vrot.slane %v1629, 4
      %v1632 = vshll.u32 %v1535, 16
      %v1634 = vrot.slane %v1632, 5
      %v1635 = vsel %vm1361, %v1630, %v1634
      %v1637 = vshrl.u32 %v1536, 16
      %v1639 = vrot.slane %v1637, 4
      %v1640 = vshll.u32 %v1536, 16
      %v1642 = vrot.slane %v1640, 5
      %v1643 = vor.u32 %v1639, %v1642
      %v1644 = vrot.slane %v1643, 4
      %v1646 = vshll.u32 %v1537, 16
      %v1648 = vrot.slane %v1646, 5
      %v1649 = vsel %vm1361, %v1644, %v1648
      %v1650 = vunpack.c.l.b16 %v1551
      %v1651 = vunpack.c.l.b16 %v1565
      %v1652 = vunpack.c.l.b16 %v1579
      %v1653 = vunpack.c.l.b16 %v1593
      %v1654 = vunpack.c.l.b16 %v1607
      %v1655 = vunpack.c.l.b16 %v1621
      %v1656 = vunpack.c.l.b16 %v1635
      %v1657 = vunpack.c.l.b16 %v1649
      %v1658 = vpack.c.b16 %v1651, %v1650
      %v1659 = vpack.c.b16 %v1653, %v1652
      %v1660 = vpack.c.b16 %v1655, %v1654
      %v1661 = vpack.c.b16 %v1657, %v1656
      %v1674 = vunpack.c.l.b16 %v1041
      %v1675 = vunpack.c.l.b16 %v1042
      %v1676 = vunpack.c.l.b16 %v1043
      %v1677 = vunpack.c.l.b16 %v1044
      %v1678 = vunpack.c.l.b16 %v1045
      %v1679 = vunpack.c.l.b16 %v1046
      %v1680 = vunpack.c.l.b16 %v1047
      %v1681 = vunpack.c.l.b16 %v1048
      %v1682 = vpack.c.b16 %v1675, %v1674
      %v1683 = vpack.c.b16 %v1677, %v1676
      %v1684 = vpack.c.b16 %v1679, %v1678
      %v1685 = vpack.c.b16 %v1681, %v1680
      %v1722 = vunpack.c.l.b16 %v1154
      %v1723 = vunpack.c.l.b16 %v1155
      %v1724 = vunpack.c.l.b16 %v1156
      %v1725 = vunpack.c.l.b16 %v1157
      %v1726 = vunpack.c.l.b16 %v1158
      %v1727 = vunpack.c.l.b16 %v1159
      %v1728 = vunpack.c.l.b16 %v1160
      %v1729 = vunpack.c.l.b16 %v1161
      %v1730 = vunpack.c.l.b16 %v1162
      %v1731 = vunpack.c.l.b16 %v1163
      %v1732 = vunpack.c.l.b16 %v1164
      %v1733 = vunpack.c.l.b16 %v1165
      %v1734 = vunpack.c.l.b16 %v1166
      %v1735 = vunpack.c.l.b16 %v1167
      %v1736 = vunpack.c.l.b16 %v1168
      %v1737 = vunpack.c.l.b16 %v1169
      %v1738 = vunpack.c.l.b16 %v1170
      %v1739 = vunpack.c.l.b16 %v1171
      %v1740 = vunpack.c.l.b16 %v1172
      %v1741 = vunpack.c.l.b16 %v1173
      %v1742 = vunpack.c.l.b16 %v1174
      %v1743 = vunpack.c.l.b16 %v1175
      %v1744 = vunpack.c.l.b16 %v1176
      %v1745 = vunpack.c.l.b16 %v1177
      %v1746 = vunpack.c.l.b16 %v1178
      %v1747 = vunpack.c.l.b16 %v1179
      %v1748 = vunpack.c.l.b16 %v1180
      %v1749 = vunpack.c.l.b16 %v1181
      %v1750 = vunpack.c.l.b16 %v1182
      %v1751 = vunpack.c.l.b16 %v1183
      %v1752 = vunpack.c.l.b16 %v1184
      %v1753 = vunpack.c.l.b16 %v1185
      %v1754 = vpack.c.b16 %v1723, %v1722
      %v1755 = vpack.c.b16 %v1725, %v1724
      %v1756 = vpack.c.b16 %v1727, %v1726
      %v1757 = vpack.c.b16 %v1729, %v1728
      %v1758 = vpack.c.b16 %v1731, %v1730
      %v1759 = vpack.c.b16 %v1733, %v1732
      %v1760 = vpack.c.b16 %v1735, %v1734
      %v1761 = vpack.c.b16 %v1737, %v1736
      %v1762 = vpack.c.b16 %v1739, %v1738
      %v1763 = vpack.c.b16 %v1741, %v1740
      %v1764 = vpack.c.b16 %v1743, %v1742
      %v1765 = vpack.c.b16 %v1745, %v1744
      %v1766 = vpack.c.b16 %v1747, %v1746
      %v1767 = vpack.c.b16 %v1749, %v1748
      %v1768 = vpack.c.b16 %v1751, %v1750
      %v1769 = vpack.c.b16 %v1753, %v1752
      %1786 = vmatprep.subr.bf16.mxu0 0
      %1787 = vmatpush1.bf16.msra.mxu0 %v1761
      %1788 = vmatprep.subr.bf16.mxu0 0
      %1789 = vmatpush1.bf16.msra.mxu0 %v1760
      %1790 = vmatprep.subr.bf16.mxu0 0
      %1791 = vmatpush1.bf16.msra.mxu0 %v1759
      %1792 = vmatprep.subr.bf16.mxu0 0
      %1793 = vmatpush1.bf16.msra.mxu0 %v1758
      %1794 = vmatprep.subr.bf16.mxu0 0
      %1795 = vmatpush1.bf16.msra.mxu0 %v1757
      %1796 = vmatprep.subr.bf16.mxu0 0
      %1797 = vmatpush1.bf16.msra.mxu0 %v1756
      %1798 = vmatprep.subr.bf16.mxu0 0
      %1799 = vmatpush1.bf16.msra.mxu0 %v1755
      %1800 = vmatprep.subr.bf16.mxu0 0
      %1801 = vmatpush1.bf16.msra.mxu0 %v1754
      %1802 = vmatprep.subr.bf16.mxu0 0
      %1803 = vmatpush2.bf16.msra.mxu0 %v1769
      %1804 = vmatprep.subr.bf16.mxu0 0
      %1805 = vmatpush2.bf16.msra.mxu0 %v1768
      %1806 = vmatprep.subr.bf16.mxu0 0
      %1807 = vmatpush2.bf16.msra.mxu0 %v1767
      %1808 = vmatprep.subr.bf16.mxu0 0
      %1809 = vmatpush2.bf16.msra.mxu0 %v1766
      %1810 = vmatprep.subr.bf16.mxu0 0
      %1811 = vmatpush2.bf16.msra.mxu0 %v1765
      %1812 = vmatprep.subr.bf16.mxu0 0
      %1813 = vmatpush2.bf16.msra.mxu0 %v1764
      %1814 = vmatprep.subr.bf16.mxu0 0
      %1815 = vmatpush2.bf16.msra.mxu0 %v1763
      %1816 = vmatprep.subr.bf16.mxu0 0
      %1817 = vmatpush2.bf16.msra.mxu0 %v1762
      %1818 = vmatprep.mubr.bf16.mxu0 %v1682
      %1819 = vmatmul.mubr.bf16.gmra.mxu0 %v1658
      %v1820 = vpop.f32.mrf.mxu0
      %v1821 = vadd.f32 0.0, %v1820
      %v1822 = vpop.f32.mrf.mxu0
      %v1823 = vpop.f32.mrf.mxu0
      %v1824 = vadd.f32 0.0, %v1823
      %v1825 = vpop.f32.mrf.mxu0
      %1826 = vmatprep.mubr.bf16.mxu0 %v1683
      %1827 = vmatmul.mubr.bf16.gmra.mxu0 %v1659
      %v1828 = vpop.f32.mrf.mxu0
      %v1829 = vadd.f32 0.0, %v1828
      %v1830 = vpop.f32.mrf.mxu0
      %v1831 = vpop.f32.mrf.mxu0
      %v1832 = vadd.f32 0.0, %v1831
      %v1833 = vpop.f32.mrf.mxu0
      %1834 = vmatprep.mubr.bf16.mxu0 %v1684
      %1835 = vmatmul.mubr.bf16.gmra.mxu0 %v1660
      %v1836 = vpop.f32.mrf.mxu0
      %v1837 = vadd.f32 0.0, %v1836
      %v1838 = vpop.f32.mrf.mxu0
      %v1839 = vpop.f32.mrf.mxu0
      %v1840 = vadd.f32 0.0, %v1839
      %v1841 = vpop.f32.mrf.mxu0
      %1842 = vmatprep.mubr.bf16.mxu0 %v1685
      %1843 = vmatmul.mubr.bf16.gmra.mxu0 %v1661
      %v1844 = vpop.f32.mrf.mxu0
      %v1845 = vadd.f32 0.0, %v1844
      %v1846 = vpop.f32.mrf.mxu0
      %v1847 = vpop.f32.mrf.mxu0
      %v1848 = vadd.f32 0.0, %v1847
      %v1849 = vpop.f32.mrf.mxu0
      %1850 = vdwg.mxu0
      %v1883 = vunpack.c.l.b16 %v1122
      %v1884 = vunpack.c.l.b16 %v1123
      %v1885 = vunpack.c.l.b16 %v1124
      %v1886 = vunpack.c.l.b16 %v1125
      %v1887 = vunpack.c.l.b16 %v1126
      %v1888 = vunpack.c.l.b16 %v1127
      %v1889 = vunpack.c.l.b16 %v1128
      %v1890 = vunpack.c.l.b16 %v1129
      %v1891 = vunpack.c.l.b16 %v1130
      %v1892 = vunpack.c.l.b16 %v1131
      %v1893 = vunpack.c.l.b16 %v1132
      %v1894 = vunpack.c.l.b16 %v1133
      %v1895 = vunpack.c.l.b16 %v1134
      %v1896 = vunpack.c.l.b16 %v1135
      %v1897 = vunpack.c.l.b16 %v1136
      %v1898 = vunpack.c.l.b16 %v1137
      %v1899 = vunpack.c.l.b16 %v1138
      %v1900 = vunpack.c.l.b16 %v1139
      %v1901 = vunpack.c.l.b16 %v1140
      %v1902 = vunpack.c.l.b16 %v1141
      %v1903 = vunpack.c.l.b16 %v1142
      %v1904 = vunpack.c.l.b16 %v1143
      %v1905 = vunpack.c.l.b16 %v1144
      %v1906 = vunpack.c.l.b16 %v1145
      %v1907 = vunpack.c.l.b16 %v1146
      %v1908 = vunpack.c.l.b16 %v1147
      %v1909 = vunpack.c.l.b16 %v1148
      %v1910 = vunpack.c.l.b16 %v1149
      %v1911 = vunpack.c.l.b16 %v1150
      %v1912 = vunpack.c.l.b16 %v1151
      %v1913 = vunpack.c.l.b16 %v1152
      %v1914 = vunpack.c.l.b16 %v1153
      %v1915 = vpack.c.b16 %v1884, %v1883
      %v1916 = vpack.c.b16 %v1886, %v1885
      %v1917 = vpack.c.b16 %v1888, %v1887
      %v1918 = vpack.c.b16 %v1890, %v1889
      %v1919 = vpack.c.b16 %v1892, %v1891
      %v1920 = vpack.c.b16 %v1894, %v1893
      %v1921 = vpack.c.b16 %v1896, %v1895
      %v1922 = vpack.c.b16 %v1898, %v1897
      %v1923 = vpack.c.b16 %v1900, %v1899
      %v1924 = vpack.c.b16 %v1902, %v1901
      %v1925 = vpack.c.b16 %v1904, %v1903
      %v1926 = vpack.c.b16 %v1906, %v1905
      %v1927 = vpack.c.b16 %v1908, %v1907
      %v1928 = vpack.c.b16 %v1910, %v1909
      %v1929 = vpack.c.b16 %v1912, %v1911
      %v1930 = vpack.c.b16 %v1914, %v1913
      %1947 = vmatprep.subr.bf16.mxu0 0
      %1948 = vmatpush1.bf16.msra.mxu0 %v1922
      %1949 = vmatprep.subr.bf16.mxu0 0
      %1950 = vmatpush1.bf16.msra.mxu0 %v1921
      %1951 = vmatprep.subr.bf16.mxu0 0
      %1952 = vmatpush1.bf16.msra.mxu0 %v1920
      %1953 = vmatprep.subr.bf16.mxu0 0
      %1954 = vmatpush1.bf16.msra.mxu0 %v1919
      %1955 = vmatprep.subr.bf16.mxu0 0
      %1956 = vmatpush1.bf16.msra.mxu0 %v1918
      %1957 = vmatprep.subr.bf16.mxu0 0
      %1958 = vmatpush1.bf16.msra.mxu0 %v1917
      %1959 = vmatprep.subr.bf16.mxu0 0
      %1960 = vmatpush1.bf16.msra.mxu0 %v1916
      %1961 = vmatprep.subr.bf16.mxu0 0
      %1962 = vmatpush1.bf16.msra.mxu0 %v1915
      %1963 = vmatprep.subr.bf16.mxu0 0
      %1964 = vmatpush2.bf16.msra.mxu0 %v1930
      %1965 = vmatprep.subr.bf16.mxu0 0
      %1966 = vmatpush2.bf16.msra.mxu0 %v1929
      %1967 = vmatprep.subr.bf16.mxu0 0
      %1968 = vmatpush2.bf16.msra.mxu0 %v1928
      %1969 = vmatprep.subr.bf16.mxu0 0
      %1970 = vmatpush2.bf16.msra.mxu0 %v1927
      %1971 = vmatprep.subr.bf16.mxu0 0
      %1972 = vmatpush2.bf16.msra.mxu0 %v1926
      %1973 = vmatprep.subr.bf16.mxu0 0
      %1974 = vmatpush2.bf16.msra.mxu0 %v1925
      %1975 = vmatprep.subr.bf16.mxu0 0
      %1976 = vmatpush2.bf16.msra.mxu0 %v1924
      %1977 = vmatprep.subr.bf16.mxu0 0
      %1978 = vmatpush2.bf16.msra.mxu0 %v1923
      %1979 = vmatprep.mubr.bf16.mxu0 %v1506
      %1980 = vmatmul.mubr.bf16.gmra.mxu0 %v1490
      %v1981 = vpop.f32.mrf.mxu0
      %v1982 = vadd.f32 %v1821, %v1981
      %v1983 = vpop.f32.mrf.mxu0
      %v1984 = vpop.f32.mrf.mxu0
      %v1985 = vadd.f32 %v1824, %v1984
      %v1986 = vpop.f32.mrf.mxu0
      %1987 = vmatprep.mubr.bf16.mxu0 %v1507
      %1988 = vmatmul.mubr.bf16.gmra.mxu0 %v1491
      %v1989 = vpop.f32.mrf.mxu0
      %v1990 = vadd.f32 %v1829, %v1989
      %v1991 = vpop.f32.mrf.mxu0
      %v1992 = vpop.f32.mrf.mxu0
      %v1993 = vadd.f32 %v1832, %v1992
      %v1994 = vpop.f32.mrf.mxu0
      %1995 = vmatprep.mubr.bf16.mxu0 %v1508
      %1996 = vmatmul.mubr.bf16.gmra.mxu0 %v1492
      %v1997 = vpop.f32.mrf.mxu0
      %v1998 = vadd.f32 %v1837, %v1997
      %v1999 = vpop.f32.mrf.mxu0
      %v2000 = vpop.f32.mrf.mxu0
      %v2001 = vadd.f32 %v1840, %v2000
      %v2002 = vpop.f32.mrf.mxu0
      %2003 = vmatprep.mubr.bf16.mxu0 %v1509
      %2004 = vmatmul.mubr.bf16.gmra.mxu0 %v1493
      %v2005 = vpop.f32.mrf.mxu0
      %v2006 = vadd.f32 %v1845, %v2005
      %v2007 = vpop.f32.mrf.mxu0
      %v2008 = vpop.f32.mrf.mxu0
      %v2009 = vadd.f32 %v1848, %v2008
      %v2010 = vpop.f32.mrf.mxu0
      %2011 = vdwg.mxu0
      %v2020 = vunpack.c.l.b16 %v1005
      %v2021 = vunpack.c.h.b16 %v1005
      %v2022 = vunpack.c.l.b16 %v1006
      %v2023 = vunpack.c.h.b16 %v1006
      %v2024 = vunpack.c.l.b16 %v1007
      %v2025 = vunpack.c.h.b16 %v1007
      %v2026 = vunpack.c.l.b16 %v1008
      %v2027 = vunpack.c.h.b16 %v1008
      %v2028 = vunpack.c.l.b16 %v1009
      %v2029 = vunpack.c.h.b16 %v1009
      %v2030 = vunpack.c.l.b16 %v1010
      %v2031 = vunpack.c.h.b16 %v1010
      %v2032 = vunpack.c.l.b16 %v1011
      %v2033 = vunpack.c.h.b16 %v1011
      %v2034 = vunpack.c.l.b16 %v1012
      %v2035 = vunpack.c.h.b16 %v1012
      %v2036 = vpack.c.b16 %v2020, %v2020
      %v2037 = vpack.c.b16 %v2021, %v2021
      %v2038 = vpack.c.b16 %v2022, %v2022
      %v2039 = vpack.c.b16 %v2023, %v2023
      %v2040 = vpack.c.b16 %v2024, %v2024
      %v2041 = vpack.c.b16 %v2025, %v2025
      %v2042 = vpack.c.b16 %v2026, %v2026
      %v2043 = vpack.c.b16 %v2027, %v2027
      %v2044 = vpack.c.b16 %v2028, %v2028
      %v2045 = vpack.c.b16 %v2029, %v2029
      %v2046 = vpack.c.b16 %v2030, %v2030
      %v2047 = vpack.c.b16 %v2031, %v2031
      %v2048 = vpack.c.b16 %v2032, %v2032
      %v2049 = vpack.c.b16 %v2033, %v2033
      %v2050 = vpack.c.b16 %v2034, %v2034
      %v2051 = vpack.c.b16 %v2035, %v2035
      %v2053 = vshrl.u32 %v2036, 16
      %v2055 = vrot.slane %v2053, 4
      %v2056 = vshll.u32 %v2036, 16
      %v2058 = vrot.slane %v2056, 5
      %v2059 = vor.u32 %v2055, %v2058
      %v2060 = vrot.slane %v2059, 4
      %v2062 = vshll.u32 %v2037, 16
      %v2064 = vrot.slane %v2062, 5
      %v2065 = vsel %vm1361, %v2060, %v2064
      %v2067 = vshrl.u32 %v2038, 16
      %v2069 = vrot.slane %v2067, 4
      %v2070 = vshll.u32 %v2038, 16
      %v2072 = vrot.slane %v2070, 5
      %v2073 = vor.u32 %v2069, %v2072
      %v2074 = vrot.slane %v2073, 4
      %v2076 = vshll.u32 %v2039, 16
      %v2078 = vrot.slane %v2076, 5
      %v2079 = vsel %vm1361, %v2074, %v2078
      %v2081 = vshrl.u32 %v2040, 16
      %v2083 = vrot.slane %v2081, 4
      %v2084 = vshll.u32 %v2040, 16
      %v2086 = vrot.slane %v2084, 5
      %v2087 = vor.u32 %v2083, %v2086
      %v2088 = vrot.slane %v2087, 4
      %v2090 = vshll.u32 %v2041, 16
      %v2092 = vrot.slane %v2090, 5
      %v2093 = vsel %vm1361, %v2088, %v2092
      %v2095 = vshrl.u32 %v2042, 16
      %v2097 = vrot.slane %v2095, 4
      %v2098 = vshll.u32 %v2042, 16
      %v2100 = vrot.slane %v2098, 5
      %v2101 = vor.u32 %v2097, %v2100
      %v2102 = vrot.slane %v2101, 4
      %v2104 = vshll.u32 %v2043, 16
      %v2106 = vrot.slane %v2104, 5
      %v2107 = vsel %vm1361, %v2102, %v2106
      %v2109 = vshrl.u32 %v2044, 16
      %v2111 = vrot.slane %v2109, 4
      %v2112 = vshll.u32 %v2044, 16
      %v2114 = vrot.slane %v2112, 5
      %v2115 = vor.u32 %v2111, %v2114
      %v2116 = vrot.slane %v2115, 4
      %v2118 = vshll.u32 %v2045, 16
      %v2120 = vrot.slane %v2118, 5
      %v2121 = vsel %vm1361, %v2116, %v2120
      %v2123 = vshrl.u32 %v2046, 16
      %v2125 = vrot.slane %v2123, 4
      %v2126 = vshll.u32 %v2046, 16
      %v2128 = vrot.slane %v2126, 5
      %v2129 = vor.u32 %v2125, %v2128
      %v2130 = vrot.slane %v2129, 4
      %v2132 = vshll.u32 %v2047, 16
      %v2134 = vrot.slane %v2132, 5
      %v2135 = vsel %vm1361, %v2130, %v2134
      %v2137 = vshrl.u32 %v2048, 16
      %v2139 = vrot.slane %v2137, 4
      %v2140 = vshll.u32 %v2048, 16
      %v2142 = vrot.slane %v2140, 5
      %v2143 = vor.u32 %v2139, %v2142
      %v2144 = vrot.slane %v2143, 4
      %v2146 = vshll.u32 %v2049, 16
      %v2148 = vrot.slane %v2146, 5
      %v2149 = vsel %vm1361, %v2144, %v2148
      %v2151 = vshrl.u32 %v2050, 16
      %v2153 = vrot.slane %v2151, 4
      %v2154 = vshll.u32 %v2050, 16
      %v2156 = vrot.slane %v2154, 5
      %v2157 = vor.u32 %v2153, %v2156
      %v2158 = vrot.slane %v2157, 4
      %v2160 = vshll.u32 %v2051, 16
      %v2162 = vrot.slane %v2160, 5
      %v2163 = vsel %vm1361, %v2158, %v2162
      %v2164 = vunpack.c.h.b16 %v1041
      %v2165 = vunpack.c.h.b16 %v1042
      %v2166 = vunpack.c.h.b16 %v1043
      %v2167 = vunpack.c.h.b16 %v1044
      %v2168 = vunpack.c.h.b16 %v1045
      %v2169 = vunpack.c.h.b16 %v1046
      %v2170 = vunpack.c.h.b16 %v1047
      %v2171 = vunpack.c.h.b16 %v1048
      %v2172 = vpack.c.b16 %v1674, %v1674
      %v2173 = vpack.c.b16 %v2164, %v2164
      %v2174 = vpack.c.b16 %v1675, %v1675
      %v2175 = vpack.c.b16 %v2165, %v2165
      %v2176 = vpack.c.b16 %v1676, %v1676
      %v2177 = vpack.c.b16 %v2166, %v2166
      %v2178 = vpack.c.b16 %v1677, %v1677
      %v2179 = vpack.c.b16 %v2167, %v2167
      %v2180 = vpack.c.b16 %v1678, %v1678
      %v2181 = vpack.c.b16 %v2168, %v2168
      %v2182 = vpack.c.b16 %v1679, %v1679
      %v2183 = vpack.c.b16 %v2169, %v2169
      %v2184 = vpack.c.b16 %v1680, %v1680
      %v2185 = vpack.c.b16 %v2170, %v2170
      %v2186 = vpack.c.b16 %v1681, %v1681
      %v2187 = vpack.c.b16 %v2171, %v2171
      %v2189 = vshrl.u32 %v2172, 16
      %v2191 = vrot.slane %v2189, 4
      %v2192 = vshll.u32 %v2172, 16
      %v2194 = vrot.slane %v2192, 5
      %v2195 = vor.u32 %v2191, %v2194
      %v2196 = vrot.slane %v2195, 4
      %v2198 = vshll.u32 %v2173, 16
      %v2200 = vrot.slane %v2198, 5
      %v2201 = vsel %vm1361, %v2196, %v2200
      %v2203 = vshrl.u32 %v2174, 16
      %v2205 = vrot.slane %v2203, 4
      %v2206 = vshll.u32 %v2174, 16
      %v2208 = vrot.slane %v2206, 5
      %v2209 = vor.u32 %v2205, %v2208
      %v2210 = vrot.slane %v2209, 4
      %v2212 = vshll.u32 %v2175, 16
      %v2214 = vrot.slane %v2212, 5
      %v2215 = vsel %vm1361, %v2210, %v2214
      %v2217 = vshrl.u32 %v2176, 16
      %v2219 = vrot.slane %v2217, 4
      %v2220 = vshll.u32 %v2176, 16
      %v2222 = vrot.slane %v2220, 5
      %v2223 = vor.u32 %v2219, %v2222
      %v2224 = vrot.slane %v2223, 4
      %v2226 = vshll.u32 %v2177, 16
      %v2228 = vrot.slane %v2226, 5
      %v2229 = vsel %vm1361, %v2224, %v2228
      %v2231 = vshrl.u32 %v2178, 16
      %v2233 = vrot.slane %v2231, 4
      %v2234 = vshll.u32 %v2178, 16
      %v2236 = vrot.slane %v2234, 5
      %v2237 = vor.u32 %v2233, %v2236
      %v2238 = vrot.slane %v2237, 4
      %v2240 = vshll.u32 %v2179, 16
      %v2242 = vrot.slane %v2240, 5
      %v2243 = vsel %vm1361, %v2238, %v2242
      %v2245 = vshrl.u32 %v2180, 16
      %v2247 = vrot.slane %v2245, 4
      %v2248 = vshll.u32 %v2180, 16
      %v2250 = vrot.slane %v2248, 5
      %v2251 = vor.u32 %v2247, %v2250
      %v2252 = vrot.slane %v2251, 4
      %v2254 = vshll.u32 %v2181, 16
      %v2256 = vrot.slane %v2254, 5
      %v2257 = vsel %vm1361, %v2252, %v2256
      %v2259 = vshrl.u32 %v2182, 16
      %v2261 = vrot.slane %v2259, 4
      %v2262 = vshll.u32 %v2182, 16
      %v2264 = vrot.slane %v2262, 5
      %v2265 = vor.u32 %v2261, %v2264
      %v2266 = vrot.slane %v2265, 4
      %v2268 = vshll.u32 %v2183, 16
      %v2270 = vrot.slane %v2268, 5
      %v2271 = vsel %vm1361, %v2266, %v2270
      %v2273 = vshrl.u32 %v2184, 16
      %v2275 = vrot.slane %v2273, 4
      %v2276 = vshll.u32 %v2184, 16
      %v2278 = vrot.slane %v2276, 5
      %v2279 = vor.u32 %v2275, %v2278
      %v2280 = vrot.slane %v2279, 4
      %v2282 = vshll.u32 %v2185, 16
      %v2284 = vrot.slane %v2282, 5
      %v2285 = vsel %vm1361, %v2280, %v2284
      %v2287 = vshrl.u32 %v2186, 16
      %v2289 = vrot.slane %v2287, 4
      %v2290 = vshll.u32 %v2186, 16
      %v2292 = vrot.slane %v2290, 5
      %v2293 = vor.u32 %v2289, %v2292
      %v2294 = vrot.slane %v2293, 4
      %v2296 = vshll.u32 %v2187, 16
      %v2298 = vrot.slane %v2296, 5
      %v2299 = vsel %vm1361, %v2294, %v2298
      %v2300 = vunpack.c.l.b16 %v2065
      %v2301 = vunpack.c.l.b16 %v2079
      %v2302 = vunpack.c.l.b16 %v2093
      %v2303 = vunpack.c.l.b16 %v2107
      %v2304 = vunpack.c.l.b16 %v2121
      %v2305 = vunpack.c.l.b16 %v2135
      %v2306 = vunpack.c.l.b16 %v2149
      %v2307 = vunpack.c.l.b16 %v2163
      %v2308 = vpack.c.b16 %v2301, %v2300
      %v2309 = vpack.c.b16 %v2303, %v2302
      %v2310 = vpack.c.b16 %v2305, %v2304
      %v2311 = vpack.c.b16 %v2307, %v2306
      %v2316 = vunpack.c.l.b16 %v2201
      %v2317 = vunpack.c.l.b16 %v2215
      %v2318 = vunpack.c.l.b16 %v2229
      %v2319 = vunpack.c.l.b16 %v2243
      %v2320 = vunpack.c.l.b16 %v2257
      %v2321 = vunpack.c.l.b16 %v2271
      %v2322 = vunpack.c.l.b16 %v2285
      %v2323 = vunpack.c.l.b16 %v2299
      %v2324 = vpack.c.b16 %v2317, %v2316
      %v2325 = vpack.c.b16 %v2319, %v2318
      %v2326 = vpack.c.b16 %v2321, %v2320
      %v2327 = vpack.c.b16 %v2323, %v2322
      %v2364 = vunpack.c.l.b16 %v1186
      %v2365 = vunpack.c.l.b16 %v1187
      %v2366 = vunpack.c.l.b16 %v1188
      %v2367 = vunpack.c.l.b16 %v1189
      %v2368 = vunpack.c.l.b16 %v1190
      %v2369 = vunpack.c.l.b16 %v1191
      %v2370 = vunpack.c.l.b16 %v1192
      %v2371 = vunpack.c.l.b16 %v1193
      %v2372 = vunpack.c.l.b16 %v1194
      %v2373 = vunpack.c.l.b16 %v1195
      %v2374 = vunpack.c.l.b16 %v1196
      %v2375 = vunpack.c.l.b16 %v1197
      %v2376 = vunpack.c.l.b16 %v1198
      %v2377 = vunpack.c.l.b16 %v1199
      %v2378 = vunpack.c.l.b16 %v1200
      %v2379 = vunpack.c.l.b16 %v1201
      %v2380 = vunpack.c.l.b16 %v1202
      %v2381 = vunpack.c.l.b16 %v1203
      %v2382 = vunpack.c.l.b16 %v1204
      %v2383 = vunpack.c.l.b16 %v1205
      %v2384 = vunpack.c.l.b16 %v1206
      %v2385 = vunpack.c.l.b16 %v1207
      %v2386 = vunpack.c.l.b16 %v1208
      %v2387 = vunpack.c.l.b16 %v1209
      %v2388 = vunpack.c.l.b16 %v1210
      %v2389 = vunpack.c.l.b16 %v1211
      %v2390 = vunpack.c.l.b16 %v1212
      %v2391 = vunpack.c.l.b16 %v1213
      %v2392 = vunpack.c.l.b16 %v1214
      %v2393 = vunpack.c.l.b16 %v1215
      %v2394 = vunpack.c.l.b16 %v1216
      %v2395 = vunpack.c.l.b16 %v1217
      %v2396 = vpack.c.b16 %v2365, %v2364
      %v2397 = vpack.c.b16 %v2367, %v2366
      %v2398 = vpack.c.b16 %v2369, %v2368
      %v2399 = vpack.c.b16 %v2371, %v2370
      %v2400 = vpack.c.b16 %v2373, %v2372
      %v2401 = vpack.c.b16 %v2375, %v2374
      %v2402 = vpack.c.b16 %v2377, %v2376
      %v2403 = vpack.c.b16 %v2379, %v2378
      %v2404 = vpack.c.b16 %v2381, %v2380
      %v2405 = vpack.c.b16 %v2383, %v2382
      %v2406 = vpack.c.b16 %v2385, %v2384
      %v2407 = vpack.c.b16 %v2387, %v2386
      %v2408 = vpack.c.b16 %v2389, %v2388
      %v2409 = vpack.c.b16 %v2391, %v2390
      %v2410 = vpack.c.b16 %v2393, %v2392
      %v2411 = vpack.c.b16 %v2395, %v2394
      %2428 = vmatprep.subr.bf16.mxu0 0
      %2429 = vmatpush1.bf16.msra.mxu0 %v2403
      %2430 = vmatprep.subr.bf16.mxu0 0
      %2431 = vmatpush1.bf16.msra.mxu0 %v2402
      %2432 = vmatprep.subr.bf16.mxu0 0
      %2433 = vmatpush1.bf16.msra.mxu0 %v2401
      %2434 = vmatprep.subr.bf16.mxu0 0
      %2435 = vmatpush1.bf16.msra.mxu0 %v2400
      %2436 = vmatprep.subr.bf16.mxu0 0
      %2437 = vmatpush1.bf16.msra.mxu0 %v2399
      %2438 = vmatprep.subr.bf16.mxu0 0
      %2439 = vmatpush1.bf16.msra.mxu0 %v2398
      %2440 = vmatprep.subr.bf16.mxu0 0
      %2441 = vmatpush1.bf16.msra.mxu0 %v2397
      %2442 = vmatprep.subr.bf16.mxu0 0
      %2443 = vmatpush1.bf16.msra.mxu0 %v2396
      %2444 = vmatprep.subr.bf16.mxu0 0
      %2445 = vmatpush2.bf16.msra.mxu0 %v2411
      %2446 = vmatprep.subr.bf16.mxu0 0
      %2447 = vmatpush2.bf16.msra.mxu0 %v2410
      %2448 = vmatprep.subr.bf16.mxu0 0
      %2449 = vmatpush2.bf16.msra.mxu0 %v2409
      %2450 = vmatprep.subr.bf16.mxu0 0
      %2451 = vmatpush2.bf16.msra.mxu0 %v2408
      %2452 = vmatprep.subr.bf16.mxu0 0
      %2453 = vmatpush2.bf16.msra.mxu0 %v2407
      %2454 = vmatprep.subr.bf16.mxu0 0
      %2455 = vmatpush2.bf16.msra.mxu0 %v2406
      %2456 = vmatprep.subr.bf16.mxu0 0
      %2457 = vmatpush2.bf16.msra.mxu0 %v2405
      %2458 = vmatprep.subr.bf16.mxu0 0
      %2459 = vmatpush2.bf16.msra.mxu0 %v2404
      %2460 = vmatprep.mubr.bf16.mxu0 %v2324
      %2461 = vmatmul.mubr.bf16.gmra.mxu0 %v2308
      %v2462 = vpop.f32.mrf.mxu0
      %v2463 = vadd.f32 0.0, %v2462
      %v2464 = vpop.f32.mrf.mxu0
      %v2465 = vpop.f32.mrf.mxu0
      %v2466 = vadd.f32 0.0, %v2465
      %v2467 = vpop.f32.mrf.mxu0
      %2468 = vmatprep.mubr.bf16.mxu0 %v2325
      %2469 = vmatmul.mubr.bf16.gmra.mxu0 %v2309
      %v2470 = vpop.f32.mrf.mxu0
      %v2471 = vadd.f32 0.0, %v2470
      %v2472 = vpop.f32.mrf.mxu0
      %v2473 = vpop.f32.mrf.mxu0
      %v2474 = vadd.f32 0.0, %v2473
      %v2475 = vpop.f32.mrf.mxu0
      %2476 = vmatprep.mubr.bf16.mxu0 %v2326
      %2477 = vmatmul.mubr.bf16.gmra.mxu0 %v2310
      %v2478 = vpop.f32.mrf.mxu0
      %v2479 = vadd.f32 0.0, %v2478
      %v2480 = vpop.f32.mrf.mxu0
      %v2481 = vpop.f32.mrf.mxu0
      %v2482 = vadd.f32 0.0, %v2481
      %v2483 = vpop.f32.mrf.mxu0
      %2484 = vmatprep.mubr.bf16.mxu0 %v2327
      %2485 = vmatmul.mubr.bf16.gmra.mxu0 %v2311
      %v2486 = vpop.f32.mrf.mxu0
      %v2487 = vadd.f32 0.0, %v2486
      %v2488 = vpop.f32.mrf.mxu0
      %v2489 = vpop.f32.mrf.mxu0
      %v2490 = vadd.f32 0.0, %v2489
      %v2491 = vpop.f32.mrf.mxu0
      %2492 = vdwg.mxu0
      %v2493 = vadd.f32 %v1982, %v2463
      %v2494 = vadd.f32 %v1985, %v2466
      %v2495 = vadd.f32 %v1990, %v2471
      %v2496 = vadd.f32 %v1993, %v2474
      %v2497 = vadd.f32 %v1998, %v2479
      %v2498 = vadd.f32 %v2001, %v2482
      %v2499 = vadd.f32 %v2006, %v2487
      %v2500 = vadd.f32 %v2009, %v2490
      %v2502 = vunpack.c.l.b16 %v1085
      %v2503 = vunpack.c.h.b16 %v1085
      %v2504 = vpack.c.b16 %v2502, %v2502
      %v2505 = vpack.c.b16 %v2503, %v2503
      %v2507 = vshrl.u32 %v2504, 16
      %v2509 = vrot.slane %v2507, 4
      %v2510 = vshll.u32 %v2504, 16
      %v2512 = vrot.slane %v2510, 5
      %v2513 = vor.u32 %v2509, %v2512
      %v2514 = vrot.slane %v2513, 4
      %v2516 = vshll.u32 %v2505, 16
      %v2518 = vrot.slane %v2516, 5
      %v2519 = vsel %vm1361, %v2514, %v2518
      %v2521 = vunpack.c.l.b16 %v1121
      %v2522 = vpack.c.b16 %v1484, %v1483
      %v2523 = vpack.c.b16 %v1486, %v1485
      %v2524 = vpack.c.b16 %v1488, %v1487
      %v2525 = vpack.c.b16 %v2521, %v1489
      %v2530 = vunpack.c.l.b16 %v2519
      %v2531 = vpack.c.b16 %v1500, %v1499
      %v2532 = vpack.c.b16 %v1502, %v1501
      %v2533 = vpack.c.b16 %v1504, %v1503
      %v2534 = vpack.c.b16 %v2530, %v1505
      %v2571 = vunpack.c.l.b16 %v1218
      %v2572 = vunpack.c.l.b16 %v1219
      %v2573 = vunpack.c.l.b16 %v1220
      %v2574 = vunpack.c.l.b16 %v1221
      %v2575 = vunpack.c.l.b16 %v1222
      %v2576 = vunpack.c.l.b16 %v1223
      %v2577 = vunpack.c.l.b16 %v1224
      %v2578 = vunpack.c.l.b16 %v1225
      %v2579 = vunpack.c.l.b16 %v1226
      %v2580 = vunpack.c.l.b16 %v1227
      %v2581 = vunpack.c.l.b16 %v1228
      %v2582 = vunpack.c.l.b16 %v1229
      %v2583 = vunpack.c.l.b16 %v1230
      %v2584 = vunpack.c.l.b16 %v1231
      %v2585 = vunpack.c.l.b16 %v1232
      %v2586 = vunpack.c.l.b16 %v1233
      %v2587 = vunpack.c.l.b16 %v1234
      %v2588 = vunpack.c.l.b16 %v1235
      %v2589 = vunpack.c.l.b16 %v1236
      %v2590 = vunpack.c.l.b16 %v1237
      %v2591 = vunpack.c.l.b16 %v1238
      %v2592 = vunpack.c.l.b16 %v1239
      %v2593 = vunpack.c.l.b16 %v1240
      %v2594 = vunpack.c.l.b16 %v1241
      %v2595 = vunpack.c.l.b16 %v1242
      %v2596 = vunpack.c.l.b16 %v1243
      %v2597 = vunpack.c.l.b16 %v1244
      %v2598 = vunpack.c.l.b16 %v1245
      %v2599 = vunpack.c.l.b16 %v1246
      %v2600 = vunpack.c.l.b16 %v1247
      %v2601 = vunpack.c.l.b16 %v1248
      %v2602 = vunpack.c.l.b16 %v1249
      %v2603 = vpack.c.b16 %v2572, %v2571
      %v2604 = vpack.c.b16 %v2574, %v2573
      %v2605 = vpack.c.b16 %v2576, %v2575
      %v2606 = vpack.c.b16 %v2578, %v2577
      %v2607 = vpack.c.b16 %v2580, %v2579
      %v2608 = vpack.c.b16 %v2582, %v2581
      %v2609 = vpack.c.b16 %v2584, %v2583
      %v2610 = vpack.c.b16 %v2586, %v2585
      %v2611 = vpack.c.b16 %v2588, %v2587
      %v2612 = vpack.c.b16 %v2590, %v2589
      %v2613 = vpack.c.b16 %v2592, %v2591
      %v2614 = vpack.c.b16 %v2594, %v2593
      %v2615 = vpack.c.b16 %v2596, %v2595
      %v2616 = vpack.c.b16 %v2598, %v2597
      %v2617 = vpack.c.b16 %v2600, %v2599
      %v2618 = vpack.c.b16 %v2602, %v2601
      %2635 = vmatprep.subr.bf16.mxu0 0
      %2636 = vmatpush1.bf16.msra.mxu0 %v2610
      %2637 = vmatprep.subr.bf16.mxu0 0
      %2638 = vmatpush1.bf16.msra.mxu0 %v2609
      %2639 = vmatprep.subr.bf16.mxu0 0
      %2640 = vmatpush1.bf16.msra.mxu0 %v2608
      %2641 = vmatprep.subr.bf16.mxu0 0
      %2642 = vmatpush1.bf16.msra.mxu0 %v2607
      %2643 = vmatprep.subr.bf16.mxu0 0
      %2644 = vmatpush1.bf16.msra.mxu0 %v2606
      %2645 = vmatprep.subr.bf16.mxu0 0
      %2646 = vmatpush1.bf16.msra.mxu0 %v2605
      %2647 = vmatprep.subr.bf16.mxu0 0
      %2648 = vmatpush1.bf16.msra.mxu0 %v2604
      %2649 = vmatprep.subr.bf16.mxu0 0
      %2650 = vmatpush1.bf16.msra.mxu0 %v2603
      %2651 = vmatprep.subr.bf16.mxu0 0
      %2652 = vmatpush2.bf16.msra.mxu0 %v2618
      %2653 = vmatprep.subr.bf16.mxu0 0
      %2654 = vmatpush2.bf16.msra.mxu0 %v2617
      %2655 = vmatprep.subr.bf16.mxu0 0
      %2656 = vmatpush2.bf16.msra.mxu0 %v2616
      %2657 = vmatprep.subr.bf16.mxu0 0
      %2658 = vmatpush2.bf16.msra.mxu0 %v2615
      %2659 = vmatprep.subr.bf16.mxu0 0
      %2660 = vmatpush2.bf16.msra.mxu0 %v2614
      %2661 = vmatprep.subr.bf16.mxu0 0
      %2662 = vmatpush2.bf16.msra.mxu0 %v2613
      %2663 = vmatprep.subr.bf16.mxu0 0
      %2664 = vmatpush2.bf16.msra.mxu0 %v2612
      %2665 = vmatprep.subr.bf16.mxu0 0
      %2666 = vmatpush2.bf16.msra.mxu0 %v2611
      %2667 = vmatprep.mubr.bf16.mxu0 %v2531
      %2668 = vmatmul.mubr.bf16.gmra.mxu0 %v2522
      %v2669 = vpop.f32.mrf.mxu0
      %v2670 = vadd.f32 0.0, %v2669
      %v2671 = vpop.f32.mrf.mxu0
      %v2672 = vpop.f32.mrf.mxu0
      %v2673 = vadd.f32 0.0, %v2672
      %v2674 = vpop.f32.mrf.mxu0
      %2675 = vmatprep.mubr.bf16.mxu0 %v2532
      %2676 = vmatmul.mubr.bf16.gmra.mxu0 %v2523
      %v2677 = vpop.f32.mrf.mxu0
      %v2678 = vadd.f32 0.0, %v2677
      %v2679 = vpop.f32.mrf.mxu0
      %v2680 = vpop.f32.mrf.mxu0
      %v2681 = vadd.f32 0.0, %v2680
      %v2682 = vpop.f32.mrf.mxu0
      %2683 = vmatprep.mubr.bf16.mxu0 %v2533
      %2684 = vmatmul.mubr.bf16.gmra.mxu0 %v2524
      %v2685 = vpop.f32.mrf.mxu0
      %v2686 = vadd.f32 0.0, %v2685
      %v2687 = vpop.f32.mrf.mxu0
      %v2688 = vpop.f32.mrf.mxu0
      %v2689 = vadd.f32 0.0, %v2688
      %v2690 = vpop.f32.mrf.mxu0
      %2691 = vmatprep.mubr.bf16.mxu0 %v2534
      %2692 = vmatmul.mubr.bf16.gmra.mxu0 %v2525
      %v2693 = vpop.f32.mrf.mxu0
      %v2694 = vadd.f32 0.0, %v2693
      %v2695 = vpop.f32.mrf.mxu0
      %v2696 = vpop.f32.mrf.mxu0
      %v2697 = vadd.f32 0.0, %v2696
      %v2698 = vpop.f32.mrf.mxu0
      %2699 = vdwg.mxu0
      %v2700 = vadd.f32 %v2493, %v2670
      %v2701 = vadd.f32 %v2494, %v2673
      %v2702 = vadd.f32 %v2495, %v2678
      %v2703 = vadd.f32 %v2496, %v2681
      %v2704 = vadd.f32 %v2497, %v2686
      %v2705 = vadd.f32 %v2498, %v2689
      %v2706 = vadd.f32 %v2499, %v2694
      %v2707 = vadd.f32 %v2500, %v2697
      %v2708 = vunpack.c.h.b16 %v1121
      %v2709 = vpack.c.b16 %v2521, %v2521
      %v2710 = vpack.c.b16 %v2708, %v2708
      %v2712 = vshrl.u32 %v2709, 16
      %v2714 = vrot.slane %v2712, 4
      %v2715 = vshll.u32 %v2709, 16
      %v2717 = vrot.slane %v2715, 5
      %v2718 = vor.u32 %v2714, %v2717
      %v2719 = vrot.slane %v2718, 4
      %v2721 = vshll.u32 %v2710, 16
      %v2723 = vrot.slane %v2721, 5
      %v2724 = vsel %vm1361, %v2719, %v2723
      %v2725 = vunpack.c.l.b16 %v2724
      %v2726 = vpack.c.b16 %v1652, %v1651
      %v2727 = vpack.c.b16 %v1654, %v1653
      %v2728 = vpack.c.b16 %v1656, %v1655
      %v2729 = vpack.c.b16 %v2725, %v1657
      %v2766 = vunpack.c.l.b16 %v1250
      %v2767 = vunpack.c.l.b16 %v1251
      %v2768 = vunpack.c.l.b16 %v1252
      %v2769 = vunpack.c.l.b16 %v1253
      %v2770 = vunpack.c.l.b16 %v1254
      %v2771 = vunpack.c.l.b16 %v1255
      %v2772 = vunpack.c.l.b16 %v1256
      %v2773 = vunpack.c.l.b16 %v1257
      %v2774 = vunpack.c.l.b16 %v1258
      %v2775 = vunpack.c.l.b16 %v1259
      %v2776 = vunpack.c.l.b16 %v1260
      %v2777 = vunpack.c.l.b16 %v1261
      %v2778 = vunpack.c.l.b16 %v1262
      %v2779 = vunpack.c.l.b16 %v1263
      %v2780 = vunpack.c.l.b16 %v1264
      %v2781 = vunpack.c.l.b16 %v1265
      %v2782 = vunpack.c.l.b16 %v1266
      %v2783 = vunpack.c.l.b16 %v1267
      %v2784 = vunpack.c.l.b16 %v1268
      %v2785 = vunpack.c.l.b16 %v1269
      %v2786 = vunpack.c.l.b16 %v1270
      %v2787 = vunpack.c.l.b16 %v1271
      %v2788 = vunpack.c.l.b16 %v1272
      %v2789 = vunpack.c.l.b16 %v1273
      %v2790 = vunpack.c.l.b16 %v1274
      %v2791 = vunpack.c.l.b16 %v1275
      %v2792 = vunpack.c.l.b16 %v1276
      %v2793 = vunpack.c.l.b16 %v1277
      %v2794 = vunpack.c.l.b16 %v1278
      %v2795 = vunpack.c.l.b16 %v1279
      %v2796 = vunpack.c.l.b16 %v1280
      %v2797 = vunpack.c.l.b16 %v1281
      %v2798 = vpack.c.b16 %v2767, %v2766
      %v2799 = vpack.c.b16 %v2769, %v2768
      %v2800 = vpack.c.b16 %v2771, %v2770
      %v2801 = vpack.c.b16 %v2773, %v2772
      %v2802 = vpack.c.b16 %v2775, %v2774
      %v2803 = vpack.c.b16 %v2777, %v2776
      %v2804 = vpack.c.b16 %v2779, %v2778
      %v2805 = vpack.c.b16 %v2781, %v2780
      %v2806 = vpack.c.b16 %v2783, %v2782
      %v2807 = vpack.c.b16 %v2785, %v2784
      %v2808 = vpack.c.b16 %v2787, %v2786
      %v2809 = vpack.c.b16 %v2789, %v2788
      %v2810 = vpack.c.b16 %v2791, %v2790
      %v2811 = vpack.c.b16 %v2793, %v2792
      %v2812 = vpack.c.b16 %v2795, %v2794
      %v2813 = vpack.c.b16 %v2797, %v2796
      %2830 = vmatprep.subr.bf16.mxu0 0
      %2831 = vmatpush1.bf16.msra.mxu0 %v2805
      %2832 = vmatprep.subr.bf16.mxu0 0
      %2833 = vmatpush1.bf16.msra.mxu0 %v2804
      %2834 = vmatprep.subr.bf16.mxu0 0
      %2835 = vmatpush1.bf16.msra.mxu0 %v2803
      %2836 = vmatprep.subr.bf16.mxu0 0
      %2837 = vmatpush1.bf16.msra.mxu0 %v2802
      %2838 = vmatprep.subr.bf16.mxu0 0
      %2839 = vmatpush1.bf16.msra.mxu0 %v2801
      %2840 = vmatprep.subr.bf16.mxu0 0
      %2841 = vmatpush1.bf16.msra.mxu0 %v2800
      %2842 = vmatprep.subr.bf16.mxu0 0
      %2843 = vmatpush1.bf16.msra.mxu0 %v2799
      %2844 = vmatprep.subr.bf16.mxu0 0
      %2845 = vmatpush1.bf16.msra.mxu0 %v2798
      %2846 = vmatprep.subr.bf16.mxu0 0
      %2847 = vmatpush2.bf16.msra.mxu0 %v2813
      %2848 = vmatprep.subr.bf16.mxu0 0
      %2849 = vmatpush2.bf16.msra.mxu0 %v2812
      %2850 = vmatprep.subr.bf16.mxu0 0
      %2851 = vmatpush2.bf16.msra.mxu0 %v2811
      %2852 = vmatprep.subr.bf16.mxu0 0
      %2853 = vmatpush2.bf16.msra.mxu0 %v2810
      %2854 = vmatprep.subr.bf16.mxu0 0
      %2855 = vmatpush2.bf16.msra.mxu0 %v2809
      %2856 = vmatprep.subr.bf16.mxu0 0
      %2857 = vmatpush2.bf16.msra.mxu0 %v2808
      %2858 = vmatprep.subr.bf16.mxu0 0
      %2859 = vmatpush2.bf16.msra.mxu0 %v2807
      %2860 = vmatprep.subr.bf16.mxu0 0
      %2861 = vmatpush2.bf16.msra.mxu0 %v2806
      %2862 = vmatprep.mubr.bf16.mxu0 %v2726
      %2863 = vmatmul.mubr.bf16.gmra.mxu0 %v2726
      %v2864 = vpop.f32.mrf.mxu0
      %v2865 = vadd.f32 0.0, %v2864
      %v2866 = vpop.f32.mrf.mxu0
      %v2867 = vpop.f32.mrf.mxu0
      %v2868 = vadd.f32 0.0, %v2867
      %v2869 = vpop.f32.mrf.mxu0
      %2870 = vmatprep.mubr.bf16.mxu0 %v2727
      %2871 = vmatmul.mubr.bf16.gmra.mxu0 %v2727
      %v2872 = vpop.f32.mrf.mxu0
      %v2873 = vadd.f32 0.0, %v2872
      %v2874 = vpop.f32.mrf.mxu0
      %v2875 = vpop.f32.mrf.mxu0
      %v2876 = vadd.f32 0.0, %v2875
      %v2877 = vpop.f32.mrf.mxu0
      %2878 = vmatprep.mubr.bf16.mxu0 %v2728
      %2879 = vmatmul.mubr.bf16.gmra.mxu0 %v2728
      %v2880 = vpop.f32.mrf.mxu0
      %v2881 = vadd.f32 0.0, %v2880
      %v2882 = vpop.f32.mrf.mxu0
      %v2883 = vpop.f32.mrf.mxu0
      %v2884 = vadd.f32 0.0, %v2883
      %v2885 = vpop.f32.mrf.mxu0
      %2886 = vmatprep.mubr.bf16.mxu0 %v2729
      %2887 = vmatmul.mubr.bf16.gmra.mxu0 %v2729
      %v2888 = vpop.f32.mrf.mxu0
      %v2889 = vadd.f32 0.0, %v2888
      %v2890 = vpop.f32.mrf.mxu0
      %v2891 = vpop.f32.mrf.mxu0
      %v2892 = vadd.f32 0.0, %v2891
      %v2893 = vpop.f32.mrf.mxu0
      %2894 = vdwg.mxu0
      %v2895 = vadd.f32 %v2700, %v2865
      %v2896 = vadd.f32 %v2701, %v2868
      %v2897 = vadd.f32 %v2702, %v2873
      %v2898 = vadd.f32 %v2703, %v2876
      %v2899 = vadd.f32 %v2704, %v2881
      %v2900 = vadd.f32 %v2705, %v2884
      %v2901 = vadd.f32 %v2706, %v2889
      %v2902 = vadd.f32 %v2707, %v2892
      %v2904 = vlaneseq
      %v2905 = vshrl.u32 %v2904, 7
      %v2906 = vsub.s32 0, %v2905
      %v2907 = vrot.slane %v1282, %v2906
      %v2909 = vadd.f32 %v2895, %v2907
      %v2910 = vadd.f32 %v2896, %v2907
      %v2911 = vadd.f32 %v2897, %v2907
      %v2912 = vadd.f32 %v2898, %v2907
      %v2913 = vadd.f32 %v2899, %v2907
      %v2914 = vadd.f32 %v2900, %v2907
      %v2915 = vadd.f32 %v2901, %v2907
      %v2916 = vadd.f32 %v2902, %v2907
      %v2917 = vmax.f32 %v2909, 0.0
      %v2918 = vmax.f32 %v2910, 0.0
      %v2919 = vmax.f32 %v2911, 0.0
      %v2920 = vmax.f32 %v2912, 0.0
      %v2921 = vmax.f32 %v2913, 0.0
      %v2922 = vmax.f32 %v2914, 0.0
      %v2923 = vmax.f32 %v2915, 0.0
      %v2924 = vmax.f32 %v2916, 0.0
      %v2925 = vpack.c.bf16 %v2918, %v2917
      %v2926 = vpack.c.bf16 %v2920, %v2919
      %v2927 = vpack.c.bf16 %v2922, %v2921
      %v2928 = vpack.c.bf16 %v2924, %v2923
      %2930 = vset.pattern.permute.xlu0 0
      %2931 = vperm.xlu0 %2930, %v1309
      %v2932 = vpop.permute.xlu0 %2931
      %2935 = vset.pattern.permute.xlu0 0
      %2936 = vperm.xlu0 %2935, %v1310
      %v2937 = vpop.permute.xlu0 %2936
      %2940 = vset.pattern.permute.xlu0 0
      %2941 = vperm.xlu0 %2940, %v1311
      %v2942 = vpop.permute.xlu0 %2941
      %2945 = vset.pattern.permute.xlu0 0
      %2946 = vperm.xlu0 %2945, %v1312
      %v2947 = vpop.permute.xlu0 %2946
      %2950 = vset.pattern.permute.xlu0 0
      %2951 = vperm.xlu0 %2950, %v1313
      %v2952 = vpop.permute.xlu0 %2951
      %2955 = vset.pattern.permute.xlu0 0
      %2956 = vperm.xlu0 %2955, %v1314
      %v2957 = vpop.permute.xlu0 %2956
      %2960 = vset.pattern.permute.xlu0 0
      %2961 = vperm.xlu0 %2960, %v1315
      %v2962 = vpop.permute.xlu0 %2961
      %2965 = vset.pattern.permute.xlu0 0
      %2966 = vperm.xlu0 %2965, %v1316
      %v2967 = vpop.permute.xlu0 %2966
      %v2969 = vlaneseq
      %v2970 = vshrl.u32 %v2969, 7
      %v2971 = vsub.s32 0, %v2970
      %v2972 = vrot.slane %v1299, %v2971
      %v2973 = vmul.f32 %v2932, %v2972
      %v2974 = vmul.f32 %v2937, %v2972
      %v2975 = vmul.f32 %v2942, %v2972
      %v2976 = vmul.f32 %v2947, %v2972
      %v2977 = vmul.f32 %v2952, %v2972
      %v2978 = vmul.f32 %v2957, %v2972
      %v2979 = vmul.f32 %v2962, %v2972
      %v2980 = vmul.f32 %v2967, %v2972
      %v2997 = vunpack.c.l.b16 %v1283
      %v2998 = vunpack.c.l.b16 %v1284
      %v2999 = vunpack.c.l.b16 %v1285
      %v3000 = vunpack.c.l.b16 %v1286
      %v3001 = vunpack.c.l.b16 %v1287
      %v3002 = vunpack.c.l.b16 %v1288
      %v3003 = vunpack.c.l.b16 %v1289
      %v3004 = vunpack.c.l.b16 %v1290
      %v3005 = vunpack.c.l.b16 %v1291
      %v3006 = vunpack.c.l.b16 %v1292
      %v3007 = vunpack.c.l.b16 %v1293
      %v3008 = vunpack.c.l.b16 %v1294
      %v3009 = vunpack.c.l.b16 %v1295
      %v3010 = vunpack.c.l.b16 %v1296
      %v3011 = vunpack.c.l.b16 %v1297
      %v3012 = vunpack.c.l.b16 %v1298
      %v3013 = vpack.c.b16 %v2998, %v2997
      %v3014 = vpack.c.b16 %v3000, %v2999
      %v3015 = vpack.c.b16 %v3002, %v3001
      %v3016 = vpack.c.b16 %v3004, %v3003
      %v3017 = vpack.c.b16 %v3006, %v3005
      %v3018 = vpack.c.b16 %v3008, %v3007
      %v3019 = vpack.c.b16 %v3010, %v3009
      %v3020 = vpack.c.b16 %v3012, %v3011
      %3029 = vmatprep.subr.bf16.mxu0 0
      %3030 = vmatpush1.bf16.msra.mxu0 %v3020
      %3031 = vmatprep.subr.bf16.mxu0 0
      %3032 = vmatpush1.bf16.msra.mxu0 %v3019
      %3033 = vmatprep.subr.bf16.mxu0 0
      %3034 = vmatpush1.bf16.msra.mxu0 %v3018
      %3035 = vmatprep.subr.bf16.mxu0 0
      %3036 = vmatpush1.bf16.msra.mxu0 %v3017
      %3037 = vmatprep.subr.bf16.mxu0 0
      %3038 = vmatpush1.bf16.msra.mxu0 %v3016
      %3039 = vmatprep.subr.bf16.mxu0 0
      %3040 = vmatpush1.bf16.msra.mxu0 %v3015
      %3041 = vmatprep.subr.bf16.mxu0 0
      %3042 = vmatpush1.bf16.msra.mxu0 %v3014
      %3043 = vmatprep.subr.bf16.mxu0 0
      %3044 = vmatpush1.bf16.msra.mxu0 %v3013
      %3045 = vmatprep.subr.bf16.mxu0 0
      %3046 = vmatpush2.bf16.msra.mxu0 0
      %3047 = vmatprep.subr.bf16.mxu0 0
      %3048 = vmatpush2.bf16.msra.mxu0 0
      %3049 = vmatprep.subr.bf16.mxu0 0
      %3050 = vmatpush2.bf16.msra.mxu0 0
      %3051 = vmatprep.subr.bf16.mxu0 0
      %3052 = vmatpush2.bf16.msra.mxu0 0
      %3053 = vmatprep.subr.bf16.mxu0 0
      %3054 = vmatpush2.bf16.msra.mxu0 0
      %3055 = vmatprep.subr.bf16.mxu0 0
      %3056 = vmatpush2.bf16.msra.mxu0 0
      %3057 = vmatprep.subr.bf16.mxu0 0
      %3058 = vmatpush2.bf16.msra.mxu0 0
      %3059 = vmatprep.subr.bf16.mxu0 0
      %3060 = vmatpush2.bf16.msra.mxu0 0
      %3061 = vmatprep.mubr.bf16.mxu0 0
      %3062 = vmatmul.mubr.bf16.gmra.mxu0 %v2925
      %v3063 = vpop.f32.mrf.mxu0
      %v3064 = vadd.f32 %v2973, %v3063
      %v3065 = vpop.f32.mrf.mxu0
      %v3066 = vpop.f32.mrf.mxu0
      %v3067 = vadd.f32 %v2974, %v3066
      %v3068 = vpop.f32.mrf.mxu0
      %3069 = vmatprep.mubr.bf16.mxu0 0
      %3070 = vmatmul.mubr.bf16.gmra.mxu0 %v2926
      %v3071 = vpop.f32.mrf.mxu0
      %v3072 = vadd.f32 %v2975, %v3071
      %v3073 = vpop.f32.mrf.mxu0
      %v3074 = vpop.f32.mrf.mxu0
      %v3075 = vadd.f32 %v2976, %v3074
      %v3076 = vpop.f32.mrf.mxu0
      %3077 = vmatprep.mubr.bf16.mxu0 0
      %3078 = vmatmul.mubr.bf16.gmra.mxu0 %v2927
      %v3079 = vpop.f32.mrf.mxu0
      %v3080 = vadd.f32 %v2977, %v3079
      %v3081 = vpop.f32.mrf.mxu0
      %v3082 = vpop.f32.mrf.mxu0
      %v3083 = vadd.f32 %v2978, %v3082
      %v3084 = vpop.f32.mrf.mxu0
      %3085 = vmatprep.mubr.bf16.mxu0 0
      %3086 = vmatmul.mubr.bf16.gmra.mxu0 %v2928
      %v3087 = vpop.f32.mrf.mxu0
      %v3088 = vadd.f32 %v2979, %v3087
      %v3089 = vpop.f32.mrf.mxu0
      %v3090 = vpop.f32.mrf.mxu0
      %v3091 = vadd.f32 %v2980, %v3090
      %v3092 = vpop.f32.mrf.mxu0
      %3093 = vdwg.mxu0
      %3094 = vset.pattern.permute.xlu0 1
      %3095 = vperm.xlu0 %3094, %v1309
      %v3096 = vpop.permute.xlu0 %3095
      %3098 = vset.pattern.permute.xlu0 1
      %3099 = vperm.xlu0 %3098, %v1310
      %v3100 = vpop.permute.xlu0 %3099
      %3102 = vset.pattern.permute.xlu0 1
      %3103 = vperm.xlu0 %3102, %v1311
      %v3104 = vpop.permute.xlu0 %3103
      %3106 = vset.pattern.permute.xlu0 1
      %3107 = vperm.xlu0 %3106, %v1312
      %v3108 = vpop.permute.xlu0 %3107
      %3110 = vset.pattern.permute.xlu0 1
      %3111 = vperm.xlu0 %3110, %v1313
      %v3112 = vpop.permute.xlu0 %3111
      %3114 = vset.pattern.permute.xlu0 1
      %3115 = vperm.xlu0 %3114, %v1314
      %v3116 = vpop.permute.xlu0 %3115
      %3118 = vset.pattern.permute.xlu0 1
      %3119 = vperm.xlu0 %3118, %v1315
      %v3120 = vpop.permute.xlu0 %3119
      %3122 = vset.pattern.permute.xlu0 1
      %3123 = vperm.xlu0 %3122, %v1316
      %v3124 = vpop.permute.xlu0 %3123
      %v3126 = vlaneseq
      %v3127 = vshrl.u32 %v3126, 7
      %v3128 = vsub.s32 1, %v3127
      %v3129 = vrot.slane %v1299, %v3128
      %v3130 = vmul.f32 %v3096, %v3129
      %v3131 = vmul.f32 %v3100, %v3129
      %v3132 = vmul.f32 %v3104, %v3129
      %v3133 = vmul.f32 %v3108, %v3129
      %v3134 = vmul.f32 %v3112, %v3129
      %v3135 = vmul.f32 %v3116, %v3129
      %v3136 = vmul.f32 %v3120, %v3129
      %v3137 = vmul.f32 %v3124, %v3129
      %v3138 = vadd.f32 %v3064, %v3130
      %v3139 = vadd.f32 %v3067, %v3131
      %v3140 = vadd.f32 %v3072, %v3132
      %v3141 = vadd.f32 %v3075, %v3133
      %v3142 = vadd.f32 %v3080, %v3134
      %v3143 = vadd.f32 %v3083, %v3135
      %v3144 = vadd.f32 %v3088, %v3136
      %v3145 = vadd.f32 %v3091, %v3137
      %3146 = vset.pattern.permute.xlu0 2
      %3147 = vperm.xlu0 %3146, %v1309
      %v3148 = vpop.permute.xlu0 %3147
      %3150 = vset.pattern.permute.xlu0 2
      %3151 = vperm.xlu0 %3150, %v1310
      %v3152 = vpop.permute.xlu0 %3151
      %3154 = vset.pattern.permute.xlu0 2
      %3155 = vperm.xlu0 %3154, %v1311
      %v3156 = vpop.permute.xlu0 %3155
      %3158 = vset.pattern.permute.xlu0 2
      %3159 = vperm.xlu0 %3158, %v1312
      %v3160 = vpop.permute.xlu0 %3159
      %3162 = vset.pattern.permute.xlu0 2
      %3163 = vperm.xlu0 %3162, %v1313
      %v3164 = vpop.permute.xlu0 %3163
      %3166 = vset.pattern.permute.xlu0 2
      %3167 = vperm.xlu0 %3166, %v1314
      %v3168 = vpop.permute.xlu0 %3167
      %3170 = vset.pattern.permute.xlu0 2
      %3171 = vperm.xlu0 %3170, %v1315
      %v3172 = vpop.permute.xlu0 %3171
      %3174 = vset.pattern.permute.xlu0 2
      %3175 = vperm.xlu0 %3174, %v1316
      %v3176 = vpop.permute.xlu0 %3175
      %v3178 = vlaneseq
      %v3179 = vshrl.u32 %v3178, 7
      %v3180 = vsub.s32 2, %v3179
      %v3181 = vrot.slane %v1299, %v3180
      %v3182 = vmul.f32 %v3148, %v3181
      %v3183 = vmul.f32 %v3152, %v3181
      %v3184 = vmul.f32 %v3156, %v3181
      %v3185 = vmul.f32 %v3160, %v3181
      %v3186 = vmul.f32 %v3164, %v3181
      %v3187 = vmul.f32 %v3168, %v3181
      %v3188 = vmul.f32 %v3172, %v3181
      %v3189 = vmul.f32 %v3176, %v3181
      %v3190 = vadd.f32 %v3138, %v3182
      %v3191 = vadd.f32 %v3139, %v3183
      %v3192 = vadd.f32 %v3140, %v3184
      %v3193 = vadd.f32 %v3141, %v3185
      %v3194 = vadd.f32 %v3142, %v3186
      %v3195 = vadd.f32 %v3143, %v3187
      %v3196 = vadd.f32 %v3144, %v3188
      %v3197 = vadd.f32 %v3145, %v3189
      %3198 = vset.pattern.permute.xlu0 3
      %3199 = vperm.xlu0 %3198, %v1309
      %v3200 = vpop.permute.xlu0 %3199
      %3202 = vset.pattern.permute.xlu0 3
      %3203 = vperm.xlu0 %3202, %v1310
      %v3204 = vpop.permute.xlu0 %3203
      %3206 = vset.pattern.permute.xlu0 3
      %3207 = vperm.xlu0 %3206, %v1311
      %v3208 = vpop.permute.xlu0 %3207
      %3210 = vset.pattern.permute.xlu0 3
      %3211 = vperm.xlu0 %3210, %v1312
      %v3212 = vpop.permute.xlu0 %3211
      %3214 = vset.pattern.permute.xlu0 3
      %3215 = vperm.xlu0 %3214, %v1313
      %v3216 = vpop.permute.xlu0 %3215
      %3218 = vset.pattern.permute.xlu0 3
      %3219 = vperm.xlu0 %3218, %v1314
      %v3220 = vpop.permute.xlu0 %3219
      %3222 = vset.pattern.permute.xlu0 3
      %3223 = vperm.xlu0 %3222, %v1315
      %v3224 = vpop.permute.xlu0 %3223
      %3226 = vset.pattern.permute.xlu0 3
      %3227 = vperm.xlu0 %3226, %v1316
      %v3228 = vpop.permute.xlu0 %3227
      %v3230 = vlaneseq
      %v3231 = vshrl.u32 %v3230, 7
      %v3232 = vsub.s32 3, %v3231
      %v3233 = vrot.slane %v1299, %v3232
      %v3234 = vmul.f32 %v3200, %v3233
      %v3235 = vmul.f32 %v3204, %v3233
      %v3236 = vmul.f32 %v3208, %v3233
      %v3237 = vmul.f32 %v3212, %v3233
      %v3238 = vmul.f32 %v3216, %v3233
      %v3239 = vmul.f32 %v3220, %v3233
      %v3240 = vmul.f32 %v3224, %v3233
      %v3241 = vmul.f32 %v3228, %v3233
      %v3242 = vadd.f32 %v3190, %v3234
      %v3243 = vadd.f32 %v3191, %v3235
      %v3244 = vadd.f32 %v3192, %v3236
      %v3245 = vadd.f32 %v3193, %v3237
      %v3246 = vadd.f32 %v3194, %v3238
      %v3247 = vadd.f32 %v3195, %v3239
      %v3248 = vadd.f32 %v3196, %v3240
      %v3249 = vadd.f32 %v3197, %v3241
      %3250 = vset.pattern.permute.xlu0 4
      %3251 = vperm.xlu0 %3250, %v1309
      %v3252 = vpop.permute.xlu0 %3251
      %3254 = vset.pattern.permute.xlu0 4
      %3255 = vperm.xlu0 %3254, %v1310
      %v3256 = vpop.permute.xlu0 %3255
      %3258 = vset.pattern.permute.xlu0 4
      %3259 = vperm.xlu0 %3258, %v1311
      %v3260 = vpop.permute.xlu0 %3259
      %3262 = vset.pattern.permute.xlu0 4
      %3263 = vperm.xlu0 %3262, %v1312
      %v3264 = vpop.permute.xlu0 %3263
      %3266 = vset.pattern.permute.xlu0 4
      %3267 = vperm.xlu0 %3266, %v1313
      %v3268 = vpop.permute.xlu0 %3267
      %3270 = vset.pattern.permute.xlu0 4
      %3271 = vperm.xlu0 %3270, %v1314
      %v3272 = vpop.permute.xlu0 %3271
      %3274 = vset.pattern.permute.xlu0 4
      %3275 = vperm.xlu0 %3274, %v1315
      %v3276 = vpop.permute.xlu0 %3275
      %3278 = vset.pattern.permute.xlu0 4
      %3279 = vperm.xlu0 %3278, %v1316
      %v3280 = vpop.permute.xlu0 %3279
      %v3282 = vlaneseq
      %v3283 = vshrl.u32 %v3282, 7
      %v3284 = vsub.s32 4, %v3283
      %v3285 = vrot.slane %v1299, %v3284
      %v3286 = vmul.f32 %v3252, %v3285
      %v3287 = vmul.f32 %v3256, %v3285
      %v3288 = vmul.f32 %v3260, %v3285
      %v3289 = vmul.f32 %v3264, %v3285
      %v3290 = vmul.f32 %v3268, %v3285
      %v3291 = vmul.f32 %v3272, %v3285
      %v3292 = vmul.f32 %v3276, %v3285
      %v3293 = vmul.f32 %v3280, %v3285
      %v3294 = vadd.f32 %v3242, %v3286
      %v3295 = vadd.f32 %v3243, %v3287
      %v3296 = vadd.f32 %v3244, %v3288
      %v3297 = vadd.f32 %v3245, %v3289
      %v3298 = vadd.f32 %v3246, %v3290
      %v3299 = vadd.f32 %v3247, %v3291
      %v3300 = vadd.f32 %v3248, %v3292
      %v3301 = vadd.f32 %v3249, %v3293
      %v3303 = vlaneseq
      %v3304 = vshrl.u32 %v3303, 7
      %v3305 = vsub.s32 0, %v3304
      %v3306 = vrot.slane %v1300, %v3305
      %v3308 = vadd.f32 %v3294, %v3306
      %v3309 = vadd.f32 %v3295, %v3306
      %v3310 = vadd.f32 %v3296, %v3306
      %v3311 = vadd.f32 %v3297, %v3306
      %v3312 = vadd.f32 %v3298, %v3306
      %v3313 = vadd.f32 %v3299, %v3306
      %v3314 = vadd.f32 %v3300, %v3306
      %v3315 = vadd.f32 %v3301, %v3306
      %vm3316 = vcmp.lt.s32.totalorder %v1318, 1
      %v3317 = vmax.f32 %v3308, 0.0
      %v3318 = vmax.f32 %v3309, 0.0
      %v3319 = vmax.f32 %v3310, 0.0
      %v3320 = vmax.f32 %v3311, 0.0
      %v3321 = vmax.f32 %v3312, 0.0
      %v3322 = vmax.f32 %v3313, 0.0
      %v3323 = vmax.f32 %v3314, 0.0
      %v3324 = vmax.f32 %v3315, 0.0
      %v3325 = vmin.f32 %v3317, 1.0
      %v3326 = vmin.f32 %v3318, 1.0
      %v3327 = vmin.f32 %v3319, 1.0
      %v3328 = vmin.f32 %v3320, 1.0
      %v3329 = vmin.f32 %v3321, 1.0
      %v3330 = vmin.f32 %v3322, 1.0
      %v3331 = vmin.f32 %v3323, 1.0
      %v3332 = vmin.f32 %v3324, 1.0
      %v3333 = vxor.u32 %v3308, 2147483648
      %v3334 = vxor.u32 %v3309, 2147483648
      %v3335 = vxor.u32 %v3310, 2147483648
      %v3336 = vxor.u32 %v3311, 2147483648
      %v3337 = vxor.u32 %v3312, 2147483648
      %v3338 = vxor.u32 %v3313, 2147483648
      %v3339 = vxor.u32 %v3314, 2147483648
      %v3340 = vxor.u32 %v3315, 2147483648
      %v3341 = vmul.f32 %v3333, 1.442695
      %v3342 = vpow.pop %v3341
      %v3343 = vmul.f32 %v3334, 1.442695
      %v3344 = vpow.pop %v3343
      %v3345 = vmul.f32 %v3335, 1.442695
      %v3346 = vpow.pop %v3345
      %v3347 = vmul.f32 %v3336, 1.442695
      %v3348 = vpow.pop %v3347
      %v3349 = vmul.f32 %v3337, 1.442695
      %v3350 = vpow.pop %v3349
      %v3351 = vmul.f32 %v3338, 1.442695
      %v3352 = vpow.pop %v3351
      %v3353 = vmul.f32 %v3339, 1.442695
      %v3354 = vpow.pop %v3353
      %v3355 = vmul.f32 %v3340, 1.442695
      %v3356 = vpow.pop %v3355
      %v3357 = vadd.f32 %v3342, 1.0
      %v3358 = vadd.f32 %v3344, 1.0
      %v3359 = vadd.f32 %v3346, 1.0
      %v3360 = vadd.f32 %v3348, 1.0
      %v3361 = vadd.f32 %v3350, 1.0
      %v3362 = vadd.f32 %v3352, 1.0
      %v3363 = vadd.f32 %v3354, 1.0
      %v3364 = vadd.f32 %v3356, 1.0
      %v3365 = vrcp.pop %v3357
      %v3366 = vmul.f32 1.0, %v3365
      %v3367 = vrcp.pop %v3358
      %v3368 = vmul.f32 1.0, %v3367
      %v3369 = vrcp.pop %v3359
      %v3370 = vmul.f32 1.0, %v3369
      %v3371 = vrcp.pop %v3360
      %v3372 = vmul.f32 1.0, %v3371
      %v3373 = vrcp.pop %v3361
      %v3374 = vmul.f32 1.0, %v3373
      %v3375 = vrcp.pop %v3362
      %v3376 = vmul.f32 1.0, %v3375
      %v3377 = vrcp.pop %v3363
      %v3378 = vmul.f32 1.0, %v3377
      %v3379 = vrcp.pop %v3364
      %v3380 = vmul.f32 1.0, %v3379
      %v3381 = vsel %vm3316, %v3325, %v3366
      %v3382 = vsel %vm3316, %v3326, %v3368
      %v3383 = vsel %vm3316, %v3327, %v3370
      %v3384 = vsel %vm3316, %v3328, %v3372
      %v3385 = vsel %vm3316, %v3329, %v3374
      %v3386 = vsel %vm3316, %v3330, %v3376
      %v3387 = vsel %vm3316, %v3331, %v3378
      %v3388 = vsel %vm3316, %v3332, %v3380
      %vm3389 = vcmask 64512
      %3390 = vst.msk [vmem:[%s759] sm:$0xff] %vm3389, %v3381
      %3391 = vst.msk [vmem:[%s759 + $0x8] sm:$0xff] %vm3389, %v3382
      %3392 = vst.msk [vmem:[%s759 + $0x10] sm:$0xff] %vm3389, %v3383
      %3393 = vst.msk [vmem:[%s759 + $0x18] sm:$0xff] %vm3389, %v3384
      %3394 = vst.msk [vmem:[%s759 + $0x20] sm:$0xff] %vm3389, %v3385
      %3395 = vst.msk [vmem:[%s759 + $0x28] sm:$0xff] %vm3389, %v3386
      %3396 = vst.msk [vmem:[%s759 + $0x30] sm:$0xff] %vm3389, %v3387
      %3397 = vst.msk [vmem:[%s759 + $0x38] sm:$0xff] %vm3389, %v3388
      %vm3398 = vcmask 1042432
      %vm3399 = vcmask 1046532
      %vm3400 = vmor %vm3398, %vm3399
      %v3401 = vrot.slane %v1343, 5
      %v3402 = vrot.slane %v3401, 4
      %v3403 = vrot.slane %v1344, 5
      %v3404 = vsel %vm3400, %v3402, %v3403
      %v3405 = vrot.slane %v1345, 5
      %v3406 = vrot.slane %v3405, 4
      %v3407 = vrot.slane %v1346, 5
      %v3408 = vsel %vm3400, %v3406, %v3407
      %v3409 = vrot.slane %v1347, 5
      %v3410 = vrot.slane %v3409, 4
      %v3411 = vrot.slane %v1348, 5
      %v3412 = vsel %vm3400, %v3410, %v3411
      %v3413 = vrot.slane %v1349, 5
      %v3414 = vrot.slane %v3413, 4
      %v3415 = vrot.slane %v1350, 5
      %v3416 = vsel %vm3400, %v3414, %v3415
      %v3417 = vrot.slane %v1351, 5
      %v3418 = vrot.slane %v3417, 4
      %v3419 = vrot.slane %v1352, 5
      %v3420 = vsel %vm3400, %v3418, %v3419
      %v3421 = vrot.slane %v1353, 5
      %v3422 = vrot.slane %v3421, 4
      %v3423 = vrot.slane %v1354, 5
      %v3424 = vsel %vm3400, %v3422, %v3423
      %v3425 = vrot.slane %v1355, 5
      %v3426 = vrot.slane %v3425, 4
      %v3427 = vrot.slane %v1356, 5
      %v3428 = vsel %vm3400, %v3426, %v3427
      %v3429 = vrot.slane %v1357, 5
      %v3430 = vrot.slane %v3429, 4
      %v3431 = vrot.slane %v1358, 5
      %v3432 = vsel %vm3400, %v3430, %v3431
      %v3433 = vunpack.c.l.b16 %v3404
      %v3434 = vunpack.c.l.b16 %v3408
      %v3435 = vunpack.c.l.b16 %v3412
      %v3436 = vunpack.c.l.b16 %v3416
      %v3437 = vunpack.c.l.b16 %v3420
      %v3438 = vunpack.c.l.b16 %v3424
      %v3439 = vunpack.c.l.b16 %v3428
      %v3440 = vunpack.c.l.b16 %v3432
      %v3441 = vpack.c.b16 %v3434, %v3433
      %v3442 = vpack.c.b16 %v3436, %v3435
      %v3443 = vpack.c.b16 %v3438, %v3437
      %v3444 = vpack.c.b16 %v3440, %v3439
      %3449 = vmatprep.subr.bf16.mxu0 0
      %3450 = vmatpush1.bf16.msra.mxu0 %v1761
      %3451 = vmatprep.subr.bf16.mxu0 0
      %3452 = vmatpush1.bf16.msra.mxu0 %v1760
      %3453 = vmatprep.subr.bf16.mxu0 0
      %3454 = vmatpush1.bf16.msra.mxu0 %v1759
      %3455 = vmatprep.subr.bf16.mxu0 0
      %3456 = vmatpush1.bf16.msra.mxu0 %v1758
      %3457 = vmatprep.subr.bf16.mxu0 0
      %3458 = vmatpush1.bf16.msra.mxu0 %v1757
      %3459 = vmatprep.subr.bf16.mxu0 0
      %3460 = vmatpush1.bf16.msra.mxu0 %v1756
      %3461 = vmatprep.subr.bf16.mxu0 0
      %3462 = vmatpush1.bf16.msra.mxu0 %v1755
      %3463 = vmatprep.subr.bf16.mxu0 0
      %3464 = vmatpush1.bf16.msra.mxu0 %v1754
      %3465 = vmatprep.subr.bf16.mxu0 0
      %3466 = vmatpush2.bf16.msra.mxu0 %v1769
      %3467 = vmatprep.subr.bf16.mxu0 0
      %3468 = vmatpush2.bf16.msra.mxu0 %v1768
      %3469 = vmatprep.subr.bf16.mxu0 0
      %3470 = vmatpush2.bf16.msra.mxu0 %v1767
      %3471 = vmatprep.subr.bf16.mxu0 0
      %3472 = vmatpush2.bf16.msra.mxu0 %v1766
      %3473 = vmatprep.subr.bf16.mxu0 0
      %3474 = vmatpush2.bf16.msra.mxu0 %v1765
      %3475 = vmatprep.subr.bf16.mxu0 0
      %3476 = vmatpush2.bf16.msra.mxu0 %v1764
      %3477 = vmatprep.subr.bf16.mxu0 0
      %3478 = vmatpush2.bf16.msra.mxu0 %v1763
      %3479 = vmatprep.subr.bf16.mxu0 0
      %3480 = vmatpush2.bf16.msra.mxu0 %v1762
      %3481 = vmatprep.mubr.bf16.mxu0 %v2308
      %3482 = vmatmul.mubr.bf16.gmra.mxu0 %v3441
      %v3483 = vpop.f32.mrf.mxu0
      %v3484 = vadd.f32 0.0, %v3483
      %v3485 = vpop.f32.mrf.mxu0
      %v3486 = vpop.f32.mrf.mxu0
      %v3487 = vadd.f32 0.0, %v3486
      %v3488 = vpop.f32.mrf.mxu0
      %3489 = vmatprep.mubr.bf16.mxu0 %v2309
      %3490 = vmatmul.mubr.bf16.gmra.mxu0 %v3442
      %v3491 = vpop.f32.mrf.mxu0
      %v3492 = vadd.f32 0.0, %v3491
      %v3493 = vpop.f32.mrf.mxu0
      %v3494 = vpop.f32.mrf.mxu0
      %v3495 = vadd.f32 0.0, %v3494
      %v3496 = vpop.f32.mrf.mxu0
      %3497 = vmatprep.mubr.bf16.mxu0 %v2310
      %3498 = vmatmul.mubr.bf16.gmra.mxu0 %v3443
      %v3499 = vpop.f32.mrf.mxu0
      %v3500 = vadd.f32 0.0, %v3499
      %v3501 = vpop.f32.mrf.mxu0
      %v3502 = vpop.f32.mrf.mxu0
      %v3503 = vadd.f32 0.0, %v3502
      %v3504 = vpop.f32.mrf.mxu0
      %3505 = vmatprep.mubr.bf16.mxu0 %v2311
      %3506 = vmatmul.mubr.bf16.gmra.mxu0 %v3444
      %v3507 = vpop.f32.mrf.mxu0
      %v3508 = vadd.f32 0.0, %v3507
      %v3509 = vpop.f32.mrf.mxu0
      %v3510 = vpop.f32.mrf.mxu0
      %v3511 = vadd.f32 0.0, %v3510
      %v3512 = vpop.f32.mrf.mxu0
      %3513 = vdwg.mxu0
      %3514 = vmatprep.subr.bf16.mxu0 0
      %3515 = vmatpush1.bf16.msra.mxu0 %v1922
      %3516 = vmatprep.subr.bf16.mxu0 0
      %3517 = vmatpush1.bf16.msra.mxu0 %v1921
      %3518 = vmatprep.subr.bf16.mxu0 0
      %3519 = vmatpush1.bf16.msra.mxu0 %v1920
      %3520 = vmatprep.subr.bf16.mxu0 0
      %3521 = vmatpush1.bf16.msra.mxu0 %v1919
      %3522 = vmatprep.subr.bf16.mxu0 0
      %3523 = vmatpush1.bf16.msra.mxu0 %v1918
      %3524 = vmatprep.subr.bf16.mxu0 0
      %3525 = vmatpush1.bf16.msra.mxu0 %v1917
      %3526 = vmatprep.subr.bf16.mxu0 0
      %3527 = vmatpush1.bf16.msra.mxu0 %v1916
      %3528 = vmatprep.subr.bf16.mxu0 0
      %3529 = vmatpush1.bf16.msra.mxu0 %v1915
      %3530 = vmatprep.subr.bf16.mxu0 0
      %3531 = vmatpush2.bf16.msra.mxu0 %v1930
      %3532 = vmatprep.subr.bf16.mxu0 0
      %3533 = vmatpush2.bf16.msra.mxu0 %v1929
      %3534 = vmatprep.subr.bf16.mxu0 0
      %3535 = vmatpush2.bf16.msra.mxu0 %v1928
      %3536 = vmatprep.subr.bf16.mxu0 0
      %3537 = vmatpush2.bf16.msra.mxu0 %v1927
      %3538 = vmatprep.subr.bf16.mxu0 0
      %3539 = vmatpush2.bf16.msra.mxu0 %v1926
      %3540 = vmatprep.subr.bf16.mxu0 0
      %3541 = vmatpush2.bf16.msra.mxu0 %v1925
      %3542 = vmatprep.subr.bf16.mxu0 0
      %3543 = vmatpush2.bf16.msra.mxu0 %v1924
      %3544 = vmatprep.subr.bf16.mxu0 0
      %3545 = vmatpush2.bf16.msra.mxu0 %v1923
      %3546 = vmatprep.mubr.bf16.mxu0 %v1658
      %3547 = vmatmul.mubr.bf16.gmra.mxu0 %v1506
      %v3548 = vpop.f32.mrf.mxu0
      %v3549 = vadd.f32 %v3484, %v3548
      %v3550 = vpop.f32.mrf.mxu0
      %v3551 = vpop.f32.mrf.mxu0
      %v3552 = vadd.f32 %v3487, %v3551
      %v3553 = vpop.f32.mrf.mxu0
      %3554 = vmatprep.mubr.bf16.mxu0 %v1659
      %3555 = vmatmul.mubr.bf16.gmra.mxu0 %v1507
      %v3556 = vpop.f32.mrf.mxu0
      %v3557 = vadd.f32 %v3492, %v3556
      %v3558 = vpop.f32.mrf.mxu0
      %v3559 = vpop.f32.mrf.mxu0
      %v3560 = vadd.f32 %v3495, %v3559
      %v3561 = vpop.f32.mrf.mxu0
      %3562 = vmatprep.mubr.bf16.mxu0 %v1660
      %3563 = vmatmul.mubr.bf16.gmra.mxu0 %v1508
      %v3564 = vpop.f32.mrf.mxu0
      %v3565 = vadd.f32 %v3500, %v3564
      %v3566 = vpop.f32.mrf.mxu0
      %v3567 = vpop.f32.mrf.mxu0
      %v3568 = vadd.f32 %v3503, %v3567
      %v3569 = vpop.f32.mrf.mxu0
      %3570 = vmatprep.mubr.bf16.mxu0 %v1661
      %3571 = vmatmul.mubr.bf16.gmra.mxu0 %v1509
      %v3572 = vpop.f32.mrf.mxu0
      %v3573 = vadd.f32 %v3508, %v3572
      %v3574 = vpop.f32.mrf.mxu0
      %v3575 = vpop.f32.mrf.mxu0
      %v3576 = vadd.f32 %v3511, %v3575
      %v3577 = vpop.f32.mrf.mxu0
      %3578 = vdwg.mxu0
      %v3579 = vrot.slane %v2036, 5
      %v3580 = vrot.slane %v3579, 4
      %v3581 = vrot.slane %v2037, 5
      %v3582 = vsel %vm3400, %v3580, %v3581
      %v3583 = vrot.slane %v2038, 5
      %v3584 = vrot.slane %v3583, 4
      %v3585 = vrot.slane %v2039, 5
      %v3586 = vsel %vm3400, %v3584, %v3585
      %v3587 = vrot.slane %v2040, 5
      %v3588 = vrot.slane %v3587, 4
      %v3589 = vrot.slane %v2041, 5
      %v3590 = vsel %vm3400, %v3588, %v3589
      %v3591 = vrot.slane %v2042, 5
      %v3592 = vrot.slane %v3591, 4
      %v3593 = vrot.slane %v2043, 5
      %v3594 = vsel %vm3400, %v3592, %v3593
      %v3595 = vrot.slane %v2044, 5
      %v3596 = vrot.slane %v3595, 4
      %v3597 = vrot.slane %v2045, 5
      %v3598 = vsel %vm3400, %v3596, %v3597
      %v3599 = vrot.slane %v2046, 5
      %v3600 = vrot.slane %v3599, 4
      %v3601 = vrot.slane %v2047, 5
      %v3602 = vsel %vm3400, %v3600, %v3601
      %v3603 = vrot.slane %v2048, 5
      %v3604 = vrot.slane %v3603, 4
      %v3605 = vrot.slane %v2049, 5
      %v3606 = vsel %vm3400, %v3604, %v3605
      %v3607 = vrot.slane %v2050, 5
      %v3608 = vrot.slane %v3607, 4
      %v3609 = vrot.slane %v2051, 5
      %v3610 = vsel %vm3400, %v3608, %v3609
      %v3611 = vunpack.c.l.b16 %v3582
      %v3612 = vunpack.c.l.b16 %v3586
      %v3613 = vunpack.c.l.b16 %v3590
      %v3614 = vunpack.c.l.b16 %v3594
      %v3615 = vunpack.c.l.b16 %v3598
      %v3616 = vunpack.c.l.b16 %v3602
      %v3617 = vunpack.c.l.b16 %v3606
      %v3618 = vunpack.c.l.b16 %v3610
      %v3619 = vpack.c.b16 %v3612, %v3611
      %v3620 = vpack.c.b16 %v3614, %v3613
      %v3621 = vpack.c.b16 %v3616, %v3615
      %v3622 = vpack.c.b16 %v3618, %v3617
      %3627 = vmatprep.subr.bf16.mxu0 0
      %3628 = vmatpush1.bf16.msra.mxu0 %v2403
      %3629 = vmatprep.subr.bf16.mxu0 0
      %3630 = vmatpush1.bf16.msra.mxu0 %v2402
      %3631 = vmatprep.subr.bf16.mxu0 0
      %3632 = vmatpush1.bf16.msra.mxu0 %v2401
      %3633 = vmatprep.subr.bf16.mxu0 0
      %3634 = vmatpush1.bf16.msra.mxu0 %v2400
      %3635 = vmatprep.subr.bf16.mxu0 0
      %3636 = vmatpush1.bf16.msra.mxu0 %v2399
      %3637 = vmatprep.subr.bf16.mxu0 0
      %3638 = vmatpush1.bf16.msra.mxu0 %v2398
      %3639 = vmatprep.subr.bf16.mxu0 0
      %3640 = vmatpush1.bf16.msra.mxu0 %v2397
      %3641 = vmatprep.subr.bf16.mxu0 0
      %3642 = vmatpush1.bf16.msra.mxu0 %v2396
      %3643 = vmatprep.subr.bf16.mxu0 0
      %3644 = vmatpush2.bf16.msra.mxu0 %v2411
      %3645 = vmatprep.subr.bf16.mxu0 0
      %3646 = vmatpush2.bf16.msra.mxu0 %v2410
      %3647 = vmatprep.subr.bf16.mxu0 0
      %3648 = vmatpush2.bf16.msra.mxu0 %v2409
      %3649 = vmatprep.subr.bf16.mxu0 0
      %3650 = vmatpush2.bf16.msra.mxu0 %v2408
      %3651 = vmatprep.subr.bf16.mxu0 0
      %3652 = vmatpush2.bf16.msra.mxu0 %v2407
      %3653 = vmatprep.subr.bf16.mxu0 0
      %3654 = vmatpush2.bf16.msra.mxu0 %v2406
      %3655 = vmatprep.subr.bf16.mxu0 0
      %3656 = vmatpush2.bf16.msra.mxu0 %v2405
      %3657 = vmatprep.subr.bf16.mxu0 0
      %3658 = vmatpush2.bf16.msra.mxu0 %v2404
      %3659 = vmatprep.mubr.bf16.mxu0 %v3619
      %3660 = vmatmul.mubr.bf16.gmra.mxu0 %v2324
      %v3661 = vpop.f32.mrf.mxu0
      %v3662 = vadd.f32 0.0, %v3661
      %v3663 = vpop.f32.mrf.mxu0
      %v3664 = vpop.f32.mrf.mxu0
      %v3665 = vadd.f32 0.0, %v3664
      %v3666 = vpop.f32.mrf.mxu0
      %3667 = vmatprep.mubr.bf16.mxu0 %v3620
      %3668 = vmatmul.mubr.bf16.gmra.mxu0 %v2325
      %v3669 = vpop.f32.mrf.mxu0
      %v3670 = vadd.f32 0.0, %v3669
      %v3671 = vpop.f32.mrf.mxu0
      %v3672 = vpop.f32.mrf.mxu0
      %v3673 = vadd.f32 0.0, %v3672
      %v3674 = vpop.f32.mrf.mxu0
      %3675 = vmatprep.mubr.bf16.mxu0 %v3621
      %3676 = vmatmul.mubr.bf16.gmra.mxu0 %v2326
      %v3677 = vpop.f32.mrf.mxu0
      %v3678 = vadd.f32 0.0, %v3677
      %v3679 = vpop.f32.mrf.mxu0
      %v3680 = vpop.f32.mrf.mxu0
      %v3681 = vadd.f32 0.0, %v3680
      %v3682 = vpop.f32.mrf.mxu0
      %3683 = vmatprep.mubr.bf16.mxu0 %v3622
      %3684 = vmatmul.mubr.bf16.gmra.mxu0 %v2327
      %v3685 = vpop.f32.mrf.mxu0
      %v3686 = vadd.f32 0.0, %v3685
      %v3687 = vpop.f32.mrf.mxu0
      %v3688 = vpop.f32.mrf.mxu0
      %v3689 = vadd.f32 0.0, %v3688
      %v3690 = vpop.f32.mrf.mxu0
      %3691 = vdwg.mxu0
      %v3692 = vadd.f32 %v3549, %v3662
      %v3693 = vadd.f32 %v3552, %v3665
      %v3694 = vadd.f32 %v3557, %v3670
      %v3695 = vadd.f32 %v3560, %v3673
      %v3696 = vadd.f32 %v3565, %v3678
      %v3697 = vadd.f32 %v3568, %v3681
      %v3698 = vadd.f32 %v3573, %v3686
      %v3699 = vadd.f32 %v3576, %v3689
      %3700 = vmatprep.subr.bf16.mxu0 0
      %3701 = vmatpush1.bf16.msra.mxu0 %v2610
      %3702 = vmatprep.subr.bf16.mxu0 0
      %3703 = vmatpush1.bf16.msra.mxu0 %v2609
      %3704 = vmatprep.subr.bf16.mxu0 0
      %3705 = vmatpush1.bf16.msra.mxu0 %v2608
      %3706 = vmatprep.subr.bf16.mxu0 0
      %3707 = vmatpush1.bf16.msra.mxu0 %v2607
      %3708 = vmatprep.subr.bf16.mxu0 0
      %3709 = vmatpush1.bf16.msra.mxu0 %v2606
      %3710 = vmatprep.subr.bf16.mxu0 0
      %3711 = vmatpush1.bf16.msra.mxu0 %v2605
      %3712 = vmatprep.subr.bf16.mxu0 0
      %3713 = vmatpush1.bf16.msra.mxu0 %v2604
      %3714 = vmatprep.subr.bf16.mxu0 0
      %3715 = vmatpush1.bf16.msra.mxu0 %v2603
      %3716 = vmatprep.subr.bf16.mxu0 0
      %3717 = vmatpush2.bf16.msra.mxu0 %v2618
      %3718 = vmatprep.subr.bf16.mxu0 0
      %3719 = vmatpush2.bf16.msra.mxu0 %v2617
      %3720 = vmatprep.subr.bf16.mxu0 0
      %3721 = vmatpush2.bf16.msra.mxu0 %v2616
      %3722 = vmatprep.subr.bf16.mxu0 0
      %3723 = vmatpush2.bf16.msra.mxu0 %v2615
      %3724 = vmatprep.subr.bf16.mxu0 0
      %3725 = vmatpush2.bf16.msra.mxu0 %v2614
      %3726 = vmatprep.subr.bf16.mxu0 0
      %3727 = vmatpush2.bf16.msra.mxu0 %v2613
      %3728 = vmatprep.subr.bf16.mxu0 0
      %3729 = vmatpush2.bf16.msra.mxu0 %v2612
      %3730 = vmatprep.subr.bf16.mxu0 0
      %3731 = vmatpush2.bf16.msra.mxu0 %v2611
      %3732 = vmatprep.mubr.bf16.mxu0 %v2726
      %3733 = vmatmul.mubr.bf16.gmra.mxu0 %v2531
      %v3734 = vpop.f32.mrf.mxu0
      %v3735 = vadd.f32 0.0, %v3734
      %v3736 = vpop.f32.mrf.mxu0
      %v3737 = vpop.f32.mrf.mxu0
      %v3738 = vadd.f32 0.0, %v3737
      %v3739 = vpop.f32.mrf.mxu0
      %3740 = vmatprep.mubr.bf16.mxu0 %v2727
      %3741 = vmatmul.mubr.bf16.gmra.mxu0 %v2532
      %v3742 = vpop.f32.mrf.mxu0
      %v3743 = vadd.f32 0.0, %v3742
      %v3744 = vpop.f32.mrf.mxu0
      %v3745 = vpop.f32.mrf.mxu0
      %v3746 = vadd.f32 0.0, %v3745
      %v3747 = vpop.f32.mrf.mxu0
      %3748 = vmatprep.mubr.bf16.mxu0 %v2728
      %3749 = vmatmul.mubr.bf16.gmra.mxu0 %v2533
      %v3750 = vpop.f32.mrf.mxu0
      %v3751 = vadd.f32 0.0, %v3750
      %v3752 = vpop.f32.mrf.mxu0
      %v3753 = vpop.f32.mrf.mxu0
      %v3754 = vadd.f32 0.0, %v3753
      %v3755 = vpop.f32.mrf.mxu0
      %3756 = vmatprep.mubr.bf16.mxu0 %v2729
      %3757 = vmatmul.mubr.bf16.gmra.mxu0 %v2534
      %v3758 = vpop.f32.mrf.mxu0
      %v3759 = vadd.f32 0.0, %v3758
      %v3760 = vpop.f32.mrf.mxu0
      %v3761 = vpop.f32.mrf.mxu0
      %v3762 = vadd.f32 0.0, %v3761
      %v3763 = vpop.f32.mrf.mxu0
      %3764 = vdwg.mxu0
      %v3765 = vadd.f32 %v3692, %v3735
      %v3766 = vadd.f32 %v3693, %v3738
      %v3767 = vadd.f32 %v3694, %v3743
      %v3768 = vadd.f32 %v3695, %v3746
      %v3769 = vadd.f32 %v3696, %v3751
      %v3770 = vadd.f32 %v3697, %v3754
      %v3771 = vadd.f32 %v3698, %v3759
      %v3772 = vadd.f32 %v3699, %v3762
      %v3773 = vrot.slane %v2504, 5
      %v3774 = vrot.slane %v3773, 4
      %v3775 = vrot.slane %v2505, 5
      %v3776 = vsel %vm3400, %v3774, %v3775
      %v3777 = vunpack.c.l.b16 %v3776
      %v3778 = vpack.c.b16 %v3435, %v3434
      %v3779 = vpack.c.b16 %v3437, %v3436
      %v3780 = vpack.c.b16 %v3439, %v3438
      %v3781 = vpack.c.b16 %v3777, %v3440
      %3786 = vmatprep.subr.bf16.mxu0 0
      %3787 = vmatpush1.bf16.msra.mxu0 %v2805
      %3788 = vmatprep.subr.bf16.mxu0 0
      %3789 = vmatpush1.bf16.msra.mxu0 %v2804
      %3790 = vmatprep.subr.bf16.mxu0 0
      %3791 = vmatpush1.bf16.msra.mxu0 %v2803
      %3792 = vmatprep.subr.bf16.mxu0 0
      %3793 = vmatpush1.bf16.msra.mxu0 %v2802
      %3794 = vmatprep.subr.bf16.mxu0 0
      %3795 = vmatpush1.bf16.msra.mxu0 %v2801
      %3796 = vmatprep.subr.bf16.mxu0 0
      %3797 = vmatpush1.bf16.msra.mxu0 %v2800
      %3798 = vmatprep.subr.bf16.mxu0 0
      %3799 = vmatpush1.bf16.msra.mxu0 %v2799
      %3800 = vmatprep.subr.bf16.mxu0 0
      %3801 = vmatpush1.bf16.msra.mxu0 %v2798
      %3802 = vmatprep.subr.bf16.mxu0 0
      %3803 = vmatpush2.bf16.msra.mxu0 %v2813
      %3804 = vmatprep.subr.bf16.mxu0 0
      %3805 = vmatpush2.bf16.msra.mxu0 %v2812
      %3806 = vmatprep.subr.bf16.mxu0 0
      %3807 = vmatpush2.bf16.msra.mxu0 %v2811
      %3808 = vmatprep.subr.bf16.mxu0 0
      %3809 = vmatpush2.bf16.msra.mxu0 %v2810
      %3810 = vmatprep.subr.bf16.mxu0 0
      %3811 = vmatpush2.bf16.msra.mxu0 %v2809
      %3812 = vmatprep.subr.bf16.mxu0 0
      %3813 = vmatpush2.bf16.msra.mxu0 %v2808
      %3814 = vmatprep.subr.bf16.mxu0 0
      %3815 = vmatpush2.bf16.msra.mxu0 %v2807
      %3816 = vmatprep.subr.bf16.mxu0 0
      %3817 = vmatpush2.bf16.msra.mxu0 %v2806
      %3818 = vmatprep.mubr.bf16.mxu0 %v3778
      %3819 = vmatmul.mubr.bf16.gmra.mxu0 %v3778
      %v3820 = vpop.f32.mrf.mxu0
      %v3821 = vadd.f32 0.0, %v3820
      %v3822 = vpop.f32.mrf.mxu0
      %v3823 = vpop.f32.mrf.mxu0
      %v3824 = vadd.f32 0.0, %v3823
      %v3825 = vpop.f32.mrf.mxu0
      %3826 = vmatprep.mubr.bf16.mxu0 %v3779
      %3827 = vmatmul.mubr.bf16.gmra.mxu0 %v3779
      %v3828 = vpop.f32.mrf.mxu0
      %v3829 = vadd.f32 0.0, %v3828
      %v3830 = vpop.f32.mrf.mxu0
      %v3831 = vpop.f32.mrf.mxu0
      %v3832 = vadd.f32 0.0, %v3831
      %v3833 = vpop.f32.mrf.mxu0
      %3834 = vmatprep.mubr.bf16.mxu0 %v3780
      %3835 = vmatmul.mubr.bf16.gmra.mxu0 %v3780
      %v3836 = vpop.f32.mrf.mxu0
      %v3837 = vadd.f32 0.0, %v3836
      %v3838 = vpop.f32.mrf.mxu0
      %v3839 = vpop.f32.mrf.mxu0
      %v3840 = vadd.f32 0.0, %v3839
      %v3841 = vpop.f32.mrf.mxu0
      %3842 = vmatprep.mubr.bf16.mxu0 %v3781
      %3843 = vmatmul.mubr.bf16.gmra.mxu0 %v3781
      %v3844 = vpop.f32.mrf.mxu0
      %v3845 = vadd.f32 0.0, %v3844
      %v3846 = vpop.f32.mrf.mxu0
      %v3847 = vpop.f32.mrf.mxu0
      %v3848 = vadd.f32 0.0, %v3847
      %v3849 = vpop.f32.mrf.mxu0
      %3850 = vdwg.mxu0
      %v3851 = vadd.f32 %v3765, %v3821
      %v3852 = vadd.f32 %v3766, %v3824
      %v3853 = vadd.f32 %v3767, %v3829
      %v3854 = vadd.f32 %v3768, %v3832
      %v3855 = vadd.f32 %v3769, %v3837
      %v3856 = vadd.f32 %v3770, %v3840
      %v3857 = vadd.f32 %v3771, %v3845
      %v3858 = vadd.f32 %v3772, %v3848
      %v3859 = vadd.f32 %v3851, %v2907
      %v3860 = vadd.f32 %v3852, %v2907
      %v3861 = vadd.f32 %v3853, %v2907
      %v3862 = vadd.f32 %v3854, %v2907
      %v3863 = vadd.f32 %v3855, %v2907
      %v3864 = vadd.f32 %v3856, %v2907
      %v3865 = vadd.f32 %v3857, %v2907
      %v3866 = vadd.f32 %v3858, %v2907
      %v3867 = vmax.f32 %v3859, 0.0
      %v3868 = vmax.f32 %v3860, 0.0
      %v3869 = vmax.f32 %v3861, 0.0
      %v3870 = vmax.f32 %v3862, 0.0
      %v3871 = vmax.f32 %v3863, 0.0
      %v3872 = vmax.f32 %v3864, 0.0
      %v3873 = vmax.f32 %v3865, 0.0
      %v3874 = vmax.f32 %v3866, 0.0
      %v3875 = vpack.c.bf16 %v3868, %v3867
      %v3876 = vpack.c.bf16 %v3870, %v3869
      %v3877 = vpack.c.bf16 %v3872, %v3871
      %v3878 = vpack.c.bf16 %v3874, %v3873
      %3879 = vset.pattern.permute.xlu0 5
      %3880 = vperm.xlu0 %3879, %v1309
      %v3881 = vpop.permute.xlu0 %3880
      %3883 = vset.pattern.permute.xlu0 5
      %3884 = vperm.xlu0 %3883, %v1310
      %v3885 = vpop.permute.xlu0 %3884
      %3887 = vset.pattern.permute.xlu0 5
      %3888 = vperm.xlu0 %3887, %v1311
      %v3889 = vpop.permute.xlu0 %3888
      %3891 = vset.pattern.permute.xlu0 5
      %3892 = vperm.xlu0 %3891, %v1312
      %v3893 = vpop.permute.xlu0 %3892
      %3895 = vset.pattern.permute.xlu0 5
      %3896 = vperm.xlu0 %3895, %v1313
      %v3897 = vpop.permute.xlu0 %3896
      %3899 = vset.pattern.permute.xlu0 5
      %3900 = vperm.xlu0 %3899, %v1314
      %v3901 = vpop.permute.xlu0 %3900
      %3903 = vset.pattern.permute.xlu0 5
      %3904 = vperm.xlu0 %3903, %v1315
      %v3905 = vpop.permute.xlu0 %3904
      %3907 = vset.pattern.permute.xlu0 5
      %3908 = vperm.xlu0 %3907, %v1316
      %v3909 = vpop.permute.xlu0 %3908
      %v3911 = vmul.f32 %v3881, %v2972
      %v3912 = vmul.f32 %v3885, %v2972
      %v3913 = vmul.f32 %v3889, %v2972
      %v3914 = vmul.f32 %v3893, %v2972
      %v3915 = vmul.f32 %v3897, %v2972
      %v3916 = vmul.f32 %v3901, %v2972
      %v3917 = vmul.f32 %v3905, %v2972
      %v3918 = vmul.f32 %v3909, %v2972
      %3919 = vmatprep.subr.bf16.mxu0 0
      %3920 = vmatpush1.bf16.msra.mxu0 %v3020
      %3921 = vmatprep.subr.bf16.mxu0 0
      %3922 = vmatpush1.bf16.msra.mxu0 %v3019
      %3923 = vmatprep.subr.bf16.mxu0 0
      %3924 = vmatpush1.bf16.msra.mxu0 %v3018
      %3925 = vmatprep.subr.bf16.mxu0 0
      %3926 = vmatpush1.bf16.msra.mxu0 %v3017
      %3927 = vmatprep.subr.bf16.mxu0 0
      %3928 = vmatpush1.bf16.msra.mxu0 %v3016
      %3929 = vmatprep.subr.bf16.mxu0 0
      %3930 = vmatpush1.bf16.msra.mxu0 %v3015
      %3931 = vmatprep.subr.bf16.mxu0 0
      %3932 = vmatpush1.bf16.msra.mxu0 %v3014
      %3933 = vmatprep.subr.bf16.mxu0 0
      %3934 = vmatpush1.bf16.msra.mxu0 %v3013
      %3935 = vmatprep.subr.bf16.mxu0 0
      %3936 = vmatpush2.bf16.msra.mxu0 0
      %3937 = vmatprep.subr.bf16.mxu0 0
      %3938 = vmatpush2.bf16.msra.mxu0 0
      %3939 = vmatprep.subr.bf16.mxu0 0
      %3940 = vmatpush2.bf16.msra.mxu0 0
      %3941 = vmatprep.subr.bf16.mxu0 0
      %3942 = vmatpush2.bf16.msra.mxu0 0
      %3943 = vmatprep.subr.bf16.mxu0 0
      %3944 = vmatpush2.bf16.msra.mxu0 0
      %3945 = vmatprep.subr.bf16.mxu0 0
      %3946 = vmatpush2.bf16.msra.mxu0 0
      %3947 = vmatprep.subr.bf16.mxu0 0
      %3948 = vmatpush2.bf16.msra.mxu0 0
      %3949 = vmatprep.subr.bf16.mxu0 0
      %3950 = vmatpush2.bf16.msra.mxu0 0
      %3951 = vmatprep.mubr.bf16.mxu0 0
      %3952 = vmatmul.mubr.bf16.gmra.mxu0 %v3875
      %v3953 = vpop.f32.mrf.mxu0
      %v3954 = vadd.f32 %v3911, %v3953
      %v3955 = vpop.f32.mrf.mxu0
      %v3956 = vpop.f32.mrf.mxu0
      %v3957 = vadd.f32 %v3912, %v3956
      %v3958 = vpop.f32.mrf.mxu0
      %3959 = vmatprep.mubr.bf16.mxu0 0
      %3960 = vmatmul.mubr.bf16.gmra.mxu0 %v3876
      %v3961 = vpop.f32.mrf.mxu0
      %v3962 = vadd.f32 %v3913, %v3961
      %v3963 = vpop.f32.mrf.mxu0
      %v3964 = vpop.f32.mrf.mxu0
      %v3965 = vadd.f32 %v3914, %v3964
      %v3966 = vpop.f32.mrf.mxu0
      %3967 = vmatprep.mubr.bf16.mxu0 0
      %3968 = vmatmul.mubr.bf16.gmra.mxu0 %v3877
      %v3969 = vpop.f32.mrf.mxu0
      %v3970 = vadd.f32 %v3915, %v3969
      %v3971 = vpop.f32.mrf.mxu0
      %v3972 = vpop.f32.mrf.mxu0
      %v3973 = vadd.f32 %v3916, %v3972
      %v3974 = vpop.f32.mrf.mxu0
      %3975 = vmatprep.mubr.bf16.mxu0 0
      %3976 = vmatmul.mubr.bf16.gmra.mxu0 %v3878
      %v3977 = vpop.f32.mrf.mxu0
      %v3978 = vadd.f32 %v3917, %v3977
      %v3979 = vpop.f32.mrf.mxu0
      %v3980 = vpop.f32.mrf.mxu0
      %v3981 = vadd.f32 %v3918, %v3980
      %v3982 = vpop.f32.mrf.mxu0
      %3983 = vdwg.mxu0
      %3984 = vset.pattern.permute.xlu0 6
      %3985 = vperm.xlu0 %3984, %v1309
      %v3986 = vpop.permute.xlu0 %3985
      %3988 = vset.pattern.permute.xlu0 6
      %3989 = vperm.xlu0 %3988, %v1310
      %v3990 = vpop.permute.xlu0 %3989
      %3992 = vset.pattern.permute.xlu0 6
      %3993 = vperm.xlu0 %3992, %v1311
      %v3994 = vpop.permute.xlu0 %3993
      %3996 = vset.pattern.permute.xlu0 6
      %3997 = vperm.xlu0 %3996, %v1312
      %v3998 = vpop.permute.xlu0 %3997
      %4000 = vset.pattern.permute.xlu0 6
      %4001 = vperm.xlu0 %4000, %v1313
      %v4002 = vpop.permute.xlu0 %4001
      %4004 = vset.pattern.permute.xlu0 6
      %4005 = vperm.xlu0 %4004, %v1314
      %v4006 = vpop.permute.xlu0 %4005
      %4008 = vset.pattern.permute.xlu0 6
      %4009 = vperm.xlu0 %4008, %v1315
      %v4010 = vpop.permute.xlu0 %4009
      %4012 = vset.pattern.permute.xlu0 6
      %4013 = vperm.xlu0 %4012, %v1316
      %v4014 = vpop.permute.xlu0 %4013
      %v4016 = vmul.f32 %v3986, %v3129
      %v4017 = vmul.f32 %v3990, %v3129
      %v4018 = vmul.f32 %v3994, %v3129
      %v4019 = vmul.f32 %v3998, %v3129
      %v4020 = vmul.f32 %v4002, %v3129
      %v4021 = vmul.f32 %v4006, %v3129
      %v4022 = vmul.f32 %v4010, %v3129
      %v4023 = vmul.f32 %v4014, %v3129
      %v4024 = vadd.f32 %v3954, %v4016
      %v4025 = vadd.f32 %v3957, %v4017
      %v4026 = vadd.f32 %v3962, %v4018
      %v4027 = vadd.f32 %v3965, %v4019
      %v4028 = vadd.f32 %v3970, %v4020
      %v4029 = vadd.f32 %v3973, %v4021
      %v4030 = vadd.f32 %v3978, %v4022
      %v4031 = vadd.f32 %v3981, %v4023
      %4032 = vset.pattern.permute.xlu0 7
      %4033 = vperm.xlu0 %4032, %v1309
      %v4034 = vpop.permute.xlu0 %4033
      %4036 = vset.pattern.permute.xlu0 7
      %4037 = vperm.xlu0 %4036, %v1310
      %v4038 = vpop.permute.xlu0 %4037
      %4040 = vset.pattern.permute.xlu0 7
      %4041 = vperm.xlu0 %4040, %v1311
      %v4042 = vpop.permute.xlu0 %4041
      %4044 = vset.pattern.permute.xlu0 7
      %4045 = vperm.xlu0 %4044, %v1312
      %v4046 = vpop.permute.xlu0 %4045
      %4048 = vset.pattern.permute.xlu0 7
      %4049 = vperm.xlu0 %4048, %v1313
      %v4050 = vpop.permute.xlu0 %4049
      %4052 = vset.pattern.permute.xlu0 7
      %4053 = vperm.xlu0 %4052, %v1314
      %v4054 = vpop.permute.xlu0 %4053
      %4056 = vset.pattern.permute.xlu0 7
      %4057 = vperm.xlu0 %4056, %v1315
      %v4058 = vpop.permute.xlu0 %4057
      %4060 = vset.pattern.permute.xlu0 7
      %4061 = vperm.xlu0 %4060, %v1316
      %v4062 = vpop.permute.xlu0 %4061
      %v4064 = vmul.f32 %v4034, %v3181
      %v4065 = vmul.f32 %v4038, %v3181
      %v4066 = vmul.f32 %v4042, %v3181
      %v4067 = vmul.f32 %v4046, %v3181
      %v4068 = vmul.f32 %v4050, %v3181
      %v4069 = vmul.f32 %v4054, %v3181
      %v4070 = vmul.f32 %v4058, %v3181
      %v4071 = vmul.f32 %v4062, %v3181
      %v4072 = vadd.f32 %v4024, %v4064
      %v4073 = vadd.f32 %v4025, %v4065
      %v4074 = vadd.f32 %v4026, %v4066
      %v4075 = vadd.f32 %v4027, %v4067
      %v4076 = vadd.f32 %v4028, %v4068
      %v4077 = vadd.f32 %v4029, %v4069
      %v4078 = vadd.f32 %v4030, %v4070
      %v4079 = vadd.f32 %v4031, %v4071
      %4080 = vset.pattern.permute.xlu0 8
      %4081 = vperm.xlu0 %4080, %v1309
      %v4082 = vpop.permute.xlu0 %4081
      %4084 = vset.pattern.permute.xlu0 8
      %4085 = vperm.xlu0 %4084, %v1310
      %v4086 = vpop.permute.xlu0 %4085
      %4088 = vset.pattern.permute.xlu0 8
      %4089 = vperm.xlu0 %4088, %v1311
      %v4090 = vpop.permute.xlu0 %4089
      %4092 = vset.pattern.permute.xlu0 8
      %4093 = vperm.xlu0 %4092, %v1312
      %v4094 = vpop.permute.xlu0 %4093
      %4096 = vset.pattern.permute.xlu0 8
      %4097 = vperm.xlu0 %4096, %v1313
      %v4098 = vpop.permute.xlu0 %4097
      %4100 = vset.pattern.permute.xlu0 8
      %4101 = vperm.xlu0 %4100, %v1314
      %v4102 = vpop.permute.xlu0 %4101
      %4104 = vset.pattern.permute.xlu0 8
      %4105 = vperm.xlu0 %4104, %v1315
      %v4106 = vpop.permute.xlu0 %4105
      %4108 = vset.pattern.permute.xlu0 8
      %4109 = vperm.xlu0 %4108, %v1316
      %v4110 = vpop.permute.xlu0 %4109
      %v4112 = vmul.f32 %v4082, %v3233
      %v4113 = vmul.f32 %v4086, %v3233
      %v4114 = vmul.f32 %v4090, %v3233
      %v4115 = vmul.f32 %v4094, %v3233
      %v4116 = vmul.f32 %v4098, %v3233
      %v4117 = vmul.f32 %v4102, %v3233
      %v4118 = vmul.f32 %v4106, %v3233
      %v4119 = vmul.f32 %v4110, %v3233
      %v4120 = vadd.f32 %v4072, %v4112
      %v4121 = vadd.f32 %v4073, %v4113
      %v4122 = vadd.f32 %v4074, %v4114
      %v4123 = vadd.f32 %v4075, %v4115
      %v4124 = vadd.f32 %v4076, %v4116
      %v4125 = vadd.f32 %v4077, %v4117
      %v4126 = vadd.f32 %v4078, %v4118
      %v4127 = vadd.f32 %v4079, %v4119
      %4128 = vset.pattern.permute.xlu0 9
      %4129 = vperm.xlu0 %4128, %v1309
      %v4130 = vpop.permute.xlu0 %4129
      %4132 = vset.pattern.permute.xlu0 9
      %4133 = vperm.xlu0 %4132, %v1310
      %v4134 = vpop.permute.xlu0 %4133
      %4136 = vset.pattern.permute.xlu0 9
      %4137 = vperm.xlu0 %4136, %v1311
      %v4138 = vpop.permute.xlu0 %4137
      %4140 = vset.pattern.permute.xlu0 9
      %4141 = vperm.xlu0 %4140, %v1312
      %v4142 = vpop.permute.xlu0 %4141
      %4144 = vset.pattern.permute.xlu0 9
      %4145 = vperm.xlu0 %4144, %v1313
      %v4146 = vpop.permute.xlu0 %4145
      %4148 = vset.pattern.permute.xlu0 9
      %4149 = vperm.xlu0 %4148, %v1314
      %v4150 = vpop.permute.xlu0 %4149
      %4152 = vset.pattern.permute.xlu0 9
      %4153 = vperm.xlu0 %4152, %v1315
      %v4154 = vpop.permute.xlu0 %4153
      %4156 = vset.pattern.permute.xlu0 9
      %4157 = vperm.xlu0 %4156, %v1316
      %v4158 = vpop.permute.xlu0 %4157
      %v4160 = vmul.f32 %v4130, %v3285
      %v4161 = vmul.f32 %v4134, %v3285
      %v4162 = vmul.f32 %v4138, %v3285
      %v4163 = vmul.f32 %v4142, %v3285
      %v4164 = vmul.f32 %v4146, %v3285
      %v4165 = vmul.f32 %v4150, %v3285
      %v4166 = vmul.f32 %v4154, %v3285
      %v4167 = vmul.f32 %v4158, %v3285
      %v4168 = vadd.f32 %v4120, %v4160
      %v4169 = vadd.f32 %v4121, %v4161
      %v4170 = vadd.f32 %v4122, %v4162
      %v4171 = vadd.f32 %v4123, %v4163
      %v4172 = vadd.f32 %v4124, %v4164
      %v4173 = vadd.f32 %v4125, %v4165
      %v4174 = vadd.f32 %v4126, %v4166
      %v4175 = vadd.f32 %v4127, %v4167
      %v4176 = vadd.f32 %v4168, %v3306
      %v4177 = vadd.f32 %v4169, %v3306
      %v4178 = vadd.f32 %v4170, %v3306
      %v4179 = vadd.f32 %v4171, %v3306
      %v4180 = vadd.f32 %v4172, %v3306
      %v4181 = vadd.f32 %v4173, %v3306
      %v4182 = vadd.f32 %v4174, %v3306
      %v4183 = vadd.f32 %v4175, %v3306
      %v4184 = vmax.f32 %v4176, 0.0
      %v4185 = vmax.f32 %v4177, 0.0
      %v4186 = vmax.f32 %v4178, 0.0
      %v4187 = vmax.f32 %v4179, 0.0
      %v4188 = vmax.f32 %v4180, 0.0
      %v4189 = vmax.f32 %v4181, 0.0
      %v4190 = vmax.f32 %v4182, 0.0
      %v4191 = vmax.f32 %v4183, 0.0
      %v4192 = vmin.f32 %v4184, 1.0
      %v4193 = vmin.f32 %v4185, 1.0
      %v4194 = vmin.f32 %v4186, 1.0
      %v4195 = vmin.f32 %v4187, 1.0
      %v4196 = vmin.f32 %v4188, 1.0
      %v4197 = vmin.f32 %v4189, 1.0
      %v4198 = vmin.f32 %v4190, 1.0
      %v4199 = vmin.f32 %v4191, 1.0
      %v4200 = vxor.u32 %v4176, 2147483648
      %v4201 = vxor.u32 %v4177, 2147483648
      %v4202 = vxor.u32 %v4178, 2147483648
      %v4203 = vxor.u32 %v4179, 2147483648
      %v4204 = vxor.u32 %v4180, 2147483648
      %v4205 = vxor.u32 %v4181, 2147483648
      %v4206 = vxor.u32 %v4182, 2147483648
      %v4207 = vxor.u32 %v4183, 2147483648
      %v4208 = vmul.f32 %v4200, 1.442695
      %v4209 = vpow.pop %v4208
      %v4210 = vmul.f32 %v4201, 1.442695
      %v4211 = vpow.pop %v4210
      %v4212 = vmul.f32 %v4202, 1.442695
      %v4213 = vpow.pop %v4212
      %v4214 = vmul.f32 %v4203, 1.442695
      %v4215 = vpow.pop %v4214
      %v4216 = vmul.f32 %v4204, 1.442695
      %v4217 = vpow.pop %v4216
      %v4218 = vmul.f32 %v4205, 1.442695
      %v4219 = vpow.pop %v4218
      %v4220 = vmul.f32 %v4206, 1.442695
      %v4221 = vpow.pop %v4220
      %v4222 = vmul.f32 %v4207, 1.442695
      %v4223 = vpow.pop %v4222
      %v4224 = vadd.f32 %v4209, 1.0
      %v4225 = vadd.f32 %v4211, 1.0
      %v4226 = vadd.f32 %v4213, 1.0
      %v4227 = vadd.f32 %v4215, 1.0
      %v4228 = vadd.f32 %v4217, 1.0
      %v4229 = vadd.f32 %v4219, 1.0
      %v4230 = vadd.f32 %v4221, 1.0
      %v4231 = vadd.f32 %v4223, 1.0
      %v4232 = vrcp.pop %v4224
      %v4233 = vmul.f32 1.0, %v4232
      %v4234 = vrcp.pop %v4225
      %v4235 = vmul.f32 1.0, %v4234
      %v4236 = vrcp.pop %v4226
      %v4237 = vmul.f32 1.0, %v4236
      %v4238 = vrcp.pop %v4227
      %v4239 = vmul.f32 1.0, %v4238
      %v4240 = vrcp.pop %v4228
      %v4241 = vmul.f32 1.0, %v4240
      %v4242 = vrcp.pop %v4229
      %v4243 = vmul.f32 1.0, %v4242
      %v4244 = vrcp.pop %v4230
      %v4245 = vmul.f32 1.0, %v4244
      %v4246 = vrcp.pop %v4231
      %v4247 = vmul.f32 1.0, %v4246
      %v4248 = vsel %vm3316, %v4192, %v4233
      %v4249 = vsel %vm3316, %v4193, %v4235
      %v4250 = vsel %vm3316, %v4194, %v4237
      %v4251 = vsel %vm3316, %v4195, %v4239
      %v4252 = vsel %vm3316, %v4196, %v4241
      %v4253 = vsel %vm3316, %v4197, %v4243
      %v4254 = vsel %vm3316, %v4198, %v4245
      %v4255 = vsel %vm3316, %v4199, %v4247
      %s4256 = scalar_lea.vmem %s759, 64
      %4257 = vst.msk [vmem:[%s4256] sm:$0xff] %vm3389, %v4248
      %4258 = vst.msk [vmem:[%s4256 + $0x8] sm:$0xff] %vm3389, %v4249
      %4259 = vst.msk [vmem:[%s4256 + $0x10] sm:$0xff] %vm3389, %v4250
      %4260 = vst.msk [vmem:[%s4256 + $0x18] sm:$0xff] %vm3389, %v4251
      %4261 = vst.msk [vmem:[%s4256 + $0x20] sm:$0xff] %vm3389, %v4252
      %4262 = vst.msk [vmem:[%s4256 + $0x28] sm:$0xff] %vm3389, %v4253
      %4263 = vst.msk [vmem:[%s4256 + $0x30] sm:$0xff] %vm3389, %v4254
      %4264 = vst.msk [vmem:[%s4256 + $0x38] sm:$0xff] %vm3389, %v4255
      %4265 = vmatprep.subr.bf16.mxu0 0
      %4266 = vmatpush1.bf16.msra.mxu0 %v1761
      %4267 = vmatprep.subr.bf16.mxu0 0
      %4268 = vmatpush1.bf16.msra.mxu0 %v1760
      %4269 = vmatprep.subr.bf16.mxu0 0
      %4270 = vmatpush1.bf16.msra.mxu0 %v1759
      %4271 = vmatprep.subr.bf16.mxu0 0
      %4272 = vmatpush1.bf16.msra.mxu0 %v1758
      %4273 = vmatprep.subr.bf16.mxu0 0
      %4274 = vmatpush1.bf16.msra.mxu0 %v1757
      %4275 = vmatprep.subr.bf16.mxu0 0
      %4276 = vmatpush1.bf16.msra.mxu0 %v1756
      %4277 = vmatprep.subr.bf16.mxu0 0
      %4278 = vmatpush1.bf16.msra.mxu0 %v1755
      %4279 = vmatprep.subr.bf16.mxu0 0
      %4280 = vmatpush1.bf16.msra.mxu0 %v1754
      %4281 = vmatprep.subr.bf16.mxu0 0
      %4282 = vmatpush2.bf16.msra.mxu0 %v1769
      %4283 = vmatprep.subr.bf16.mxu0 0
      %4284 = vmatpush2.bf16.msra.mxu0 %v1768
      %4285 = vmatprep.subr.bf16.mxu0 0
      %4286 = vmatpush2.bf16.msra.mxu0 %v1767
      %4287 = vmatprep.subr.bf16.mxu0 0
      %4288 = vmatpush2.bf16.msra.mxu0 %v1766
      %4289 = vmatprep.subr.bf16.mxu0 0
      %4290 = vmatpush2.bf16.msra.mxu0 %v1765
      %4291 = vmatprep.subr.bf16.mxu0 0
      %4292 = vmatpush2.bf16.msra.mxu0 %v1764
      %4293 = vmatprep.subr.bf16.mxu0 0
      %4294 = vmatpush2.bf16.msra.mxu0 %v1763
      %4295 = vmatprep.subr.bf16.mxu0 0
      %4296 = vmatpush2.bf16.msra.mxu0 %v1762
      %4297 = vmatprep.mubr.bf16.mxu0 %v2522
      %4298 = vmatmul.mubr.bf16.gmra.mxu0 %v2324
      %v4299 = vpop.f32.mrf.mxu0
      %v4300 = vadd.f32 0.0, %v4299
      %v4301 = vpop.f32.mrf.mxu0
      %v4302 = vpop.f32.mrf.mxu0
      %v4303 = vadd.f32 0.0, %v4302
      %v4304 = vpop.f32.mrf.mxu0
      %4305 = vmatprep.mubr.bf16.mxu0 %v2523
      %4306 = vmatmul.mubr.bf16.gmra.mxu0 %v2325
      %v4307 = vpop.f32.mrf.mxu0
      %v4308 = vadd.f32 0.0, %v4307
      %v4309 = vpop.f32.mrf.mxu0
      %v4310 = vpop.f32.mrf.mxu0
      %v4311 = vadd.f32 0.0, %v4310
      %v4312 = vpop.f32.mrf.mxu0
      %4313 = vmatprep.mubr.bf16.mxu0 %v2524
      %4314 = vmatmul.mubr.bf16.gmra.mxu0 %v2326
      %v4315 = vpop.f32.mrf.mxu0
      %v4316 = vadd.f32 0.0, %v4315
      %v4317 = vpop.f32.mrf.mxu0
      %v4318 = vpop.f32.mrf.mxu0
      %v4319 = vadd.f32 0.0, %v4318
      %v4320 = vpop.f32.mrf.mxu0
      %4321 = vmatprep.mubr.bf16.mxu0 %v2525
      %4322 = vmatmul.mubr.bf16.gmra.mxu0 %v2327
      %v4323 = vpop.f32.mrf.mxu0
      %v4324 = vadd.f32 0.0, %v4323
      %v4325 = vpop.f32.mrf.mxu0
      %v4326 = vpop.f32.mrf.mxu0
      %v4327 = vadd.f32 0.0, %v4326
      %v4328 = vpop.f32.mrf.mxu0
      %4329 = vdwg.mxu0
      %4330 = vmatprep.subr.bf16.mxu0 0
      %4331 = vmatpush1.bf16.msra.mxu0 %v1922
      %4332 = vmatprep.subr.bf16.mxu0 0
      %4333 = vmatpush1.bf16.msra.mxu0 %v1921
      %4334 = vmatprep.subr.bf16.mxu0 0
      %4335 = vmatpush1.bf16.msra.mxu0 %v1920
      %4336 = vmatprep.subr.bf16.mxu0 0
      %4337 = vmatpush1.bf16.msra.mxu0 %v1919
      %4338 = vmatprep.subr.bf16.mxu0 0
      %4339 = vmatpush1.bf16.msra.mxu0 %v1918
      %4340 = vmatprep.subr.bf16.mxu0 0
      %4341 = vmatpush1.bf16.msra.mxu0 %v1917
      %4342 = vmatprep.subr.bf16.mxu0 0
      %4343 = vmatpush1.bf16.msra.mxu0 %v1916
      %4344 = vmatprep.subr.bf16.mxu0 0
      %4345 = vmatpush1.bf16.msra.mxu0 %v1915
      %4346 = vmatprep.subr.bf16.mxu0 0
      %4347 = vmatpush2.bf16.msra.mxu0 %v1930
      %4348 = vmatprep.subr.bf16.mxu0 0
      %4349 = vmatpush2.bf16.msra.mxu0 %v1929
      %4350 = vmatprep.subr.bf16.mxu0 0
      %4351 = vmatpush2.bf16.msra.mxu0 %v1928
      %4352 = vmatprep.subr.bf16.mxu0 0
      %4353 = vmatpush2.bf16.msra.mxu0 %v1927
      %4354 = vmatprep.subr.bf16.mxu0 0
      %4355 = vmatpush2.bf16.msra.mxu0 %v1926
      %4356 = vmatprep.subr.bf16.mxu0 0
      %4357 = vmatpush2.bf16.msra.mxu0 %v1925
      %4358 = vmatprep.subr.bf16.mxu0 0
      %4359 = vmatpush2.bf16.msra.mxu0 %v1924
      %4360 = vmatprep.subr.bf16.mxu0 0
      %4361 = vmatpush2.bf16.msra.mxu0 %v1923
      %4362 = vmatprep.mubr.bf16.mxu0 %v2308
      %4363 = vmatmul.mubr.bf16.gmra.mxu0 %v1682
      %v4364 = vpop.f32.mrf.mxu0
      %v4365 = vadd.f32 %v4300, %v4364
      %v4366 = vpop.f32.mrf.mxu0
      %v4367 = vpop.f32.mrf.mxu0
      %v4368 = vadd.f32 %v4303, %v4367
      %v4369 = vpop.f32.mrf.mxu0
      %4370 = vmatprep.mubr.bf16.mxu0 %v2309
      %4371 = vmatmul.mubr.bf16.gmra.mxu0 %v1683
      %v4372 = vpop.f32.mrf.mxu0
      %v4373 = vadd.f32 %v4308, %v4372
      %v4374 = vpop.f32.mrf.mxu0
      %v4375 = vpop.f32.mrf.mxu0
      %v4376 = vadd.f32 %v4311, %v4375
      %v4377 = vpop.f32.mrf.mxu0
      %4378 = vmatprep.mubr.bf16.mxu0 %v2310
      %4379 = vmatmul.mubr.bf16.gmra.mxu0 %v1684
      %v4380 = vpop.f32.mrf.mxu0
      %v4381 = vadd.f32 %v4316, %v4380
      %v4382 = vpop.f32.mrf.mxu0
      %v4383 = vpop.f32.mrf.mxu0
      %v4384 = vadd.f32 %v4319, %v4383
      %v4385 = vpop.f32.mrf.mxu0
      %4386 = vmatprep.mubr.bf16.mxu0 %v2311
      %4387 = vmatmul.mubr.bf16.gmra.mxu0 %v1685
      %v4388 = vpop.f32.mrf.mxu0
      %v4389 = vadd.f32 %v4324, %v4388
      %v4390 = vpop.f32.mrf.mxu0
      %v4391 = vpop.f32.mrf.mxu0
      %v4392 = vadd.f32 %v4327, %v4391
      %v4393 = vpop.f32.mrf.mxu0
      %4394 = vdwg.mxu0
      %4395 = vmatprep.subr.bf16.mxu0 0
      %4396 = vmatpush1.bf16.msra.mxu0 %v2403
      %4397 = vmatprep.subr.bf16.mxu0 0
      %4398 = vmatpush1.bf16.msra.mxu0 %v2402
      %4399 = vmatprep.subr.bf16.mxu0 0
      %4400 = vmatpush1.bf16.msra.mxu0 %v2401
      %4401 = vmatprep.subr.bf16.mxu0 0
      %4402 = vmatpush1.bf16.msra.mxu0 %v2400
      %4403 = vmatprep.subr.bf16.mxu0 0
      %4404 = vmatpush1.bf16.msra.mxu0 %v2399
      %4405 = vmatprep.subr.bf16.mxu0 0
      %4406 = vmatpush1.bf16.msra.mxu0 %v2398
      %4407 = vmatprep.subr.bf16.mxu0 0
      %4408 = vmatpush1.bf16.msra.mxu0 %v2397
      %4409 = vmatprep.subr.bf16.mxu0 0
      %4410 = vmatpush1.bf16.msra.mxu0 %v2396
      %4411 = vmatprep.subr.bf16.mxu0 0
      %4412 = vmatpush2.bf16.msra.mxu0 %v2411
      %4413 = vmatprep.subr.bf16.mxu0 0
      %4414 = vmatpush2.bf16.msra.mxu0 %v2410
      %4415 = vmatprep.subr.bf16.mxu0 0
      %4416 = vmatpush2.bf16.msra.mxu0 %v2409
      %4417 = vmatprep.subr.bf16.mxu0 0
      %4418 = vmatpush2.bf16.msra.mxu0 %v2408
      %4419 = vmatprep.subr.bf16.mxu0 0
      %4420 = vmatpush2.bf16.msra.mxu0 %v2407
      %4421 = vmatprep.subr.bf16.mxu0 0
      %4422 = vmatpush2.bf16.msra.mxu0 %v2406
      %4423 = vmatprep.subr.bf16.mxu0 0
      %4424 = vmatpush2.bf16.msra.mxu0 %v2405
      %4425 = vmatprep.subr.bf16.mxu0 0
      %4426 = vmatpush2.bf16.msra.mxu0 %v2404
      %4427 = vmatprep.mubr.bf16.mxu0 %v2726
      %4428 = vmatmul.mubr.bf16.gmra.mxu0 %v2531
      %v4429 = vpop.f32.mrf.mxu0
      %v4430 = vadd.f32 0.0, %v4429
      %v4431 = vpop.f32.mrf.mxu0
      %v4432 = vpop.f32.mrf.mxu0
      %v4433 = vadd.f32 0.0, %v4432
      %v4434 = vpop.f32.mrf.mxu0
      %4435 = vmatprep.mubr.bf16.mxu0 %v2727
      %4436 = vmatmul.mubr.bf16.gmra.mxu0 %v2532
      %v4437 = vpop.f32.mrf.mxu0
      %v4438 = vadd.f32 0.0, %v4437
      %v4439 = vpop.f32.mrf.mxu0
      %v4440 = vpop.f32.mrf.mxu0
      %v4441 = vadd.f32 0.0, %v4440
      %v4442 = vpop.f32.mrf.mxu0
      %4443 = vmatprep.mubr.bf16.mxu0 %v2728
      %4444 = vmatmul.mubr.bf16.gmra.mxu0 %v2533
      %v4445 = vpop.f32.mrf.mxu0
      %v4446 = vadd.f32 0.0, %v4445
      %v4447 = vpop.f32.mrf.mxu0
      %v4448 = vpop.f32.mrf.mxu0
      %v4449 = vadd.f32 0.0, %v4448
      %v4450 = vpop.f32.mrf.mxu0
      %4451 = vmatprep.mubr.bf16.mxu0 %v2729
      %4452 = vmatmul.mubr.bf16.gmra.mxu0 %v2534
      %v4453 = vpop.f32.mrf.mxu0
      %v4454 = vadd.f32 0.0, %v4453
      %v4455 = vpop.f32.mrf.mxu0
      %v4456 = vpop.f32.mrf.mxu0
      %v4457 = vadd.f32 0.0, %v4456
      %v4458 = vpop.f32.mrf.mxu0
      %4459 = vdwg.mxu0
      %v4460 = vadd.f32 %v4365, %v4430
      %v4461 = vadd.f32 %v4368, %v4433
      %v4462 = vadd.f32 %v4373, %v4438
      %v4463 = vadd.f32 %v4376, %v4441
      %v4464 = vadd.f32 %v4381, %v4446
      %v4465 = vadd.f32 %v4384, %v4449
      %v4466 = vadd.f32 %v4389, %v4454
      %v4467 = vadd.f32 %v4392, %v4457
      %v4469 = vunpack.c.l.b16 %v1013
      %v4470 = vunpack.c.h.b16 %v1013
      %v4471 = vpack.c.b16 %v4469, %v4469
      %v4472 = vpack.c.b16 %v4470, %v4470
      %v4474 = vshrl.u32 %v4471, 16
      %v4476 = vrot.slane %v4474, 4
      %v4477 = vshll.u32 %v4471, 16
      %v4479 = vrot.slane %v4477, 5
      %v4480 = vor.u32 %v4476, %v4479
      %v4481 = vrot.slane %v4480, 4
      %v4483 = vshll.u32 %v4472, 16
      %v4485 = vrot.slane %v4483, 5
      %v4486 = vsel %vm1361, %v4481, %v4485
      %v4488 = vunpack.c.l.b16 %v1049
      %v4489 = vpack.c.b16 %v1676, %v1675
      %v4490 = vpack.c.b16 %v1678, %v1677
      %v4491 = vpack.c.b16 %v1680, %v1679
      %v4492 = vpack.c.b16 %v4488, %v1681
      %v4497 = vunpack.c.l.b16 %v4486
      %v4498 = vpack.c.b16 %v2302, %v2301
      %v4499 = vpack.c.b16 %v2304, %v2303
      %v4500 = vpack.c.b16 %v2306, %v2305
      %v4501 = vpack.c.b16 %v4497, %v2307
      %4506 = vmatprep.subr.bf16.mxu0 0
      %4507 = vmatpush1.bf16.msra.mxu0 %v2610
      %4508 = vmatprep.subr.bf16.mxu0 0
      %4509 = vmatpush1.bf16.msra.mxu0 %v2609
      %4510 = vmatprep.subr.bf16.mxu0 0
      %4511 = vmatpush1.bf16.msra.mxu0 %v2608
      %4512 = vmatprep.subr.bf16.mxu0 0
      %4513 = vmatpush1.bf16.msra.mxu0 %v2607
      %4514 = vmatprep.subr.bf16.mxu0 0
      %4515 = vmatpush1.bf16.msra.mxu0 %v2606
      %4516 = vmatprep.subr.bf16.mxu0 0
      %4517 = vmatpush1.bf16.msra.mxu0 %v2605
      %4518 = vmatprep.subr.bf16.mxu0 0
      %4519 = vmatpush1.bf16.msra.mxu0 %v2604
      %4520 = vmatprep.subr.bf16.mxu0 0
      %4521 = vmatpush1.bf16.msra.mxu0 %v2603
      %4522 = vmatprep.subr.bf16.mxu0 0
      %4523 = vmatpush2.bf16.msra.mxu0 %v2618
      %4524 = vmatprep.subr.bf16.mxu0 0
      %4525 = vmatpush2.bf16.msra.mxu0 %v2617
      %4526 = vmatprep.subr.bf16.mxu0 0
      %4527 = vmatpush2.bf16.msra.mxu0 %v2616
      %4528 = vmatprep.subr.bf16.mxu0 0
      %4529 = vmatpush2.bf16.msra.mxu0 %v2615
      %4530 = vmatprep.subr.bf16.mxu0 0
      %4531 = vmatpush2.bf16.msra.mxu0 %v2614
      %4532 = vmatprep.subr.bf16.mxu0 0
      %4533 = vmatpush2.bf16.msra.mxu0 %v2613
      %4534 = vmatprep.subr.bf16.mxu0 0
      %4535 = vmatpush2.bf16.msra.mxu0 %v2612
      %4536 = vmatprep.subr.bf16.mxu0 0
      %4537 = vmatpush2.bf16.msra.mxu0 %v2611
      %4538 = vmatprep.mubr.bf16.mxu0 %v4498
      %4539 = vmatmul.mubr.bf16.gmra.mxu0 %v4489
      %v4540 = vpop.f32.mrf.mxu0
      %v4541 = vadd.f32 0.0, %v4540
      %v4542 = vpop.f32.mrf.mxu0
      %v4543 = vpop.f32.mrf.mxu0
      %v4544 = vadd.f32 0.0, %v4543
      %v4545 = vpop.f32.mrf.mxu0
      %4546 = vmatprep.mubr.bf16.mxu0 %v4499
      %4547 = vmatmul.mubr.bf16.gmra.mxu0 %v4490
      %v4548 = vpop.f32.mrf.mxu0
      %v4549 = vadd.f32 0.0, %v4548
      %v4550 = vpop.f32.mrf.mxu0
      %v4551 = vpop.f32.mrf.mxu0
      %v4552 = vadd.f32 0.0, %v4551
      %v4553 = vpop.f32.mrf.mxu0
      %4554 = vmatprep.mubr.bf16.mxu0 %v4500
      %4555 = vmatmul.mubr.bf16.gmra.mxu0 %v4491
      %v4556 = vpop.f32.mrf.mxu0
      %v4557 = vadd.f32 0.0, %v4556
      %v4558 = vpop.f32.mrf.mxu0
      %v4559 = vpop.f32.mrf.mxu0
      %v4560 = vadd.f32 0.0, %v4559
      %v4561 = vpop.f32.mrf.mxu0
      %4562 = vmatprep.mubr.bf16.mxu0 %v4501
      %4563 = vmatmul.mubr.bf16.gmra.mxu0 %v4492
      %v4564 = vpop.f32.mrf.mxu0
      %v4565 = vadd.f32 0.0, %v4564
      %v4566 = vpop.f32.mrf.mxu0
      %v4567 = vpop.f32.mrf.mxu0
      %v4568 = vadd.f32 0.0, %v4567
      %v4569 = vpop.f32.mrf.mxu0
      %4570 = vdwg.mxu0
      %v4571 = vadd.f32 %v4460, %v4541
      %v4572 = vadd.f32 %v4461, %v4544
      %v4573 = vadd.f32 %v4462, %v4549
      %v4574 = vadd.f32 %v4463, %v4552
      %v4575 = vadd.f32 %v4464, %v4557
      %v4576 = vadd.f32 %v4465, %v4560
      %v4577 = vadd.f32 %v4466, %v4565
      %v4578 = vadd.f32 %v4467, %v4568
      %v4579 = vunpack.c.h.b16 %v1049
      %v4580 = vpack.c.b16 %v4488, %v4488
      %v4581 = vpack.c.b16 %v4579, %v4579
      %v4583 = vshrl.u32 %v4580, 16
      %v4585 = vrot.slane %v4583, 4
      %v4586 = vshll.u32 %v4580, 16
      %v4588 = vrot.slane %v4586, 5
      %v4589 = vor.u32 %v4585, %v4588
      %v4590 = vrot.slane %v4589, 4
      %v4592 = vshll.u32 %v4581, 16
      %v4594 = vrot.slane %v4592, 5
      %v4595 = vsel %vm1361, %v4590, %v4594
      %v4596 = vunpack.c.l.b16 %v4595
      %v4597 = vpack.c.b16 %v2318, %v2317
      %v4598 = vpack.c.b16 %v2320, %v2319
      %v4599 = vpack.c.b16 %v2322, %v2321
      %v4600 = vpack.c.b16 %v4596, %v2323
      %4605 = vmatprep.subr.bf16.mxu0 0
      %4606 = vmatpush1.bf16.msra.mxu0 %v2805
      %4607 = vmatprep.subr.bf16.mxu0 0
      %4608 = vmatpush1.bf16.msra.mxu0 %v2804
      %4609 = vmatprep.subr.bf16.mxu0 0
      %4610 = vmatpush1.bf16.msra.mxu0 %v2803
      %4611 = vmatprep.subr.bf16.mxu0 0
      %4612 = vmatpush1.bf16.msra.mxu0 %v2802
      %4613 = vmatprep.subr.bf16.mxu0 0
      %4614 = vmatpush1.bf16.msra.mxu0 %v2801
      %4615 = vmatprep.subr.bf16.mxu0 0
      %4616 = vmatpush1.bf16.msra.mxu0 %v2800
      %4617 = vmatprep.subr.bf16.mxu0 0
      %4618 = vmatpush1.bf16.msra.mxu0 %v2799
      %4619 = vmatprep.subr.bf16.mxu0 0
      %4620 = vmatpush1.bf16.msra.mxu0 %v2798
      %4621 = vmatprep.subr.bf16.mxu0 0
      %4622 = vmatpush2.bf16.msra.mxu0 %v2813
      %4623 = vmatprep.subr.bf16.mxu0 0
      %4624 = vmatpush2.bf16.msra.mxu0 %v2812
      %4625 = vmatprep.subr.bf16.mxu0 0
      %4626 = vmatpush2.bf16.msra.mxu0 %v2811
      %4627 = vmatprep.subr.bf16.mxu0 0
      %4628 = vmatpush2.bf16.msra.mxu0 %v2810
      %4629 = vmatprep.subr.bf16.mxu0 0
      %4630 = vmatpush2.bf16.msra.mxu0 %v2809
      %4631 = vmatprep.subr.bf16.mxu0 0
      %4632 = vmatpush2.bf16.msra.mxu0 %v2808
      %4633 = vmatprep.subr.bf16.mxu0 0
      %4634 = vmatpush2.bf16.msra.mxu0 %v2807
      %4635 = vmatprep.subr.bf16.mxu0 0
      %4636 = vmatpush2.bf16.msra.mxu0 %v2806
      %4637 = vmatprep.mubr.bf16.mxu0 %v4597
      %4638 = vmatmul.mubr.bf16.gmra.mxu0 %v4597
      %v4639 = vpop.f32.mrf.mxu0
      %v4640 = vadd.f32 0.0, %v4639
      %v4641 = vpop.f32.mrf.mxu0
      %v4642 = vpop.f32.mrf.mxu0
      %v4643 = vadd.f32 0.0, %v4642
      %v4644 = vpop.f32.mrf.mxu0
      %4645 = vmatprep.mubr.bf16.mxu0 %v4598
      %4646 = vmatmul.mubr.bf16.gmra.mxu0 %v4598
      %v4647 = vpop.f32.mrf.mxu0
      %v4648 = vadd.f32 0.0, %v4647
      %v4649 = vpop.f32.mrf.mxu0
      %v4650 = vpop.f32.mrf.mxu0
      %v4651 = vadd.f32 0.0, %v4650
      %v4652 = vpop.f32.mrf.mxu0
      %4653 = vmatprep.mubr.bf16.mxu0 %v4599
      %4654 = vmatmul.mubr.bf16.gmra.mxu0 %v4599
      %v4655 = vpop.f32.mrf.mxu0
      %v4656 = vadd.f32 0.0, %v4655
      %v4657 = vpop.f32.mrf.mxu0
      %v4658 = vpop.f32.mrf.mxu0
      %v4659 = vadd.f32 0.0, %v4658
      %v4660 = vpop.f32.mrf.mxu0
      %4661 = vmatprep.mubr.bf16.mxu0 %v4600
      %4662 = vmatmul.mubr.bf16.gmra.mxu0 %v4600
      %v4663 = vpop.f32.mrf.mxu0
      %v4664 = vadd.f32 0.0, %v4663
      %v4665 = vpop.f32.mrf.mxu0
      %v4666 = vpop.f32.mrf.mxu0
      %v4667 = vadd.f32 0.0, %v4666
      %v4668 = vpop.f32.mrf.mxu0
      %4669 = vdwg.mxu0
      %v4670 = vadd.f32 %v4571, %v4640
      %v4671 = vadd.f32 %v4572, %v4643
      %v4672 = vadd.f32 %v4573, %v4648
      %v4673 = vadd.f32 %v4574, %v4651
      %v4674 = vadd.f32 %v4575, %v4656
      %v4675 = vadd.f32 %v4576, %v4659
      %v4676 = vadd.f32 %v4577, %v4664
      %v4677 = vadd.f32 %v4578, %v4667
      %v4678 = vadd.f32 %v4670, %v2907
      %v4679 = vadd.f32 %v4671, %v2907
      %v4680 = vadd.f32 %v4672, %v2907
      %v4681 = vadd.f32 %v4673, %v2907
      %v4682 = vadd.f32 %v4674, %v2907
      %v4683 = vadd.f32 %v4675, %v2907
      %v4684 = vadd.f32 %v4676, %v2907
      %v4685 = vadd.f32 %v4677, %v2907
      %v4686 = vmax.f32 %v4678, 0.0
      %v4687 = vmax.f32 %v4679, 0.0
      %v4688 = vmax.f32 %v4680, 0.0
      %v4689 = vmax.f32 %v4681, 0.0
      %v4690 = vmax.f32 %v4682, 0.0
      %v4691 = vmax.f32 %v4683, 0.0
      %v4692 = vmax.f32 %v4684, 0.0
      %v4693 = vmax.f32 %v4685, 0.0
      %v4694 = vpack.c.bf16 %v4687, %v4686
      %v4695 = vpack.c.bf16 %v4689, %v4688
      %v4696 = vpack.c.bf16 %v4691, %v4690
      %v4697 = vpack.c.bf16 %v4693, %v4692
      %4698 = vset.pattern.permute.xlu0 10
      %4699 = vperm.xlu0 %4698, %v1309
      %v4700 = vpop.permute.xlu0 %4699
      %4702 = vset.pattern.permute.xlu0 10
      %4703 = vperm.xlu0 %4702, %v1310
      %v4704 = vpop.permute.xlu0 %4703
      %4706 = vset.pattern.permute.xlu0 10
      %4707 = vperm.xlu0 %4706, %v1311
      %v4708 = vpop.permute.xlu0 %4707
      %4710 = vset.pattern.permute.xlu0 10
      %4711 = vperm.xlu0 %4710, %v1312
      %v4712 = vpop.permute.xlu0 %4711
      %4714 = vset.pattern.permute.xlu0 10
      %4715 = vperm.xlu0 %4714, %v1313
      %v4716 = vpop.permute.xlu0 %4715
      %4718 = vset.pattern.permute.xlu0 10
      %4719 = vperm.xlu0 %4718, %v1314
      %v4720 = vpop.permute.xlu0 %4719
      %4722 = vset.pattern.permute.xlu0 10
      %4723 = vperm.xlu0 %4722, %v1315
      %v4724 = vpop.permute.xlu0 %4723
      %4726 = vset.pattern.permute.xlu0 10
      %4727 = vperm.xlu0 %4726, %v1316
      %v4728 = vpop.permute.xlu0 %4727
      %v4730 = vmul.f32 %v4700, %v2972
      %v4731 = vmul.f32 %v4704, %v2972
      %v4732 = vmul.f32 %v4708, %v2972
      %v4733 = vmul.f32 %v4712, %v2972
      %v4734 = vmul.f32 %v4716, %v2972
      %v4735 = vmul.f32 %v4720, %v2972
      %v4736 = vmul.f32 %v4724, %v2972
      %v4737 = vmul.f32 %v4728, %v2972
      %4738 = vmatprep.subr.bf16.mxu0 0
      %4739 = vmatpush1.bf16.msra.mxu0 %v3020
      %4740 = vmatprep.subr.bf16.mxu0 0
      %4741 = vmatpush1.bf16.msra.mxu0 %v3019
      %4742 = vmatprep.subr.bf16.mxu0 0
      %4743 = vmatpush1.bf16.msra.mxu0 %v3018
      %4744 = vmatprep.subr.bf16.mxu0 0
      %4745 = vmatpush1.bf16.msra.mxu0 %v3017
      %4746 = vmatprep.subr.bf16.mxu0 0
      %4747 = vmatpush1.bf16.msra.mxu0 %v3016
      %4748 = vmatprep.subr.bf16.mxu0 0
      %4749 = vmatpush1.bf16.msra.mxu0 %v3015
      %4750 = vmatprep.subr.bf16.mxu0 0
      %4751 = vmatpush1.bf16.msra.mxu0 %v3014
      %4752 = vmatprep.subr.bf16.mxu0 0
      %4753 = vmatpush1.bf16.msra.mxu0 %v3013
      %4754 = vmatprep.subr.bf16.mxu0 0
      %4755 = vmatpush2.bf16.msra.mxu0 0
      %4756 = vmatprep.subr.bf16.mxu0 0
      %4757 = vmatpush2.bf16.msra.mxu0 0
      %4758 = vmatprep.subr.bf16.mxu0 0
      %4759 = vmatpush2.bf16.msra.mxu0 0
      %4760 = vmatprep.subr.bf16.mxu0 0
      %4761 = vmatpush2.bf16.msra.mxu0 0
      %4762 = vmatprep.subr.bf16.mxu0 0
      %4763 = vmatpush2.bf16.msra.mxu0 0
      %4764 = vmatprep.subr.bf16.mxu0 0
      %4765 = vmatpush2.bf16.msra.mxu0 0
      %4766 = vmatprep.subr.bf16.mxu0 0
      %4767 = vmatpush2.bf16.msra.mxu0 0
      %4768 = vmatprep.subr.bf16.mxu0 0
      %4769 = vmatpush2.bf16.msra.mxu0 0
      %4770 = vmatprep.mubr.bf16.mxu0 0
      %4771 = vmatmul.mubr.bf16.gmra.mxu0 %v4694
      %v4772 = vpop.f32.mrf.mxu0
      %v4773 = vadd.f32 %v4730, %v4772
      %v4774 = vpop.f32.mrf.mxu0
      %v4775 = vpop.f32.mrf.mxu0
      %v4776 = vadd.f32 %v4731, %v4775
      %v4777 = vpop.f32.mrf.mxu0
      %4778 = vmatprep.mubr.bf16.mxu0 0
      %4779 = vmatmul.mubr.bf16.gmra.mxu0 %v4695
      %v4780 = vpop.f32.mrf.mxu0
      %v4781 = vadd.f32 %v4732, %v4780
      %v4782 = vpop.f32.mrf.mxu0
      %v4783 = vpop.f32.mrf.mxu0
      %v4784 = vadd.f32 %v4733, %v4783
      %v4785 = vpop.f32.mrf.mxu0
      %4786 = vmatprep.mubr.bf16.mxu0 0
      %4787 = vmatmul.mubr.bf16.gmra.mxu0 %v4696
      %v4788 = vpop.f32.mrf.mxu0
      %v4789 = vadd.f32 %v4734, %v4788
      %v4790 = vpop.f32.mrf.mxu0
      %v4791 = vpop.f32.mrf.mxu0
      %v4792 = vadd.f32 %v4735, %v4791
      %v4793 = vpop.f32.mrf.mxu0
      %4794 = vmatprep.mubr.bf16.mxu0 0
      %4795 = vmatmul.mubr.bf16.gmra.mxu0 %v4697
      %v4796 = vpop.f32.mrf.mxu0
      %v4797 = vadd.f32 %v4736, %v4796
      %v4798 = vpop.f32.mrf.mxu0
      %v4799 = vpop.f32.mrf.mxu0
      %v4800 = vadd.f32 %v4737, %v4799
      %v4801 = vpop.f32.mrf.mxu0
      %4802 = vdwg.mxu0
      %4803 = vset.pattern.permute.xlu0 11
      %4804 = vperm.xlu0 %4803, %v1309
      %v4805 = vpop.permute.xlu0 %4804
      %4807 = vset.pattern.permute.xlu0 11
      %4808 = vperm.xlu0 %4807, %v1310
      %v4809 = vpop.permute.xlu0 %4808
      %4811 = vset.pattern.permute.xlu0 11
      %4812 = vperm.xlu0 %4811, %v1311
      %v4813 = vpop.permute.xlu0 %4812
      %4815 = vset.pattern.permute.xlu0 11
      %4816 = vperm.xlu0 %4815, %v1312
      %v4817 = vpop.permute.xlu0 %4816
      %4819 = vset.pattern.permute.xlu0 11
      %4820 = vperm.xlu0 %4819, %v1313
      %v4821 = vpop.permute.xlu0 %4820
      %4823 = vset.pattern.permute.xlu0 11
      %4824 = vperm.xlu0 %4823, %v1314
      %v4825 = vpop.permute.xlu0 %4824
      %4827 = vset.pattern.permute.xlu0 11
      %4828 = vperm.xlu0 %4827, %v1315
      %v4829 = vpop.permute.xlu0 %4828
      %4831 = vset.pattern.permute.xlu0 11
      %4832 = vperm.xlu0 %4831, %v1316
      %v4833 = vpop.permute.xlu0 %4832
      %v4835 = vmul.f32 %v4805, %v3129
      %v4836 = vmul.f32 %v4809, %v3129
      %v4837 = vmul.f32 %v4813, %v3129
      %v4838 = vmul.f32 %v4817, %v3129
      %v4839 = vmul.f32 %v4821, %v3129
      %v4840 = vmul.f32 %v4825, %v3129
      %v4841 = vmul.f32 %v4829, %v3129
      %v4842 = vmul.f32 %v4833, %v3129
      %v4843 = vadd.f32 %v4773, %v4835
      %v4844 = vadd.f32 %v4776, %v4836
      %v4845 = vadd.f32 %v4781, %v4837
      %v4846 = vadd.f32 %v4784, %v4838
      %v4847 = vadd.f32 %v4789, %v4839
      %v4848 = vadd.f32 %v4792, %v4840
      %v4849 = vadd.f32 %v4797, %v4841
      %v4850 = vadd.f32 %v4800, %v4842
      %4851 = vset.pattern.permute.xlu0 12
      %4852 = vperm.xlu0 %4851, %v1309
      %v4853 = vpop.permute.xlu0 %4852
      %4855 = vset.pattern.permute.xlu0 12
      %4856 = vperm.xlu0 %4855, %v1310
      %v4857 = vpop.permute.xlu0 %4856
      %4859 = vset.pattern.permute.xlu0 12
      %4860 = vperm.xlu0 %4859, %v1311
      %v4861 = vpop.permute.xlu0 %4860
      %4863 = vset.pattern.permute.xlu0 12
      %4864 = vperm.xlu0 %4863, %v1312
      %v4865 = vpop.permute.xlu0 %4864
      %4867 = vset.pattern.permute.xlu0 12
      %4868 = vperm.xlu0 %4867, %v1313
      %v4869 = vpop.permute.xlu0 %4868
      %4871 = vset.pattern.permute.xlu0 12
      %4872 = vperm.xlu0 %4871, %v1314
      %v4873 = vpop.permute.xlu0 %4872
      %4875 = vset.pattern.permute.xlu0 12
      %4876 = vperm.xlu0 %4875, %v1315
      %v4877 = vpop.permute.xlu0 %4876
      %4879 = vset.pattern.permute.xlu0 12
      %4880 = vperm.xlu0 %4879, %v1316
      %v4881 = vpop.permute.xlu0 %4880
      %v4883 = vmul.f32 %v4853, %v3181
      %v4884 = vmul.f32 %v4857, %v3181
      %v4885 = vmul.f32 %v4861, %v3181
      %v4886 = vmul.f32 %v4865, %v3181
      %v4887 = vmul.f32 %v4869, %v3181
      %v4888 = vmul.f32 %v4873, %v3181
      %v4889 = vmul.f32 %v4877, %v3181
      %v4890 = vmul.f32 %v4881, %v3181
      %v4891 = vadd.f32 %v4843, %v4883
      %v4892 = vadd.f32 %v4844, %v4884
      %v4893 = vadd.f32 %v4845, %v4885
      %v4894 = vadd.f32 %v4846, %v4886
      %v4895 = vadd.f32 %v4847, %v4887
      %v4896 = vadd.f32 %v4848, %v4888
      %v4897 = vadd.f32 %v4849, %v4889
      %v4898 = vadd.f32 %v4850, %v4890
      %4899 = vset.pattern.permute.xlu0 13
      %4900 = vperm.xlu0 %4899, %v1309
      %v4901 = vpop.permute.xlu0 %4900
      %4903 = vset.pattern.permute.xlu0 13
      %4904 = vperm.xlu0 %4903, %v1310
      %v4905 = vpop.permute.xlu0 %4904
      %4907 = vset.pattern.permute.xlu0 13
      %4908 = vperm.xlu0 %4907, %v1311
      %v4909 = vpop.permute.xlu0 %4908
      %4911 = vset.pattern.permute.xlu0 13
      %4912 = vperm.xlu0 %4911, %v1312
      %v4913 = vpop.permute.xlu0 %4912
      %4915 = vset.pattern.permute.xlu0 13
      %4916 = vperm.xlu0 %4915, %v1313
      %v4917 = vpop.permute.xlu0 %4916
      %4919 = vset.pattern.permute.xlu0 13
      %4920 = vperm.xlu0 %4919, %v1314
      %v4921 = vpop.permute.xlu0 %4920
      %4923 = vset.pattern.permute.xlu0 13
      %4924 = vperm.xlu0 %4923, %v1315
      %v4925 = vpop.permute.xlu0 %4924
      %4927 = vset.pattern.permute.xlu0 13
      %4928 = vperm.xlu0 %4927, %v1316
      %v4929 = vpop.permute.xlu0 %4928
      %v4931 = vmul.f32 %v4901, %v3233
      %v4932 = vmul.f32 %v4905, %v3233
      %v4933 = vmul.f32 %v4909, %v3233
      %v4934 = vmul.f32 %v4913, %v3233
      %v4935 = vmul.f32 %v4917, %v3233
      %v4936 = vmul.f32 %v4921, %v3233
      %v4937 = vmul.f32 %v4925, %v3233
      %v4938 = vmul.f32 %v4929, %v3233
      %v4939 = vadd.f32 %v4891, %v4931
      %v4940 = vadd.f32 %v4892, %v4932
      %v4941 = vadd.f32 %v4893, %v4933
      %v4942 = vadd.f32 %v4894, %v4934
      %v4943 = vadd.f32 %v4895, %v4935
      %v4944 = vadd.f32 %v4896, %v4936
      %v4945 = vadd.f32 %v4897, %v4937
      %v4946 = vadd.f32 %v4898, %v4938
      %4947 = vset.pattern.permute.xlu0 14
      %4948 = vperm.xlu0 %4947, %v1309
      %v4949 = vpop.permute.xlu0 %4948
      %4951 = vset.pattern.permute.xlu0 14
      %4952 = vperm.xlu0 %4951, %v1310
      %v4953 = vpop.permute.xlu0 %4952
      %4955 = vset.pattern.permute.xlu0 14
      %4956 = vperm.xlu0 %4955, %v1311
      %v4957 = vpop.permute.xlu0 %4956
      %4959 = vset.pattern.permute.xlu0 14
      %4960 = vperm.xlu0 %4959, %v1312
      %v4961 = vpop.permute.xlu0 %4960
      %4963 = vset.pattern.permute.xlu0 14
      %4964 = vperm.xlu0 %4963, %v1313
      %v4965 = vpop.permute.xlu0 %4964
      %4967 = vset.pattern.permute.xlu0 14
      %4968 = vperm.xlu0 %4967, %v1314
      %v4969 = vpop.permute.xlu0 %4968
      %4971 = vset.pattern.permute.xlu0 14
      %4972 = vperm.xlu0 %4971, %v1315
      %v4973 = vpop.permute.xlu0 %4972
      %4975 = vset.pattern.permute.xlu0 14
      %4976 = vperm.xlu0 %4975, %v1316
      %v4977 = vpop.permute.xlu0 %4976
      %v4979 = vmul.f32 %v4949, %v3285
      %v4980 = vmul.f32 %v4953, %v3285
      %v4981 = vmul.f32 %v4957, %v3285
      %v4982 = vmul.f32 %v4961, %v3285
      %v4983 = vmul.f32 %v4965, %v3285
      %v4984 = vmul.f32 %v4969, %v3285
      %v4985 = vmul.f32 %v4973, %v3285
      %v4986 = vmul.f32 %v4977, %v3285
      %v4987 = vadd.f32 %v4939, %v4979
      %v4988 = vadd.f32 %v4940, %v4980
      %v4989 = vadd.f32 %v4941, %v4981
      %v4990 = vadd.f32 %v4942, %v4982
      %v4991 = vadd.f32 %v4943, %v4983
      %v4992 = vadd.f32 %v4944, %v4984
      %v4993 = vadd.f32 %v4945, %v4985
      %v4994 = vadd.f32 %v4946, %v4986
      %v4995 = vadd.f32 %v4987, %v3306
      %v4996 = vadd.f32 %v4988, %v3306
      %v4997 = vadd.f32 %v4989, %v3306
      %v4998 = vadd.f32 %v4990, %v3306
      %v4999 = vadd.f32 %v4991, %v3306
      %v5000 = vadd.f32 %v4992, %v3306
      %v5001 = vadd.f32 %v4993, %v3306
      %v5002 = vadd.f32 %v4994, %v3306
      %v5003 = vmax.f32 %v4995, 0.0
      %v5004 = vmax.f32 %v4996, 0.0
      %v5005 = vmax.f32 %v4997, 0.0
      %v5006 = vmax.f32 %v4998, 0.0
      %v5007 = vmax.f32 %v4999, 0.0
      %v5008 = vmax.f32 %v5000, 0.0
      %v5009 = vmax.f32 %v5001, 0.0
      %v5010 = vmax.f32 %v5002, 0.0
      %v5011 = vmin.f32 %v5003, 1.0
      %v5012 = vmin.f32 %v5004, 1.0
      %v5013 = vmin.f32 %v5005, 1.0
      %v5014 = vmin.f32 %v5006, 1.0
      %v5015 = vmin.f32 %v5007, 1.0
      %v5016 = vmin.f32 %v5008, 1.0
      %v5017 = vmin.f32 %v5009, 1.0
      %v5018 = vmin.f32 %v5010, 1.0
      %v5019 = vxor.u32 %v4995, 2147483648
      %v5020 = vxor.u32 %v4996, 2147483648
      %v5021 = vxor.u32 %v4997, 2147483648
      %v5022 = vxor.u32 %v4998, 2147483648
      %v5023 = vxor.u32 %v4999, 2147483648
      %v5024 = vxor.u32 %v5000, 2147483648
      %v5025 = vxor.u32 %v5001, 2147483648
      %v5026 = vxor.u32 %v5002, 2147483648
      %v5027 = vmul.f32 %v5019, 1.442695
      %v5028 = vpow.pop %v5027
      %v5029 = vmul.f32 %v5020, 1.442695
      %v5030 = vpow.pop %v5029
      %v5031 = vmul.f32 %v5021, 1.442695
      %v5032 = vpow.pop %v5031
      %v5033 = vmul.f32 %v5022, 1.442695
      %v5034 = vpow.pop %v5033
      %v5035 = vmul.f32 %v5023, 1.442695
      %v5036 = vpow.pop %v5035
      %v5037 = vmul.f32 %v5024, 1.442695
      %v5038 = vpow.pop %v5037
      %v5039 = vmul.f32 %v5025, 1.442695
      %v5040 = vpow.pop %v5039
      %v5041 = vmul.f32 %v5026, 1.442695
      %v5042 = vpow.pop %v5041
      %v5043 = vadd.f32 %v5028, 1.0
      %v5044 = vadd.f32 %v5030, 1.0
      %v5045 = vadd.f32 %v5032, 1.0
      %v5046 = vadd.f32 %v5034, 1.0
      %v5047 = vadd.f32 %v5036, 1.0
      %v5048 = vadd.f32 %v5038, 1.0
      %v5049 = vadd.f32 %v5040, 1.0
      %v5050 = vadd.f32 %v5042, 1.0
      %v5051 = vrcp.pop %v5043
      %v5052 = vmul.f32 1.0, %v5051
      %v5053 = vrcp.pop %v5044
      %v5054 = vmul.f32 1.0, %v5053
      %v5055 = vrcp.pop %v5045
      %v5056 = vmul.f32 1.0, %v5055
      %v5057 = vrcp.pop %v5046
      %v5058 = vmul.f32 1.0, %v5057
      %v5059 = vrcp.pop %v5047
      %v5060 = vmul.f32 1.0, %v5059
      %v5061 = vrcp.pop %v5048
      %v5062 = vmul.f32 1.0, %v5061
      %v5063 = vrcp.pop %v5049
      %v5064 = vmul.f32 1.0, %v5063
      %v5065 = vrcp.pop %v5050
      %v5066 = vmul.f32 1.0, %v5065
      %v5067 = vsel %vm3316, %v5011, %v5052
      %v5068 = vsel %vm3316, %v5012, %v5054
      %v5069 = vsel %vm3316, %v5013, %v5056
      %v5070 = vsel %vm3316, %v5014, %v5058
      %v5071 = vsel %vm3316, %v5015, %v5060
      %v5072 = vsel %vm3316, %v5016, %v5062
      %v5073 = vsel %vm3316, %v5017, %v5064
      %v5074 = vsel %vm3316, %v5018, %v5066
      %s5075 = scalar_lea.vmem %s759, 128
      %5076 = vst.msk [vmem:[%s5075] sm:$0xff] %vm3389, %v5067
      %5077 = vst.msk [vmem:[%s5075 + $0x8] sm:$0xff] %vm3389, %v5068
      %5078 = vst.msk [vmem:[%s5075 + $0x10] sm:$0xff] %vm3389, %v5069
      %5079 = vst.msk [vmem:[%s5075 + $0x18] sm:$0xff] %vm3389, %v5070
      %5080 = vst.msk [vmem:[%s5075 + $0x20] sm:$0xff] %vm3389, %v5071
      %5081 = vst.msk [vmem:[%s5075 + $0x28] sm:$0xff] %vm3389, %v5072
      %5082 = vst.msk [vmem:[%s5075 + $0x30] sm:$0xff] %vm3389, %v5073
      %5083 = vst.msk [vmem:[%s5075 + $0x38] sm:$0xff] %vm3389, %v5074
      %5084 = vmatprep.subr.bf16.mxu0 0
      %5085 = vmatpush1.bf16.msra.mxu0 %v1761
      %5086 = vmatprep.subr.bf16.mxu0 0
      %5087 = vmatpush1.bf16.msra.mxu0 %v1760
      %5088 = vmatprep.subr.bf16.mxu0 0
      %5089 = vmatpush1.bf16.msra.mxu0 %v1759
      %5090 = vmatprep.subr.bf16.mxu0 0
      %5091 = vmatpush1.bf16.msra.mxu0 %v1758
      %5092 = vmatprep.subr.bf16.mxu0 0
      %5093 = vmatpush1.bf16.msra.mxu0 %v1757
      %5094 = vmatprep.subr.bf16.mxu0 0
      %5095 = vmatpush1.bf16.msra.mxu0 %v1756
      %5096 = vmatprep.subr.bf16.mxu0 0
      %5097 = vmatpush1.bf16.msra.mxu0 %v1755
      %5098 = vmatprep.subr.bf16.mxu0 0
      %5099 = vmatpush1.bf16.msra.mxu0 %v1754
      %5100 = vmatprep.subr.bf16.mxu0 0
      %5101 = vmatpush2.bf16.msra.mxu0 %v1769
      %5102 = vmatprep.subr.bf16.mxu0 0
      %5103 = vmatpush2.bf16.msra.mxu0 %v1768
      %5104 = vmatprep.subr.bf16.mxu0 0
      %5105 = vmatpush2.bf16.msra.mxu0 %v1767
      %5106 = vmatprep.subr.bf16.mxu0 0
      %5107 = vmatpush2.bf16.msra.mxu0 %v1766
      %5108 = vmatprep.subr.bf16.mxu0 0
      %5109 = vmatpush2.bf16.msra.mxu0 %v1765
      %5110 = vmatprep.subr.bf16.mxu0 0
      %5111 = vmatpush2.bf16.msra.mxu0 %v1764
      %5112 = vmatprep.subr.bf16.mxu0 0
      %5113 = vmatpush2.bf16.msra.mxu0 %v1763
      %5114 = vmatprep.subr.bf16.mxu0 0
      %5115 = vmatpush2.bf16.msra.mxu0 %v1762
      %5116 = vmatprep.mubr.bf16.mxu0 %v2531
      %5117 = vmatmul.mubr.bf16.gmra.mxu0 %v3619
      %v5118 = vpop.f32.mrf.mxu0
      %v5119 = vadd.f32 0.0, %v5118
      %v5120 = vpop.f32.mrf.mxu0
      %v5121 = vpop.f32.mrf.mxu0
      %v5122 = vadd.f32 0.0, %v5121
      %v5123 = vpop.f32.mrf.mxu0
      %5124 = vmatprep.mubr.bf16.mxu0 %v2532
      %5125 = vmatmul.mubr.bf16.gmra.mxu0 %v3620
      %v5126 = vpop.f32.mrf.mxu0
      %v5127 = vadd.f32 0.0, %v5126
      %v5128 = vpop.f32.mrf.mxu0
      %v5129 = vpop.f32.mrf.mxu0
      %v5130 = vadd.f32 0.0, %v5129
      %v5131 = vpop.f32.mrf.mxu0
      %5132 = vmatprep.mubr.bf16.mxu0 %v2533
      %5133 = vmatmul.mubr.bf16.gmra.mxu0 %v3621
      %v5134 = vpop.f32.mrf.mxu0
      %v5135 = vadd.f32 0.0, %v5134
      %v5136 = vpop.f32.mrf.mxu0
      %v5137 = vpop.f32.mrf.mxu0
      %v5138 = vadd.f32 0.0, %v5137
      %v5139 = vpop.f32.mrf.mxu0
      %5140 = vmatprep.mubr.bf16.mxu0 %v2534
      %5141 = vmatmul.mubr.bf16.gmra.mxu0 %v3622
      %v5142 = vpop.f32.mrf.mxu0
      %v5143 = vadd.f32 0.0, %v5142
      %v5144 = vpop.f32.mrf.mxu0
      %v5145 = vpop.f32.mrf.mxu0
      %v5146 = vadd.f32 0.0, %v5145
      %v5147 = vpop.f32.mrf.mxu0
      %5148 = vdwg.mxu0
      %5149 = vmatprep.subr.bf16.mxu0 0
      %5150 = vmatpush1.bf16.msra.mxu0 %v1922
      %5151 = vmatprep.subr.bf16.mxu0 0
      %5152 = vmatpush1.bf16.msra.mxu0 %v1921
      %5153 = vmatprep.subr.bf16.mxu0 0
      %5154 = vmatpush1.bf16.msra.mxu0 %v1920
      %5155 = vmatprep.subr.bf16.mxu0 0
      %5156 = vmatpush1.bf16.msra.mxu0 %v1919
      %5157 = vmatprep.subr.bf16.mxu0 0
      %5158 = vmatpush1.bf16.msra.mxu0 %v1918
      %5159 = vmatprep.subr.bf16.mxu0 0
      %5160 = vmatpush1.bf16.msra.mxu0 %v1917
      %5161 = vmatprep.subr.bf16.mxu0 0
      %5162 = vmatpush1.bf16.msra.mxu0 %v1916
      %5163 = vmatprep.subr.bf16.mxu0 0
      %5164 = vmatpush1.bf16.msra.mxu0 %v1915
      %5165 = vmatprep.subr.bf16.mxu0 0
      %5166 = vmatpush2.bf16.msra.mxu0 %v1930
      %5167 = vmatprep.subr.bf16.mxu0 0
      %5168 = vmatpush2.bf16.msra.mxu0 %v1929
      %5169 = vmatprep.subr.bf16.mxu0 0
      %5170 = vmatpush2.bf16.msra.mxu0 %v1928
      %5171 = vmatprep.subr.bf16.mxu0 0
      %5172 = vmatpush2.bf16.msra.mxu0 %v1927
      %5173 = vmatprep.subr.bf16.mxu0 0
      %5174 = vmatpush2.bf16.msra.mxu0 %v1926
      %5175 = vmatprep.subr.bf16.mxu0 0
      %5176 = vmatpush2.bf16.msra.mxu0 %v1925
      %5177 = vmatprep.subr.bf16.mxu0 0
      %5178 = vmatpush2.bf16.msra.mxu0 %v1924
      %5179 = vmatprep.subr.bf16.mxu0 0
      %5180 = vmatpush2.bf16.msra.mxu0 %v1923
      %5181 = vmatprep.mubr.bf16.mxu0 %v2324
      %5182 = vmatmul.mubr.bf16.gmra.mxu0 %v2308
      %v5183 = vpop.f32.mrf.mxu0
      %v5184 = vadd.f32 %v5119, %v5183
      %v5185 = vpop.f32.mrf.mxu0
      %v5186 = vpop.f32.mrf.mxu0
      %v5187 = vadd.f32 %v5122, %v5186
      %v5188 = vpop.f32.mrf.mxu0
      %5189 = vmatprep.mubr.bf16.mxu0 %v2325
      %5190 = vmatmul.mubr.bf16.gmra.mxu0 %v2309
      %v5191 = vpop.f32.mrf.mxu0
      %v5192 = vadd.f32 %v5127, %v5191
      %v5193 = vpop.f32.mrf.mxu0
      %v5194 = vpop.f32.mrf.mxu0
      %v5195 = vadd.f32 %v5130, %v5194
      %v5196 = vpop.f32.mrf.mxu0
      %5197 = vmatprep.mubr.bf16.mxu0 %v2326
      %5198 = vmatmul.mubr.bf16.gmra.mxu0 %v2310
      %v5199 = vpop.f32.mrf.mxu0
      %v5200 = vadd.f32 %v5135, %v5199
      %v5201 = vpop.f32.mrf.mxu0
      %v5202 = vpop.f32.mrf.mxu0
      %v5203 = vadd.f32 %v5138, %v5202
      %v5204 = vpop.f32.mrf.mxu0
      %5205 = vmatprep.mubr.bf16.mxu0 %v2327
      %5206 = vmatmul.mubr.bf16.gmra.mxu0 %v2311
      %v5207 = vpop.f32.mrf.mxu0
      %v5208 = vadd.f32 %v5143, %v5207
      %v5209 = vpop.f32.mrf.mxu0
      %v5210 = vpop.f32.mrf.mxu0
      %v5211 = vadd.f32 %v5146, %v5210
      %v5212 = vpop.f32.mrf.mxu0
      %5213 = vdwg.mxu0
      %5214 = vmatprep.subr.bf16.mxu0 0
      %5215 = vmatpush1.bf16.msra.mxu0 %v2403
      %5216 = vmatprep.subr.bf16.mxu0 0
      %5217 = vmatpush1.bf16.msra.mxu0 %v2402
      %5218 = vmatprep.subr.bf16.mxu0 0
      %5219 = vmatpush1.bf16.msra.mxu0 %v2401
      %5220 = vmatprep.subr.bf16.mxu0 0
      %5221 = vmatpush1.bf16.msra.mxu0 %v2400
      %5222 = vmatprep.subr.bf16.mxu0 0
      %5223 = vmatpush1.bf16.msra.mxu0 %v2399
      %5224 = vmatprep.subr.bf16.mxu0 0
      %5225 = vmatpush1.bf16.msra.mxu0 %v2398
      %5226 = vmatprep.subr.bf16.mxu0 0
      %5227 = vmatpush1.bf16.msra.mxu0 %v2397
      %5228 = vmatprep.subr.bf16.mxu0 0
      %5229 = vmatpush1.bf16.msra.mxu0 %v2396
      %5230 = vmatprep.subr.bf16.mxu0 0
      %5231 = vmatpush2.bf16.msra.mxu0 %v2411
      %5232 = vmatprep.subr.bf16.mxu0 0
      %5233 = vmatpush2.bf16.msra.mxu0 %v2410
      %5234 = vmatprep.subr.bf16.mxu0 0
      %5235 = vmatpush2.bf16.msra.mxu0 %v2409
      %5236 = vmatprep.subr.bf16.mxu0 0
      %5237 = vmatpush2.bf16.msra.mxu0 %v2408
      %5238 = vmatprep.subr.bf16.mxu0 0
      %5239 = vmatpush2.bf16.msra.mxu0 %v2407
      %5240 = vmatprep.subr.bf16.mxu0 0
      %5241 = vmatpush2.bf16.msra.mxu0 %v2406
      %5242 = vmatprep.subr.bf16.mxu0 0
      %5243 = vmatpush2.bf16.msra.mxu0 %v2405
      %5244 = vmatprep.subr.bf16.mxu0 0
      %5245 = vmatpush2.bf16.msra.mxu0 %v2404
      %5246 = vmatprep.mubr.bf16.mxu0 %v3778
      %5247 = vmatmul.mubr.bf16.gmra.mxu0 %v2726
      %v5248 = vpop.f32.mrf.mxu0
      %v5249 = vadd.f32 0.0, %v5248
      %v5250 = vpop.f32.mrf.mxu0
      %v5251 = vpop.f32.mrf.mxu0
      %v5252 = vadd.f32 0.0, %v5251
      %v5253 = vpop.f32.mrf.mxu0
      %5254 = vmatprep.mubr.bf16.mxu0 %v3779
      %5255 = vmatmul.mubr.bf16.gmra.mxu0 %v2727
      %v5256 = vpop.f32.mrf.mxu0
      %v5257 = vadd.f32 0.0, %v5256
      %v5258 = vpop.f32.mrf.mxu0
      %v5259 = vpop.f32.mrf.mxu0
      %v5260 = vadd.f32 0.0, %v5259
      %v5261 = vpop.f32.mrf.mxu0
      %5262 = vmatprep.mubr.bf16.mxu0 %v3780
      %5263 = vmatmul.mubr.bf16.gmra.mxu0 %v2728
      %v5264 = vpop.f32.mrf.mxu0
      %v5265 = vadd.f32 0.0, %v5264
      %v5266 = vpop.f32.mrf.mxu0
      %v5267 = vpop.f32.mrf.mxu0
      %v5268 = vadd.f32 0.0, %v5267
      %v5269 = vpop.f32.mrf.mxu0
      %5270 = vmatprep.mubr.bf16.mxu0 %v3781
      %5271 = vmatmul.mubr.bf16.gmra.mxu0 %v2729
      %v5272 = vpop.f32.mrf.mxu0
      %v5273 = vadd.f32 0.0, %v5272
      %v5274 = vpop.f32.mrf.mxu0
      %v5275 = vpop.f32.mrf.mxu0
      %v5276 = vadd.f32 0.0, %v5275
      %v5277 = vpop.f32.mrf.mxu0
      %5278 = vdwg.mxu0
      %v5279 = vadd.f32 %v5184, %v5249
      %v5280 = vadd.f32 %v5187, %v5252
      %v5281 = vadd.f32 %v5192, %v5257
      %v5282 = vadd.f32 %v5195, %v5260
      %v5283 = vadd.f32 %v5200, %v5265
      %v5284 = vadd.f32 %v5203, %v5268
      %v5285 = vadd.f32 %v5208, %v5273
      %v5286 = vadd.f32 %v5211, %v5276
      %5287 = vmatprep.subr.bf16.mxu0 0
      %5288 = vmatpush1.bf16.msra.mxu0 %v2610
      %5289 = vmatprep.subr.bf16.mxu0 0
      %5290 = vmatpush1.bf16.msra.mxu0 %v2609
      %5291 = vmatprep.subr.bf16.mxu0 0
      %5292 = vmatpush1.bf16.msra.mxu0 %v2608
      %5293 = vmatprep.subr.bf16.mxu0 0
      %5294 = vmatpush1.bf16.msra.mxu0 %v2607
      %5295 = vmatprep.subr.bf16.mxu0 0
      %5296 = vmatpush1.bf16.msra.mxu0 %v2606
      %5297 = vmatprep.subr.bf16.mxu0 0
      %5298 = vmatpush1.bf16.msra.mxu0 %v2605
      %5299 = vmatprep.subr.bf16.mxu0 0
      %5300 = vmatpush1.bf16.msra.mxu0 %v2604
      %5301 = vmatprep.subr.bf16.mxu0 0
      %5302 = vmatpush1.bf16.msra.mxu0 %v2603
      %5303 = vmatprep.subr.bf16.mxu0 0
      %5304 = vmatpush2.bf16.msra.mxu0 %v2618
      %5305 = vmatprep.subr.bf16.mxu0 0
      %5306 = vmatpush2.bf16.msra.mxu0 %v2617
      %5307 = vmatprep.subr.bf16.mxu0 0
      %5308 = vmatpush2.bf16.msra.mxu0 %v2616
      %5309 = vmatprep.subr.bf16.mxu0 0
      %5310 = vmatpush2.bf16.msra.mxu0 %v2615
      %5311 = vmatprep.subr.bf16.mxu0 0
      %5312 = vmatpush2.bf16.msra.mxu0 %v2614
      %5313 = vmatprep.subr.bf16.mxu0 0
      %5314 = vmatpush2.bf16.msra.mxu0 %v2613
      %5315 = vmatprep.subr.bf16.mxu0 0
      %5316 = vmatpush2.bf16.msra.mxu0 %v2612
      %5317 = vmatprep.subr.bf16.mxu0 0
      %5318 = vmatpush2.bf16.msra.mxu0 %v2611
      %5319 = vmatprep.mubr.bf16.mxu0 %v4597
      %5320 = vmatmul.mubr.bf16.gmra.mxu0 %v4498
      %v5321 = vpop.f32.mrf.mxu0
      %v5322 = vadd.f32 0.0, %v5321
      %v5323 = vpop.f32.mrf.mxu0
      %v5324 = vpop.f32.mrf.mxu0
      %v5325 = vadd.f32 0.0, %v5324
      %v5326 = vpop.f32.mrf.mxu0
      %5327 = vmatprep.mubr.bf16.mxu0 %v4598
      %5328 = vmatmul.mubr.bf16.gmra.mxu0 %v4499
      %v5329 = vpop.f32.mrf.mxu0
      %v5330 = vadd.f32 0.0, %v5329
      %v5331 = vpop.f32.mrf.mxu0
      %v5332 = vpop.f32.mrf.mxu0
      %v5333 = vadd.f32 0.0, %v5332
      %v5334 = vpop.f32.mrf.mxu0
      %5335 = vmatprep.mubr.bf16.mxu0 %v4599
      %5336 = vmatmul.mubr.bf16.gmra.mxu0 %v4500
      %v5337 = vpop.f32.mrf.mxu0
      %v5338 = vadd.f32 0.0, %v5337
      %v5339 = vpop.f32.mrf.mxu0
      %v5340 = vpop.f32.mrf.mxu0
      %v5341 = vadd.f32 0.0, %v5340
      %v5342 = vpop.f32.mrf.mxu0
      %5343 = vmatprep.mubr.bf16.mxu0 %v4600
      %5344 = vmatmul.mubr.bf16.gmra.mxu0 %v4501
      %v5345 = vpop.f32.mrf.mxu0
      %v5346 = vadd.f32 0.0, %v5345
      %v5347 = vpop.f32.mrf.mxu0
      %v5348 = vpop.f32.mrf.mxu0
      %v5349 = vadd.f32 0.0, %v5348
      %v5350 = vpop.f32.mrf.mxu0
      %5351 = vdwg.mxu0
      %v5352 = vadd.f32 %v5279, %v5322
      %v5353 = vadd.f32 %v5280, %v5325
      %v5354 = vadd.f32 %v5281, %v5330
      %v5355 = vadd.f32 %v5282, %v5333
      %v5356 = vadd.f32 %v5283, %v5338
      %v5357 = vadd.f32 %v5284, %v5341
      %v5358 = vadd.f32 %v5285, %v5346
      %v5359 = vadd.f32 %v5286, %v5349
      %v5360 = vrot.slane %v4471, 5
      %v5361 = vrot.slane %v5360, 4
      %v5362 = vrot.slane %v4472, 5
      %v5363 = vsel %vm3400, %v5361, %v5362
      %v5364 = vunpack.c.l.b16 %v5363
      %v5365 = vpack.c.b16 %v3613, %v3612
      %v5366 = vpack.c.b16 %v3615, %v3614
      %v5367 = vpack.c.b16 %v3617, %v3616
      %v5368 = vpack.c.b16 %v5364, %v3618
      %5373 = vmatprep.subr.bf16.mxu0 0
      %5374 = vmatpush1.bf16.msra.mxu0 %v2805
      %5375 = vmatprep.subr.bf16.mxu0 0
      %5376 = vmatpush1.bf16.msra.mxu0 %v2804
      %5377 = vmatprep.subr.bf16.mxu0 0
      %5378 = vmatpush1.bf16.msra.mxu0 %v2803
      %5379 = vmatprep.subr.bf16.mxu0 0
      %5380 = vmatpush1.bf16.msra.mxu0 %v2802
      %5381 = vmatprep.subr.bf16.mxu0 0
      %5382 = vmatpush1.bf16.msra.mxu0 %v2801
      %5383 = vmatprep.subr.bf16.mxu0 0
      %5384 = vmatpush1.bf16.msra.mxu0 %v2800
      %5385 = vmatprep.subr.bf16.mxu0 0
      %5386 = vmatpush1.bf16.msra.mxu0 %v2799
      %5387 = vmatprep.subr.bf16.mxu0 0
      %5388 = vmatpush1.bf16.msra.mxu0 %v2798
      %5389 = vmatprep.subr.bf16.mxu0 0
      %5390 = vmatpush2.bf16.msra.mxu0 %v2813
      %5391 = vmatprep.subr.bf16.mxu0 0
      %5392 = vmatpush2.bf16.msra.mxu0 %v2812
      %5393 = vmatprep.subr.bf16.mxu0 0
      %5394 = vmatpush2.bf16.msra.mxu0 %v2811
      %5395 = vmatprep.subr.bf16.mxu0 0
      %5396 = vmatpush2.bf16.msra.mxu0 %v2810
      %5397 = vmatprep.subr.bf16.mxu0 0
      %5398 = vmatpush2.bf16.msra.mxu0 %v2809
      %5399 = vmatprep.subr.bf16.mxu0 0
      %5400 = vmatpush2.bf16.msra.mxu0 %v2808
      %5401 = vmatprep.subr.bf16.mxu0 0
      %5402 = vmatpush2.bf16.msra.mxu0 %v2807
      %5403 = vmatprep.subr.bf16.mxu0 0
      %5404 = vmatpush2.bf16.msra.mxu0 %v2806
      %5405 = vmatprep.mubr.bf16.mxu0 %v5365
      %5406 = vmatmul.mubr.bf16.gmra.mxu0 %v5365
      %v5407 = vpop.f32.mrf.mxu0
      %v5408 = vadd.f32 0.0, %v5407
      %v5409 = vpop.f32.mrf.mxu0
      %v5410 = vpop.f32.mrf.mxu0
      %v5411 = vadd.f32 0.0, %v5410
      %v5412 = vpop.f32.mrf.mxu0
      %5413 = vmatprep.mubr.bf16.mxu0 %v5366
      %5414 = vmatmul.mubr.bf16.gmra.mxu0 %v5366
      %v5415 = vpop.f32.mrf.mxu0
      %v5416 = vadd.f32 0.0, %v5415
      %v5417 = vpop.f32.mrf.mxu0
      %v5418 = vpop.f32.mrf.mxu0
      %v5419 = vadd.f32 0.0, %v5418
      %v5420 = vpop.f32.mrf.mxu0
      %5421 = vmatprep.mubr.bf16.mxu0 %v5367
      %5422 = vmatmul.mubr.bf16.gmra.mxu0 %v5367
      %v5423 = vpop.f32.mrf.mxu0
      %v5424 = vadd.f32 0.0, %v5423
      %v5425 = vpop.f32.mrf.mxu0
      %v5426 = vpop.f32.mrf.mxu0
      %v5427 = vadd.f32 0.0, %v5426
      %v5428 = vpop.f32.mrf.mxu0
      %5429 = vmatprep.mubr.bf16.mxu0 %v5368
      %5430 = vmatmul.mubr.bf16.gmra.mxu0 %v5368
      %v5431 = vpop.f32.mrf.mxu0
      %v5432 = vadd.f32 0.0, %v5431
      %v5433 = vpop.f32.mrf.mxu0
      %v5434 = vpop.f32.mrf.mxu0
      %v5435 = vadd.f32 0.0, %v5434
      %v5436 = vpop.f32.mrf.mxu0
      %5437 = vdwg.mxu0
      %v5438 = vadd.f32 %v5352, %v5408
      %v5439 = vadd.f32 %v5353, %v5411
      %v5440 = vadd.f32 %v5354, %v5416
      %v5441 = vadd.f32 %v5355, %v5419
      %v5442 = vadd.f32 %v5356, %v5424
      %v5443 = vadd.f32 %v5357, %v5427
      %v5444 = vadd.f32 %v5358, %v5432
      %v5445 = vadd.f32 %v5359, %v5435
      %v5446 = vadd.f32 %v5438, %v2907
      %v5447 = vadd.f32 %v5439, %v2907
      %v5448 = vadd.f32 %v5440, %v2907
      %v5449 = vadd.f32 %v5441, %v2907
      %v5450 = vadd.f32 %v5442, %v2907
      %v5451 = vadd.f32 %v5443, %v2907
      %v5452 = vadd.f32 %v5444, %v2907
      %v5453 = vadd.f32 %v5445, %v2907
      %v5454 = vmax.f32 %v5446, 0.0
      %v5455 = vmax.f32 %v5447, 0.0
      %v5456 = vmax.f32 %v5448, 0.0
      %v5457 = vmax.f32 %v5449, 0.0
      %v5458 = vmax.f32 %v5450, 0.0
      %v5459 = vmax.f32 %v5451, 0.0
      %v5460 = vmax.f32 %v5452, 0.0
      %v5461 = vmax.f32 %v5453, 0.0
      %v5462 = vpack.c.bf16 %v5455, %v5454
      %v5463 = vpack.c.bf16 %v5457, %v5456
      %v5464 = vpack.c.bf16 %v5459, %v5458
      %v5465 = vpack.c.bf16 %v5461, %v5460
      %5466 = vset.pattern.permute.xlu0 15
      %5467 = vperm.xlu0 %5466, %v1309
      %v5468 = vpop.permute.xlu0 %5467
      %5470 = vset.pattern.permute.xlu0 15
      %5471 = vperm.xlu0 %5470, %v1310
      %v5472 = vpop.permute.xlu0 %5471
      %5474 = vset.pattern.permute.xlu0 15
      %5475 = vperm.xlu0 %5474, %v1311
      %v5476 = vpop.permute.xlu0 %5475
      %5478 = vset.pattern.permute.xlu0 15
      %5479 = vperm.xlu0 %5478, %v1312
      %v5480 = vpop.permute.xlu0 %5479
      %5482 = vset.pattern.permute.xlu0 15
      %5483 = vperm.xlu0 %5482, %v1313
      %v5484 = vpop.permute.xlu0 %5483
      %5486 = vset.pattern.permute.xlu0 15
      %5487 = vperm.xlu0 %5486, %v1314
      %v5488 = vpop.permute.xlu0 %5487
      %5490 = vset.pattern.permute.xlu0 15
      %5491 = vperm.xlu0 %5490, %v1315
      %v5492 = vpop.permute.xlu0 %5491
      %5494 = vset.pattern.permute.xlu0 15
      %5495 = vperm.xlu0 %5494, %v1316
      %v5496 = vpop.permute.xlu0 %5495
      %v5498 = vmul.f32 %v5468, %v2972
      %v5499 = vmul.f32 %v5472, %v2972
      %v5500 = vmul.f32 %v5476, %v2972
      %v5501 = vmul.f32 %v5480, %v2972
      %v5502 = vmul.f32 %v5484, %v2972
      %v5503 = vmul.f32 %v5488, %v2972
      %v5504 = vmul.f32 %v5492, %v2972
      %v5505 = vmul.f32 %v5496, %v2972
      %5506 = vmatprep.subr.bf16.mxu0 0
      %5507 = vmatpush1.bf16.msra.mxu0 %v3020
      %5508 = vmatprep.subr.bf16.mxu0 0
      %5509 = vmatpush1.bf16.msra.mxu0 %v3019
      %5510 = vmatprep.subr.bf16.mxu0 0
      %5511 = vmatpush1.bf16.msra.mxu0 %v3018
      %5512 = vmatprep.subr.bf16.mxu0 0
      %5513 = vmatpush1.bf16.msra.mxu0 %v3017
      %5514 = vmatprep.subr.bf16.mxu0 0
      %5515 = vmatpush1.bf16.msra.mxu0 %v3016
      %5516 = vmatprep.subr.bf16.mxu0 0
      %5517 = vmatpush1.bf16.msra.mxu0 %v3015
      %5518 = vmatprep.subr.bf16.mxu0 0
      %5519 = vmatpush1.bf16.msra.mxu0 %v3014
      %5520 = vmatprep.subr.bf16.mxu0 0
      %5521 = vmatpush1.bf16.msra.mxu0 %v3013
      %5522 = vmatprep.subr.bf16.mxu0 0
      %5523 = vmatpush2.bf16.msra.mxu0 0
      %5524 = vmatprep.subr.bf16.mxu0 0
      %5525 = vmatpush2.bf16.msra.mxu0 0
      %5526 = vmatprep.subr.bf16.mxu0 0
      %5527 = vmatpush2.bf16.msra.mxu0 0
      %5528 = vmatprep.subr.bf16.mxu0 0
      %5529 = vmatpush2.bf16.msra.mxu0 0
      %5530 = vmatprep.subr.bf16.mxu0 0
      %5531 = vmatpush2.bf16.msra.mxu0 0
      %5532 = vmatprep.subr.bf16.mxu0 0
      %5533 = vmatpush2.bf16.msra.mxu0 0
      %5534 = vmatprep.subr.bf16.mxu0 0
      %5535 = vmatpush2.bf16.msra.mxu0 0
      %5536 = vmatprep.subr.bf16.mxu0 0
      %5537 = vmatpush2.bf16.msra.mxu0 0
      %5538 = vmatprep.mubr.bf16.mxu0 0
      %5539 = vmatmul.mubr.bf16.gmra.mxu0 %v5462
      %v5540 = vpop.f32.mrf.mxu0
      %v5541 = vadd.f32 %v5498, %v5540
      %v5542 = vpop.f32.mrf.mxu0
      %v5543 = vpop.f32.mrf.mxu0
      %v5544 = vadd.f32 %v5499, %v5543
      %v5545 = vpop.f32.mrf.mxu0
      %5546 = vmatprep.mubr.bf16.mxu0 0
      %5547 = vmatmul.mubr.bf16.gmra.mxu0 %v5463
      %v5548 = vpop.f32.mrf.mxu0
      %v5549 = vadd.f32 %v5500, %v5548
      %v5550 = vpop.f32.mrf.mxu0
      %v5551 = vpop.f32.mrf.mxu0
      %v5552 = vadd.f32 %v5501, %v5551
      %v5553 = vpop.f32.mrf.mxu0
      %5554 = vmatprep.mubr.bf16.mxu0 0
      %5555 = vmatmul.mubr.bf16.gmra.mxu0 %v5464
      %v5556 = vpop.f32.mrf.mxu0
      %v5557 = vadd.f32 %v5502, %v5556
      %v5558 = vpop.f32.mrf.mxu0
      %v5559 = vpop.f32.mrf.mxu0
      %v5560 = vadd.f32 %v5503, %v5559
      %v5561 = vpop.f32.mrf.mxu0
      %5562 = vmatprep.mubr.bf16.mxu0 0
      %5563 = vmatmul.mubr.bf16.gmra.mxu0 %v5465
      %v5564 = vpop.f32.mrf.mxu0
      %v5565 = vadd.f32 %v5504, %v5564
      %v5566 = vpop.f32.mrf.mxu0
      %v5567 = vpop.f32.mrf.mxu0
      %v5568 = vadd.f32 %v5505, %v5567
      %v5569 = vpop.f32.mrf.mxu0
      %5570 = vdwg.mxu0
      %5571 = vset.pattern.permute.xlu0 16
      %5572 = vperm.xlu0 %5571, %v1309
      %v5573 = vpop.permute.xlu0 %5572
      %5575 = vset.pattern.permute.xlu0 16
      %5576 = vperm.xlu0 %5575, %v1310
      %v5577 = vpop.permute.xlu0 %5576
      %5579 = vset.pattern.permute.xlu0 16
      %5580 = vperm.xlu0 %5579, %v1311
      %v5581 = vpop.permute.xlu0 %5580
      %5583 = vset.pattern.permute.xlu0 16
      %5584 = vperm.xlu0 %5583, %v1312
      %v5585 = vpop.permute.xlu0 %5584
      %5587 = vset.pattern.permute.xlu0 16
      %5588 = vperm.xlu0 %5587, %v1313
      %v5589 = vpop.permute.xlu0 %5588
      %5591 = vset.pattern.permute.xlu0 16
      %5592 = vperm.xlu0 %5591, %v1314
      %v5593 = vpop.permute.xlu0 %5592
      %5595 = vset.pattern.permute.xlu0 16
      %5596 = vperm.xlu0 %5595, %v1315
      %v5597 = vpop.permute.xlu0 %5596
      %5599 = vset.pattern.permute.xlu0 16
      %5600 = vperm.xlu0 %5599, %v1316
      %v5601 = vpop.permute.xlu0 %5600
      %v5603 = vmul.f32 %v5573, %v3129
      %v5604 = vmul.f32 %v5577, %v3129
      %v5605 = vmul.f32 %v5581, %v3129
      %v5606 = vmul.f32 %v5585, %v3129
      %v5607 = vmul.f32 %v5589, %v3129
      %v5608 = vmul.f32 %v5593, %v3129
      %v5609 = vmul.f32 %v5597, %v3129
      %v5610 = vmul.f32 %v5601, %v3129
      %v5611 = vadd.f32 %v5541, %v5603
      %v5612 = vadd.f32 %v5544, %v5604
      %v5613 = vadd.f32 %v5549, %v5605
      %v5614 = vadd.f32 %v5552, %v5606
      %v5615 = vadd.f32 %v5557, %v5607
      %v5616 = vadd.f32 %v5560, %v5608
      %v5617 = vadd.f32 %v5565, %v5609
      %v5618 = vadd.f32 %v5568, %v5610
      %5619 = vset.pattern.permute.xlu0 17
      %5620 = vperm.xlu0 %5619, %v1309
      %v5621 = vpop.permute.xlu0 %5620
      %5623 = vset.pattern.permute.xlu0 17
      %5624 = vperm.xlu0 %5623, %v1310
      %v5625 = vpop.permute.xlu0 %5624
      %5627 = vset.pattern.permute.xlu0 17
      %5628 = vperm.xlu0 %5627, %v1311
      %v5629 = vpop.permute.xlu0 %5628
      %5631 = vset.pattern.permute.xlu0 17
      %5632 = vperm.xlu0 %5631, %v1312
      %v5633 = vpop.permute.xlu0 %5632
      %5635 = vset.pattern.permute.xlu0 17
      %5636 = vperm.xlu0 %5635, %v1313
      %v5637 = vpop.permute.xlu0 %5636
      %5639 = vset.pattern.permute.xlu0 17
      %5640 = vperm.xlu0 %5639, %v1314
      %v5641 = vpop.permute.xlu0 %5640
      %5643 = vset.pattern.permute.xlu0 17
      %5644 = vperm.xlu0 %5643, %v1315
      %v5645 = vpop.permute.xlu0 %5644
      %5647 = vset.pattern.permute.xlu0 17
      %5648 = vperm.xlu0 %5647, %v1316
      %v5649 = vpop.permute.xlu0 %5648
      %v5651 = vmul.f32 %v5621, %v3181
      %v5652 = vmul.f32 %v5625, %v3181
      %v5653 = vmul.f32 %v5629, %v3181
      %v5654 = vmul.f32 %v5633, %v3181
      %v5655 = vmul.f32 %v5637, %v3181
      %v5656 = vmul.f32 %v5641, %v3181
      %v5657 = vmul.f32 %v5645, %v3181
      %v5658 = vmul.f32 %v5649, %v3181
      %v5659 = vadd.f32 %v5611, %v5651
      %v5660 = vadd.f32 %v5612, %v5652
      %v5661 = vadd.f32 %v5613, %v5653
      %v5662 = vadd.f32 %v5614, %v5654
      %v5663 = vadd.f32 %v5615, %v5655
      %v5664 = vadd.f32 %v5616, %v5656
      %v5665 = vadd.f32 %v5617, %v5657
      %v5666 = vadd.f32 %v5618, %v5658
      %5667 = vset.pattern.permute.xlu0 18
      %5668 = vperm.xlu0 %5667, %v1309
      %v5669 = vpop.permute.xlu0 %5668
      %5671 = vset.pattern.permute.xlu0 18
      %5672 = vperm.xlu0 %5671, %v1310
      %v5673 = vpop.permute.xlu0 %5672
      %5675 = vset.pattern.permute.xlu0 18
      %5676 = vperm.xlu0 %5675, %v1311
      %v5677 = vpop.permute.xlu0 %5676
      %5679 = vset.pattern.permute.xlu0 18
      %5680 = vperm.xlu0 %5679, %v1312
      %v5681 = vpop.permute.xlu0 %5680
      %5683 = vset.pattern.permute.xlu0 18
      %5684 = vperm.xlu0 %5683, %v1313
      %v5685 = vpop.permute.xlu0 %5684
      %5687 = vset.pattern.permute.xlu0 18
      %5688 = vperm.xlu0 %5687, %v1314
      %v5689 = vpop.permute.xlu0 %5688
      %5691 = vset.pattern.permute.xlu0 18
      %5692 = vperm.xlu0 %5691, %v1315
      %v5693 = vpop.permute.xlu0 %5692
      %5695 = vset.pattern.permute.xlu0 18
      %5696 = vperm.xlu0 %5695, %v1316
      %v5697 = vpop.permute.xlu0 %5696
      %v5699 = vmul.f32 %v5669, %v3233
      %v5700 = vmul.f32 %v5673, %v3233
      %v5701 = vmul.f32 %v5677, %v3233
      %v5702 = vmul.f32 %v5681, %v3233
      %v5703 = vmul.f32 %v5685, %v3233
      %v5704 = vmul.f32 %v5689, %v3233
      %v5705 = vmul.f32 %v5693, %v3233
      %v5706 = vmul.f32 %v5697, %v3233
      %v5707 = vadd.f32 %v5659, %v5699
      %v5708 = vadd.f32 %v5660, %v5700
      %v5709 = vadd.f32 %v5661, %v5701
      %v5710 = vadd.f32 %v5662, %v5702
      %v5711 = vadd.f32 %v5663, %v5703
      %v5712 = vadd.f32 %v5664, %v5704
      %v5713 = vadd.f32 %v5665, %v5705
      %v5714 = vadd.f32 %v5666, %v5706
      %5715 = vset.pattern.permute.xlu0 19
      %5716 = vperm.xlu0 %5715, %v1309
      %v5717 = vpop.permute.xlu0 %5716
      %5719 = vset.pattern.permute.xlu0 19
      %5720 = vperm.xlu0 %5719, %v1310
      %v5721 = vpop.permute.xlu0 %5720
      %5723 = vset.pattern.permute.xlu0 19
      %5724 = vperm.xlu0 %5723, %v1311
      %v5725 = vpop.permute.xlu0 %5724
      %5727 = vset.pattern.permute.xlu0 19
      %5728 = vperm.xlu0 %5727, %v1312
      %v5729 = vpop.permute.xlu0 %5728
      %5731 = vset.pattern.permute.xlu0 19
      %5732 = vperm.xlu0 %5731, %v1313
      %v5733 = vpop.permute.xlu0 %5732
      %5735 = vset.pattern.permute.xlu0 19
      %5736 = vperm.xlu0 %5735, %v1314
      %v5737 = vpop.permute.xlu0 %5736
      %5739 = vset.pattern.permute.xlu0 19
      %5740 = vperm.xlu0 %5739, %v1315
      %v5741 = vpop.permute.xlu0 %5740
      %5743 = vset.pattern.permute.xlu0 19
      %5744 = vperm.xlu0 %5743, %v1316
      %v5745 = vpop.permute.xlu0 %5744
      %v5747 = vmul.f32 %v5717, %v3285
      %v5748 = vmul.f32 %v5721, %v3285
      %v5749 = vmul.f32 %v5725, %v3285
      %v5750 = vmul.f32 %v5729, %v3285
      %v5751 = vmul.f32 %v5733, %v3285
      %v5752 = vmul.f32 %v5737, %v3285
      %v5753 = vmul.f32 %v5741, %v3285
      %v5754 = vmul.f32 %v5745, %v3285
      %v5755 = vadd.f32 %v5707, %v5747
      %v5756 = vadd.f32 %v5708, %v5748
      %v5757 = vadd.f32 %v5709, %v5749
      %v5758 = vadd.f32 %v5710, %v5750
      %v5759 = vadd.f32 %v5711, %v5751
      %v5760 = vadd.f32 %v5712, %v5752
      %v5761 = vadd.f32 %v5713, %v5753
      %v5762 = vadd.f32 %v5714, %v5754
      %v5763 = vadd.f32 %v5755, %v3306
      %v5764 = vadd.f32 %v5756, %v3306
      %v5765 = vadd.f32 %v5757, %v3306
      %v5766 = vadd.f32 %v5758, %v3306
      %v5767 = vadd.f32 %v5759, %v3306
      %v5768 = vadd.f32 %v5760, %v3306
      %v5769 = vadd.f32 %v5761, %v3306
      %v5770 = vadd.f32 %v5762, %v3306
      %v5771 = vmax.f32 %v5763, 0.0
      %v5772 = vmax.f32 %v5764, 0.0
      %v5773 = vmax.f32 %v5765, 0.0
      %v5774 = vmax.f32 %v5766, 0.0
      %v5775 = vmax.f32 %v5767, 0.0
      %v5776 = vmax.f32 %v5768, 0.0
      %v5777 = vmax.f32 %v5769, 0.0
      %v5778 = vmax.f32 %v5770, 0.0
      %v5779 = vmin.f32 %v5771, 1.0
      %v5780 = vmin.f32 %v5772, 1.0
      %v5781 = vmin.f32 %v5773, 1.0
      %v5782 = vmin.f32 %v5774, 1.0
      %v5783 = vmin.f32 %v5775, 1.0
      %v5784 = vmin.f32 %v5776, 1.0
      %v5785 = vmin.f32 %v5777, 1.0
      %v5786 = vmin.f32 %v5778, 1.0
      %v5787 = vxor.u32 %v5763, 2147483648
      %v5788 = vxor.u32 %v5764, 2147483648
      %v5789 = vxor.u32 %v5765, 2147483648
      %v5790 = vxor.u32 %v5766, 2147483648
      %v5791 = vxor.u32 %v5767, 2147483648
      %v5792 = vxor.u32 %v5768, 2147483648
      %v5793 = vxor.u32 %v5769, 2147483648
      %v5794 = vxor.u32 %v5770, 2147483648
      %v5795 = vmul.f32 %v5787, 1.442695
      %v5796 = vpow.pop %v5795
      %v5797 = vmul.f32 %v5788, 1.442695
      %v5798 = vpow.pop %v5797
      %v5799 = vmul.f32 %v5789, 1.442695
      %v5800 = vpow.pop %v5799
      %v5801 = vmul.f32 %v5790, 1.442695
      %v5802 = vpow.pop %v5801
      %v5803 = vmul.f32 %v5791, 1.442695
      %v5804 = vpow.pop %v5803
      %v5805 = vmul.f32 %v5792, 1.442695
      %v5806 = vpow.pop %v5805
      %v5807 = vmul.f32 %v5793, 1.442695
      %v5808 = vpow.pop %v5807
      %v5809 = vmul.f32 %v5794, 1.442695
      %v5810 = vpow.pop %v5809
      %v5811 = vadd.f32 %v5796, 1.0
      %v5812 = vadd.f32 %v5798, 1.0
      %v5813 = vadd.f32 %v5800, 1.0
      %v5814 = vadd.f32 %v5802, 1.0
      %v5815 = vadd.f32 %v5804, 1.0
      %v5816 = vadd.f32 %v5806, 1.0
      %v5817 = vadd.f32 %v5808, 1.0
      %v5818 = vadd.f32 %v5810, 1.0
      %v5819 = vrcp.pop %v5811
      %v5820 = vmul.f32 1.0, %v5819
      %v5821 = vrcp.pop %v5812
      %v5822 = vmul.f32 1.0, %v5821
      %v5823 = vrcp.pop %v5813
      %v5824 = vmul.f32 1.0, %v5823
      %v5825 = vrcp.pop %v5814
      %v5826 = vmul.f32 1.0, %v5825
      %v5827 = vrcp.pop %v5815
      %v5828 = vmul.f32 1.0, %v5827
      %v5829 = vrcp.pop %v5816
      %v5830 = vmul.f32 1.0, %v5829
      %v5831 = vrcp.pop %v5817
      %v5832 = vmul.f32 1.0, %v5831
      %v5833 = vrcp.pop %v5818
      %v5834 = vmul.f32 1.0, %v5833
      %v5835 = vsel %vm3316, %v5779, %v5820
      %v5836 = vsel %vm3316, %v5780, %v5822
      %v5837 = vsel %vm3316, %v5781, %v5824
      %v5838 = vsel %vm3316, %v5782, %v5826
      %v5839 = vsel %vm3316, %v5783, %v5828
      %v5840 = vsel %vm3316, %v5784, %v5830
      %v5841 = vsel %vm3316, %v5785, %v5832
      %v5842 = vsel %vm3316, %v5786, %v5834
      %s5843 = scalar_lea.vmem %s759, 192
      %5844 = vst.msk [vmem:[%s5843] sm:$0xff] %vm3389, %v5835
      %5845 = vst.msk [vmem:[%s5843 + $0x8] sm:$0xff] %vm3389, %v5836
      %5846 = vst.msk [vmem:[%s5843 + $0x10] sm:$0xff] %vm3389, %v5837
      %5847 = vst.msk [vmem:[%s5843 + $0x18] sm:$0xff] %vm3389, %v5838
      %5848 = vst.msk [vmem:[%s5843 + $0x20] sm:$0xff] %vm3389, %v5839
      %5849 = vst.msk [vmem:[%s5843 + $0x28] sm:$0xff] %vm3389, %v5840
      %5850 = vst.msk [vmem:[%s5843 + $0x30] sm:$0xff] %vm3389, %v5841
      %5851 = vst.msk [vmem:[%s5843 + $0x38] sm:$0xff] %vm3389, %v5842
      %s5852 = smul.u32 8, %s28
      %p5853 = scmp.lt.s32.totalorder %s27, 1
      %s5854 = scalar_select %p5853, %s27, 1
      %p5855 = scmp.lt.s32.totalorder %s5852, 7
      %s5856 = scalar_select %p5855, %s5852, 7
      %s5857 = smul.addr %s5854, 32
      %s5858 = sadd.s32 %s5856, %s5857
      %s5859 = smul.addr %s5858, 8
      %s5860 = scalar_lea.vmem %s12, %s5859
      // Predicated region
      $region69: #{matting_module_forward.3} parent=67 // pred_check
        %p5861 = pneg %p388
      $region70: #{matting_module_forward.3} parent=67 // pred_check_branch
        %5863 = sbr.rel (%p5861) target = $region72
      $region71: #{matting_module_forward.3} parent=67 // pred_region
        %s5864 = smul.u32 8, %s28
      $region72: #{matting_module_forward.3} parent=67 // pred_fallthru
        _
    $region68: #{matting_module_forward.3} parent=5 // pred_fallthru
      _
    %p5865 = scmp.le.s32.totalorder 2, %s18
    // Predicated region
    $region73: #{matting_module_forward.3} parent=5 // pred_check
      %p5866 = pneg %p5865
    $region74: #{matting_module_forward.3} parent=5 // pred_check_branch
      %5868 = sbr.rel (%p5866) target = $region76
    $region75: #{matting_module_forward.3} parent=5 // pred_region
      %s5869 = ssub.s32 %s18, 2
      // Predicated region
      $region77: #{matting_module_forward.3} parent=75 // pred_check
        %p5870 = pneg %p394
      $region78: #{matting_module_forward.3} parent=75 // pred_check_branch
        %5872 = sbr.rel (%p5870) target = $region80
      $region79: #{matting_module_forward.3} parent=75 // pred_region
        %s5873 = smul.u32 8, %s30
        %p5874 = scmp.lt.s32.totalorder %s29, 1
        %s5875 = scalar_select %p5874, %s29, 1
        %p5876 = scmp.lt.s32.totalorder %s5873, 7
        %s5877 = scalar_select %p5876, %s5873, 7
        %s5878 = smul.addr %s5875, 32
        %s5879 = sadd.s32 %s5877, %s5878
        %s5880 = smul.addr %s5879, 8
        %s5881 = scalar_lea.vmem %s12, %s5880
      $region80: #{matting_module_forward.3} parent=75 // pred_fallthru
        _
    $region76: #{matting_module_forward.3} parent=5 // pred_fallthru
      _
  $region6: #{matting_module_forward.3} parent=0 // loop_footer
    %s22 = sadd.s32 1, %s18
  $region7: #{matting_module_forward.3} parent=0 // loop_footer_branch
    %17 = sbr.rel target = $region3
  $region8: #{matting_module_forward.3} parent=0 // loop_exit
    _

</llo_original>
